<compile_context>
chip_gen: v6e
topology: v6e:2x2x1
jax: 0.10.0
libtpu: 0.0.40
codegen_flags: <defaults>
</compile_context>

<pallas_src>
import math
from functools import partial

import jax
import jax.numpy as jnp
from jax.experimental import pallas as pl
from jax.experimental.pallas import tpu as pltpu


# ---------------------- Pallas kernel: time-averaged SCM ----------------------

def _scm_kernel(y_ref, phi_ref, *, inv_T):
    @pl.when(pl.program_id(1) == 0)
    def _():
        phi_ref[...] = jnp.zeros_like(phi_ref)

    y = y_ref[...]                                   # (2, C, Tb, F)
    yr, yi = y[0], y[1]                              # (C, Tb, F)
    # phi[c1, c2, f] += (1/T) * sum_t  y[c1] * conj(y[c2])  (zero-padded frames add 0)
    pr = jnp.sum(yr[:, None] * yr[None, :] + yi[:, None] * yi[None, :], axis=2)
    pi = jnp.sum(yi[:, None] * yr[None, :] - yr[:, None] * yi[None, :], axis=2)
    phi_ref[0] += pr * inv_T                         # dense (C, C, F) accumulate
    phi_ref[1] += pi * inv_T


def spatial_covariance(Yp, T_true, Tb):
    """Yp: (N,2,C,Tp,F) zero-padded along T -> time-averaged SCM phi: (N,2,C,C,F)."""
    N, _, C, Tp, F = Yp.shape
    return pl.pallas_call(
        partial(_scm_kernel, inv_T=1.0 / T_true),
        out_shape=jax.ShapeDtypeStruct((N, 2, C, C, F), jnp.float32),
        grid=(N, Tp // Tb),
        in_specs=[pl.BlockSpec((None, 2, C, Tb, F), lambda n, t: (n, 0, 0, t, 0))],
        out_specs=pl.BlockSpec((None, 2, C, C, F), lambda n, t: (n, 0, 0, 0, 0)),
        compiler_params=pltpu.CompilerParams(
            dimension_semantics=("parallel", "arbitrary")),
    )(Yp)


# ------------- Pallas kernel: fused per-frame beamformer + TDU-net -------------

def _shift_zero(x, off, F):
    """out[:, f] = x[:, f + off], zero outside [0, F). Uses XLU roll + lane mask."""
    if off == 0:
        return x
    rolled = pltpu.roll(x, (-off) % F, 1)
    lane = jax.lax.broadcasted_iota(jnp.int32, x.shape, 1)
    if off > 0:
        return jnp.where(lane < F - off, rolled, 0.0)
    return jnp.where(lane >= -off, rolled, 0.0)


def _conv_same(x, w, b, dil, ks, F, relu):
    """Dilated 'same' Conv1d on a vreg-resident activation.
    x: (C_in, F); w: (C_out, ks*C_in) tap-major; b: (C_out, 1)."""
    half = (ks - 1) // 2
    taps = [_shift_zero(x, (k - half) * dil, F) for k in range(ks)]
    xs = taps[0] if ks == 1 else jnp.concatenate(taps, axis=0)     # (ks*C_in, F)
    y = jnp.dot(w, xs, preferred_element_type=jnp.float32) + b
    return jnp.maximum(y, 0.0) if relu else y


def _branch(x, ws, bs, L, ks, F):
    """TDU-net branch: dilated conv encoder + decoder with skip concatenations."""
    # TODO(synk): `conv_block` / norm='batch' are injected modules in the reference;
    # substituted with Conv1d + ReLU.
    fmaps = []
    for i in range(L):                                  # encoder, dilation 2**i
        x = _conv_same(x, ws[i], bs[i], 2 ** i, ks, F, relu=True)
        fmaps.append(x)
    for l in range(L):                                  # decoder, dilation 2**(L-1-l)
        d = 2 ** (L - 1 - l)
        if l != 0:
            x = jnp.concatenate([x, fmaps[L - l - 1]], axis=0)
        x = _conv_same(x, ws[L + l], bs[L + l], d, ks, F, relu=True)
    return x


def _fused_frame_kernel(*refs, L, ks, C, F, Tb):
    n_layers = 2 * L
    y_ref, xprev_ref, inv_ref = refs[0], refs[1], refs[2]
    base = 3
    rec_w_refs = refs[base:base + n_layers]
    rec_b_refs = refs[base + n_layers:base + 2 * n_layers]
    bf_w_refs = refs[base + 2 * n_layers:base + 3 * n_layers]
    bf_b_refs = refs[base + 3 * n_layers:base + 4 * n_layers]
    wc_ref = refs[base + 4 * n_layers]
    bc_ref = refs[base + 4 * n_layers + 1]
    ybf_ref = refs[base + 4 * n_layers + 2]
    xnn_ref = refs[base + 4 * n_layers + 3]

    tb = pl.program_id(1)

    # hoist: load all layer weights into vregs once per grid step, reuse for Tb frames
    rec_w = [r[...] for r in rec_w_refs]
    rec_b = [r[...] for r in rec_b_refs]
    bf_w = [r[...] for r in bf_w_refs]
    bf_b = [r[...] for r in bf_b_refs]
    wc = wc_ref[...]
    bc = bc_ref[...]

    y = y_ref[...]                                     # (2, C, Tb, F) mixture frames
    xp = xprev_ref[...]                                # (2, C, Tb, F) teacher-forced X_{t-1}
    invr, invi = inv_ref[0], inv_ref[1]                # (C, C, F) inv(phi_Y)

    # frame-0 init weights = eye(C)/C on BOTH real/imag slabs (hoisted out of the loop)
    rid = jax.lax.broadcasted_iota(jnp.int32, (C, C, F), 0)
    cid = jax.lax.broadcasted_iota(jnp.int32, (C, C, F), 1)
    eye_f = jnp.where(rid == cid, 1.0 / C, 0.0)
    m0 = (tb == 0).astype(jnp.float32)

    ybf_r_frames, ybf_i_frames = [], []
    xnn_r_frames, xnn_i_frames = [], []

    for lt in range(Tb):                               # static unrolled loop over frames
        yr, yi = y[0, :, lt, :], y[1, :, lt, :]        # (C, F)
        xr, xi = xp[0, :, lt, :], xp[1, :, lt, :]

        # single-frame spatial covariance of the teacher-forced previous target frame
        pr = xr[:, None, :] * xr[None, :, :] + xi[:, None, :] * xi[None, :, :]   # (C,C,F)
        pi = xi[:, None, :] * xr[None, :, :] - xr[:, None, :] * xi[None, :, :]

        # TODO(synk): `compute_beamformer_weights` is an externally injected module in the
        # reference; substituted with the multichannel Wiener filter W = inv(phi_Y) @ phi_X.
        Wr = jnp.sum(invr[:, :, None, :] * pr[None] - invi[:, :, None, :] * pi[None], axis=1)
        Wi = jnp.sum(invr[:, :, None, :] * pi[None] + invi[:, :, None, :] * pr[None], axis=1)

        if lt == 0:   # only frame 0 of grid block 0 can be the global first frame
            Wr = m0 * eye_f + (1.0 - m0) * Wr
            Wi = m0 * eye_f + (1.0 - m0) * Wi

        # apply beamformer: X_bf[a] = sum_b conj(W[b, a]) * Y[b]   (dense (C,F) reductions)
        ybf_r = jnp.sum(Wr * yr[:, None, :] + Wi * yi[:, None, :], axis=0)        # (C, F)
        ybf_i = jnp.sum(Wr * yi[:, None, :] - Wi * yr[:, None, :], axis=0)
        ybf_r_frames.append(ybf_r)
        ybf_i_frames.append(ybf_i)

        # TDU-net branches -- activations stay in vregs/VMEM, no HBM writeback between layers
        x_in = jnp.concatenate([yr, yi], axis=0)                                  # (2C, F)
        xbf_in = jnp.concatenate([ybf_r, ybf_i], axis=0)
        x_bf = _branch(x_in, rec_w, rec_b, L, ks, F)                              # (K, F)
        x_y = _branch(xbf_in, bf_w, bf_b, L, ks, F)

        # feature_combine: cat + 1x1 Conv1d (no activation)
        x_comb = jnp.concatenate([x_bf, x_y], axis=0)                             # (2K, F)
        out = jnp.dot(wc, x_comb, preferred_element_type=jnp.float32) + bc        # (2C, F)
        xnn_r_frames.append(out[:C, :])
        xnn_i_frames.append(out[C:, :])

    # dense, lane-aligned full-block stores in the final (C, 2, Tb, F) layout
    ybf_ref[...] = jnp.stack(
        [jnp.stack(ybf_r_frames, axis=1), jnp.stack(ybf_i_frames, axis=1)], axis=1)
    xnn_ref[...] = jnp.stack(
        [jnp.stack(xnn_r_frames, axis=1), jnp.stack(xnn_i_frames, axis=1)], axis=1)


def _prep_conv(w, b):
    """PyTorch Conv1d weight (C_out,C_in,ks) -> tap-major 2D matmul weight (C_out, ks*C_in)."""
    C_out, C_in, ks = w.shape
    w2 = jnp.transpose(w, (0, 2, 1)).reshape(C_out, ks * C_in)
    return w2, b.reshape(C_out, 1)


def fused_frames(params, Yp, Xpp, inv_phi, *, Tb, kernel_size=3):
    """Yp, Xpp: (N,2,C,Tp,F); inv_phi: (N,2,C,C,F).
    Returns (Y_bf, X_nn), each already in the output layout (N,C,2,Tp,F)."""
    N, _, C, Tp, F = Yp.shape
    rec, bfm = params["received"], params["beamformed"]
    L = len(rec["enc"])

    def flat(branch):
        ws, bs = [], []
        for (w, b) in list(branch["enc"]) + list(branch["dec"]):
            w2, b2 = _prep_conv(w, b)
            ws.append(w2)
            bs.append(b2)
        return ws, bs

    rw, rb = flat(rec)
    bw, bb = flat(bfm)
    wc, bc = _prep_conv(*params["combinator"])
    weight_args = rw + rb + bw + bb + [wc, bc]

    def _const_spec(a):
        nd = a.ndim
        return pl.BlockSpec(a.shape, lambda n, t, _nd=nd: (0,) * _nd)

    in_frame_spec = pl.BlockSpec((None, 2, C, Tb, F), lambda n, t: (n, 0, 0, t, 0))
    out_frame_spec = pl.BlockSpec((None, C, 2, Tb, F), lambda n, t: (n, 0, 0, t, 0))
    in_specs = ([in_frame_spec, in_frame_spec,
                 pl.BlockSpec((None, 2, C, C, F), lambda n, t: (n, 0, 0, 0, 0))]
                + [_const_spec(a) for a in weight_args])
    out_specs = [out_frame_spec, out_frame_spec]
    out_shape = [jax.ShapeDtypeStruct((N, C, 2, Tp, F), jnp.float32),
                 jax.ShapeDtypeStruct((N, C, 2, Tp, F), jnp.float32)]

    kernel = partial(_fused_frame_kernel, L=L, ks=kernel_size, C=C, F=F, Tb=Tb)
    ybf, xnn = pl.pallas_call(
        kernel,
        out_shape=out_shape,
        grid=(N, Tp // Tb),
        in_specs=in_specs,
        out_specs=out_specs,
        compiler_params=pltpu.CompilerParams(
            dimension_semantics=("parallel", "parallel")),
    )(Yp, Xpp, inv_phi, *weight_args)
    return ybf, xnn


# --------------------------------- JAX glue ----------------------------------

def diag_load_and_inverse(phi, diag_loadings=1e-4):
    """phi: (N,2,C,C,F). Mirrors the torch code: eps*I is added to BOTH real and imag slabs.
    Complex inverse via the real 2Cx2C embedding (TPU-friendly)."""
    N, _, C, _, F = phi.shape
    eye = jnp.eye(C, dtype=phi.dtype)[None, None, :, :, None]
    phi = phi + diag_loadings * eye
    A = jnp.moveaxis(phi[:, 0], -1, 1)                 # (N,F,C,C)
    B = jnp.moveaxis(phi[:, 1], -1, 1)
    M = jnp.concatenate(
        [jnp.concatenate([A, -B], axis=-1),
         jnp.concatenate([B, A], axis=-1)], axis=-2)   # (N,F,2C,2C)
    Minv = jnp.linalg.inv(M)
    inv_r = jnp.moveaxis(Minv[..., :C, :C], 1, -1)     # (N,C,C,F)
    inv_i = jnp.moveaxis(Minv[..., C:, :C], 1, -1)
    return inv_r, inv_i


def forward_train(params, Y, X_target, *, ref_mic_idx=0, frames_per_block=8):
    """Teacher-forcing forward pass of RecurrentNeuralBeamformerTeacherForcing.
    Y, X_target: (N, 2, C, T, F) STFT-domain tensors."""
    # TODO(synk): STFT.forward / STFT.backward are external modules; inputs/outputs here
    # stay in the STFT domain (iSTFT resynthesis omitted).
    N, _, C, T, F = Y.shape

    # Teacher forcing => no true recurrence: frame t depends only on X_target[..., t-1],
    # so frames are processed in independent blocks of Tb per grid step.
    Tb = min(frames_per_block, T)
    Tp = ((T + Tb - 1) // Tb) * Tb
    pad = Tp - T
    Yp = jnp.pad(Y, ((0, 0), (0, 0), (0, 0), (0, pad), (0, 0))) if pad else Y
    # frame 0 uses the identity init weights, so its X_prev slot (zeros) is never used.
    Xprev_p = jnp.pad(X_target[:, :, :, :T - 1],
                      ((0, 0), (0, 0), (0, 0), (1, pad), (0, 0)))

    # precompute_inv_phi_Y (Pallas SCM accumulated over T blocks + complex inverse in JAX)
    phi_Y = spatial_covariance(Yp, T, Tb)
    invY_r, invY_i = diag_load_and_inverse(phi_Y)
    inv_phi = jnp.stack([invY_r, invY_i], axis=1)       # (N,2,C,C,F)

    Ybf_p, Xnn_p = fused_frames(params, Yp, Xprev_p, inv_phi, Tb=Tb)  # (N,C,2,Tp,F)

    est_target_STFT_multi_channel = Xnn_p[:, :, :, :T] if pad else Xnn_p
    Y_bf_STFT = Ybf_p[:, :, :, :T] if pad else Ybf_p
    return {
        "est_target_STFT_multi_channel": est_target_STFT_multi_channel,
        "est_target_STFT": est_target_STFT_multi_channel[:, ref_mic_idx],
        "Y_bf_STFT": Y_bf_STFT,
        "ref_mic_idx": jnp.int32(ref_mic_idx),
    }


# --------------------------- deterministic params ----------------------------

def init_conv_params(key, c_out, c_in, ks):
    k1, k2 = jax.random.split(key)
    bound = 1.0 / math.sqrt(c_in * ks)                  # PyTorch default Conv1d init
    w = jax.random.uniform(k1, (c_out, c_in, ks), jnp.float32, -bound, bound)
    b = jax.random.uniform(k2, (c_out,), jnp.float32, -bound, bound)
    return w, b


def build_branch(key, n_mics, n_kernels, n_layers, kernel_size=3):
    enc, dec = [], []
    keys = jax.random.split(key, 2 * n_layers)
    in_ch = 2 * n_mics
    for i in range(n_layers):                           # encoder, dilation 2**i
        w, b = init_conv_params(keys[i], n_kernels, in_ch, kernel_size)
        enc.append((w, b))
        in_ch = n_kernels
    for l in range(n_layers):                           # decoder, dilation 2**(L-1-l)
        in_ch = n_kernels if l == 0 else 2 * n_kernels
        w, b = init_conv_params(keys[n_layers + l], n_kernels, in_ch, kernel_size)
        dec.append((w, b))
    return {"enc": enc, "dec": dec}


# ----------------------------------- main -------------------------------------

if __name__ == "__main__":
    N, n_mics, T, F = 2, 2, 3, 128
    selector_rate = 4
    n_dilated_layers = 3
    n_kernels = n_mics * selector_rate                  # 8
    ref_mic_idx = 0

    root = jax.random.PRNGKey(0)
    k_y, k_x, k_rec, k_bf, k_comb = jax.random.split(root, 5)
    Y = jax.random.normal(k_y, (N, 2, n_mics, T, F), jnp.float32)
    X = jax.random.normal(k_x, (N, 2, n_mics, T, F), jnp.float32)

    params = {
        "received": build_branch(k_rec, n_mics, n_kernels, n_dilated_layers),
        "beamformed": build_branch(k_bf, n_mics, n_kernels, n_dilated_layers),
        "combinator": init_conv_params(k_comb, 2 * n_mics, 2 * n_kernels, 1),
    }

    fwd = jax.jit(forward_train)
    out = fwd(params, Y, X)
    jax.block_until_ready(out)

    assert out["est_target_STFT_multi_channel"].shape == (N, n_mics, 2, T, F)
    assert out["est_target_STFT"].shape == (N, 2, T, F)
    assert out["Y_bf_STFT"].shape == (N, n_mics, 2, T, F)
    print("KERNEL_OK")
</pallas_src>

<mosaic_0001>
module attributes {stable_mosaic.version = 11 : i64} {
  func.func @_scm_kernel(%arg0: i32, %arg1: i32, %arg2: memref<1x2x2x3x128xf32, #tpu.memory_space<vmem>>, %arg3: memref<1x2x2x2x128xf32, #tpu.memory_space<vmem>>) attributes {dimension_semantics = [#tpu.dimension_semantics<parallel>, #tpu.dimension_semantics<arbitrary>], iteration_bounds = array<i64: 2, 1>, scalar_prefetch = 0 : i64, scratch_operands = 0 : i64, tpu.core_type = #tpu.core_type<tc>, window_params = [{transform_indices = @transform_0, window_bounds = array<i64: 1, 2, 2, 3, 128>}, {transform_indices = @transform_1, window_bounds = array<i64: 1, 2, 2, 2, 128>}]} {
    %c0_i32 = arith.constant 0 : i32
    %0 = arith.cmpi eq, %arg1, %c0_i32 : i32
    %1 = arith.extui %0 : i1 to i32
    %c0_i32_0 = arith.constant 0 : i32
    %2 = arith.cmpi ne, %1, %c0_i32_0 : i32
    scf.if %2 {
      %cst_27 = arith.constant 0.000000e+00 : f32
      %49 = vector.broadcast %cst_27 : f32 to vector<2x2x2x128xf32>
      %c0_28 = arith.constant 0 : index
      %c0_29 = arith.constant 0 : index
      %c0_30 = arith.constant 0 : index
      %c0_31 = arith.constant 0 : index
      %c0_32 = arith.constant 0 : index
      %50 = vector.load %arg3[%c0_28, %c0_29, %c0_30, %c0_31, %c0_32] : memref<1x2x2x2x128xf32, #tpu.memory_space<vmem>>, vector<1x2x2x2x128xf32>
      %51 = vector.shape_cast %50 : vector<1x2x2x2x128xf32> to vector<2x2x2x128xf32>
      %52 = vector.shape_cast %49 : vector<2x2x2x128xf32> to vector<1x2x2x2x128xf32>
      tpu.vector_store %arg3[%c0_28, %c0_29, %c0_30, %c0_31, %c0_32], %52 {strides = array<i32>} : memref<1x2x2x2x128xf32, #tpu.memory_space<vmem>>, vector<1x2x2x2x128xf32>,
    } else {
    }
    %c0 = arith.constant 0 : index
    %c0_1 = arith.constant 0 : index
    %c0_2 = arith.constant 0 : index
    %c0_3 = arith.constant 0 : index
    %c0_4 = arith.constant 0 : index
    %3 = vector.load %arg2[%c0, %c0_1, %c0_2, %c0_3, %c0_4] : memref<1x2x2x3x128xf32, #tpu.memory_space<vmem>>, vector<1x2x2x3x128xf32>
    %4 = vector.shape_cast %3 : vector<1x2x2x3x128xf32> to vector<2x2x3x128xf32>
    %5 = vector.extract_strided_slice %4 {offsets = [0, 0, 0, 0], sizes = [1, 2, 3, 128], strides = [1, 1, 1, 1]} : vector<2x2x3x128xf32> to vector<1x2x3x128xf32>
    %6 = vector.shape_cast %5 : vector<1x2x3x128xf32> to vector<2x3x128xf32>
    %7 = vector.extract_strided_slice %4 {offsets = [1, 0, 0, 0], sizes = [1, 2, 3, 128], strides = [1, 1, 1, 1]} : vector<2x2x3x128xf32> to vector<1x2x3x128xf32>
    %8 = vector.shape_cast %7 : vector<1x2x3x128xf32> to vector<2x3x128xf32>
    %9 = vector.shape_cast %6 : vector<2x3x128xf32> to vector<2x1x3x128xf32>
    %10 = vector.shape_cast %6 : vector<2x3x128xf32> to vector<1x2x3x128xf32>
    %11 = vector.broadcast %9 : vector<2x1x3x128xf32> to vector<2x2x3x128xf32>
    %12 = vector.broadcast %10 : vector<1x2x3x128xf32> to vector<2x2x3x128xf32>
    %13 = arith.mulf %11, %12 : vector<2x2x3x128xf32>
    %14 = vector.shape_cast %8 : vector<2x3x128xf32> to vector<2x1x3x128xf32>
    %15 = vector.shape_cast %8 : vector<2x3x128xf32> to vector<1x2x3x128xf32>
    %16 = vector.broadcast %14 : vector<2x1x3x128xf32> to vector<2x2x3x128xf32>
    %17 = vector.broadcast %15 : vector<1x2x3x128xf32> to vector<2x2x3x128xf32>
    %18 = arith.mulf %16, %17 : vector<2x2x3x128xf32>
    %19 = arith.addf %13, %18 : vector<2x2x3x128xf32>
    %cst = arith.constant dense<0.000000e+00> : vector<2x2x128xf32>
    %20 = vector.multi_reduction <add>, %19, %cst [2] : vector<2x2x3x128xf32> to vector<2x2x128xf32>
    %21 = vector.shape_cast %8 : vector<2x3x128xf32> to vector<2x1x3x128xf32>
    %22 = vector.shape_cast %6 : vector<2x3x128xf32> to vector<1x2x3x128xf32>
    %23 = vector.broadcast %21 : vector<2x1x3x128xf32> to vector<2x2x3x128xf32>
    %24 = vector.broadcast %22 : vector<1x2x3x128xf32> to vector<2x2x3x128xf32>
    %25 = arith.mulf %23, %24 : vector<2x2x3x128xf32>
    %26 = vector.shape_cast %6 : vector<2x3x128xf32> to vector<2x1x3x128xf32>
    %27 = vector.shape_cast %8 : vector<2x3x128xf32> to vector<1x2x3x128xf32>
    %28 = vector.broadcast %26 : vector<2x1x3x128xf32> to vector<2x2x3x128xf32>
    %29 = vector.broadcast %27 : vector<1x2x3x128xf32> to vector<2x2x3x128xf32>
    %30 = arith.mulf %28, %29 : vector<2x2x3x128xf32>
    %31 = arith.subf %25, %30 : vector<2x2x3x128xf32>
    %cst_5 = arith.constant dense<0.000000e+00> : vector<2x2x128xf32>
    %32 = vector.multi_reduction <add>, %31, %cst_5 [2] : vector<2x2x3x128xf32> to vector<2x2x128xf32>
    %c0_6 = arith.constant 0 : index
    %c0_7 = arith.constant 0 : index
    %c0_8 = arith.constant 0 : index
    %c0_9 = arith.constant 0 : index
    %c0_10 = arith.constant 0 : index
    %33 = vector.load %arg3[%c0_6, %c0_7, %c0_8, %c0_9, %c0_10] : memref<1x2x2x2x128xf32, #tpu.memory_space<vmem>>, vector<1x1x2x2x128xf32>
    %34 = vector.shape_cast %33 : vector<1x1x2x2x128xf32> to vector<2x2x128xf32>
    %cst_11 = arith.constant 0.333333343 : f32
    %35 = vector.broadcast %cst_11 : f32 to vector<2x2x128xf32>
    %36 = arith.mulf %20, %35 : vector<2x2x128xf32>
    %37 = arith.addf %34, %36 : vector<2x2x128xf32>
    %c0_12 = arith.constant 0 : index
    %c0_13 = arith.constant 0 : index
    %c0_14 = arith.constant 0 : index
    %c0_15 = arith.constant 0 : index
    %c0_16 = arith.constant 0 : index
    %38 = vector.load %arg3[%c0_12, %c0_13, %c0_14, %c0_15, %c0_16] : memref<1x2x2x2x128xf32, #tpu.memory_space<vmem>>, vector<1x1x2x2x128xf32>
    %39 = vector.shape_cast %38 : vector<1x1x2x2x128xf32> to vector<2x2x128xf32>
    %40 = vector.shape_cast %37 : vector<2x2x128xf32> to vector<1x1x2x2x128xf32>
    tpu.vector_store %arg3[%c0_12, %c0_13, %c0_14, %c0_15, %c0_16], %40 {strides = array<i32>} : memref<1x2x2x2x128xf32, #tpu.memory_space<vmem>>, vector<1x1x2x2x128xf32>,
    %c0_17 = arith.constant 0 : index
    %c1 = arith.constant 1 : index
    %c0_18 = arith.constant 0 : index
    %c0_19 = arith.constant 0 : index
    %c0_20 = arith.constant 0 : index
    %41 = vector.load %arg3[%c0_17, %c1, %c0_18, %c0_19, %c0_20] : memref<1x2x2x2x128xf32, #tpu.memory_space<vmem>>, vector<1x1x2x2x128xf32>
    %42 = vector.shape_cast %41 : vector<1x1x2x2x128xf32> to vector<2x2x128xf32>
    %cst_21 = arith.constant 0.333333343 : f32
    %43 = vector.broadcast %cst_21 : f32 to vector<2x2x128xf32>
    %44 = arith.mulf %32, %43 : vector<2x2x128xf32>
    %45 = arith.addf %42, %44 : vector<2x2x128xf32>
    %c0_22 = arith.constant 0 : index
    %c1_23 = arith.constant 1 : index
    %c0_24 = arith.constant 0 : index
    %c0_25 = arith.constant 0 : index
    %c0_26 = arith.constant 0 : index
    %46 = vector.load %arg3[%c0_22, %c1_23, %c0_24, %c0_25, %c0_26] : memref<1x2x2x2x128xf32, #tpu.memory_space<vmem>>, vector<1x1x2x2x128xf32>
    %47 = vector.shape_cast %46 : vector<1x1x2x2x128xf32> to vector<2x2x128xf32>
    %48 = vector.shape_cast %45 : vector<2x2x128xf32> to vector<1x1x2x2x128xf32>
    tpu.vector_store %arg3[%c0_22, %c1_23, %c0_24, %c0_25, %c0_26], %48 {strides = array<i32>} : memref<1x2x2x2x128xf32, #tpu.memory_space<vmem>>, vector<1x1x2x2x128xf32>,
    return
  }
  func.func @transform_0(%arg0: i32, %arg1: i32) -> (i32, i32, i32, i32, i32) {
    %c0_i32 = arith.constant 0 : i32
    %c0_i32_0 = arith.constant 0 : i32
    %c0_i32_1 = arith.constant 0 : i32
    %c0_i32_2 = arith.constant 0 : i32
    return %arg0, %c0_i32, %c0_i32_0, %arg1, %c0_i32_1 : i32, i32, i32, i32, i32
  }
  func.func @transform_1(%arg0: i32, %arg1: i32) -> (i32, i32, i32, i32, i32) {
    %c0_i32 = arith.constant 0 : i32
    %c0_i32_0 = arith.constant 0 : i32
    %c0_i32_1 = arith.constant 0 : i32
    %c0_i32_2 = arith.constant 0 : i32
    %c0_i32_3 = arith.constant 0 : i32
    return %arg0, %c0_i32, %c0_i32_0, %c0_i32_1, %c0_i32_2 : i32, i32, i32, i32, i32
  }
}

module attributes {stable_mosaic.version = 11 : i64} {
  func.func @_fused_frame_kernel(%arg0: i32, %arg1: i32, %arg2: memref<1x2x2x3x128xf32, #tpu.memory_space<vmem>>, %arg3: memref<1x2x2x3x128xf32, #tpu.memory_space<vmem>>, %arg4: memref<1x2x2x2x128xf32, #tpu.memory_space<vmem>>, %arg5: memref<8x12xf32, #tpu.memory_space<vmem>>, %arg6: memref<8x24xf32, #tpu.memory_space<vmem>>, %arg7: memref<8x24xf32, #tpu.memory_space<vmem>>, %arg8: memref<8x24xf32, #tpu.memory_space<vmem>>, %arg9: memref<8x48xf32, #tpu.memory_space<vmem>>, %arg10: memref<8x48xf32, #tpu.memory_space<vmem>>, %arg11: memref<8x1xf32, #tpu.memory_space<vmem>>, %arg12: memref<8x1xf32, #tpu.memory_space<vmem>>, %arg13: memref<8x1xf32, #tpu.memory_space<vmem>>, %arg14: memref<8x1xf32, #tpu.memory_space<vmem>>, %arg15: memref<8x1xf32, #tpu.memory_space<vmem>>, %arg16: memref<8x1xf32, #tpu.memory_space<vmem>>, %arg17: memref<8x12xf32, #tpu.memory_space<vmem>>, %arg18: memref<8x24xf32, #tpu.memory_space<vmem>>, %arg19: memref<8x24xf32, #tpu.memory_space<vmem>>, %arg20: memref<8x24xf32, #tpu.memory_space<vmem>>, %arg21: memref<8x48xf32, #tpu.memory_space<vmem>>, %arg22: memref<8x48xf32, #tpu.memory_space<vmem>>, %arg23: memref<8x1xf32, #tpu.memory_space<vmem>>, %arg24: memref<8x1xf32, #tpu.memory_space<vmem>>, %arg25: memref<8x1xf32, #tpu.memory_space<vmem>>, %arg26: memref<8x1xf32, #tpu.memory_space<vmem>>, %arg27: memref<8x1xf32, #tpu.memory_space<vmem>>, %arg28: memref<8x1xf32, #tpu.memory_space<vmem>>, %arg29: memref<4x16xf32, #tpu.memory_space<vmem>>, %arg30: memref<4x1xf32, #tpu.memory_space<vmem>>, %arg31: memref<1x2x2x3x128xf32, #tpu.memory_space<vmem>>, %arg32: memref<1x2x2x3x128xf32, #tpu.memory_space<vmem>>) attributes {dimension_semantics = [#tpu.dimension_semantics<parallel>, #tpu.dimension_semantics<parallel>], iteration_bounds = array<i64: 2, 1>, scalar_prefetch = 0 : i64, scratch_operands = 0 : i64, tpu.core_type = #tpu.core_type<tc>, window_params = [{transform_indices = @transform_0, window_bounds = array<i64: 1, 2, 2, 3, 128>}, {transform_indices = @transform_1, window_bounds = array<i64: 1, 2, 2, 3, 128>}, {transform_indices = @transform_2, window_bounds = array<i64: 1, 2, 2, 2, 128>}, {pipeline_mode = #tpu.pipeline_mode<synchronous>, transform_indices = @transform_3, window_bounds = array<i64: 8, 12>}, {pipeline_mode = #tpu.pipeline_mode<synchronous>, transform_indices = @transform_4, window_bounds = array<i64: 8, 24>}, {pipeline_mode = #tpu.pipeline_mode<synchronous>, transform_indices = @transform_5, window_bounds = array<i64: 8, 24>}, {pipeline_mode = #tpu.pipeline_mode<synchronous>, transform_indices = @transform_6, window_bounds = array<i64: 8, 24>}, {pipeline_mode = #tpu.pipeline_mode<synchronous>, transform_indices = @transform_7, window_bounds = array<i64: 8, 48>}, {pipeline_mode = #tpu.pipeline_mode<synchronous>, transform_indices = @transform_8, window_bounds = array<i64: 8, 48>}, {pipeline_mode = #tpu.pipeline_mode<synchronous>, transform_indices = @transform_9, window_bounds = array<i64: 8, 1>}, {pipeline_mode = #tpu.pipeline_mode<synchronous>, transform_indices = @transform_10, window_bounds = array<i64: 8, 1>}, {pipeline_mode = #tpu.pipeline_mode<synchronous>, transform_indices = @transform_11, window_bounds = array<i64: 8, 1>}, {pipeline_mode = #tpu.pipeline_mode<synchronous>, transform_indices = @transform_12, window_bounds = array<i64: 8, 1>}, {pipeline_mode = #tpu.pipeline_mode<synchronous>, transform_indices = @transform_13, window_bounds = array<i64: 8, 1>}, {pipeline_mode = #tpu.pipeline_mode<synchronous>, transform_indices = @transform_14, window_bounds = array<i64: 8, 1>}, {pipeline_mode = #tpu.pipeline_mode<synchronous>, transform_indices = @transform_15, window_bounds = array<i64: 8, 12>}, {pipeline_mode = #tpu.pipeline_mode<synchronous>, transform_indices = @transform_16, window_bounds = array<i64: 8, 24>}, {pipeline_mode = #tpu.pipeline_mode<synchronous>, transform_indices = @transform_17, window_bounds = array<i64: 8, 24>}, {pipeline_mode = #tpu.pipeline_mode<synchronous>, transform_indices = @transform_18, window_bounds = array<i64: 8, 24>}, {pipeline_mode = #tpu.pipeline_mode<synchronous>, transform_indices = @transform_19, window_bounds = array<i64: 8, 48>}, {pipeline_mode = #tpu.pipeline_mode<synchronous>, transform_indices = @transform_20, window_bounds = array<i64: 8, 48>}, {pipeline_mode = #tpu.pipeline_mode<synchronous>, transform_indices = @transform_21, window_bounds = array<i64: 8, 1>}, {pipeline_mode = #tpu.pipeline_mode<synchronous>, transform_indices = @transform_22, window_bounds = array<i64: 8, 1>}, {pipeline_mode = #tpu.pipeline_mode<synchronous>, transform_indices = @transform_23, window_bounds = array<i64: 8, 1>}, {pipeline_mode = #tpu.pipeline_mode<synchronous>, transform_indices = @transform_24, window_bounds = array<i64: 8, 1>}, {pipeline_mode = #tpu.pipeline_mode<synchronous>, transform_indices = @transform_25, window_bounds = array<i64: 8, 1>}, {pipeline_mode = #tpu.pipeline_mode<synchronous>, transform_indices = @transform_26, window_bounds = array<i64: 8, 1>}, {pipeline_mode = #tpu.pipeline_mode<synchronous>, transform_indices = @transform_27, window_bounds = array<i64: 4, 16>}, {pipeline_mode = #tpu.pipeline_mode<synchronous>, transform_indices = @transform_28, window_bounds = array<i64: 4, 1>}, {transform_indices = @transform_29, window_bounds = array<i64: 1, 2, 2, 3, 128>}, {transform_indices = @transform_30, window_bounds = array<i64: 1, 2, 2, 3, 128>}]} {
    %c0 = arith.constant 0 : index
    %c0_0 = arith.constant 0 : index
    %0 = vector.load %arg5[%c0, %c0_0] : memref<8x12xf32, #tpu.memory_space<vmem>>, vector<8x12xf32>
    %c0_1 = arith.constant 0 : index
    %c0_2 = arith.constant 0 : index
    %1 = vector.load %arg6[%c0_1, %c0_2] : memref<8x24xf32, #tpu.memory_space<vmem>>, vector<8x24xf32>
    %c0_3 = arith.constant 0 : index
    %c0_4 = arith.constant 0 : index
    %2 = vector.load %arg7[%c0_3, %c0_4] : memref<8x24xf32, #tpu.memory_space<vmem>>, vector<8x24xf32>
    %c0_5 = arith.constant 0 : index
    %c0_6 = arith.constant 0 : index
    %3 = vector.load %arg8[%c0_5, %c0_6] : memref<8x24xf32, #tpu.memory_space<vmem>>, vector<8x24xf32>
    %c0_7 = arith.constant 0 : index
    %c0_8 = arith.constant 0 : index
    %4 = vector.load %arg9[%c0_7, %c0_8] : memref<8x48xf32, #tpu.memory_space<vmem>>, vector<8x48xf32>
    %c0_9 = arith.constant 0 : index
    %c0_10 = arith.constant 0 : index
    %5 = vector.load %arg10[%c0_9, %c0_10] : memref<8x48xf32, #tpu.memory_space<vmem>>, vector<8x48xf32>
    %c0_11 = arith.constant 0 : index
    %c0_12 = arith.constant 0 : index
    %6 = vector.load %arg11[%c0_11, %c0_12] : memref<8x1xf32, #tpu.memory_space<vmem>>, vector<8x1xf32>
    %c0_13 = arith.constant 0 : index
    %c0_14 = arith.constant 0 : index
    %7 = vector.load %arg12[%c0_13, %c0_14] : memref<8x1xf32, #tpu.memory_space<vmem>>, vector<8x1xf32>
    %c0_15 = arith.constant 0 : index
    %c0_16 = arith.constant 0 : index
    %8 = vector.load %arg13[%c0_15, %c0_16] : memref<8x1xf32, #tpu.memory_space<vmem>>, vector<8x1xf32>
    %c0_17 = arith.constant 0 : index
    %c0_18 = arith.constant 0 : index
    %9 = vector.load %arg14[%c0_17, %c0_18] : memref<8x1xf32, #tpu.memory_space<vmem>>, vector<8x1xf32>
    %c0_19 = arith.constant 0 : index
    %c0_20 = arith.constant 0 : index
    %10 = vector.load %arg15[%c0_19, %c0_20] : memref<8x1xf32, #tpu.memory_space<vmem>>, vector<8x1xf32>
    %c0_21 = arith.constant 0 : index
    %c0_22 = arith.constant 0 : index
    %11 = vector.load %arg16[%c0_21, %c0_22] : memref<8x1xf32, #tpu.memory_space<vmem>>, vector<8x1xf32>
    %c0_23 = arith.constant 0 : index
    %c0_24 = arith.constant 0 : index
    %12 = vector.load %arg17[%c0_23, %c0_24] : memref<8x12xf32, #tpu.memory_space<vmem>>, vector<8x12xf32>
    %c0_25 = arith.constant 0 : index
    %c0_26 = arith.constant 0 : index
    %13 = vector.load %arg18[%c0_25, %c0_26] : memref<8x24xf32, #tpu.memory_space<vmem>>, vector<8x24xf32>
    %c0_27 = arith.constant 0 : index
    %c0_28 = arith.constant 0 : index
    %14 = vector.load %arg19[%c0_27, %c0_28] : memref<8x24xf32, #tpu.memory_space<vmem>>, vector<8x24xf32>
    %c0_29 = arith.constant 0 : index
    %c0_30 = arith.constant 0 : index
    %15 = vector.load %arg20[%c0_29, %c0_30] : memref<8x24xf32, #tpu.memory_space<vmem>>, vector<8x24xf32>
    %c0_31 = arith.constant 0 : index
    %c0_32 = arith.constant 0 : index
    %16 = vector.load %arg21[%c0_31, %c0_32] : memref<8x48xf32, #tpu.memory_space<vmem>>, vector<8x48xf32>
    %c0_33 = arith.constant 0 : index
    %c0_34 = arith.constant 0 : index
    %17 = vector.load %arg22[%c0_33, %c0_34] : memref<8x48xf32, #tpu.memory_space<vmem>>, vector<8x48xf32>
    %c0_35 = arith.constant 0 : index
    %c0_36 = arith.constant 0 : index
    %18 = vector.load %arg23[%c0_35, %c0_36] : memref<8x1xf32, #tpu.memory_space<vmem>>, vector<8x1xf32>
    %c0_37 = arith.constant 0 : index
    %c0_38 = arith.constant 0 : index
    %19 = vector.load %arg24[%c0_37, %c0_38] : memref<8x1xf32, #tpu.memory_space<vmem>>, vector<8x1xf32>
    %c0_39 = arith.constant 0 : index
    %c0_40 = arith.constant 0 : index
    %20 = vector.load %arg25[%c0_39, %c0_40] : memref<8x1xf32, #tpu.memory_space<vmem>>, vector<8x1xf32>
    %c0_41 = arith.constant 0 : index
    %c0_42 = arith.constant 0 : index
    %21 = vector.load %arg26[%c0_41, %c0_42] : memref<8x1xf32, #tpu.memory_space<vmem>>, vector<8x1xf32>
    %c0_43 = arith.constant 0 : index
    %c0_44 = arith.constant 0 : index
    %22 = vector.load %arg27[%c0_43, %c0_44] : memref<8x1xf32, #tpu.memory_space<vmem>>, vector<8x1xf32>
    %c0_45 = arith.constant 0 : index
    %c0_46 = arith.constant 0 : index
    %23 = vector.load %arg28[%c0_45, %c0_46] : memref<8x1xf32, #tpu.memory_space<vmem>>, vector<8x1xf32>
    %c0_47 = arith.constant 0 : index
    %c0_48 = arith.constant 0 : index
    %24 = vector.load %arg29[%c0_47, %c0_48] : memref<4x16xf32, #tpu.memory_space<vmem>>, vector<4x16xf32>
    %c0_49 = arith.constant 0 : index
    %c0_50 = arith.constant 0 : index
    %25 = vector.load %arg30[%c0_49, %c0_50] : memref<4x1xf32, #tpu.memory_space<vmem>>, vector<4x1xf32>
    %c0_51 = arith.constant 0 : index
    %c0_52 = arith.constant 0 : index
    %c0_53 = arith.constant 0 : index
    %c0_54 = arith.constant 0 : index
    %c0_55 = arith.constant 0 : index
    %26 = vector.load %arg2[%c0_51, %c0_52, %c0_53, %c0_54, %c0_55] : memref<1x2x2x3x128xf32, #tpu.memory_space<vmem>>, vector<1x2x2x3x128xf32>
    %27 = vector.shape_cast %26 : vector<1x2x2x3x128xf32> to vector<2x2x3x128xf32>
    %c0_56 = arith.constant 0 : index
    %c0_57 = arith.constant 0 : index
    %c0_58 = arith.constant 0 : index
    %c0_59 = arith.constant 0 : index
    %c0_60 = arith.constant 0 : index
    %28 = vector.load %arg3[%c0_56, %c0_57, %c0_58, %c0_59, %c0_60] : memref<1x2x2x3x128xf32, #tpu.memory_space<vmem>>, vector<1x2x2x3x128xf32>
    %29 = vector.shape_cast %28 : vector<1x2x2x3x128xf32> to vector<2x2x3x128xf32>
    %c0_61 = arith.constant 0 : index
    %c0_62 = arith.constant 0 : index
    %c0_63 = arith.constant 0 : index
    %c0_64 = arith.constant 0 : index
    %c0_65 = arith.constant 0 : index
    %30 = vector.load %arg4[%c0_61, %c0_62, %c0_63, %c0_64, %c0_65] : memref<1x2x2x2x128xf32, #tpu.memory_space<vmem>>, vector<1x1x2x2x128xf32>
    %31 = vector.shape_cast %30 : vector<1x1x2x2x128xf32> to vector<2x2x128xf32>
    %c0_66 = arith.constant 0 : index
    %c1 = arith.constant 1 : index
    %c0_67 = arith.constant 0 : index
    %c0_68 = arith.constant 0 : index
    %c0_69 = arith.constant 0 : index
    %32 = vector.load %arg4[%c0_66, %c1, %c0_67, %c0_68, %c0_69] : memref<1x2x2x2x128xf32, #tpu.memory_space<vmem>>, vector<1x1x2x2x128xf32>
    %33 = vector.shape_cast %32 : vector<1x1x2x2x128xf32> to vector<2x2x128xf32>
    %34 = tpu.iota {dimensions = array<i32: 0>} : vector<2x2x128xi32>
    %35 = tpu.iota {dimensions = array<i32: 1>} : vector<2x2x128xi32>
    %36 = arith.cmpi eq, %34, %35 : vector<2x2x128xi32>
    %cst = arith.constant 5.000000e-01 : f32
    %cst_70 = arith.constant 0.000000e+00 : f32
    %37 = vector.broadcast %cst : f32 to vector<2x2x128xf32>
    %38 = vector.broadcast %cst_70 : f32 to vector<2x2x128xf32>
    %39 = arith.select %36, %37, %38 : vector<2x2x128xi1>, vector<2x2x128xf32>
    %c0_i32 = arith.constant 0 : i32
    %40 = arith.cmpi eq, %arg1, %c0_i32 : i32
    %41 = arith.extui %40 : i1 to i32
    %42 = arith.sitofp %41 : i32 to f32
    %43 = vector.extract_strided_slice %27 {offsets = [0, 0, 0, 0], sizes = [1, 2, 1, 128], strides = [1, 1, 1, 1]} : vector<2x2x3x128xf32> to vector<1x2x1x128xf32>
    %44 = vector.shape_cast %43 : vector<1x2x1x128xf32> to vector<2x128xf32>
    %45 = vector.extract_strided_slice %27 {offsets = [1, 0, 0, 0], sizes = [1, 2, 1, 128], strides = [1, 1, 1, 1]} : vector<2x2x3x128xf32> to vector<1x2x1x128xf32>
    %46 = vector.shape_cast %45 : vector<1x2x1x128xf32> to vector<2x128xf32>
    %47 = vector.extract_strided_slice %29 {offsets = [0, 0, 0, 0], sizes = [1, 2, 1, 128], strides = [1, 1, 1, 1]} : vector<2x2x3x128xf32> to vector<1x2x1x128xf32>
    %48 = vector.shape_cast %47 : vector<1x2x1x128xf32> to vector<2x128xf32>
    %49 = vector.extract_strided_slice %29 {offsets = [1, 0, 0, 0], sizes = [1, 2, 1, 128], strides = [1, 1, 1, 1]} : vector<2x2x3x128xf32> to vector<1x2x1x128xf32>
    %50 = vector.shape_cast %49 : vector<1x2x1x128xf32> to vector<2x128xf32>
    %51 = vector.shape_cast %48 : vector<2x128xf32> to vector<2x1x128xf32>
    %52 = vector.shape_cast %48 : vector<2x128xf32> to vector<1x2x128xf32>
    %53 = vector.broadcast %51 : vector<2x1x128xf32> to vector<2x2x128xf32>
    %54 = vector.broadcast %52 : vector<1x2x128xf32> to vector<2x2x128xf32>
    %55 = arith.mulf %53, %54 : vector<2x2x128xf32>
    %56 = vector.shape_cast %50 : vector<2x128xf32> to vector<2x1x128xf32>
    %57 = vector.shape_cast %50 : vector<2x128xf32> to vector<1x2x128xf32>
    %58 = vector.broadcast %56 : vector<2x1x128xf32> to vector<2x2x128xf32>
    %59 = vector.broadcast %57 : vector<1x2x128xf32> to vector<2x2x128xf32>
    %60 = arith.mulf %58, %59 : vector<2x2x128xf32>
    %61 = arith.addf %55, %60 : vector<2x2x128xf32>
    %62 = vector.shape_cast %50 : vector<2x128xf32> to vector<2x1x128xf32>
    %63 = vector.shape_cast %48 : vector<2x128xf32> to vector<1x2x128xf32>
    %64 = vector.broadcast %62 : vector<2x1x128xf32> to vector<2x2x128xf32>
    %65 = vector.broadcast %63 : vector<1x2x128xf32> to vector<2x2x128xf32>
    %66 = arith.mulf %64, %65 : vector<2x2x128xf32>
    %67 = vector.shape_cast %48 : vector<2x128xf32> to vector<2x1x128xf32>
    %68 = vector.shape_cast %50 : vector<2x128xf32> to vector<1x2x128xf32>
    %69 = vector.broadcast %67 : vector<2x1x128xf32> to vector<2x2x128xf32>
    %70 = vector.broadcast %68 : vector<1x2x128xf32> to vector<2x2x128xf32>
    %71 = arith.mulf %69, %70 : vector<2x2x128xf32>
    %72 = arith.subf %66, %71 : vector<2x2x128xf32>
    %73 = vector.shape_cast %31 : vector<2x2x128xf32> to vector<2x2x1x128xf32>
    %74 = vector.shape_cast %61 : vector<2x2x128xf32> to vector<1x2x2x128xf32>
    %75 = vector.broadcast %73 : vector<2x2x1x128xf32> to vector<2x2x2x128xf32>
    %76 = vector.broadcast %74 : vector<1x2x2x128xf32> to vector<2x2x2x128xf32>
    %77 = arith.mulf %75, %76 : vector<2x2x2x128xf32>
    %78 = vector.shape_cast %33 : vector<2x2x128xf32> to vector<2x2x1x128xf32>
    %79 = vector.shape_cast %72 : vector<2x2x128xf32> to vector<1x2x2x128xf32>
    %80 = vector.broadcast %78 : vector<2x2x1x128xf32> to vector<2x2x2x128xf32>
    %81 = vector.broadcast %79 : vector<1x2x2x128xf32> to vector<2x2x2x128xf32>
    %82 = arith.mulf %80, %81 : vector<2x2x2x128xf32>
    %83 = arith.subf %77, %82 : vector<2x2x2x128xf32>
    %cst_71 = arith.constant dense<0.000000e+00> : vector<2x2x128xf32>
    %84 = vector.multi_reduction <add>, %83, %cst_71 [1] : vector<2x2x2x128xf32> to vector<2x2x128xf32>
    %85 = vector.shape_cast %31 : vector<2x2x128xf32> to vector<2x2x1x128xf32>
    %86 = vector.shape_cast %72 : vector<2x2x128xf32> to vector<1x2x2x128xf32>
    %87 = vector.broadcast %85 : vector<2x2x1x128xf32> to vector<2x2x2x128xf32>
    %88 = vector.broadcast %86 : vector<1x2x2x128xf32> to vector<2x2x2x128xf32>
    %89 = arith.mulf %87, %88 : vector<2x2x2x128xf32>
    %90 = vector.shape_cast %33 : vector<2x2x128xf32> to vector<2x2x1x128xf32>
    %91 = vector.shape_cast %61 : vector<2x2x128xf32> to vector<1x2x2x128xf32>
    %92 = vector.broadcast %90 : vector<2x2x1x128xf32> to vector<2x2x2x128xf32>
    %93 = vector.broadcast %91 : vector<1x2x2x128xf32> to vector<2x2x2x128xf32>
    %94 = arith.mulf %92, %93 : vector<2x2x2x128xf32>
    %95 = arith.addf %89, %94 : vector<2x2x2x128xf32>
    %cst_72 = arith.constant dense<0.000000e+00> : vector<2x2x128xf32>
    %96 = vector.multi_reduction <add>, %95, %cst_72 [1] : vector<2x2x2x128xf32> to vector<2x2x128xf32>
    %97 = vector.broadcast %42 : f32 to vector<2x2x128xf32>
    %98 = arith.mulf %97, %39 : vector<2x2x128xf32>
    %cst_73 = arith.constant 1.000000e+00 : f32
    %99 = arith.subf %cst_73, %42 : f32
    %100 = vector.broadcast %99 : f32 to vector<2x2x128xf32>
    %101 = arith.mulf %100, %84 : vector<2x2x128xf32>
    %102 = arith.addf %98, %101 : vector<2x2x128xf32>
    %103 = vector.broadcast %42 : f32 to vector<2x2x128xf32>
    %104 = arith.mulf %103, %39 : vector<2x2x128xf32>
    %cst_74 = arith.constant 1.000000e+00 : f32
    %105 = arith.subf %cst_74, %42 : f32
    %106 = vector.broadcast %105 : f32 to vector<2x2x128xf32>
    %107 = arith.mulf %106, %96 : vector<2x2x128xf32>
    %108 = arith.addf %104, %107 : vector<2x2x128xf32>
    %109 = vector.shape_cast %44 : vector<2x128xf32> to vector<2x1x128xf32>
    %110 = vector.broadcast %109 : vector<2x1x128xf32> to vector<2x2x128xf32>
    %111 = arith.mulf %102, %110 : vector<2x2x128xf32>
    %112 = vector.shape_cast %46 : vector<2x128xf32> to vector<2x1x128xf32>
    %113 = vector.broadcast %112 : vector<2x1x128xf32> to vector<2x2x128xf32>
    %114 = arith.mulf %108, %113 : vector<2x2x128xf32>
    %115 = arith.addf %111, %114 : vector<2x2x128xf32>
    %cst_75 = arith.constant dense<0.000000e+00> : vector<2x128xf32>
    %116 = vector.multi_reduction <add>, %115, %cst_75 [0] : vector<2x2x128xf32> to vector<2x128xf32>
    %117 = vector.shape_cast %46 : vector<2x128xf32> to vector<2x1x128xf32>
    %118 = vector.broadcast %117 : vector<2x1x128xf32> to vector<2x2x128xf32>
    %119 = arith.mulf %102, %118 : vector<2x2x128xf32>
    %120 = vector.shape_cast %44 : vector<2x128xf32> to vector<2x1x128xf32>
    %121 = vector.broadcast %120 : vector<2x1x128xf32> to vector<2x2x128xf32>
    %122 = arith.mulf %108, %121 : vector<2x2x128xf32>
    %123 = arith.subf %119, %122 : vector<2x2x128xf32>
    %cst_76 = arith.constant dense<0.000000e+00> : vector<2x128xf32>
    %124 = vector.multi_reduction <add>, %123, %cst_76 [0] : vector<2x2x128xf32> to vector<2x128xf32>
    %125 = tpu.concatenate %44, %46 in 0 : vector<2x128xf32>, vector<2x128xf32> -> vector<4x128xf32>
    %126 = tpu.concatenate %116, %124 in 0 : vector<2x128xf32>, vector<2x128xf32> -> vector<4x128xf32>
    %c1_i32 = arith.constant 1 : i32
    %127 = tpu.dynamic_rotate %125 by %c1_i32 dim 1 : vector<4x128xf32>, i32 -> vector<4x128xf32>
    %128 = tpu.iota {dimensions = array<i32: 1>} : vector<4x128xi32>
    %c1_i32_77 = arith.constant 1 : i32
    %129 = vector.broadcast %c1_i32_77 : i32 to vector<4x128xi32>
    %130 = arith.cmpi sge, %128, %129 : vector<4x128xi32>
    %cst_78 = arith.constant 0.000000e+00 : f32
    %131 = vector.broadcast %cst_78 : f32 to vector<4x128xf32>
    %132 = arith.select %130, %127, %131 : vector<4x128xi1>, vector<4x128xf32>
    %c127_i32 = arith.constant 127 : i32
    %133 = tpu.dynamic_rotate %125 by %c127_i32 dim 1 : vector<4x128xf32>, i32 -> vector<4x128xf32>
    %134 = tpu.iota {dimensions = array<i32: 1>} : vector<4x128xi32>
    %c127_i32_79 = arith.constant 127 : i32
    %135 = vector.broadcast %c127_i32_79 : i32 to vector<4x128xi32>
    %136 = arith.cmpi slt, %134, %135 : vector<4x128xi32>
    %cst_80 = arith.constant 0.000000e+00 : f32
    %137 = vector.broadcast %cst_80 : f32 to vector<4x128xf32>
    %138 = arith.select %136, %133, %137 : vector<4x128xi1>, vector<4x128xf32>
    %139 = tpu.concatenate %132, %125, %138 in 0 : vector<4x128xf32>, vector<4x128xf32>, vector<4x128xf32> -> vector<12x128xf32>
    %cst_81 = arith.constant dense<0.000000e+00> : vector<8x128xf32>
    %140 = tpu.matmul %0, %139, %cst_81 {dimension_numbers = #tpu.dot_dimension_numbers<[1], [0], [0], [1], [0, 0, 1, 1], [], []>} : vector<8x12xf32>, vector<12x128xf32>, vector<8x128xf32> -> vector<8x128xf32>
    %141 = vector.broadcast %6 : vector<8x1xf32> to vector<8x128xf32>
    %142 = arith.addf %140, %141 : vector<8x128xf32>
    %cst_82 = arith.constant 0.000000e+00 : f32
    %143 = vector.broadcast %cst_82 : f32 to vector<8x128xf32>
    %144 = arith.maximumf %142, %143 : vector<8x128xf32>
    %c2_i32 = arith.constant 2 : i32
    %145 = tpu.dynamic_rotate %144 by %c2_i32 dim 1 : vector<8x128xf32>, i32 -> vector<8x128xf32>
    %146 = tpu.iota {dimensions = array<i32: 1>} : vector<8x128xi32>
    %c2_i32_83 = arith.constant 2 : i32
    %147 = vector.broadcast %c2_i32_83 : i32 to vector<8x128xi32>
    %148 = arith.cmpi sge, %146, %147 : vector<8x128xi32>
    %cst_84 = arith.constant 0.000000e+00 : f32
    %149 = vector.broadcast %cst_84 : f32 to vector<8x128xf32>
    %150 = arith.select %148, %145, %149 : vector<8x128xi1>, vector<8x128xf32>
    %c126_i32 = arith.constant 126 : i32
    %151 = tpu.dynamic_rotate %144 by %c126_i32 dim 1 : vector<8x128xf32>, i32 -> vector<8x128xf32>
    %152 = tpu.iota {dimensions = array<i32: 1>} : vector<8x128xi32>
    %c126_i32_85 = arith.constant 126 : i32
    %153 = vector.broadcast %c126_i32_85 : i32 to vector<8x128xi32>
    %154 = arith.cmpi slt, %152, %153 : vector<8x128xi32>
    %cst_86 = arith.constant 0.000000e+00 : f32
    %155 = vector.broadcast %cst_86 : f32 to vector<8x128xf32>
    %156 = arith.select %154, %151, %155 : vector<8x128xi1>, vector<8x128xf32>
    %157 = tpu.concatenate %150, %144, %156 in 0 : vector<8x128xf32>, vector<8x128xf32>, vector<8x128xf32> -> vector<24x128xf32>
    %cst_87 = arith.constant dense<0.000000e+00> : vector<8x128xf32>
    %158 = tpu.matmul %1, %157, %cst_87 {dimension_numbers = #tpu.dot_dimension_numbers<[1], [0], [0], [1], [0, 0, 1, 1], [], []>} : vector<8x24xf32>, vector<24x128xf32>, vector<8x128xf32> -> vector<8x128xf32>
    %159 = vector.broadcast %7 : vector<8x1xf32> to vector<8x128xf32>
    %160 = arith.addf %158, %159 : vector<8x128xf32>
    %cst_88 = arith.constant 0.000000e+00 : f32
    %161 = vector.broadcast %cst_88 : f32 to vector<8x128xf32>
    %162 = arith.maximumf %160, %161 : vector<8x128xf32>
    %c4_i32 = arith.constant 4 : i32
    %163 = tpu.dynamic_rotate %162 by %c4_i32 dim 1 : vector<8x128xf32>, i32 -> vector<8x128xf32>
    %164 = tpu.iota {dimensions = array<i32: 1>} : vector<8x128xi32>
    %c4_i32_89 = arith.constant 4 : i32
    %165 = vector.broadcast %c4_i32_89 : i32 to vector<8x128xi32>
    %166 = arith.cmpi sge, %164, %165 : vector<8x128xi32>
    %cst_90 = arith.constant 0.000000e+00 : f32
    %167 = vector.broadcast %cst_90 : f32 to vector<8x128xf32>
    %168 = arith.select %166, %163, %167 : vector<8x128xi1>, vector<8x128xf32>
    %c124_i32 = arith.constant 124 : i32
    %169 = tpu.dynamic_rotate %162 by %c124_i32 dim 1 : vector<8x128xf32>, i32 -> vector<8x128xf32>
    %170 = tpu.iota {dimensions = array<i32: 1>} : vector<8x128xi32>
    %c124_i32_91 = arith.constant 124 : i32
    %171 = vector.broadcast %c124_i32_91 : i32 to vector<8x128xi32>
    %172 = arith.cmpi slt, %170, %171 : vector<8x128xi32>
    %cst_92 = arith.constant 0.000000e+00 : f32
    %173 = vector.broadcast %cst_92 : f32 to vector<8x128xf32>
    %174 = arith.select %172, %169, %173 : vector<8x128xi1>, vector<8x128xf32>
    %175 = tpu.concatenate %168, %162, %174 in 0 : vector<8x128xf32>, vector<8x128xf32>, vector<8x128xf32> -> vector<24x128xf32>
    %cst_93 = arith.constant dense<0.000000e+00> : vector<8x128xf32>
    %176 = tpu.matmul %2, %175, %cst_93 {dimension_numbers = #tpu.dot_dimension_numbers<[1], [0], [0], [1], [0, 0, 1, 1], [], []>} : vector<8x24xf32>, vector<24x128xf32>, vector<8x128xf32> -> vector<8x128xf32>
    %177 = vector.broadcast %8 : vector<8x1xf32> to vector<8x128xf32>
    %178 = arith.addf %176, %177 : vector<8x128xf32>
    %cst_94 = arith.constant 0.000000e+00 : f32
    %179 = vector.broadcast %cst_94 : f32 to vector<8x128xf32>
    %180 = arith.maximumf %178, %179 : vector<8x128xf32>
    %c4_i32_95 = arith.constant 4 : i32
    %181 = tpu.dynamic_rotate %180 by %c4_i32_95 dim 1 : vector<8x128xf32>, i32 -> vector<8x128xf32>
    %182 = tpu.iota {dimensions = array<i32: 1>} : vector<8x128xi32>
    %c4_i32_96 = arith.constant 4 : i32
    %183 = vector.broadcast %c4_i32_96 : i32 to vector<8x128xi32>
    %184 = arith.cmpi sge, %182, %183 : vector<8x128xi32>
    %cst_97 = arith.constant 0.000000e+00 : f32
    %185 = vector.broadcast %cst_97 : f32 to vector<8x128xf32>
    %186 = arith.select %184, %181, %185 : vector<8x128xi1>, vector<8x128xf32>
    %c124_i32_98 = arith.constant 124 : i32
    %187 = tpu.dynamic_rotate %180 by %c124_i32_98 dim 1 : vector<8x128xf32>, i32 -> vector<8x128xf32>
    %188 = tpu.iota {dimensions = array<i32: 1>} : vector<8x128xi32>
    %c124_i32_99 = arith.constant 124 : i32
    %189 = vector.broadcast %c124_i32_99 : i32 to vector<8x128xi32>
    %190 = arith.cmpi slt, %188, %189 : vector<8x128xi32>
    %cst_100 = arith.constant 0.000000e+00 : f32
    %191 = vector.broadcast %cst_100 : f32 to vector<8x128xf32>
    %192 = arith.select %190, %187, %191 : vector<8x128xi1>, vector<8x128xf32>
    %193 = tpu.concatenate %186, %180, %192 in 0 : vector<8x128xf32>, vector<8x128xf32>, vector<8x128xf32> -> vector<24x128xf32>
    %cst_101 = arith.constant dense<0.000000e+00> : vector<8x128xf32>
    %194 = tpu.matmul %3, %193, %cst_101 {dimension_numbers = #tpu.dot_dimension_numbers<[1], [0], [0], [1], [0, 0, 1, 1], [], []>} : vector<8x24xf32>, vector<24x128xf32>, vector<8x128xf32> -> vector<8x128xf32>
    %195 = vector.broadcast %9 : vector<8x1xf32> to vector<8x128xf32>
    %196 = arith.addf %194, %195 : vector<8x128xf32>
    %cst_102 = arith.constant 0.000000e+00 : f32
    %197 = vector.broadcast %cst_102 : f32 to vector<8x128xf32>
    %198 = arith.maximumf %196, %197 : vector<8x128xf32>
    %199 = tpu.concatenate %198, %162 in 0 : vector<8x128xf32>, vector<8x128xf32> -> vector<16x128xf32>
    %c2_i32_103 = arith.constant 2 : i32
    %200 = tpu.dynamic_rotate %199 by %c2_i32_103 dim 1 : vector<16x128xf32>, i32 -> vector<16x128xf32>
    %201 = tpu.iota {dimensions = array<i32: 1>} : vector<16x128xi32>
    %c2_i32_104 = arith.constant 2 : i32
    %202 = vector.broadcast %c2_i32_104 : i32 to vector<16x128xi32>
    %203 = arith.cmpi sge, %201, %202 : vector<16x128xi32>
    %cst_105 = arith.constant 0.000000e+00 : f32
    %204 = vector.broadcast %cst_105 : f32 to vector<16x128xf32>
    %205 = arith.select %203, %200, %204 : vector<16x128xi1>, vector<16x128xf32>
    %c126_i32_106 = arith.constant 126 : i32
    %206 = tpu.dynamic_rotate %199 by %c126_i32_106 dim 1 : vector<16x128xf32>, i32 -> vector<16x128xf32>
    %207 = tpu.iota {dimensions = array<i32: 1>} : vector<16x128xi32>
    %c126_i32_107 = arith.constant 126 : i32
    %208 = vector.broadcast %c126_i32_107 : i32 to vector<16x128xi32>
    %209 = arith.cmpi slt, %207, %208 : vector<16x128xi32>
    %cst_108 = arith.constant 0.000000e+00 : f32
    %210 = vector.broadcast %cst_108 : f32 to vector<16x128xf32>
    %211 = arith.select %209, %206, %210 : vector<16x128xi1>, vector<16x128xf32>
    %212 = tpu.concatenate %205, %199, %211 in 0 : vector<16x128xf32>, vector<16x128xf32>, vector<16x128xf32> -> vector<48x128xf32>
    %cst_109 = arith.constant dense<0.000000e+00> : vector<8x128xf32>
    %213 = tpu.matmul %4, %212, %cst_109 {dimension_numbers = #tpu.dot_dimension_numbers<[1], [0], [0], [1], [0, 0, 1, 1], [], []>} : vector<8x48xf32>, vector<48x128xf32>, vector<8x128xf32> -> vector<8x128xf32>
    %214 = vector.broadcast %10 : vector<8x1xf32> to vector<8x128xf32>
    %215 = arith.addf %213, %214 : vector<8x128xf32>
    %cst_110 = arith.constant 0.000000e+00 : f32
    %216 = vector.broadcast %cst_110 : f32 to vector<8x128xf32>
    %217 = arith.maximumf %215, %216 : vector<8x128xf32>
    %218 = tpu.concatenate %217, %144 in 0 : vector<8x128xf32>, vector<8x128xf32> -> vector<16x128xf32>
    %c1_i32_111 = arith.constant 1 : i32
    %219 = tpu.dynamic_rotate %218 by %c1_i32_111 dim 1 : vector<16x128xf32>, i32 -> vector<16x128xf32>
    %220 = tpu.iota {dimensions = array<i32: 1>} : vector<16x128xi32>
    %c1_i32_112 = arith.constant 1 : i32
    %221 = vector.broadcast %c1_i32_112 : i32 to vector<16x128xi32>
    %222 = arith.cmpi sge, %220, %221 : vector<16x128xi32>
    %cst_113 = arith.constant 0.000000e+00 : f32
    %223 = vector.broadcast %cst_113 : f32 to vector<16x128xf32>
    %224 = arith.select %222, %219, %223 : vector<16x128xi1>, vector<16x128xf32>
    %c127_i32_114 = arith.constant 127 : i32
    %225 = tpu.dynamic_rotate %218 by %c127_i32_114 dim 1 : vector<16x128xf32>, i32 -> vector<16x128xf32>
    %226 = tpu.iota {dimensions = array<i32: 1>} : vector<16x128xi32>
    %c127_i32_115 = arith.constant 127 : i32
    %227 = vector.broadcast %c127_i32_115 : i32 to vector<16x128xi32>
    %228 = arith.cmpi slt, %226, %227 : vector<16x128xi32>
    %cst_116 = arith.constant 0.000000e+00 : f32
    %229 = vector.broadcast %cst_116 : f32 to vector<16x128xf32>
    %230 = arith.select %228, %225, %229 : vector<16x128xi1>, vector<16x128xf32>
    %231 = tpu.concatenate %224, %218, %230 in 0 : vector<16x128xf32>, vector<16x128xf32>, vector<16x128xf32> -> vector<48x128xf32>
    %cst_117 = arith.constant dense<0.000000e+00> : vector<8x128xf32>
    %232 = tpu.matmul %5, %231, %cst_117 {dimension_numbers = #tpu.dot_dimension_numbers<[1], [0], [0], [1], [0, 0, 1, 1], [], []>} : vector<8x48xf32>, vector<48x128xf32>, vector<8x128xf32> -> vector<8x128xf32>
    %233 = vector.broadcast %11 : vector<8x1xf32> to vector<8x128xf32>
    %234 = arith.addf %232, %233 : vector<8x128xf32>
    %cst_118 = arith.constant 0.000000e+00 : f32
    %235 = vector.broadcast %cst_118 : f32 to vector<8x128xf32>
    %236 = arith.maximumf %234, %235 : vector<8x128xf32>
    %c1_i32_119 = arith.constant 1 : i32
    %237 = tpu.dynamic_rotate %126 by %c1_i32_119 dim 1 : vector<4x128xf32>, i32 -> vector<4x128xf32>
    %238 = tpu.iota {dimensions = array<i32: 1>} : vector<4x128xi32>
    %c1_i32_120 = arith.constant 1 : i32
    %239 = vector.broadcast %c1_i32_120 : i32 to vector<4x128xi32>
    %240 = arith.cmpi sge, %238, %239 : vector<4x128xi32>
    %cst_121 = arith.constant 0.000000e+00 : f32
    %241 = vector.broadcast %cst_121 : f32 to vector<4x128xf32>
    %242 = arith.select %240, %237, %241 : vector<4x128xi1>, vector<4x128xf32>
    %c127_i32_122 = arith.constant 127 : i32
    %243 = tpu.dynamic_rotate %126 by %c127_i32_122 dim 1 : vector<4x128xf32>, i32 -> vector<4x128xf32>
    %244 = tpu.iota {dimensions = array<i32: 1>} : vector<4x128xi32>
    %c127_i32_123 = arith.constant 127 : i32
    %245 = vector.broadcast %c127_i32_123 : i32 to vector<4x128xi32>
    %246 = arith.cmpi slt, %244, %245 : vector<4x128xi32>
    %cst_124 = arith.constant 0.000000e+00 : f32
    %247 = vector.broadcast %cst_124 : f32 to vector<4x128xf32>
    %248 = arith.select %246, %243, %247 : vector<4x128xi1>, vector<4x128xf32>
    %249 = tpu.concatenate %242, %126, %248 in 0 : vector<4x128xf32>, vector<4x128xf32>, vector<4x128xf32> -> vector<12x128xf32>
    %cst_125 = arith.constant dense<0.000000e+00> : vector<8x128xf32>
    %250 = tpu.matmul %12, %249, %cst_125 {dimension_numbers = #tpu.dot_dimension_numbers<[1], [0], [0], [1], [0, 0, 1, 1], [], []>} : vector<8x12xf32>, vector<12x128xf32>, vector<8x128xf32> -> vector<8x128xf32>
    %251 = vector.broadcast %18 : vector<8x1xf32> to vector<8x128xf32>
    %252 = arith.addf %250, %251 : vector<8x128xf32>
    %cst_126 = arith.constant 0.000000e+00 : f32
    %253 = vector.broadcast %cst_126 : f32 to vector<8x128xf32>
    %254 = arith.maximumf %252, %253 : vector<8x128xf32>
    %c2_i32_127 = arith.constant 2 : i32
    %255 = tpu.dynamic_rotate %254 by %c2_i32_127 dim 1 : vector<8x128xf32>, i32 -> vector<8x128xf32>
    %256 = tpu.iota {dimensions = array<i32: 1>} : vector<8x128xi32>
    %c2_i32_128 = arith.constant 2 : i32
    %257 = vector.broadcast %c2_i32_128 : i32 to vector<8x128xi32>
    %258 = arith.cmpi sge, %256, %257 : vector<8x128xi32>
    %cst_129 = arith.constant 0.000000e+00 : f32
    %259 = vector.broadcast %cst_129 : f32 to vector<8x128xf32>
    %260 = arith.select %258, %255, %259 : vector<8x128xi1>, vector<8x128xf32>
    %c126_i32_130 = arith.constant 126 : i32
    %261 = tpu.dynamic_rotate %254 by %c126_i32_130 dim 1 : vector<8x128xf32>, i32 -> vector<8x128xf32>
    %262 = tpu.iota {dimensions = array<i32: 1>} : vector<8x128xi32>
    %c126_i32_131 = arith.constant 126 : i32
    %263 = vector.broadcast %c126_i32_131 : i32 to vector<8x128xi32>
    %264 = arith.cmpi slt, %262, %263 : vector<8x128xi32>
    %cst_132 = arith.constant 0.000000e+00 : f32
    %265 = vector.broadcast %cst_132 : f32 to vector<8x128xf32>
    %266 = arith.select %264, %261, %265 : vector<8x128xi1>, vector<8x128xf32>
    %267 = tpu.concatenate %260, %254, %266 in 0 : vector<8x128xf32>, vector<8x128xf32>, vector<8x128xf32> -> vector<24x128xf32>
    %cst_133 = arith.constant dense<0.000000e+00> : vector<8x128xf32>
    %268 = tpu.matmul %13, %267, %cst_133 {dimension_numbers = #tpu.dot_dimension_numbers<[1], [0], [0], [1], [0, 0, 1, 1], [], []>} : vector<8x24xf32>, vector<24x128xf32>, vector<8x128xf32> -> vector<8x128xf32>
    %269 = vector.broadcast %19 : vector<8x1xf32> to vector<8x128xf32>
    %270 = arith.addf %268, %269 : vector<8x128xf32>
    %cst_134 = arith.constant 0.000000e+00 : f32
    %271 = vector.broadcast %cst_134 : f32 to vector<8x128xf32>
    %272 = arith.maximumf %270, %271 : vector<8x128xf32>
    %c4_i32_135 = arith.constant 4 : i32
    %273 = tpu.dynamic_rotate %272 by %c4_i32_135 dim 1 : vector<8x128xf32>, i32 -> vector<8x128xf32>
    %274 = tpu.iota {dimensions = array<i32: 1>} : vector<8x128xi32>
    %c4_i32_136 = arith.constant 4 : i32
    %275 = vector.broadcast %c4_i32_136 : i32 to vector<8x128xi32>
    %276 = arith.cmpi sge, %274, %275 : vector<8x128xi32>
    %cst_137 = arith.constant 0.000000e+00 : f32
    %277 = vector.broadcast %cst_137 : f32 to vector<8x128xf32>
    %278 = arith.select %276, %273, %277 : vector<8x128xi1>, vector<8x128xf32>
    %c124_i32_138 = arith.constant 124 : i32
    %279 = tpu.dynamic_rotate %272 by %c124_i32_138 dim 1 : vector<8x128xf32>, i32 -> vector<8x128xf32>
    %280 = tpu.iota {dimensions = array<i32: 1>} : vector<8x128xi32>
    %c124_i32_139 = arith.constant 124 : i32
    %281 = vector.broadcast %c124_i32_139 : i32 to vector<8x128xi32>
    %282 = arith.cmpi slt, %280, %281 : vector<8x128xi32>
    %cst_140 = arith.constant 0.000000e+00 : f32
    %283 = vector.broadcast %cst_140 : f32 to vector<8x128xf32>
    %284 = arith.select %282, %279, %283 : vector<8x128xi1>, vector<8x128xf32>
    %285 = tpu.concatenate %278, %272, %284 in 0 : vector<8x128xf32>, vector<8x128xf32>, vector<8x128xf32> -> vector<24x128xf32>
    %cst_141 = arith.constant dense<0.000000e+00> : vector<8x128xf32>
    %286 = tpu.matmul %14, %285, %cst_141 {dimension_numbers = #tpu.dot_dimension_numbers<[1], [0], [0], [1], [0, 0, 1, 1], [], []>} : vector<8x24xf32>, vector<24x128xf32>, vector<8x128xf32> -> vector<8x128xf32>
    %287 = vector.broadcast %20 : vector<8x1xf32> to vector<8x128xf32>
    %288 = arith.addf %286, %287 : vector<8x128xf32>
    %cst_142 = arith.constant 0.000000e+00 : f32
    %289 = vector.broadcast %cst_142 : f32 to vector<8x128xf32>
    %290 = arith.maximumf %288, %289 : vector<8x128xf32>
    %c4_i32_143 = arith.constant 4 : i32
    %291 = tpu.dynamic_rotate %290 by %c4_i32_143 dim 1 : vector<8x128xf32>, i32 -> vector<8x128xf32>
    %292 = tpu.iota {dimensions = array<i32: 1>} : vector<8x128xi32>
    %c4_i32_144 = arith.constant 4 : i32
    %293 = vector.broadcast %c4_i32_144 : i32 to vector<8x128xi32>
    %294 = arith.cmpi sge, %292, %293 : vector<8x128xi32>
    %cst_145 = arith.constant 0.000000e+00 : f32
    %295 = vector.broadcast %cst_145 : f32 to vector<8x128xf32>
    %296 = arith.select %294, %291, %295 : vector<8x128xi1>, vector<8x128xf32>
    %c124_i32_146 = arith.constant 124 : i32
    %297 = tpu.dynamic_rotate %290 by %c124_i32_146 dim 1 : vector<8x128xf32>, i32 -> vector<8x128xf32>
    %298 = tpu.iota {dimensions = array<i32: 1>} : vector<8x128xi32>
    %c124_i32_147 = arith.constant 124 : i32
    %299 = vector.broadcast %c124_i32_147 : i32 to vector<8x128xi32>
    %300 = arith.cmpi slt, %298, %299 : vector<8x128xi32>
    %cst_148 = arith.constant 0.000000e+00 : f32
    %301 = vector.broadcast %cst_148 : f32 to vector<8x128xf32>
    %302 = arith.select %300, %297, %301 : vector<8x128xi1>, vector<8x128xf32>
    %303 = tpu.concatenate %296, %290, %302 in 0 : vector<8x128xf32>, vector<8x128xf32>, vector<8x128xf32> -> vector<24x128xf32>
    %cst_149 = arith.constant dense<0.000000e+00> : vector<8x128xf32>
    %304 = tpu.matmul %15, %303, %cst_149 {dimension_numbers = #tpu.dot_dimension_numbers<[1], [0], [0], [1], [0, 0, 1, 1], [], []>} : vector<8x24xf32>, vector<24x128xf32>, vector<8x128xf32> -> vector<8x128xf32>
    %305 = vector.broadcast %21 : vector<8x1xf32> to vector<8x128xf32>
    %306 = arith.addf %304, %305 : vector<8x128xf32>
    %cst_150 = arith.constant 0.000000e+00 : f32
    %307 = vector.broadcast %cst_150 : f32 to vector<8x128xf32>
    %308 = arith.maximumf %306, %307 : vector<8x128xf32>
    %309 = tpu.concatenate %308, %272 in 0 : vector<8x128xf32>, vector<8x128xf32> -> vector<16x128xf32>
    %c2_i32_151 = arith.constant 2 : i32
    %310 = tpu.dynamic_rotate %309 by %c2_i32_151 dim 1 : vector<16x128xf32>, i32 -> vector<16x128xf32>
    %311 = tpu.iota {dimensions = array<i32: 1>} : vector<16x128xi32>
    %c2_i32_152 = arith.constant 2 : i32
    %312 = vector.broadcast %c2_i32_152 : i32 to vector<16x128xi32>
    %313 = arith.cmpi sge, %311, %312 : vector<16x128xi32>
    %cst_153 = arith.constant 0.000000e+00 : f32
    %314 = vector.broadcast %cst_153 : f32 to vector<16x128xf32>
    %315 = arith.select %313, %310, %314 : vector<16x128xi1>, vector<16x128xf32>
    %c126_i32_154 = arith.constant 126 : i32
    %316 = tpu.dynamic_rotate %309 by %c126_i32_154 dim 1 : vector<16x128xf32>, i32 -> vector<16x128xf32>
    %317 = tpu.iota {dimensions = array<i32: 1>} : vector<16x128xi32>
    %c126_i32_155 = arith.constant 126 : i32
    %318 = vector.broadcast %c126_i32_155 : i32 to vector<16x128xi32>
    %319 = arith.cmpi slt, %317, %318 : vector<16x128xi32>
    %cst_156 = arith.constant 0.000000e+00 : f32
    %320 = vector.broadcast %cst_156 : f32 to vector<16x128xf32>
    %321 = arith.select %319, %316, %320 : vector<16x128xi1>, vector<16x128xf32>
    %322 = tpu.concatenate %315, %309, %321 in 0 : vector<16x128xf32>, vector<16x128xf32>, vector<16x128xf32> -> vector<48x128xf32>
    %cst_157 = arith.constant dense<0.000000e+00> : vector<8x128xf32>
    %323 = tpu.matmul %16, %322, %cst_157 {dimension_numbers = #tpu.dot_dimension_numbers<[1], [0], [0], [1], [0, 0, 1, 1], [], []>} : vector<8x48xf32>, vector<48x128xf32>, vector<8x128xf32> -> vector<8x128xf32>
    %324 = vector.broadcast %22 : vector<8x1xf32> to vector<8x128xf32>
    %325 = arith.addf %323, %324 : vector<8x128xf32>
    %cst_158 = arith.constant 0.000000e+00 : f32
    %326 = vector.broadcast %cst_158 : f32 to vector<8x128xf32>
    %327 = arith.maximumf %325, %326 : vector<8x128xf32>
    %328 = tpu.concatenate %327, %254 in 0 : vector<8x128xf32>, vector<8x128xf32> -> vector<16x128xf32>
    %c1_i32_159 = arith.constant 1 : i32
    %329 = tpu.dynamic_rotate %328 by %c1_i32_159 dim 1 : vector<16x128xf32>, i32 -> vector<16x128xf32>
    %330 = tpu.iota {dimensions = array<i32: 1>} : vector<16x128xi32>
    %c1_i32_160 = arith.constant 1 : i32
    %331 = vector.broadcast %c1_i32_160 : i32 to vector<16x128xi32>
    %332 = arith.cmpi sge, %330, %331 : vector<16x128xi32>
    %cst_161 = arith.constant 0.000000e+00 : f32
    %333 = vector.broadcast %cst_161 : f32 to vector<16x128xf32>
    %334 = arith.select %332, %329, %333 : vector<16x128xi1>, vector<16x128xf32>
    %c127_i32_162 = arith.constant 127 : i32
    %335 = tpu.dynamic_rotate %328 by %c127_i32_162 dim 1 : vector<16x128xf32>, i32 -> vector<16x128xf32>
    %336 = tpu.iota {dimensions = array<i32: 1>} : vector<16x128xi32>
    %c127_i32_163 = arith.constant 127 : i32
    %337 = vector.broadcast %c127_i32_163 : i32 to vector<16x128xi32>
    %338 = arith.cmpi slt, %336, %337 : vector<16x128xi32>
    %cst_164 = arith.constant 0.000000e+00 : f32
    %339 = vector.broadcast %cst_164 : f32 to vector<16x128xf32>
    %340 = arith.select %338, %335, %339 : vector<16x128xi1>, vector<16x128xf32>
    %341 = tpu.concatenate %334, %328, %340 in 0 : vector<16x128xf32>, vector<16x128xf32>, vector<16x128xf32> -> vector<48x128xf32>
    %cst_165 = arith.constant dense<0.000000e+00> : vector<8x128xf32>
    %342 = tpu.matmul %17, %341, %cst_165 {dimension_numbers = #tpu.dot_dimension_numbers<[1], [0], [0], [1], [0, 0, 1, 1], [], []>} : vector<8x48xf32>, vector<48x128xf32>, vector<8x128xf32> -> vector<8x128xf32>
    %343 = vector.broadcast %23 : vector<8x1xf32> to vector<8x128xf32>
    %344 = arith.addf %342, %343 : vector<8x128xf32>
    %cst_166 = arith.constant 0.000000e+00 : f32
    %345 = vector.broadcast %cst_166 : f32 to vector<8x128xf32>
    %346 = arith.maximumf %344, %345 : vector<8x128xf32>
    %347 = tpu.concatenate %236, %346 in 0 : vector<8x128xf32>, vector<8x128xf32> -> vector<16x128xf32>
    %cst_167 = arith.constant dense<0.000000e+00> : vector<4x128xf32>
    %348 = tpu.matmul %24, %347, %cst_167 {dimension_numbers = #tpu.dot_dimension_numbers<[1], [0], [0], [1], [0, 0, 1, 1], [], []>} : vector<4x16xf32>, vector<16x128xf32>, vector<4x128xf32> -> vector<4x128xf32>
    %349 = vector.broadcast %25 : vector<4x1xf32> to vector<4x128xf32>
    %350 = arith.addf %348, %349 : vector<4x128xf32>
    %351 = vector.extract_strided_slice %350 {offsets = [0, 0], sizes = [2, 128], strides = [1, 1]} : vector<4x128xf32> to vector<2x128xf32>
    %352 = vector.extract_strided_slice %350 {offsets = [2, 0], sizes = [2, 128], strides = [1, 1]} : vector<4x128xf32> to vector<2x128xf32>
    %353 = vector.extract_strided_slice %27 {offsets = [0, 0, 1, 0], sizes = [1, 2, 1, 128], strides = [1, 1, 1, 1]} : vector<2x2x3x128xf32> to vector<1x2x1x128xf32>
    %354 = vector.shape_cast %353 : vector<1x2x1x128xf32> to vector<2x128xf32>
    %355 = vector.extract_strided_slice %27 {offsets = [1, 0, 1, 0], sizes = [1, 2, 1, 128], strides = [1, 1, 1, 1]} : vector<2x2x3x128xf32> to vector<1x2x1x128xf32>
    %356 = vector.shape_cast %355 : vector<1x2x1x128xf32> to vector<2x128xf32>
    %357 = vector.extract_strided_slice %29 {offsets = [0, 0, 1, 0], sizes = [1, 2, 1, 128], strides = [1, 1, 1, 1]} : vector<2x2x3x128xf32> to vector<1x2x1x128xf32>
    %358 = vector.shape_cast %357 : vector<1x2x1x128xf32> to vector<2x128xf32>
    %359 = vector.extract_strided_slice %29 {offsets = [1, 0, 1, 0], sizes = [1, 2, 1, 128], strides = [1, 1, 1, 1]} : vector<2x2x3x128xf32> to vector<1x2x1x128xf32>
    %360 = vector.shape_cast %359 : vector<1x2x1x128xf32> to vector<2x128xf32>
    %361 = vector.shape_cast %358 : vector<2x128xf32> to vector<2x1x128xf32>
    %362 = vector.shape_cast %358 : vector<2x128xf32> to vector<1x2x128xf32>
    %363 = vector.broadcast %361 : vector<2x1x128xf32> to vector<2x2x128xf32>
    %364 = vector.broadcast %362 : vector<1x2x128xf32> to vector<2x2x128xf32>
    %365 = arith.mulf %363, %364 : vector<2x2x128xf32>
    %366 = vector.shape_cast %360 : vector<2x128xf32> to vector<2x1x128xf32>
    %367 = vector.shape_cast %360 : vector<2x128xf32> to vector<1x2x128xf32>
    %368 = vector.broadcast %366 : vector<2x1x128xf32> to vector<2x2x128xf32>
    %369 = vector.broadcast %367 : vector<1x2x128xf32> to vector<2x2x128xf32>
    %370 = arith.mulf %368, %369 : vector<2x2x128xf32>
    %371 = arith.addf %365, %370 : vector<2x2x128xf32>
    %372 = vector.shape_cast %360 : vector<2x128xf32> to vector<2x1x128xf32>
    %373 = vector.shape_cast %358 : vector<2x128xf32> to vector<1x2x128xf32>
    %374 = vector.broadcast %372 : vector<2x1x128xf32> to vector<2x2x128xf32>
    %375 = vector.broadcast %373 : vector<1x2x128xf32> to vector<2x2x128xf32>
    %376 = arith.mulf %374, %375 : vector<2x2x128xf32>
    %377 = vector.shape_cast %358 : vector<2x128xf32> to vector<2x1x128xf32>
    %378 = vector.shape_cast %360 : vector<2x128xf32> to vector<1x2x128xf32>
    %379 = vector.broadcast %377 : vector<2x1x128xf32> to vector<2x2x128xf32>
    %380 = vector.broadcast %378 : vector<1x2x128xf32> to vector<2x2x128xf32>
    %381 = arith.mulf %379, %380 : vector<2x2x128xf32>
    %382 = arith.subf %376, %381 : vector<2x2x128xf32>
    %383 = vector.shape_cast %31 : vector<2x2x128xf32> to vector<2x2x1x128xf32>
    %384 = vector.shape_cast %371 : vector<2x2x128xf32> to vector<1x2x2x128xf32>
    %385 = vector.broadcast %383 : vector<2x2x1x128xf32> to vector<2x2x2x128xf32>
    %386 = vector.broadcast %384 : vector<1x2x2x128xf32> to vector<2x2x2x128xf32>
    %387 = arith.mulf %385, %386 : vector<2x2x2x128xf32>
    %388 = vector.shape_cast %33 : vector<2x2x128xf32> to vector<2x2x1x128xf32>
    %389 = vector.shape_cast %382 : vector<2x2x128xf32> to vector<1x2x2x128xf32>
    %390 = vector.broadcast %388 : vector<2x2x1x128xf32> to vector<2x2x2x128xf32>
    %391 = vector.broadcast %389 : vector<1x2x2x128xf32> to vector<2x2x2x128xf32>
    %392 = arith.mulf %390, %391 : vector<2x2x2x128xf32>
    %393 = arith.subf %387, %392 : vector<2x2x2x128xf32>
    %cst_168 = arith.constant dense<0.000000e+00> : vector<2x2x128xf32>
    %394 = vector.multi_reduction <add>, %393, %cst_168 [1] : vector<2x2x2x128xf32> to vector<2x2x128xf32>
    %395 = vector.shape_cast %31 : vector<2x2x128xf32> to vector<2x2x1x128xf32>
    %396 = vector.shape_cast %382 : vector<2x2x128xf32> to vector<1x2x2x128xf32>
    %397 = vector.broadcast %395 : vector<2x2x1x128xf32> to vector<2x2x2x128xf32>
    %398 = vector.broadcast %396 : vector<1x2x2x128xf32> to vector<2x2x2x128xf32>
    %399 = arith.mulf %397, %398 : vector<2x2x2x128xf32>
    %400 = vector.shape_cast %33 : vector<2x2x128xf32> to vector<2x2x1x128xf32>
    %401 = vector.shape_cast %371 : vector<2x2x128xf32> to vector<1x2x2x128xf32>
    %402 = vector.broadcast %400 : vector<2x2x1x128xf32> to vector<2x2x2x128xf32>
    %403 = vector.broadcast %401 : vector<1x2x2x128xf32> to vector<2x2x2x128xf32>
    %404 = arith.mulf %402, %403 : vector<2x2x2x128xf32>
    %405 = arith.addf %399, %404 : vector<2x2x2x128xf32>
    %cst_169 = arith.constant dense<0.000000e+00> : vector<2x2x128xf32>
    %406 = vector.multi_reduction <add>, %405, %cst_169 [1] : vector<2x2x2x128xf32> to vector<2x2x128xf32>
    %407 = vector.shape_cast %354 : vector<2x128xf32> to vector<2x1x128xf32>
    %408 = vector.broadcast %407 : vector<2x1x128xf32> to vector<2x2x128xf32>
    %409 = arith.mulf %394, %408 : vector<2x2x128xf32>
    %410 = vector.shape_cast %356 : vector<2x128xf32> to vector<2x1x128xf32>
    %411 = vector.broadcast %410 : vector<2x1x128xf32> to vector<2x2x128xf32>
    %412 = arith.mulf %406, %411 : vector<2x2x128xf32>
    %413 = arith.addf %409, %412 : vector<2x2x128xf32>
    %cst_170 = arith.constant dense<0.000000e+00> : vector<2x128xf32>
    %414 = vector.multi_reduction <add>, %413, %cst_170 [0] : vector<2x2x128xf32> to vector<2x128xf32>
    %415 = vector.shape_cast %356 : vector<2x128xf32> to vector<2x1x128xf32>
    %416 = vector.broadcast %415 : vector<2x1x128xf32> to vector<2x2x128xf32>
    %417 = arith.mulf %394, %416 : vector<2x2x128xf32>
    %418 = vector.shape_cast %354 : vector<2x128xf32> to vector<2x1x128xf32>
    %419 = vector.broadcast %418 : vector<2x1x128xf32> to vector<2x2x128xf32>
    %420 = arith.mulf %406, %419 : vector<2x2x128xf32>
    %421 = arith.subf %417, %420 : vector<2x2x128xf32>
    %cst_171 = arith.constant dense<0.000000e+00> : vector<2x128xf32>
    %422 = vector.multi_reduction <add>, %421, %cst_171 [0] : vector<2x2x128xf32> to vector<2x128xf32>
    %423 = tpu.concatenate %354, %356 in 0 : vector<2x128xf32>, vector<2x128xf32> -> vector<4x128xf32>
    %424 = tpu.concatenate %414, %422 in 0 : vector<2x128xf32>, vector<2x128xf32> -> vector<4x128xf32>
    %c1_i32_172 = arith.constant 1 : i32
    %425 = tpu.dynamic_rotate %423 by %c1_i32_172 dim 1 : vector<4x128xf32>, i32 -> vector<4x128xf32>
    %426 = tpu.iota {dimensions = array<i32: 1>} : vector<4x128xi32>
    %c1_i32_173 = arith.constant 1 : i32
    %427 = vector.broadcast %c1_i32_173 : i32 to vector<4x128xi32>
    %428 = arith.cmpi sge, %426, %427 : vector<4x128xi32>
    %cst_174 = arith.constant 0.000000e+00 : f32
    %429 = vector.broadcast %cst_174 : f32 to vector<4x128xf32>
    %430 = arith.select %428, %425, %429 : vector<4x128xi1>, vector<4x128xf32>
    %c127_i32_175 = arith.constant 127 : i32
    %431 = tpu.dynamic_rotate %423 by %c127_i32_175 dim 1 : vector<4x128xf32>, i32 -> vector<4x128xf32>
    %432 = tpu.iota {dimensions = array<i32: 1>} : vector<4x128xi32>
    %c127_i32_176 = arith.constant 127 : i32
    %433 = vector.broadcast %c127_i32_176 : i32 to vector<4x128xi32>
    %434 = arith.cmpi slt, %432, %433 : vector<4x128xi32>
    %cst_177 = arith.constant 0.000000e+00 : f32
    %435 = vector.broadcast %cst_177 : f32 to vector<4x128xf32>
    %436 = arith.select %434, %431, %435 : vector<4x128xi1>, vector<4x128xf32>
    %437 = tpu.concatenate %430, %423, %436 in 0 : vector<4x128xf32>, vector<4x128xf32>, vector<4x128xf32> -> vector<12x128xf32>
    %cst_178 = arith.constant dense<0.000000e+00> : vector<8x128xf32>
    %438 = tpu.matmul %0, %437, %cst_178 {dimension_numbers = #tpu.dot_dimension_numbers<[1], [0], [0], [1], [0, 0, 1, 1], [], []>} : vector<8x12xf32>, vector<12x128xf32>, vector<8x128xf32> -> vector<8x128xf32>
    %439 = vector.broadcast %6 : vector<8x1xf32> to vector<8x128xf32>
    %440 = arith.addf %438, %439 : vector<8x128xf32>
    %cst_179 = arith.constant 0.000000e+00 : f32
    %441 = vector.broadcast %cst_179 : f32 to vector<8x128xf32>
    %442 = arith.maximumf %440, %441 : vector<8x128xf32>
    %c2_i32_180 = arith.constant 2 : i32
    %443 = tpu.dynamic_rotate %442 by %c2_i32_180 dim 1 : vector<8x128xf32>, i32 -> vector<8x128xf32>
    %444 = tpu.iota {dimensions = array<i32: 1>} : vector<8x128xi32>
    %c2_i32_181 = arith.constant 2 : i32
    %445 = vector.broadcast %c2_i32_181 : i32 to vector<8x128xi32>
    %446 = arith.cmpi sge, %444, %445 : vector<8x128xi32>
    %cst_182 = arith.constant 0.000000e+00 : f32
    %447 = vector.broadcast %cst_182 : f32 to vector<8x128xf32>
    %448 = arith.select %446, %443, %447 : vector<8x128xi1>, vector<8x128xf32>
    %c126_i32_183 = arith.constant 126 : i32
    %449 = tpu.dynamic_rotate %442 by %c126_i32_183 dim 1 : vector<8x128xf32>, i32 -> vector<8x128xf32>
    %450 = tpu.iota {dimensions = array<i32: 1>} : vector<8x128xi32>
    %c126_i32_184 = arith.constant 126 : i32
    %451 = vector.broadcast %c126_i32_184 : i32 to vector<8x128xi32>
    %452 = arith.cmpi slt, %450, %451 : vector<8x128xi32>
    %cst_185 = arith.constant 0.000000e+00 : f32
    %453 = vector.broadcast %cst_185 : f32 to vector<8x128xf32>
    %454 = arith.select %452, %449, %453 : vector<8x128xi1>, vector<8x128xf32>
    %455 = tpu.concatenate %448, %442, %454 in 0 : vector<8x128xf32>, vector<8x128xf32>, vector<8x128xf32> -> vector<24x128xf32>
    %cst_186 = arith.constant dense<0.000000e+00> : vector<8x128xf32>
    %456 = tpu.matmul %1, %455, %cst_186 {dimension_numbers = #tpu.dot_dimension_numbers<[1], [0], [0], [1], [0, 0, 1, 1], [], []>} : vector<8x24xf32>, vector<24x128xf32>, vector<8x128xf32> -> vector<8x128xf32>
    %457 = vector.broadcast %7 : vector<8x1xf32> to vector<8x128xf32>
    %458 = arith.addf %456, %457 : vector<8x128xf32>
    %cst_187 = arith.constant 0.000000e+00 : f32
    %459 = vector.broadcast %cst_187 : f32 to vector<8x128xf32>
    %460 = arith.maximumf %458, %459 : vector<8x128xf32>
    %c4_i32_188 = arith.constant 4 : i32
    %461 = tpu.dynamic_rotate %460 by %c4_i32_188 dim 1 : vector<8x128xf32>, i32 -> vector<8x128xf32>
    %462 = tpu.iota {dimensions = array<i32: 1>} : vector<8x128xi32>
    %c4_i32_189 = arith.constant 4 : i32
    %463 = vector.broadcast %c4_i32_189 : i32 to vector<8x128xi32>
    %464 = arith.cmpi sge, %462, %463 : vector<8x128xi32>
    %cst_190 = arith.constant 0.000000e+00 : f32
    %465 = vector.broadcast %cst_190 : f32 to vector<8x128xf32>
    %466 = arith.select %464, %461, %465 : vector<8x128xi1>, vector<8x128xf32>
    %c124_i32_191 = arith.constant 124 : i32
    %467 = tpu.dynamic_rotate %460 by %c124_i32_191 dim 1 : vector<8x128xf32>, i32 -> vector<8x128xf32>
    %468 = tpu.iota {dimensions = array<i32: 1>} : vector<8x128xi32>
    %c124_i32_192 = arith.constant 124 : i32
    %469 = vector.broadcast %c124_i32_192 : i32 to vector<8x128xi32>
    %470 = arith.cmpi slt, %468, %469 : vector<8x128xi32>
    %cst_193 = arith.constant 0.000000e+00 : f32
    %471 = vector.broadcast %cst_193 : f32 to vector<8x128xf32>
    %472 = arith.select %470, %467, %471 : vector<8x128xi1>, vector<8x128xf32>
    %473 = tpu.concatenate %466, %460, %472 in 0 : vector<8x128xf32>, vector<8x128xf32>, vector<8x128xf32> -> vector<24x128xf32>
    %cst_194 = arith.constant dense<0.000000e+00> : vector<8x128xf32>
    %474 = tpu.matmul %2, %473, %cst_194 {dimension_numbers = #tpu.dot_dimension_numbers<[1], [0], [0], [1], [0, 0, 1, 1], [], []>} : vector<8x24xf32>, vector<24x128xf32>, vector<8x128xf32> -> vector<8x128xf32>
    %475 = vector.broadcast %8 : vector<8x1xf32> to vector<8x128xf32>
    %476 = arith.addf %474, %475 : vector<8x128xf32>
    %cst_195 = arith.constant 0.000000e+00 : f32
    %477 = vector.broadcast %cst_195 : f32 to vector<8x128xf32>
    %478 = arith.maximumf %476, %477 : vector<8x128xf32>
    %c4_i32_196 = arith.constant 4 : i32
    %479 = tpu.dynamic_rotate %478 by %c4_i32_196 dim 1 : vector<8x128xf32>, i32 -> vector<8x128xf32>
    %480 = tpu.iota {dimensions = array<i32: 1>} : vector<8x128xi32>
    %c4_i32_197 = arith.constant 4 : i32
    %481 = vector.broadcast %c4_i32_197 : i32 to vector<8x128xi32>
    %482 = arith.cmpi sge, %480, %481 : vector<8x128xi32>
    %cst_198 = arith.constant 0.000000e+00 : f32
    %483 = vector.broadcast %cst_198 : f32 to vector<8x128xf32>
    %484 = arith.select %482, %479, %483 : vector<8x128xi1>, vector<8x128xf32>
    %c124_i32_199 = arith.constant 124 : i32
    %485 = tpu.dynamic_rotate %478 by %c124_i32_199 dim 1 : vector<8x128xf32>, i32 -> vector<8x128xf32>
    %486 = tpu.iota {dimensions = array<i32: 1>} : vector<8x128xi32>
    %c124_i32_200 = arith.constant 124 : i32
    %487 = vector.broadcast %c124_i32_200 : i32 to vector<8x128xi32>
    %488 = arith.cmpi slt, %486, %487 : vector<8x128xi32>
    %cst_201 = arith.constant 0.000000e+00 : f32
    %489 = vector.broadcast %cst_201 : f32 to vector<8x128xf32>
    %490 = arith.select %488, %485, %489 : vector<8x128xi1>, vector<8x128xf32>
    %491 = tpu.concatenate %484, %478, %490 in 0 : vector<8x128xf32>, vector<8x128xf32>, vector<8x128xf32> -> vector<24x128xf32>
    %cst_202 = arith.constant dense<0.000000e+00> : vector<8x128xf32>
    %492 = tpu.matmul %3, %491, %cst_202 {dimension_numbers = #tpu.dot_dimension_numbers<[1], [0], [0], [1], [0, 0, 1, 1], [], []>} : vector<8x24xf32>, vector<24x128xf32>, vector<8x128xf32> -> vector<8x128xf32>
    %493 = vector.broadcast %9 : vector<8x1xf32> to vector<8x128xf32>
    %494 = arith.addf %492, %493 : vector<8x128xf32>
    %cst_203 = arith.constant 0.000000e+00 : f32
    %495 = vector.broadcast %cst_203 : f32 to vector<8x128xf32>
    %496 = arith.maximumf %494, %495 : vector<8x128xf32>
    %497 = tpu.concatenate %496, %460 in 0 : vector<8x128xf32>, vector<8x128xf32> -> vector<16x128xf32>
    %c2_i32_204 = arith.constant 2 : i32
    %498 = tpu.dynamic_rotate %497 by %c2_i32_204 dim 1 : vector<16x128xf32>, i32 -> vector<16x128xf32>
    %499 = tpu.iota {dimensions = array<i32: 1>} : vector<16x128xi32>
    %c2_i32_205 = arith.constant 2 : i32
    %500 = vector.broadcast %c2_i32_205 : i32 to vector<16x128xi32>
    %501 = arith.cmpi sge, %499, %500 : vector<16x128xi32>
    %cst_206 = arith.constant 0.000000e+00 : f32
    %502 = vector.broadcast %cst_206 : f32 to vector<16x128xf32>
    %503 = arith.select %501, %498, %502 : vector<16x128xi1>, vector<16x128xf32>
    %c126_i32_207 = arith.constant 126 : i32
    %504 = tpu.dynamic_rotate %497 by %c126_i32_207 dim 1 : vector<16x128xf32>, i32 -> vector<16x128xf32>
    %505 = tpu.iota {dimensions = array<i32: 1>} : vector<16x128xi32>
    %c126_i32_208 = arith.constant 126 : i32
    %506 = vector.broadcast %c126_i32_208 : i32 to vector<16x128xi32>
    %507 = arith.cmpi slt, %505, %506 : vector<16x128xi32>
    %cst_209 = arith.constant 0.000000e+00 : f32
    %508 = vector.broadcast %cst_209 : f32 to vector<16x128xf32>
    %509 = arith.select %507, %504, %508 : vector<16x128xi1>, vector<16x128xf32>
    %510 = tpu.concatenate %503, %497, %509 in 0 : vector<16x128xf32>, vector<16x128xf32>, vector<16x128xf32> -> vector<48x128xf32>
    %cst_210 = arith.constant dense<0.000000e+00> : vector<8x128xf32>
    %511 = tpu.matmul %4, %510, %cst_210 {dimension_numbers = #tpu.dot_dimension_numbers<[1], [0], [0], [1], [0, 0, 1, 1], [], []>} : vector<8x48xf32>, vector<48x128xf32>, vector<8x128xf32> -> vector<8x128xf32>
    %512 = vector.broadcast %10 : vector<8x1xf32> to vector<8x128xf32>
    %513 = arith.addf %511, %512 : vector<8x128xf32>
    %cst_211 = arith.constant 0.000000e+00 : f32
    %514 = vector.broadcast %cst_211 : f32 to vector<8x128xf32>
    %515 = arith.maximumf %513, %514 : vector<8x128xf32>
    %516 = tpu.concatenate %515, %442 in 0 : vector<8x128xf32>, vector<8x128xf32> -> vector<16x128xf32>
    %c1_i32_212 = arith.constant 1 : i32
    %517 = tpu.dynamic_rotate %516 by %c1_i32_212 dim 1 : vector<16x128xf32>, i32 -> vector<16x128xf32>
    %518 = tpu.iota {dimensions = array<i32: 1>} : vector<16x128xi32>
    %c1_i32_213 = arith.constant 1 : i32
    %519 = vector.broadcast %c1_i32_213 : i32 to vector<16x128xi32>
    %520 = arith.cmpi sge, %518, %519 : vector<16x128xi32>
    %cst_214 = arith.constant 0.000000e+00 : f32
    %521 = vector.broadcast %cst_214 : f32 to vector<16x128xf32>
    %522 = arith.select %520, %517, %521 : vector<16x128xi1>, vector<16x128xf32>
    %c127_i32_215 = arith.constant 127 : i32
    %523 = tpu.dynamic_rotate %516 by %c127_i32_215 dim 1 : vector<16x128xf32>, i32 -> vector<16x128xf32>
    %524 = tpu.iota {dimensions = array<i32: 1>} : vector<16x128xi32>
    %c127_i32_216 = arith.constant 127 : i32
    %525 = vector.broadcast %c127_i32_216 : i32 to vector<16x128xi32>
    %526 = arith.cmpi slt, %524, %525 : vector<16x128xi32>
    %cst_217 = arith.constant 0.000000e+00 : f32
    %527 = vector.broadcast %cst_217 : f32 to vector<16x128xf32>
    %528 = arith.select %526, %523, %527 : vector<16x128xi1>, vector<16x128xf32>
    %529 = tpu.concatenate %522, %516, %528 in 0 : vector<16x128xf32>, vector<16x128xf32>, vector<16x128xf32> -> vector<48x128xf32>
    %cst_218 = arith.constant dense<0.000000e+00> : vector<8x128xf32>
    %530 = tpu.matmul %5, %529, %cst_218 {dimension_numbers = #tpu.dot_dimension_numbers<[1], [0], [0], [1], [0, 0, 1, 1], [], []>} : vector<8x48xf32>, vector<48x128xf32>, vector<8x128xf32> -> vector<8x128xf32>
    %531 = vector.broadcast %11 : vector<8x1xf32> to vector<8x128xf32>
    %532 = arith.addf %530, %531 : vector<8x128xf32>
    %cst_219 = arith.constant 0.000000e+00 : f32
    %533 = vector.broadcast %cst_219 : f32 to vector<8x128xf32>
    %534 = arith.maximumf %532, %533 : vector<8x128xf32>
    %c1_i32_220 = arith.constant 1 : i32
    %535 = tpu.dynamic_rotate %424 by %c1_i32_220 dim 1 : vector<4x128xf32>, i32 -> vector<4x128xf32>
    %536 = tpu.iota {dimensions = array<i32: 1>} : vector<4x128xi32>
    %c1_i32_221 = arith.constant 1 : i32
    %537 = vector.broadcast %c1_i32_221 : i32 to vector<4x128xi32>
    %538 = arith.cmpi sge, %536, %537 : vector<4x128xi32>
    %cst_222 = arith.constant 0.000000e+00 : f32
    %539 = vector.broadcast %cst_222 : f32 to vector<4x128xf32>
    %540 = arith.select %538, %535, %539 : vector<4x128xi1>, vector<4x128xf32>
    %c127_i32_223 = arith.constant 127 : i32
    %541 = tpu.dynamic_rotate %424 by %c127_i32_223 dim 1 : vector<4x128xf32>, i32 -> vector<4x128xf32>
    %542 = tpu.iota {dimensions = array<i32: 1>} : vector<4x128xi32>
    %c127_i32_224 = arith.constant 127 : i32
    %543 = vector.broadcast %c127_i32_224 : i32 to vector<4x128xi32>
    %544 = arith.cmpi slt, %542, %543 : vector<4x128xi32>
    %cst_225 = arith.constant 0.000000e+00 : f32
    %545 = vector.broadcast %cst_225 : f32 to vector<4x128xf32>
    %546 = arith.select %544, %541, %545 : vector<4x128xi1>, vector<4x128xf32>
    %547 = tpu.concatenate %540, %424, %546 in 0 : vector<4x128xf32>, vector<4x128xf32>, vector<4x128xf32> -> vector<12x128xf32>
    %cst_226 = arith.constant dense<0.000000e+00> : vector<8x128xf32>
    %548 = tpu.matmul %12, %547, %cst_226 {dimension_numbers = #tpu.dot_dimension_numbers<[1], [0], [0], [1], [0, 0, 1, 1], [], []>} : vector<8x12xf32>, vector<12x128xf32>, vector<8x128xf32> -> vector<8x128xf32>
    %549 = vector.broadcast %18 : vector<8x1xf32> to vector<8x128xf32>
    %550 = arith.addf %548, %549 : vector<8x128xf32>
    %cst_227 = arith.constant 0.000000e+00 : f32
    %551 = vector.broadcast %cst_227 : f32 to vector<8x128xf32>
    %552 = arith.maximumf %550, %551 : vector<8x128xf32>
    %c2_i32_228 = arith.constant 2 : i32
    %553 = tpu.dynamic_rotate %552 by %c2_i32_228 dim 1 : vector<8x128xf32>, i32 -> vector<8x128xf32>
    %554 = tpu.iota {dimensions = array<i32: 1>} : vector<8x128xi32>
    %c2_i32_229 = arith.constant 2 : i32
    %555 = vector.broadcast %c2_i32_229 : i32 to vector<8x128xi32>
    %556 = arith.cmpi sge, %554, %555 : vector<8x128xi32>
    %cst_230 = arith.constant 0.000000e+00 : f32
    %557 = vector.broadcast %cst_230 : f32 to vector<8x128xf32>
    %558 = arith.select %556, %553, %557 : vector<8x128xi1>, vector<8x128xf32>
    %c126_i32_231 = arith.constant 126 : i32
    %559 = tpu.dynamic_rotate %552 by %c126_i32_231 dim 1 : vector<8x128xf32>, i32 -> vector<8x128xf32>
    %560 = tpu.iota {dimensions = array<i32: 1>} : vector<8x128xi32>
    %c126_i32_232 = arith.constant 126 : i32
    %561 = vector.broadcast %c126_i32_232 : i32 to vector<8x128xi32>
    %562 = arith.cmpi slt, %560, %561 : vector<8x128xi32>
    %cst_233 = arith.constant 0.000000e+00 : f32
    %563 = vector.broadcast %cst_233 : f32 to vector<8x128xf32>
    %564 = arith.select %562, %559, %563 : vector<8x128xi1>, vector<8x128xf32>
    %565 = tpu.concatenate %558, %552, %564 in 0 : vector<8x128xf32>, vector<8x128xf32>, vector<8x128xf32> -> vector<24x128xf32>
    %cst_234 = arith.constant dense<0.000000e+00> : vector<8x128xf32>
    %566 = tpu.matmul %13, %565, %cst_234 {dimension_numbers = #tpu.dot_dimension_numbers<[1], [0], [0], [1], [0, 0, 1, 1], [], []>} : vector<8x24xf32>, vector<24x128xf32>, vector<8x128xf32> -> vector<8x128xf32>
    %567 = vector.broadcast %19 : vector<8x1xf32> to vector<8x128xf32>
    %568 = arith.addf %566, %567 : vector<8x128xf32>
    %cst_235 = arith.constant 0.000000e+00 : f32
    %569 = vector.broadcast %cst_235 : f32 to vector<8x128xf32>
    %570 = arith.maximumf %568, %569 : vector<8x128xf32>
    %c4_i32_236 = arith.constant 4 : i32
    %571 = tpu.dynamic_rotate %570 by %c4_i32_236 dim 1 : vector<8x128xf32>, i32 -> vector<8x128xf32>
    %572 = tpu.iota {dimensions = array<i32: 1>} : vector<8x128xi32>
    %c4_i32_237 = arith.constant 4 : i32
    %573 = vector.broadcast %c4_i32_237 : i32 to vector<8x128xi32>
    %574 = arith.cmpi sge, %572, %573 : vector<8x128xi32>
    %cst_238 = arith.constant 0.000000e+00 : f32
    %575 = vector.broadcast %cst_238 : f32 to vector<8x128xf32>
    %576 = arith.select %574, %571, %575 : vector<8x128xi1>, vector<8x128xf32>
    %c124_i32_239 = arith.constant 124 : i32
    %577 = tpu.dynamic_rotate %570 by %c124_i32_239 dim 1 : vector<8x128xf32>, i32 -> vector<8x128xf32>
    %578 = tpu.iota {dimensions = array<i32: 1>} : vector<8x128xi32>
    %c124_i32_240 = arith.constant 124 : i32
    %579 = vector.broadcast %c124_i32_240 : i32 to vector<8x128xi32>
    %580 = arith.cmpi slt, %578, %579 : vector<8x128xi32>
    %cst_241 = arith.constant 0.000000e+00 : f32
    %581 = vector.broadcast %cst_241 : f32 to vector<8x128xf32>
    %582 = arith.select %580, %577, %581 : vector<8x128xi1>, vector<8x128xf32>
    %583 = tpu.concatenate %576, %570, %582 in 0 : vector<8x128xf32>, vector<8x128xf32>, vector<8x128xf32> -> vector<24x128xf32>
    %cst_242 = arith.constant dense<0.000000e+00> : vector<8x128xf32>
    %584 = tpu.matmul %14, %583, %cst_242 {dimension_numbers = #tpu.dot_dimension_numbers<[1], [0], [0], [1], [0, 0, 1, 1], [], []>} : vector<8x24xf32>, vector<24x128xf32>, vector<8x128xf32> -> vector<8x128xf32>
    %585 = vector.broadcast %20 : vector<8x1xf32> to vector<8x128xf32>
    %586 = arith.addf %584, %585 : vector<8x128xf32>
    %cst_243 = arith.constant 0.000000e+00 : f32
    %587 = vector.broadcast %cst_243 : f32 to vector<8x128xf32>
    %588 = arith.maximumf %586, %587 : vector<8x128xf32>
    %c4_i32_244 = arith.constant 4 : i32
    %589 = tpu.dynamic_rotate %588 by %c4_i32_244 dim 1 : vector<8x128xf32>, i32 -> vector<8x128xf32>
    %590 = tpu.iota {dimensions = array<i32: 1>} : vector<8x128xi32>
    %c4_i32_245 = arith.constant 4 : i32
    %591 = vector.broadcast %c4_i32_245 : i32 to vector<8x128xi32>
    %592 = arith.cmpi sge, %590, %591 : vector<8x128xi32>
    %cst_246 = arith.constant 0.000000e+00 : f32
    %593 = vector.broadcast %cst_246 : f32 to vector<8x128xf32>
    %594 = arith.select %592, %589, %593 : vector<8x128xi1>, vector<8x128xf32>
    %c124_i32_247 = arith.constant 124 : i32
    %595 = tpu.dynamic_rotate %588 by %c124_i32_247 dim 1 : vector<8x128xf32>, i32 -> vector<8x128xf32>
    %596 = tpu.iota {dimensions = array<i32: 1>} : vector<8x128xi32>
    %c124_i32_248 = arith.constant 124 : i32
    %597 = vector.broadcast %c124_i32_248 : i32 to vector<8x128xi32>
    %598 = arith.cmpi slt, %596, %597 : vector<8x128xi32>
    %cst_249 = arith.constant 0.000000e+00 : f32
    %599 = vector.broadcast %cst_249 : f32 to vector<8x128xf32>
    %600 = arith.select %598, %595, %599 : vector<8x128xi1>, vector<8x128xf32>
    %601 = tpu.concatenate %594, %588, %600 in 0 : vector<8x128xf32>, vector<8x128xf32>, vector<8x128xf32> -> vector<24x128xf32>
    %cst_250 = arith.constant dense<0.000000e+00> : vector<8x128xf32>
    %602 = tpu.matmul %15, %601, %cst_250 {dimension_numbers = #tpu.dot_dimension_numbers<[1], [0], [0], [1], [0, 0, 1, 1], [], []>} : vector<8x24xf32>, vector<24x128xf32>, vector<8x128xf32> -> vector<8x128xf32>
    %603 = vector.broadcast %21 : vector<8x1xf32> to vector<8x128xf32>
    %604 = arith.addf %602, %603 : vector<8x128xf32>
    %cst_251 = arith.constant 0.000000e+00 : f32
    %605 = vector.broadcast %cst_251 : f32 to vector<8x128xf32>
    %606 = arith.maximumf %604, %605 : vector<8x128xf32>
    %607 = tpu.concatenate %606, %570 in 0 : vector<8x128xf32>, vector<8x128xf32> -> vector<16x128xf32>
    %c2_i32_252 = arith.constant 2 : i32
    %608 = tpu.dynamic_rotate %607 by %c2_i32_252 dim 1 : vector<16x128xf32>, i32 -> vector<16x128xf32>
    %609 = tpu.iota {dimensions = array<i32: 1>} : vector<16x128xi32>
    %c2_i32_253 = arith.constant 2 : i32
    %610 = vector.broadcast %c2_i32_253 : i32 to vector<16x128xi32>
    %611 = arith.cmpi sge, %609, %610 : vector<16x128xi32>
    %cst_254 = arith.constant 0.000000e+00 : f32
    %612 = vector.broadcast %cst_254 : f32 to vector<16x128xf32>
    %613 = arith.select %611, %608, %612 : vector<16x128xi1>, vector<16x128xf32>
    %c126_i32_255 = arith.constant 126 : i32
    %614 = tpu.dynamic_rotate %607 by %c126_i32_255 dim 1 : vector<16x128xf32>, i32 -> vector<16x128xf32>
    %615 = tpu.iota {dimensions = array<i32: 1>} : vector<16x128xi32>
    %c126_i32_256 = arith.constant 126 : i32
    %616 = vector.broadcast %c126_i32_256 : i32 to vector<16x128xi32>
    %617 = arith.cmpi slt, %615, %616 : vector<16x128xi32>
    %cst_257 = arith.constant 0.000000e+00 : f32
    %618 = vector.broadcast %cst_257 : f32 to vector<16x128xf32>
    %619 = arith.select %617, %614, %618 : vector<16x128xi1>, vector<16x128xf32>
    %620 = tpu.concatenate %613, %607, %619 in 0 : vector<16x128xf32>, vector<16x128xf32>, vector<16x128xf32> -> vector<48x128xf32>
    %cst_258 = arith.constant dense<0.000000e+00> : vector<8x128xf32>
    %621 = tpu.matmul %16, %620, %cst_258 {dimension_numbers = #tpu.dot_dimension_numbers<[1], [0], [0], [1], [0, 0, 1, 1], [], []>} : vector<8x48xf32>, vector<48x128xf32>, vector<8x128xf32> -> vector<8x128xf32>
    %622 = vector.broadcast %22 : vector<8x1xf32> to vector<8x128xf32>
    %623 = arith.addf %621, %622 : vector<8x128xf32>
    %cst_259 = arith.constant 0.000000e+00 : f32
    %624 = vector.broadcast %cst_259 : f32 to vector<8x128xf32>
    %625 = arith.maximumf %623, %624 : vector<8x128xf32>
    %626 = tpu.concatenate %625, %552 in 0 : vector<8x128xf32>, vector<8x128xf32> -> vector<16x128xf32>
    %c1_i32_260 = arith.constant 1 : i32
    %627 = tpu.dynamic_rotate %626 by %c1_i32_260 dim 1 : vector<16x128xf32>, i32 -> vector<16x128xf32>
    %628 = tpu.iota {dimensions = array<i32: 1>} : vector<16x128xi32>
    %c1_i32_261 = arith.constant 1 : i32
    %629 = vector.broadcast %c1_i32_261 : i32 to vector<16x128xi32>
    %630 = arith.cmpi sge, %628, %629 : vector<16x128xi32>
    %cst_262 = arith.constant 0.000000e+00 : f32
    %631 = vector.broadcast %cst_262 : f32 to vector<16x128xf32>
    %632 = arith.select %630, %627, %631 : vector<16x128xi1>, vector<16x128xf32>
    %c127_i32_263 = arith.constant 127 : i32
    %633 = tpu.dynamic_rotate %626 by %c127_i32_263 dim 1 : vector<16x128xf32>, i32 -> vector<16x128xf32>
    %634 = tpu.iota {dimensions = array<i32: 1>} : vector<16x128xi32>
    %c127_i32_264 = arith.constant 127 : i32
    %635 = vector.broadcast %c127_i32_264 : i32 to vector<16x128xi32>
    %636 = arith.cmpi slt, %634, %635 : vector<16x128xi32>
    %cst_265 = arith.constant 0.000000e+00 : f32
    %637 = vector.broadcast %cst_265 : f32 to vector<16x128xf32>
    %638 = arith.select %636, %633, %637 : vector<16x128xi1>, vector<16x128xf32>
    %639 = tpu.concatenate %632, %626, %638 in 0 : vector<16x128xf32>, vector<16x128xf32>, vector<16x128xf32> -> vector<48x128xf32>
    %cst_266 = arith.constant dense<0.000000e+00> : vector<8x128xf32>
    %640 = tpu.matmul %17, %639, %cst_266 {dimension_numbers = #tpu.dot_dimension_numbers<[1], [0], [0], [1], [0, 0, 1, 1], [], []>} : vector<8x48xf32>, vector<48x128xf32>, vector<8x128xf32> -> vector<8x128xf32>
    %641 = vector.broadcast %23 : vector<8x1xf32> to vector<8x128xf32>
    %642 = arith.addf %640, %641 : vector<8x128xf32>
    %cst_267 = arith.constant 0.000000e+00 : f32
    %643 = vector.broadcast %cst_267 : f32 to vector<8x128xf32>
    %644 = arith.maximumf %642, %643 : vector<8x128xf32>
    %645 = tpu.concatenate %534, %644 in 0 : vector<8x128xf32>, vector<8x128xf32> -> vector<16x128xf32>
    %cst_268 = arith.constant dense<0.000000e+00> : vector<4x128xf32>
    %646 = tpu.matmul %24, %645, %cst_268 {dimension_numbers = #tpu.dot_dimension_numbers<[1], [0], [0], [1], [0, 0, 1, 1], [], []>} : vector<4x16xf32>, vector<16x128xf32>, vector<4x128xf32> -> vector<4x128xf32>
    %647 = vector.broadcast %25 : vector<4x1xf32> to vector<4x128xf32>
    %648 = arith.addf %646, %647 : vector<4x128xf32>
    %649 = vector.extract_strided_slice %648 {offsets = [0, 0], sizes = [2, 128], strides = [1, 1]} : vector<4x128xf32> to vector<2x128xf32>
    %650 = vector.extract_strided_slice %648 {offsets = [2, 0], sizes = [2, 128], strides = [1, 1]} : vector<4x128xf32> to vector<2x128xf32>
    %651 = vector.extract_strided_slice %27 {offsets = [0, 0, 2, 0], sizes = [1, 2, 1, 128], strides = [1, 1, 1, 1]} : vector<2x2x3x128xf32> to vector<1x2x1x128xf32>
    %652 = vector.shape_cast %651 : vector<1x2x1x128xf32> to vector<2x128xf32>
    %653 = vector.extract_strided_slice %27 {offsets = [1, 0, 2, 0], sizes = [1, 2, 1, 128], strides = [1, 1, 1, 1]} : vector<2x2x3x128xf32> to vector<1x2x1x128xf32>
    %654 = vector.shape_cast %653 : vector<1x2x1x128xf32> to vector<2x128xf32>
    %655 = vector.extract_strided_slice %29 {offsets = [0, 0, 2, 0], sizes = [1, 2, 1, 128], strides = [1, 1, 1, 1]} : vector<2x2x3x128xf32> to vector<1x2x1x128xf32>
    %656 = vector.shape_cast %655 : vector<1x2x1x128xf32> to vector<2x128xf32>
    %657 = vector.extract_strided_slice %29 {offsets = [1, 0, 2, 0], sizes = [1, 2, 1, 128], strides = [1, 1, 1, 1]} : vector<2x2x3x128xf32> to vector<1x2x1x128xf32>
    %658 = vector.shape_cast %657 : vector<1x2x1x128xf32> to vector<2x128xf32>
    %659 = vector.shape_cast %656 : vector<2x128xf32> to vector<2x1x128xf32>
    %660 = vector.shape_cast %656 : vector<2x128xf32> to vector<1x2x128xf32>
    %661 = vector.broadcast %659 : vector<2x1x128xf32> to vector<2x2x128xf32>
    %662 = vector.broadcast %660 : vector<1x2x128xf32> to vector<2x2x128xf32>
    %663 = arith.mulf %661, %662 : vector<2x2x128xf32>
    %664 = vector.shape_cast %658 : vector<2x128xf32> to vector<2x1x128xf32>
    %665 = vector.shape_cast %658 : vector<2x128xf32> to vector<1x2x128xf32>
    %666 = vector.broadcast %664 : vector<2x1x128xf32> to vector<2x2x128xf32>
    %667 = vector.broadcast %665 : vector<1x2x128xf32> to vector<2x2x128xf32>
    %668 = arith.mulf %666, %667 : vector<2x2x128xf32>
    %669 = arith.addf %663, %668 : vector<2x2x128xf32>
    %670 = vector.shape_cast %658 : vector<2x128xf32> to vector<2x1x128xf32>
    %671 = vector.shape_cast %656 : vector<2x128xf32> to vector<1x2x128xf32>
    %672 = vector.broadcast %670 : vector<2x1x128xf32> to vector<2x2x128xf32>
    %673 = vector.broadcast %671 : vector<1x2x128xf32> to vector<2x2x128xf32>
    %674 = arith.mulf %672, %673 : vector<2x2x128xf32>
    %675 = vector.shape_cast %656 : vector<2x128xf32> to vector<2x1x128xf32>
    %676 = vector.shape_cast %658 : vector<2x128xf32> to vector<1x2x128xf32>
    %677 = vector.broadcast %675 : vector<2x1x128xf32> to vector<2x2x128xf32>
    %678 = vector.broadcast %676 : vector<1x2x128xf32> to vector<2x2x128xf32>
    %679 = arith.mulf %677, %678 : vector<2x2x128xf32>
    %680 = arith.subf %674, %679 : vector<2x2x128xf32>
    %681 = vector.shape_cast %31 : vector<2x2x128xf32> to vector<2x2x1x128xf32>
    %682 = vector.shape_cast %669 : vector<2x2x128xf32> to vector<1x2x2x128xf32>
    %683 = vector.broadcast %681 : vector<2x2x1x128xf32> to vector<2x2x2x128xf32>
    %684 = vector.broadcast %682 : vector<1x2x2x128xf32> to vector<2x2x2x128xf32>
    %685 = arith.mulf %683, %684 : vector<2x2x2x128xf32>
    %686 = vector.shape_cast %33 : vector<2x2x128xf32> to vector<2x2x1x128xf32>
    %687 = vector.shape_cast %680 : vector<2x2x128xf32> to vector<1x2x2x128xf32>
    %688 = vector.broadcast %686 : vector<2x2x1x128xf32> to vector<2x2x2x128xf32>
    %689 = vector.broadcast %687 : vector<1x2x2x128xf32> to vector<2x2x2x128xf32>
    %690 = arith.mulf %688, %689 : vector<2x2x2x128xf32>
    %691 = arith.subf %685, %690 : vector<2x2x2x128xf32>
    %cst_269 = arith.constant dense<0.000000e+00> : vector<2x2x128xf32>
    %692 = vector.multi_reduction <add>, %691, %cst_269 [1] : vector<2x2x2x128xf32> to vector<2x2x128xf32>
    %693 = vector.shape_cast %31 : vector<2x2x128xf32> to vector<2x2x1x128xf32>
    %694 = vector.shape_cast %680 : vector<2x2x128xf32> to vector<1x2x2x128xf32>
    %695 = vector.broadcast %693 : vector<2x2x1x128xf32> to vector<2x2x2x128xf32>
    %696 = vector.broadcast %694 : vector<1x2x2x128xf32> to vector<2x2x2x128xf32>
    %697 = arith.mulf %695, %696 : vector<2x2x2x128xf32>
    %698 = vector.shape_cast %33 : vector<2x2x128xf32> to vector<2x2x1x128xf32>
    %699 = vector.shape_cast %669 : vector<2x2x128xf32> to vector<1x2x2x128xf32>
    %700 = vector.broadcast %698 : vector<2x2x1x128xf32> to vector<2x2x2x128xf32>
    %701 = vector.broadcast %699 : vector<1x2x2x128xf32> to vector<2x2x2x128xf32>
    %702 = arith.mulf %700, %701 : vector<2x2x2x128xf32>
    %703 = arith.addf %697, %702 : vector<2x2x2x128xf32>
    %cst_270 = arith.constant dense<0.000000e+00> : vector<2x2x128xf32>
    %704 = vector.multi_reduction <add>, %703, %cst_270 [1] : vector<2x2x2x128xf32> to vector<2x2x128xf32>
    %705 = vector.shape_cast %652 : vector<2x128xf32> to vector<2x1x128xf32>
    %706 = vector.broadcast %705 : vector<2x1x128xf32> to vector<2x2x128xf32>
    %707 = arith.mulf %692, %706 : vector<2x2x128xf32>
    %708 = vector.shape_cast %654 : vector<2x128xf32> to vector<2x1x128xf32>
    %709 = vector.broadcast %708 : vector<2x1x128xf32> to vector<2x2x128xf32>
    %710 = arith.mulf %704, %709 : vector<2x2x128xf32>
    %711 = arith.addf %707, %710 : vector<2x2x128xf32>
    %cst_271 = arith.constant dense<0.000000e+00> : vector<2x128xf32>
    %712 = vector.multi_reduction <add>, %711, %cst_271 [0] : vector<2x2x128xf32> to vector<2x128xf32>
    %713 = vector.shape_cast %654 : vector<2x128xf32> to vector<2x1x128xf32>
    %714 = vector.broadcast %713 : vector<2x1x128xf32> to vector<2x2x128xf32>
    %715 = arith.mulf %692, %714 : vector<2x2x128xf32>
    %716 = vector.shape_cast %652 : vector<2x128xf32> to vector<2x1x128xf32>
    %717 = vector.broadcast %716 : vector<2x1x128xf32> to vector<2x2x128xf32>
    %718 = arith.mulf %704, %717 : vector<2x2x128xf32>
    %719 = arith.subf %715, %718 : vector<2x2x128xf32>
    %cst_272 = arith.constant dense<0.000000e+00> : vector<2x128xf32>
    %720 = vector.multi_reduction <add>, %719, %cst_272 [0] : vector<2x2x128xf32> to vector<2x128xf32>
    %721 = tpu.concatenate %652, %654 in 0 : vector<2x128xf32>, vector<2x128xf32> -> vector<4x128xf32>
    %722 = tpu.concatenate %712, %720 in 0 : vector<2x128xf32>, vector<2x128xf32> -> vector<4x128xf32>
    %c1_i32_273 = arith.constant 1 : i32
    %723 = tpu.dynamic_rotate %721 by %c1_i32_273 dim 1 : vector<4x128xf32>, i32 -> vector<4x128xf32>
    %724 = tpu.iota {dimensions = array<i32: 1>} : vector<4x128xi32>
    %c1_i32_274 = arith.constant 1 : i32
    %725 = vector.broadcast %c1_i32_274 : i32 to vector<4x128xi32>
    %726 = arith.cmpi sge, %724, %725 : vector<4x128xi32>
    %cst_275 = arith.constant 0.000000e+00 : f32
    %727 = vector.broadcast %cst_275 : f32 to vector<4x128xf32>
    %728 = arith.select %726, %723, %727 : vector<4x128xi1>, vector<4x128xf32>
    %c127_i32_276 = arith.constant 127 : i32
    %729 = tpu.dynamic_rotate %721 by %c127_i32_276 dim 1 : vector<4x128xf32>, i32 -> vector<4x128xf32>
    %730 = tpu.iota {dimensions = array<i32: 1>} : vector<4x128xi32>
    %c127_i32_277 = arith.constant 127 : i32
    %731 = vector.broadcast %c127_i32_277 : i32 to vector<4x128xi32>
    %732 = arith.cmpi slt, %730, %731 : vector<4x128xi32>
    %cst_278 = arith.constant 0.000000e+00 : f32
    %733 = vector.broadcast %cst_278 : f32 to vector<4x128xf32>
    %734 = arith.select %732, %729, %733 : vector<4x128xi1>, vector<4x128xf32>
    %735 = tpu.concatenate %728, %721, %734 in 0 : vector<4x128xf32>, vector<4x128xf32>, vector<4x128xf32> -> vector<12x128xf32>
    %cst_279 = arith.constant dense<0.000000e+00> : vector<8x128xf32>
    %736 = tpu.matmul %0, %735, %cst_279 {dimension_numbers = #tpu.dot_dimension_numbers<[1], [0], [0], [1], [0, 0, 1, 1], [], []>} : vector<8x12xf32>, vector<12x128xf32>, vector<8x128xf32> -> vector<8x128xf32>
    %737 = vector.broadcast %6 : vector<8x1xf32> to vector<8x128xf32>
    %738 = arith.addf %736, %737 : vector<8x128xf32>
    %cst_280 = arith.constant 0.000000e+00 : f32
    %739 = vector.broadcast %cst_280 : f32 to vector<8x128xf32>
    %740 = arith.maximumf %738, %739 : vector<8x128xf32>
    %c2_i32_281 = arith.constant 2 : i32
    %741 = tpu.dynamic_rotate %740 by %c2_i32_281 dim 1 : vector<8x128xf32>, i32 -> vector<8x128xf32>
    %742 = tpu.iota {dimensions = array<i32: 1>} : vector<8x128xi32>
    %c2_i32_282 = arith.constant 2 : i32
    %743 = vector.broadcast %c2_i32_282 : i32 to vector<8x128xi32>
    %744 = arith.cmpi sge, %742, %743 : vector<8x128xi32>
    %cst_283 = arith.constant 0.000000e+00 : f32
    %745 = vector.broadcast %cst_283 : f32 to vector<8x128xf32>
    %746 = arith.select %744, %741, %745 : vector<8x128xi1>, vector<8x128xf32>
    %c126_i32_284 = arith.constant 126 : i32
    %747 = tpu.dynamic_rotate %740 by %c126_i32_284 dim 1 : vector<8x128xf32>, i32 -> vector<8x128xf32>
    %748 = tpu.iota {dimensions = array<i32: 1>} : vector<8x128xi32>
    %c126_i32_285 = arith.constant 126 : i32
    %749 = vector.broadcast %c126_i32_285 : i32 to vector<8x128xi32>
    %750 = arith.cmpi slt, %748, %749 : vector<8x128xi32>
    %cst_286 = arith.constant 0.000000e+00 : f32
    %751 = vector.broadcast %cst_286 : f32 to vector<8x128xf32>
    %752 = arith.select %750, %747, %751 : vector<8x128xi1>, vector<8x128xf32>
    %753 = tpu.concatenate %746, %740, %752 in 0 : vector<8x128xf32>, vector<8x128xf32>, vector<8x128xf32> -> vector<24x128xf32>
    %cst_287 = arith.constant dense<0.000000e+00> : vector<8x128xf32>
    %754 = tpu.matmul %1, %753, %cst_287 {dimension_numbers = #tpu.dot_dimension_numbers<[1], [0], [0], [1], [0, 0, 1, 1], [], []>} : vector<8x24xf32>, vector<24x128xf32>, vector<8x128xf32> -> vector<8x128xf32>
    %755 = vector.broadcast %7 : vector<8x1xf32> to vector<8x128xf32>
    %756 = arith.addf %754, %755 : vector<8x128xf32>
    %cst_288 = arith.constant 0.000000e+00 : f32
    %757 = vector.broadcast %cst_288 : f32 to vector<8x128xf32>
    %758 = arith.maximumf %756, %757 : vector<8x128xf32>
    %c4_i32_289 = arith.constant 4 : i32
    %759 = tpu.dynamic_rotate %758 by %c4_i32_289 dim 1 : vector<8x128xf32>, i32 -> vector<8x128xf32>
    %760 = tpu.iota {dimensions = array<i32: 1>} : vector<8x128xi32>
    %c4_i32_290 = arith.constant 4 : i32
    %761 = vector.broadcast %c4_i32_290 : i32 to vector<8x128xi32>
    %762 = arith.cmpi sge, %760, %761 : vector<8x128xi32>
    %cst_291 = arith.constant 0.000000e+00 : f32
    %763 = vector.broadcast %cst_291 : f32 to vector<8x128xf32>
    %764 = arith.select %762, %759, %763 : vector<8x128xi1>, vector<8x128xf32>
    %c124_i32_292 = arith.constant 124 : i32
    %765 = tpu.dynamic_rotate %758 by %c124_i32_292 dim 1 : vector<8x128xf32>, i32 -> vector<8x128xf32>
    %766 = tpu.iota {dimensions = array<i32: 1>} : vector<8x128xi32>
    %c124_i32_293 = arith.constant 124 : i32
    %767 = vector.broadcast %c124_i32_293 : i32 to vector<8x128xi32>
    %768 = arith.cmpi slt, %766, %767 : vector<8x128xi32>
    %cst_294 = arith.constant 0.000000e+00 : f32
    %769 = vector.broadcast %cst_294 : f32 to vector<8x128xf32>
    %770 = arith.select %768, %765, %769 : vector<8x128xi1>, vector<8x128xf32>
    %771 = tpu.concatenate %764, %758, %770 in 0 : vector<8x128xf32>, vector<8x128xf32>, vector<8x128xf32> -> vector<24x128xf32>
    %cst_295 = arith.constant dense<0.000000e+00> : vector<8x128xf32>
    %772 = tpu.matmul %2, %771, %cst_295 {dimension_numbers = #tpu.dot_dimension_numbers<[1], [0], [0], [1], [0, 0, 1, 1], [], []>} : vector<8x24xf32>, vector<24x128xf32>, vector<8x128xf32> -> vector<8x128xf32>
    %773 = vector.broadcast %8 : vector<8x1xf32> to vector<8x128xf32>
    %774 = arith.addf %772, %773 : vector<8x128xf32>
    %cst_296 = arith.constant 0.000000e+00 : f32
    %775 = vector.broadcast %cst_296 : f32 to vector<8x128xf32>
    %776 = arith.maximumf %774, %775 : vector<8x128xf32>
    %c4_i32_297 = arith.constant 4 : i32
    %777 = tpu.dynamic_rotate %776 by %c4_i32_297 dim 1 : vector<8x128xf32>, i32 -> vector<8x128xf32>
    %778 = tpu.iota {dimensions = array<i32: 1>} : vector<8x128xi32>
    %c4_i32_298 = arith.constant 4 : i32
    %779 = vector.broadcast %c4_i32_298 : i32 to vector<8x128xi32>
    %780 = arith.cmpi sge, %778, %779 : vector<8x128xi32>
    %cst_299 = arith.constant 0.000000e+00 : f32
    %781 = vector.broadcast %cst_299 : f32 to vector<8x128xf32>
    %782 = arith.select %780, %777, %781 : vector<8x128xi1>, vector<8x128xf32>
    %c124_i32_300 = arith.constant 124 : i32
    %783 = tpu.dynamic_rotate %776 by %c124_i32_300 dim 1 : vector<8x128xf32>, i32 -> vector<8x128xf32>
    %784 = tpu.iota {dimensions = array<i32: 1>} : vector<8x128xi32>
    %c124_i32_301 = arith.constant 124 : i32
    %785 = vector.broadcast %c124_i32_301 : i32 to vector<8x128xi32>
    %786 = arith.cmpi slt, %784, %785 : vector<8x128xi32>
    %cst_302 = arith.constant 0.000000e+00 : f32
    %787 = vector.broadcast %cst_302 : f32 to vector<8x128xf32>
    %788 = arith.select %786, %783, %787 : vector<8x128xi1>, vector<8x128xf32>
    %789 = tpu.concatenate %782, %776, %788 in 0 : vector<8x128xf32>, vector<8x128xf32>, vector<8x128xf32> -> vector<24x128xf32>
    %cst_303 = arith.constant dense<0.000000e+00> : vector<8x128xf32>
    %790 = tpu.matmul %3, %789, %cst_303 {dimension_numbers = #tpu.dot_dimension_numbers<[1], [0], [0], [1], [0, 0, 1, 1], [], []>} : vector<8x24xf32>, vector<24x128xf32>, vector<8x128xf32> -> vector<8x128xf32>
    %791 = vector.broadcast %9 : vector<8x1xf32> to vector<8x128xf32>
    %792 = arith.addf %790, %791 : vector<8x128xf32>
    %cst_304 = arith.constant 0.000000e+00 : f32
    %793 = vector.broadcast %cst_304 : f32 to vector<8x128xf32>
    %794 = arith.maximumf %792, %793 : vector<8x128xf32>
    %795 = tpu.concatenate %794, %758 in 0 : vector<8x128xf32>, vector<8x128xf32> -> vector<16x128xf32>
    %c2_i32_305 = arith.constant 2 : i32
    %796 = tpu.dynamic_rotate %795 by %c2_i32_305 dim 1 : vector<16x128xf32>, i32 -> vector<16x128xf32>
    %797 = tpu.iota {dimensions = array<i32: 1>} : vector<16x128xi32>
    %c2_i32_306 = arith.constant 2 : i32
    %798 = vector.broadcast %c2_i32_306 : i32 to vector<16x128xi32>
    %799 = arith.cmpi sge, %797, %798 : vector<16x128xi32>
    %cst_307 = arith.constant 0.000000e+00 : f32
    %800 = vector.broadcast %cst_307 : f32 to vector<16x128xf32>
    %801 = arith.select %799, %796, %800 : vector<16x128xi1>, vector<16x128xf32>
    %c126_i32_308 = arith.constant 126 : i32
    %802 = tpu.dynamic_rotate %795 by %c126_i32_308 dim 1 : vector<16x128xf32>, i32 -> vector<16x128xf32>
    %803 = tpu.iota {dimensions = array<i32: 1>} : vector<16x128xi32>
    %c126_i32_309 = arith.constant 126 : i32
    %804 = vector.broadcast %c126_i32_309 : i32 to vector<16x128xi32>
    %805 = arith.cmpi slt, %803, %804 : vector<16x128xi32>
    %cst_310 = arith.constant 0.000000e+00 : f32
    %806 = vector.broadcast %cst_310 : f32 to vector<16x128xf32>
    %807 = arith.select %805, %802, %806 : vector<16x128xi1>, vector<16x128xf32>
    %808 = tpu.concatenate %801, %795, %807 in 0 : vector<16x128xf32>, vector<16x128xf32>, vector<16x128xf32> -> vector<48x128xf32>
    %cst_311 = arith.constant dense<0.000000e+00> : vector<8x128xf32>
    %809 = tpu.matmul %4, %808, %cst_311 {dimension_numbers = #tpu.dot_dimension_numbers<[1], [0], [0], [1], [0, 0, 1, 1], [], []>} : vector<8x48xf32>, vector<48x128xf32>, vector<8x128xf32> -> vector<8x128xf32>
    %810 = vector.broadcast %10 : vector<8x1xf32> to vector<8x128xf32>
    %811 = arith.addf %809, %810 : vector<8x128xf32>
    %cst_312 = arith.constant 0.000000e+00 : f32
    %812 = vector.broadcast %cst_312 : f32 to vector<8x128xf32>
    %813 = arith.maximumf %811, %812 : vector<8x128xf32>
    %814 = tpu.concatenate %813, %740 in 0 : vector<8x128xf32>, vector<8x128xf32> -> vector<16x128xf32>
    %c1_i32_313 = arith.constant 1 : i32
    %815 = tpu.dynamic_rotate %814 by %c1_i32_313 dim 1 : vector<16x128xf32>, i32 -> vector<16x128xf32>
    %816 = tpu.iota {dimensions = array<i32: 1>} : vector<16x128xi32>
    %c1_i32_314 = arith.constant 1 : i32
    %817 = vector.broadcast %c1_i32_314 : i32 to vector<16x128xi32>
    %818 = arith.cmpi sge, %816, %817 : vector<16x128xi32>
    %cst_315 = arith.constant 0.000000e+00 : f32
    %819 = vector.broadcast %cst_315 : f32 to vector<16x128xf32>
    %820 = arith.select %818, %815, %819 : vector<16x128xi1>, vector<16x128xf32>
    %c127_i32_316 = arith.constant 127 : i32
    %821 = tpu.dynamic_rotate %814 by %c127_i32_316 dim 1 : vector<16x128xf32>, i32 -> vector<16x128xf32>
    %822 = tpu.iota {dimensions = array<i32: 1>} : vector<16x128xi32>
    %c127_i32_317 = arith.constant 127 : i32
    %823 = vector.broadcast %c127_i32_317 : i32 to vector<16x128xi32>
    %824 = arith.cmpi slt, %822, %823 : vector<16x128xi32>
    %cst_318 = arith.constant 0.000000e+00 : f32
    %825 = vector.broadcast %cst_318 : f32 to vector<16x128xf32>
    %826 = arith.select %824, %821, %825 : vector<16x128xi1>, vector<16x128xf32>
    %827 = tpu.concatenate %820, %814, %826 in 0 : vector<16x128xf32>, vector<16x128xf32>, vector<16x128xf32> -> vector<48x128xf32>
    %cst_319 = arith.constant dense<0.000000e+00> : vector<8x128xf32>
    %828 = tpu.matmul %5, %827, %cst_319 {dimension_numbers = #tpu.dot_dimension_numbers<[1], [0], [0], [1], [0, 0, 1, 1], [], []>} : vector<8x48xf32>, vector<48x128xf32>, vector<8x128xf32> -> vector<8x128xf32>
    %829 = vector.broadcast %11 : vector<8x1xf32> to vector<8x128xf32>
    %830 = arith.addf %828, %829 : vector<8x128xf32>
    %cst_320 = arith.constant 0.000000e+00 : f32
    %831 = vector.broadcast %cst_320 : f32 to vector<8x128xf32>
    %832 = arith.maximumf %830, %831 : vector<8x128xf32>
    %c1_i32_321 = arith.constant 1 : i32
    %833 = tpu.dynamic_rotate %722 by %c1_i32_321 dim 1 : vector<4x128xf32>, i32 -> vector<4x128xf32>
    %834 = tpu.iota {dimensions = array<i32: 1>} : vector<4x128xi32>
    %c1_i32_322 = arith.constant 1 : i32
    %835 = vector.broadcast %c1_i32_322 : i32 to vector<4x128xi32>
    %836 = arith.cmpi sge, %834, %835 : vector<4x128xi32>
    %cst_323 = arith.constant 0.000000e+00 : f32
    %837 = vector.broadcast %cst_323 : f32 to vector<4x128xf32>
    %838 = arith.select %836, %833, %837 : vector<4x128xi1>, vector<4x128xf32>
    %c127_i32_324 = arith.constant 127 : i32
    %839 = tpu.dynamic_rotate %722 by %c127_i32_324 dim 1 : vector<4x128xf32>, i32 -> vector<4x128xf32>
    %840 = tpu.iota {dimensions = array<i32: 1>} : vector<4x128xi32>
    %c127_i32_325 = arith.constant 127 : i32
    %841 = vector.broadcast %c127_i32_325 : i32 to vector<4x128xi32>
    %842 = arith.cmpi slt, %840, %841 : vector<4x128xi32>
    %cst_326 = arith.constant 0.000000e+00 : f32
    %843 = vector.broadcast %cst_326 : f32 to vector<4x128xf32>
    %844 = arith.select %842, %839, %843 : vector<4x128xi1>, vector<4x128xf32>
    %845 = tpu.concatenate %838, %722, %844 in 0 : vector<4x128xf32>, vector<4x128xf32>, vector<4x128xf32> -> vector<12x128xf32>
    %cst_327 = arith.constant dense<0.000000e+00> : vector<8x128xf32>
    %846 = tpu.matmul %12, %845, %cst_327 {dimension_numbers = #tpu.dot_dimension_numbers<[1], [0], [0], [1], [0, 0, 1, 1], [], []>} : vector<8x12xf32>, vector<12x128xf32>, vector<8x128xf32> -> vector<8x128xf32>
    %847 = vector.broadcast %18 : vector<8x1xf32> to vector<8x128xf32>
    %848 = arith.addf %846, %847 : vector<8x128xf32>
    %cst_328 = arith.constant 0.000000e+00 : f32
    %849 = vector.broadcast %cst_328 : f32 to vector<8x128xf32>
    %850 = arith.maximumf %848, %849 : vector<8x128xf32>
    %c2_i32_329 = arith.constant 2 : i32
    %851 = tpu.dynamic_rotate %850 by %c2_i32_329 dim 1 : vector<8x128xf32>, i32 -> vector<8x128xf32>
    %852 = tpu.iota {dimensions = array<i32: 1>} : vector<8x128xi32>
    %c2_i32_330 = arith.constant 2 : i32
    %853 = vector.broadcast %c2_i32_330 : i32 to vector<8x128xi32>
    %854 = arith.cmpi sge, %852, %853 : vector<8x128xi32>
    %cst_331 = arith.constant 0.000000e+00 : f32
    %855 = vector.broadcast %cst_331 : f32 to vector<8x128xf32>
    %856 = arith.select %854, %851, %855 : vector<8x128xi1>, vector<8x128xf32>
    %c126_i32_332 = arith.constant 126 : i32
    %857 = tpu.dynamic_rotate %850 by %c126_i32_332 dim 1 : vector<8x128xf32>, i32 -> vector<8x128xf32>
    %858 = tpu.iota {dimensions = array<i32: 1>} : vector<8x128xi32>
    %c126_i32_333 = arith.constant 126 : i32
    %859 = vector.broadcast %c126_i32_333 : i32 to vector<8x128xi32>
    %860 = arith.cmpi slt, %858, %859 : vector<8x128xi32>
    %cst_334 = arith.constant 0.000000e+00 : f32
    %861 = vector.broadcast %cst_334 : f32 to vector<8x128xf32>
    %862 = arith.select %860, %857, %861 : vector<8x128xi1>, vector<8x128xf32>
    %863 = tpu.concatenate %856, %850, %862 in 0 : vector<8x128xf32>, vector<8x128xf32>, vector<8x128xf32> -> vector<24x128xf32>
    %cst_335 = arith.constant dense<0.000000e+00> : vector<8x128xf32>
    %864 = tpu.matmul %13, %863, %cst_335 {dimension_numbers = #tpu.dot_dimension_numbers<[1], [0], [0], [1], [0, 0, 1, 1], [], []>} : vector<8x24xf32>, vector<24x128xf32>, vector<8x128xf32> -> vector<8x128xf32>
    %865 = vector.broadcast %19 : vector<8x1xf32> to vector<8x128xf32>
    %866 = arith.addf %864, %865 : vector<8x128xf32>
    %cst_336 = arith.constant 0.000000e+00 : f32
    %867 = vector.broadcast %cst_336 : f32 to vector<8x128xf32>
    %868 = arith.maximumf %866, %867 : vector<8x128xf32>
    %c4_i32_337 = arith.constant 4 : i32
    %869 = tpu.dynamic_rotate %868 by %c4_i32_337 dim 1 : vector<8x128xf32>, i32 -> vector<8x128xf32>
    %870 = tpu.iota {dimensions = array<i32: 1>} : vector<8x128xi32>
    %c4_i32_338 = arith.constant 4 : i32
    %871 = vector.broadcast %c4_i32_338 : i32 to vector<8x128xi32>
    %872 = arith.cmpi sge, %870, %871 : vector<8x128xi32>
    %cst_339 = arith.constant 0.000000e+00 : f32
    %873 = vector.broadcast %cst_339 : f32 to vector<8x128xf32>
    %874 = arith.select %872, %869, %873 : vector<8x128xi1>, vector<8x128xf32>
    %c124_i32_340 = arith.constant 124 : i32
    %875 = tpu.dynamic_rotate %868 by %c124_i32_340 dim 1 : vector<8x128xf32>, i32 -> vector<8x128xf32>
    %876 = tpu.iota {dimensions = array<i32: 1>} : vector<8x128xi32>
    %c124_i32_341 = arith.constant 124 : i32
    %877 = vector.broadcast %c124_i32_341 : i32 to vector<8x128xi32>
    %878 = arith.cmpi slt, %876, %877 : vector<8x128xi32>
    %cst_342 = arith.constant 0.000000e+00 : f32
    %879 = vector.broadcast %cst_342 : f32 to vector<8x128xf32>
    %880 = arith.select %878, %875, %879 : vector<8x128xi1>, vector<8x128xf32>
    %881 = tpu.concatenate %874, %868, %880 in 0 : vector<8x128xf32>, vector<8x128xf32>, vector<8x128xf32> -> vector<24x128xf32>
    %cst_343 = arith.constant dense<0.000000e+00> : vector<8x128xf32>
    %882 = tpu.matmul %14, %881, %cst_343 {dimension_numbers = #tpu.dot_dimension_numbers<[1], [0], [0], [1], [0, 0, 1, 1], [], []>} : vector<8x24xf32>, vector<24x128xf32>, vector<8x128xf32> -> vector<8x128xf32>
    %883 = vector.broadcast %20 : vector<8x1xf32> to vector<8x128xf32>
    %884 = arith.addf %882, %883 : vector<8x128xf32>
    %cst_344 = arith.constant 0.000000e+00 : f32
    %885 = vector.broadcast %cst_344 : f32 to vector<8x128xf32>
    %886 = arith.maximumf %884, %885 : vector<8x128xf32>
    %c4_i32_345 = arith.constant 4 : i32
    %887 = tpu.dynamic_rotate %886 by %c4_i32_345 dim 1 : vector<8x128xf32>, i32 -> vector<8x128xf32>
    %888 = tpu.iota {dimensions = array<i32: 1>} : vector<8x128xi32>
    %c4_i32_346 = arith.constant 4 : i32
    %889 = vector.broadcast %c4_i32_346 : i32 to vector<8x128xi32>
    %890 = arith.cmpi sge, %888, %889 : vector<8x128xi32>
    %cst_347 = arith.constant 0.000000e+00 : f32
    %891 = vector.broadcast %cst_347 : f32 to vector<8x128xf32>
    %892 = arith.select %890, %887, %891 : vector<8x128xi1>, vector<8x128xf32>
    %c124_i32_348 = arith.constant 124 : i32
    %893 = tpu.dynamic_rotate %886 by %c124_i32_348 dim 1 : vector<8x128xf32>, i32 -> vector<8x128xf32>
    %894 = tpu.iota {dimensions = array<i32: 1>} : vector<8x128xi32>
    %c124_i32_349 = arith.constant 124 : i32
    %895 = vector.broadcast %c124_i32_349 : i32 to vector<8x128xi32>
    %896 = arith.cmpi slt, %894, %895 : vector<8x128xi32>
    %cst_350 = arith.constant 0.000000e+00 : f32
    %897 = vector.broadcast %cst_350 : f32 to vector<8x128xf32>
    %898 = arith.select %896, %893, %897 : vector<8x128xi1>, vector<8x128xf32>
    %899 = tpu.concatenate %892, %886, %898 in 0 : vector<8x128xf32>, vector<8x128xf32>, vector<8x128xf32> -> vector<24x128xf32>
    %cst_351 = arith.constant dense<0.000000e+00> : vector<8x128xf32>
    %900 = tpu.matmul %15, %899, %cst_351 {dimension_numbers = #tpu.dot_dimension_numbers<[1], [0], [0], [1], [0, 0, 1, 1], [], []>} : vector<8x24xf32>, vector<24x128xf32>, vector<8x128xf32> -> vector<8x128xf32>
    %901 = vector.broadcast %21 : vector<8x1xf32> to vector<8x128xf32>
    %902 = arith.addf %900, %901 : vector<8x128xf32>
    %cst_352 = arith.constant 0.000000e+00 : f32
    %903 = vector.broadcast %cst_352 : f32 to vector<8x128xf32>
    %904 = arith.maximumf %902, %903 : vector<8x128xf32>
    %905 = tpu.concatenate %904, %868 in 0 : vector<8x128xf32>, vector<8x128xf32> -> vector<16x128xf32>
    %c2_i32_353 = arith.constant 2 : i32
    %906 = tpu.dynamic_rotate %905 by %c2_i32_353 dim 1 : vector<16x128xf32>, i32 -> vector<16x128xf32>
    %907 = tpu.iota {dimensions = array<i32: 1>} : vector<16x128xi32>
    %c2_i32_354 = arith.constant 2 : i32
    %908 = vector.broadcast %c2_i32_354 : i32 to vector<16x128xi32>
    %909 = arith.cmpi sge, %907, %908 : vector<16x128xi32>
    %cst_355 = arith.constant 0.000000e+00 : f32
    %910 = vector.broadcast %cst_355 : f32 to vector<16x128xf32>
    %911 = arith.select %909, %906, %910 : vector<16x128xi1>, vector<16x128xf32>
    %c126_i32_356 = arith.constant 126 : i32
    %912 = tpu.dynamic_rotate %905 by %c126_i32_356 dim 1 : vector<16x128xf32>, i32 -> vector<16x128xf32>
    %913 = tpu.iota {dimensions = array<i32: 1>} : vector<16x128xi32>
    %c126_i32_357 = arith.constant 126 : i32
    %914 = vector.broadcast %c126_i32_357 : i32 to vector<16x128xi32>
    %915 = arith.cmpi slt, %913, %914 : vector<16x128xi32>
    %cst_358 = arith.constant 0.000000e+00 : f32
    %916 = vector.broadcast %cst_358 : f32 to vector<16x128xf32>
    %917 = arith.select %915, %912, %916 : vector<16x128xi1>, vector<16x128xf32>
    %918 = tpu.concatenate %911, %905, %917 in 0 : vector<16x128xf32>, vector<16x128xf32>, vector<16x128xf32> -> vector<48x128xf32>
    %cst_359 = arith.constant dense<0.000000e+00> : vector<8x128xf32>
    %919 = tpu.matmul %16, %918, %cst_359 {dimension_numbers = #tpu.dot_dimension_numbers<[1], [0], [0], [1], [0, 0, 1, 1], [], []>} : vector<8x48xf32>, vector<48x128xf32>, vector<8x128xf32> -> vector<8x128xf32>
    %920 = vector.broadcast %22 : vector<8x1xf32> to vector<8x128xf32>
    %921 = arith.addf %919, %920 : vector<8x128xf32>
    %cst_360 = arith.constant 0.000000e+00 : f32
    %922 = vector.broadcast %cst_360 : f32 to vector<8x128xf32>
    %923 = arith.maximumf %921, %922 : vector<8x128xf32>
    %924 = tpu.concatenate %923, %850 in 0 : vector<8x128xf32>, vector<8x128xf32> -> vector<16x128xf32>
    %c1_i32_361 = arith.constant 1 : i32
    %925 = tpu.dynamic_rotate %924 by %c1_i32_361 dim 1 : vector<16x128xf32>, i32 -> vector<16x128xf32>
    %926 = tpu.iota {dimensions = array<i32: 1>} : vector<16x128xi32>
    %c1_i32_362 = arith.constant 1 : i32
    %927 = vector.broadcast %c1_i32_362 : i32 to vector<16x128xi32>
    %928 = arith.cmpi sge, %926, %927 : vector<16x128xi32>
    %cst_363 = arith.constant 0.000000e+00 : f32
    %929 = vector.broadcast %cst_363 : f32 to vector<16x128xf32>
    %930 = arith.select %928, %925, %929 : vector<16x128xi1>, vector<16x128xf32>
    %c127_i32_364 = arith.constant 127 : i32
    %931 = tpu.dynamic_rotate %924 by %c127_i32_364 dim 1 : vector<16x128xf32>, i32 -> vector<16x128xf32>
    %932 = tpu.iota {dimensions = array<i32: 1>} : vector<16x128xi32>
    %c127_i32_365 = arith.constant 127 : i32
    %933 = vector.broadcast %c127_i32_365 : i32 to vector<16x128xi32>
    %934 = arith.cmpi slt, %932, %933 : vector<16x128xi32>
    %cst_366 = arith.constant 0.000000e+00 : f32
    %935 = vector.broadcast %cst_366 : f32 to vector<16x128xf32>
    %936 = arith.select %934, %931, %935 : vector<16x128xi1>, vector<16x128xf32>
    %937 = tpu.concatenate %930, %924, %936 in 0 : vector<16x128xf32>, vector<16x128xf32>, vector<16x128xf32> -> vector<48x128xf32>
    %cst_367 = arith.constant dense<0.000000e+00> : vector<8x128xf32>
    %938 = tpu.matmul %17, %937, %cst_367 {dimension_numbers = #tpu.dot_dimension_numbers<[1], [0], [0], [1], [0, 0, 1, 1], [], []>} : vector<8x48xf32>, vector<48x128xf32>, vector<8x128xf32> -> vector<8x128xf32>
    %939 = vector.broadcast %23 : vector<8x1xf32> to vector<8x128xf32>
    %940 = arith.addf %938, %939 : vector<8x128xf32>
    %cst_368 = arith.constant 0.000000e+00 : f32
    %941 = vector.broadcast %cst_368 : f32 to vector<8x128xf32>
    %942 = arith.maximumf %940, %941 : vector<8x128xf32>
    %943 = tpu.concatenate %832, %942 in 0 : vector<8x128xf32>, vector<8x128xf32> -> vector<16x128xf32>
    %cst_369 = arith.constant dense<0.000000e+00> : vector<4x128xf32>
    %944 = tpu.matmul %24, %943, %cst_369 {dimension_numbers = #tpu.dot_dimension_numbers<[1], [0], [0], [1], [0, 0, 1, 1], [], []>} : vector<4x16xf32>, vector<16x128xf32>, vector<4x128xf32> -> vector<4x128xf32>
    %945 = vector.broadcast %25 : vector<4x1xf32> to vector<4x128xf32>
    %946 = arith.addf %944, %945 : vector<4x128xf32>
    %947 = vector.extract_strided_slice %946 {offsets = [0, 0], sizes = [2, 128], strides = [1, 1]} : vector<4x128xf32> to vector<2x128xf32>
    %948 = vector.extract_strided_slice %946 {offsets = [2, 0], sizes = [2, 128], strides = [1, 1]} : vector<4x128xf32> to vector<2x128xf32>
    %949 = vector.shape_cast %116 : vector<2x128xf32> to vector<2x1x128xf32>
    %950 = vector.shape_cast %414 : vector<2x128xf32> to vector<2x1x128xf32>
    %951 = vector.shape_cast %712 : vector<2x128xf32> to vector<2x1x128xf32>
    %952 = tpu.concatenate %949, %950, %951 in 1 : vector<2x1x128xf32>, vector<2x1x128xf32>, vector<2x1x128xf32> -> vector<2x3x128xf32>
    %953 = vector.shape_cast %124 : vector<2x128xf32> to vector<2x1x128xf32>
    %954 = vector.shape_cast %422 : vector<2x128xf32> to vector<2x1x128xf32>
    %955 = vector.shape_cast %720 : vector<2x128xf32> to vector<2x1x128xf32>
    %956 = tpu.concatenate %953, %954, %955 in 1 : vector<2x1x128xf32>, vector<2x1x128xf32>, vector<2x1x128xf32> -> vector<2x3x128xf32>
    %957 = vector.shape_cast %952 : vector<2x3x128xf32> to vector<2x1x3x128xf32>
    %958 = vector.shape_cast %956 : vector<2x3x128xf32> to vector<2x1x3x128xf32>
    %959 = tpu.concatenate %957, %958 in 1 : vector<2x1x3x128xf32>, vector<2x1x3x128xf32> -> vector<2x2x3x128xf32>
    %c0_370 = arith.constant 0 : index
    %c0_371 = arith.constant 0 : index
    %c0_372 = arith.constant 0 : index
    %c0_373 = arith.constant 0 : index
    %c0_374 = arith.constant 0 : index
    %960 = vector.load %arg31[%c0_370, %c0_371, %c0_372, %c0_373, %c0_374] : memref<1x2x2x3x128xf32, #tpu.memory_space<vmem>>, vector<1x2x2x3x128xf32>
    %961 = vector.shape_cast %960 : vector<1x2x2x3x128xf32> to vector<2x2x3x128xf32>
    %962 = vector.shape_cast %959 : vector<2x2x3x128xf32> to vector<1x2x2x3x128xf32>
    tpu.vector_store %arg31[%c0_370, %c0_371, %c0_372, %c0_373, %c0_374], %962 {strides = array<i32>} : memref<1x2x2x3x128xf32, #tpu.memory_space<vmem>>, vector<1x2x2x3x128xf32>,
    %963 = vector.shape_cast %351 : vector<2x128xf32> to vector<2x1x128xf32>
    %964 = vector.shape_cast %649 : vector<2x128xf32> to vector<2x1x128xf32>
    %965 = vector.shape_cast %947 : vector<2x128xf32> to vector<2x1x128xf32>
    %966 = tpu.concatenate %963, %964, %965 in 1 : vector<2x1x128xf32>, vector<2x1x128xf32>, vector<2x1x128xf32> -> vector<2x3x128xf32>
    %967 = vector.shape_cast %352 : vector<2x128xf32> to vector<2x1x128xf32>
    %968 = vector.shape_cast %650 : vector<2x128xf32> to vector<2x1x128xf32>
    %969 = vector.shape_cast %948 : vector<2x128xf32> to vector<2x1x128xf32>
    %970 = tpu.concatenate %967, %968, %969 in 1 : vector<2x1x128xf32>, vector<2x1x128xf32>, vector<2x1x128xf32> -> vector<2x3x128xf32>
    %971 = vector.shape_cast %966 : vector<2x3x128xf32> to vector<2x1x3x128xf32>
    %972 = vector.shape_cast %970 : vector<2x3x128xf32> to vector<2x1x3x128xf32>
    %973 = tpu.concatenate %971, %972 in 1 : vector<2x1x3x128xf32>, vector<2x1x3x128xf32> -> vector<2x2x3x128xf32>
    %c0_375 = arith.constant 0 : index
    %c0_376 = arith.constant 0 : index
    %c0_377 = arith.constant 0 : index
    %c0_378 = arith.constant 0 : index
    %c0_379 = arith.constant 0 : index
    %974 = vector.load %arg32[%c0_375, %c0_376, %c0_377, %c0_378, %c0_379] : memref<1x2x2x3x128xf32, #tpu.memory_space<vmem>>, vector<1x2x2x3x128xf32>
    %975 = vector.shape_cast %974 : vector<1x2x2x3x128xf32> to vector<2x2x3x128xf32>
    %976 = vector.shape_cast %973 : vector<2x2x3x128xf32> to vector<1x2x2x3x128xf32>
    tpu.vector_store %arg32[%c0_375, %c0_376, %c0_377, %c0_378, %c0_379], %976 {strides = array<i32>} : memref<1x2x2x3x128xf32, #tpu.memory_space<vmem>>, vector<1x2x2x3x128xf32>,
    return
  }
  func.func @transform_0(%arg0: i32, %arg1: i32) -> (i32, i32, i32, i32, i32) {
    %c0_i32 = arith.constant 0 : i32
    %c0_i32_0 = arith.constant 0 : i32
    %c0_i32_1 = arith.constant 0 : i32
    %c0_i32_2 = arith.constant 0 : i32
    return %arg0, %c0_i32, %c0_i32_0, %arg1, %c0_i32_1 : i32, i32, i32, i32, i32
  }
  func.func @transform_1(%arg0: i32, %arg1: i32) -> (i32, i32, i32, i32, i32) {
    %c0_i32 = arith.constant 0 : i32
    %c0_i32_0 = arith.constant 0 : i32
    %c0_i32_1 = arith.constant 0 : i32
    %c0_i32_2 = arith.constant 0 : i32
    return %arg0, %c0_i32, %c0_i32_0, %arg1, %c0_i32_1 : i32, i32, i32, i32, i32
  }
  func.func @transform_2(%arg0: i32, %arg1: i32) -> (i32, i32, i32, i32, i32) {
    %c0_i32 = arith.constant 0 : i32
    %c0_i32_0 = arith.constant 0 : i32
    %c0_i32_1 = arith.constant 0 : i32
    %c0_i32_2 = arith.constant 0 : i32
    %c0_i32_3 = arith.constant 0 : i32
    return %arg0, %c0_i32, %c0_i32_0, %c0_i32_1, %c0_i32_2 : i32, i32, i32, i32, i32
  }
  func.func @transform_3(%arg0: i32, %arg1: i32) -> (i32, i32) {
    %c0_i32 = arith.constant 0 : i32
    %c0_i32_0 = arith.constant 0 : i32
    %c0_i32_1 = arith.constant 0 : i32
    return %c0_i32, %c0_i32_0 : i32, i32
  }
  func.func @transform_4(%arg0: i32, %arg1: i32) -> (i32, i32) {
    %c0_i32 = arith.constant 0 : i32
    %c0_i32_0 = arith.constant 0 : i32
    %c0_i32_1 = arith.constant 0 : i32
    return %c0_i32, %c0_i32_0 : i32, i32
  }
  func.func @transform_5(%arg0: i32, %arg1: i32) -> (i32, i32) {
    %c0_i32 = arith.constant 0 : i32
    %c0_i32_0 = arith.constant 0 : i32
    %c0_i32_1 = arith.constant 0 : i32
    return %c0_i32, %c0_i32_0 : i32, i32
  }
  func.func @transform_6(%arg0: i32, %arg1: i32) -> (i32, i32) {
    %c0_i32 = arith.constant 0 : i32
    %c0_i32_0 = arith.constant 0 : i32
    %c0_i32_1 = arith.constant 0 : i32
    return %c0_i32, %c0_i32_0 : i32, i32
  }
  func.func @transform_7(%arg0: i32, %arg1: i32) -> (i32, i32) {
    %c0_i32 = arith.constant 0 : i32
    %c0_i32_0 = arith.constant 0 : i32
    %c0_i32_1 = arith.constant 0 : i32
    return %c0_i32, %c0_i32_0 : i32, i32
  }
  func.func @transform_8(%arg0: i32, %arg1: i32) -> (i32, i32) {
    %c0_i32 = arith.constant 0 : i32
    %c0_i32_0 = arith.constant 0 : i32
    %c0_i32_1 = arith.constant 0 : i32
    return %c0_i32, %c0_i32_0 : i32, i32
  }
  func.func @transform_9(%arg0: i32, %arg1: i32) -> (i32, i32) {
    %c0_i32 = arith.constant 0 : i32
    %c0_i32_0 = arith.constant 0 : i32
    %c0_i32_1 = arith.constant 0 : i32
    return %c0_i32, %c0_i32_0 : i32, i32
  }
  func.func @transform_10(%arg0: i32, %arg1: i32) -> (i32, i32) {
    %c0_i32 = arith.constant 0 : i32
    %c0_i32_0 = arith.constant 0 : i32
    %c0_i32_1 = arith.constant 0 : i32
    return %c0_i32, %c0_i32_0 : i32, i32
  }
  func.func @transform_11(%arg0: i32, %arg1: i32) -> (i32, i32) {
    %c0_i32 = arith.constant 0 : i32
    %c0_i32_0 = arith.constant 0 : i32
    %c0_i32_1 = arith.constant 0 : i32
    return %c0_i32, %c0_i32_0 : i32, i32
  }
  func.func @transform_12(%arg0: i32, %arg1: i32) -> (i32, i32) {
    %c0_i32 = arith.constant 0 : i32
    %c0_i32_0 = arith.constant 0 : i32
    %c0_i32_1 = arith.constant 0 : i32
    return %c0_i32, %c0_i32_0 : i32, i32
  }
  func.func @transform_13(%arg0: i32, %arg1: i32) -> (i32, i32) {
    %c0_i32 = arith.constant 0 : i32
    %c0_i32_0 = arith.constant 0 : i32
    %c0_i32_1 = arith.constant 0 : i32
    return %c0_i32, %c0_i32_0 : i32, i32
  }
  func.func @transform_14(%arg0: i32, %arg1: i32) -> (i32, i32) {
    %c0_i32 = arith.constant 0 : i32
    %c0_i32_0 = arith.constant 0 : i32
    %c0_i32_1 = arith.constant 0 : i32
    return %c0_i32, %c0_i32_0 : i32, i32
  }
  func.func @transform_15(%arg0: i32, %arg1: i32) -> (i32, i32) {
    %c0_i32 = arith.constant 0 : i32
    %c0_i32_0 = arith.constant 0 : i32
    %c0_i32_1 = arith.constant 0 : i32
    return %c0_i32, %c0_i32_0 : i32, i32
  }
  func.func @transform_16(%arg0: i32, %arg1: i32) -> (i32, i32) {
    %c0_i32 = arith.constant 0 : i32
    %c0_i32_0 = arith.constant 0 : i32
    %c0_i32_1 = arith.constant 0 : i32
    return %c0_i32, %c0_i32_0 : i32, i32
  }
  func.func @transform_17(%arg0: i32, %arg1: i32) -> (i32, i32) {
    %c0_i32 = arith.constant 0 : i32
    %c0_i32_0 = arith.constant 0 : i32
    %c0_i32_1 = arith.constant 0 : i32
    return %c0_i32, %c0_i32_0 : i32, i32
  }
  func.func @transform_18(%arg0: i32, %arg1: i32) -> (i32, i32) {
    %c0_i32 = arith.constant 0 : i32
    %c0_i32_0 = arith.constant 0 : i32
    %c0_i32_1 = arith.constant 0 : i32
    return %c0_i32, %c0_i32_0 : i32, i32
  }
  func.func @transform_19(%arg0: i32, %arg1: i32) -> (i32, i32) {
    %c0_i32 = arith.constant 0 : i32
    %c0_i32_0 = arith.constant 0 : i32
    %c0_i32_1 = arith.constant 0 : i32
    return %c0_i32, %c0_i32_0 : i32, i32
  }
  func.func @transform_20(%arg0: i32, %arg1: i32) -> (i32, i32) {
    %c0_i32 = arith.constant 0 : i32
    %c0_i32_0 = arith.constant 0 : i32
    %c0_i32_1 = arith.constant 0 : i32
    return %c0_i32, %c0_i32_0 : i32, i32
  }
  func.func @transform_21(%arg0: i32, %arg1: i32) -> (i32, i32) {
    %c0_i32 = arith.constant 0 : i32
    %c0_i32_0 = arith.constant 0 : i32
    %c0_i32_1 = arith.constant 0 : i32
    return %c0_i32, %c0_i32_0 : i32, i32
  }
  func.func @transform_22(%arg0: i32, %arg1: i32) -> (i32, i32) {
    %c0_i32 = arith.constant 0 : i32
    %c0_i32_0 = arith.constant 0 : i32
    %c0_i32_1 = arith.constant 0 : i32
    return %c0_i32, %c0_i32_0 : i32, i32
  }
  func.func @transform_23(%arg0: i32, %arg1: i32) -> (i32, i32) {
    %c0_i32 = arith.constant 0 : i32
    %c0_i32_0 = arith.constant 0 : i32
    %c0_i32_1 = arith.constant 0 : i32
    return %c0_i32, %c0_i32_0 : i32, i32
  }
  func.func @transform_24(%arg0: i32, %arg1: i32) -> (i32, i32) {
    %c0_i32 = arith.constant 0 : i32
    %c0_i32_0 = arith.constant 0 : i32
    %c0_i32_1 = arith.constant 0 : i32
    return %c0_i32, %c0_i32_0 : i32, i32
  }
  func.func @transform_25(%arg0: i32, %arg1: i32) -> (i32, i32) {
    %c0_i32 = arith.constant 0 : i32
    %c0_i32_0 = arith.constant 0 : i32
    %c0_i32_1 = arith.constant 0 : i32
    return %c0_i32, %c0_i32_0 : i32, i32
  }
  func.func @transform_26(%arg0: i32, %arg1: i32) -> (i32, i32) {
    %c0_i32 = arith.constant 0 : i32
    %c0_i32_0 = arith.constant 0 : i32
    %c0_i32_1 = arith.constant 0 : i32
    return %c0_i32, %c0_i32_0 : i32, i32
  }
  func.func @transform_27(%arg0: i32, %arg1: i32) -> (i32, i32) {
    %c0_i32 = arith.constant 0 : i32
    %c0_i32_0 = arith.constant 0 : i32
    %c0_i32_1 = arith.constant 0 : i32
    return %c0_i32, %c0_i32_0 : i32, i32
  }
  func.func @transform_28(%arg0: i32, %arg1: i32) -> (i32, i32) {
    %c0_i32 = arith.constant 0 : i32
    %c0_i32_0 = arith.constant 0 : i32
    %c0_i32_1 = arith.constant 0 : i32
    return %c0_i32, %c0_i32_0 : i32, i32
  }
  func.func @transform_29(%arg0: i32, %arg1: i32) -> (i32, i32, i32, i32, i32) {
    %c0_i32 = arith.constant 0 : i32
    %c0_i32_0 = arith.constant 0 : i32
    %c0_i32_1 = arith.constant 0 : i32
    %c0_i32_2 = arith.constant 0 : i32
    return %arg0, %c0_i32, %c0_i32_0, %arg1, %c0_i32_1 : i32, i32, i32, i32, i32
  }
  func.func @transform_30(%arg0: i32, %arg1: i32) -> (i32, i32, i32, i32, i32) {
    %c0_i32 = arith.constant 0 : i32
    %c0_i32_0 = arith.constant 0 : i32
    %c0_i32_1 = arith.constant 0 : i32
    %c0_i32_2 = arith.constant 0 : i32
    return %arg0, %c0_i32, %c0_i32_0, %arg1, %c0_i32_1 : i32, i32, i32, i32, i32
  }
}

</mosaic_0001>

<llo_original>
// kernel: custom-call.11
$region0: #{custom-call.11}
  %s0 = inlined_call_operand.vmem [shape: f32[2,128,4,4], index: 0, kind: input, shape index: {}]
  %s1 = inlined_call_operand.vmem [shape: f32[2,128,4,4], index: 1, kind: output, shape index: {0}]
  %s2 = inlined_call_operand.hbm [shape: s32[2,128,4], index: 2, kind: output, shape index: {1}]
  %s3 = inlined_call_operand.vmem [shape: s32[2,128,4], index: 3, kind: output, shape index: {2}]
  %4 = xla_tuple %s1, %s2, %s3
  $region1: #{custom-call.11} parent=0
    #allocation0 [shape = 'u8[4096]{0}', space=vmem, size = 0x1000, scoped, tag = 'operand span for operand 0']
    #allocation1 [shape = 'u8[4096]{0}', space=vmem, size = 0x1000, scoped, tag = 'packed  for operand 0']
    #allocation2 [shape = 'u8[4096]{0}', space=vmem, size = 0x1000, scoped, tag = 'operand span for operand 1']
    #allocation3 [shape = 'u8[4096]{0}', space=vmem, size = 0x1000, scoped, tag = 'packed  for operand 1']
    #allocation4 [shape = 'u8[8192]{0}', space=vmem, size = 0x2000, scoped, tag = 'operand span for operand 2']
    #allocation5 [shape = 's32[2]{0}', space=sflag, size = 0x8, scoped, tag = 'scoped memory for custom-call.11']
    #allocation6 [shape = 'u8[8192]{0}', space=vmem, size = 0x2000, scoped, tag = 'operand span for operand 3']
    %5 = vsyncpa [#allocation5], 0
    %s6 = scalar_lea.sflag [#allocation5], 1
    %7 = vsyncpa %s6, 0
    loop: start=0, step=1, limit=258
    $region2: #{custom-call.11} parent=1 // loop_pre_header
      _
    $region3: #{custom-call.11} parent=1 // loop_header
      %s9 = sphi 0, %s13
      %p10 = scmp.ge.s32.totalorder %s9, 258
      %s16 = sphi 0, %s28
      %s17 = sphi 0, %s24
      %s18 = sphi 0, %s16
      %s19 = sphi 0, %s17
      %s20 = sphi 0, %s18
      %s21 = sphi 0, %s19
      %s35 = sphi 0, %s37
      %s38 = sphi 0, %s35
      %s39 = sphi 0, %s38
      %s55 = sphi 0, %s39
      %s65 = sphi 0, %s67
      %s68 = sphi 0, %s65
      %s69 = sphi 0, %s68
      %s85 = sphi 0, %s69
    $region4: #{custom-call.11} parent=1 // loop_header_branch
      %12 = sbr.rel (%p10) target = $region8
    $region5: #{custom-call.11} parent=1 // loop_body
      %s14 = ssub.s32 %s9, 1
      %s15 = ssub.s32 %s9, 2
      %s22 = sadd.s32 1, %s17
      %p23 = scmp.ge.s32.totalorder %s22, 128
      %s24 = scalar_select %p23, 0, %s22
      %s25 = sadd.s32 1, %s16
      %s26 = scalar_select %p23, %s25, %s16
      %p27 = scmp.ge.s32.totalorder %s26, 2
      %s28 = scalar_select %p27, 0, %s26
      %s29 = sshrl.u32 %s17, 3
      %s30 = sshrl.u32 %s24, 3
      %s31 = ssub.s32 %s16, %s28
      %s32 = ssub.s32 %s29, %s30
      %s33 = sor.u32 %s31, %s32
      %p34 = scmp.eq.s32.totalorder %s33, 0
      %s36 = sadd.s32 %s35, 1
      %s37 = scalar_select %p34, %s35, %s36
      %p40 = pneg %p34
      %p41 = scmp.eq.s32.totalorder %s9, 255
      %p42 = por %p40, %p41
      %p43 = scmp.ne.s32.totalorder %s35, %s38
      %p44 = scmp.eq.s32.totalorder %s9, 0
      %p45 = por %p43, %p44
      %p46 = scmp.ne.s32.totalorder %s35, %s38
      %p47 = scmp.eq.s32.totalorder %s14, 255
      %p48 = por %p46, %p47
      %p49 = scmp.ne.s32.totalorder %s38, %s39
      %p50 = scmp.eq.s32.totalorder %s14, 0
      %p51 = por %p49, %p50
      %p52 = scmp.ne.s32.totalorder %s38, %s39
      %p53 = scmp.eq.s32.totalorder %s15, 255
      %p54 = por %p52, %p53
      %p56 = scmp.ne.s32.totalorder %s39, %s55
      %p57 = scmp.eq.s32.totalorder %s15, 0
      %p58 = por %p56, %p57
      %s59 = sshrl.u32 %s17, 3
      %s60 = sshrl.u32 %s24, 3
      %s61 = ssub.s32 %s16, %s28
      %s62 = ssub.s32 %s59, %s60
      %s63 = sor.u32 %s61, %s62
      %p64 = scmp.eq.s32.totalorder %s63, 0
      %s66 = sadd.s32 %s65, 1
      %s67 = scalar_select %p64, %s65, %s66
      %p70 = pneg %p64
      %p71 = scmp.eq.s32.totalorder %s9, 255
      %p72 = por %p70, %p71
      %p73 = scmp.ne.s32.totalorder %s65, %s68
      %p74 = scmp.eq.s32.totalorder %s9, 0
      %p75 = por %p73, %p74
      %p76 = scmp.ne.s32.totalorder %s65, %s68
      %p77 = scmp.eq.s32.totalorder %s14, 255
      %p78 = por %p76, %p77
      %p79 = scmp.ne.s32.totalorder %s68, %s69
      %p80 = scmp.eq.s32.totalorder %s14, 0
      %p81 = por %p79, %p80
      %p82 = scmp.ne.s32.totalorder %s68, %s69
      %p83 = scmp.eq.s32.totalorder %s15, 255
      %p84 = por %p82, %p83
      %p86 = scmp.ne.s32.totalorder %s69, %s85
      %p87 = scmp.eq.s32.totalorder %s15, 0
      %p88 = por %p86, %p87
      %p89 = scmp.le.s32.totalorder 1, %s9
      %p90 = scmp.lt.s32.totalorder %s9, 257
      %p91 = pnand %p89, %p90
      %p92 = pneg %p91
      // Predicated region
      $region9: #{custom-call.11} parent=5 // pred_check
        _
      $region10: #{custom-call.11} parent=5 // pred_check_branch
        %94 = sbr.rel (%p91) target = $region12
      $region11: #{custom-call.11} parent=5 // pred_region
        %s95 = ssub.s32 %s9, 1
      $region12: #{custom-call.11} parent=5 // pred_fallthru
        _
      %p96 = scmp.lt.s32.totalorder %s9, 256
      // Predicated region
      $region13: #{custom-call.11} parent=5 // pred_check
        %p97 = pneg %p96
      $region14: #{custom-call.11} parent=5 // pred_check_branch
        %99 = sbr.rel (%p97) target = $region16
      $region15: #{custom-call.11} parent=5 // pred_region
        %s100 = sand.u32 %s9, 1
        %s101 = sand.u32 %s9, 1
        %s102 = smul.addr %s101, 4
        %s103 = scalar_lea.vmem [#allocation1], %s102
        %s104 = smul.addr %s16, 128
        %s105 = sadd.s32 %s17, %s104
        %s106 = smul.addr %s105, 4
        %s107 = scalar_lea.vmem %s0, %s106
        // Predicated region
        $region17: #{custom-call.11} parent=15 // pred_check
          _
        $region18: #{custom-call.11} parent=15 // pred_check_branch
          %109 = sbr.rel (0) target = $region20
        $region19: #{custom-call.11} parent=15 // pred_region
          // Predicated region
          $region21: #{custom-call.11} parent=19 // pred_check
            _
          $region22: #{custom-call.11} parent=19 // pred_check_branch
            %111 = sbr.rel target = $region24
          $region23: #{custom-call.11} parent=19 // pred_region
            // Predicated region
            $region36: #{custom-call.11} parent=23 // pred_check
              _
            $region37: #{custom-call.11} parent=23 // pred_check_branch
              %127 = sbr.rel (0) target = $region39
            $region38: #{custom-call.11} parent=23 // pred_region
              %s129 = ssub.s32 16, 1
              loop: start=0, step=1, limit=1
              $region40: #{custom-call.11} parent=38 // loop_pre_header
                _
              $region41: #{custom-call.11} parent=38 // loop_header
                %s131 = sphi 0, %s135
                %p132 = scmp.ge.s32.totalorder %s131, 1
                %s136 = sphi %s107, %s107
                %s137 = sphi %s103, %s103
              $region42: #{custom-call.11} parent=38 // loop_header_branch
                %134 = sbr.rel (%p132) target = $region46
              $region43: #{custom-call.11} parent=38 // loop_body
                %v138 = vld [vmem:[%s136] sm:%s129]
                %139 = vst [vmem:[%s137] sm:%s129] %v138
              $region44: #{custom-call.11} parent=38 // loop_footer
                %s135 = sadd.s32 1, %s131
              $region45: #{custom-call.11} parent=38 // loop_footer_branch
                %130 = sbr.rel target = $region41
              $region46: #{custom-call.11} parent=38 // loop_exit
                _
            $region39: #{custom-call.11} parent=23 // pred_fallthru
              _
          $region24: #{custom-call.11} parent=19 // pred_fallthru
            _
          // Predicated region
          $region25: #{custom-call.11} parent=19 // pred_check
            _
          $region26: #{custom-call.11} parent=19 // pred_check_branch
            %113 = sbr.rel (0) target = $region28
          $region27: #{custom-call.11} parent=19 // pred_region
            %s115 = ssub.s32 16, 1
            loop: start=0, step=1, limit=1
            $region29: #{custom-call.11} parent=27 // loop_pre_header
              _
            $region30: #{custom-call.11} parent=27 // loop_header
              %s117 = sphi 0, %s121
              %p118 = scmp.ge.s32.totalorder %s117, 1
              %s122 = sphi %s107, %s107
              %s123 = sphi %s103, %s103
            $region31: #{custom-call.11} parent=27 // loop_header_branch
              %120 = sbr.rel (%p118) target = $region35
            $region32: #{custom-call.11} parent=27 // loop_body
              %v124 = vld [vmem:[%s122] sm:%s115]
              %125 = vst [vmem:[%s123] sm:%s115] %v124
            $region33: #{custom-call.11} parent=27 // loop_footer
              %s121 = sadd.s32 1, %s117
            $region34: #{custom-call.11} parent=27 // loop_footer_branch
              %116 = sbr.rel target = $region30
            $region35: #{custom-call.11} parent=27 // loop_exit
              _
          $region28: #{custom-call.11} parent=19 // pred_fallthru
            _
        $region20: #{custom-call.11} parent=15 // pred_fallthru
          _
        %140 = vnop
      $region16: #{custom-call.11} parent=5 // pred_fallthru
        _
      %p141 = scmp.le.s32.totalorder 1, %s9
      %p142 = scmp.lt.s32.totalorder %s9, 257
      %p143 = pnand %p141, %p142
      %p144 = pneg %p143
      // Predicated region
      $region47: #{custom-call.11} parent=5 // pred_check
        _
      $region48: #{custom-call.11} parent=5 // pred_check_branch
        %146 = sbr.rel (%p143) target = $region50
      $region49: #{custom-call.11} parent=5 // pred_region
        #allocation7 [shape = 's32[4,128]{1,0}', space=vmem, size = 0x1000, scoped, tag = 'scratch for permutations']
        %s147 = ssub.s32 %s9, 1
        %s148 = sand.u32 %s14, 1
        %s149 = sand.u32 %s14, 1
        %s150 = smul.addr %s149, 4
        %s151 = scalar_lea.vmem [#allocation1], %s150
        %s152 = sand.u32 %s14, 1
        %s153 = sand.u32 %s14, 1
        %s154 = smul.addr %s153, 4
        %s155 = scalar_lea.vmem [#allocation1], %s154
        %s156 = sand.u32 %s14, 1
        %s157 = sand.u32 %s14, 1
        %s158 = smul.addr %s157, 4
        %s159 = scalar_lea.vmem [#allocation3], %s158
        %p160 = pneg %p51
        %p161 = pneg %p48
        %s162 = sand.u32 %s38, 1
        %s163 = scalar_lea.sflag [#allocation5], %s162
        %s164 = sand.u32 %s38, 1
        %s165 = smul.addr %s164, 8
        %s166 = scalar_lea.vmem [#allocation4], %s165
        %p167 = pneg %p81
        %p168 = pneg %p78
        %s169 = sand.u32 %s68, 1
        %s170 = sand.u32 %s68, 1
        %s171 = smul.addr %s170, 8
        %s172 = scalar_lea.vmem [#allocation6], %s171
        %s174 = sshll.u32 1, 4
        %s175 = ssub.s32 %s174, 1
        %v176 = vld [vmem:[%s155] sm:%s175]
        %177 = vst [vmem:[#allocation0] sm:%s175] %v176
        %s178 = sshrl.u32 %s19, 3
        %s179 = sshrl.u32 %s19, 3
        %v180 = vld [vmem:[#allocation0] sm:$0xff]
        %181 = vst [vmem:[#allocation2] sm:$0xff] %v180
        %s182 = sand.u32 %s19, 7
        %s183 = scalar_lea.vmem %s166, %s182 [#allocation4]
        %s184 = sand.u32 %s19, 7
        %s185 = scalar_lea.vmem %s172, %s184 [#allocation6]
        %186 = vst [vmem:[%s183] sm:$0x1] 0
        %v187 = vlaneseq
        %v188 = vshrl.u32 %v187, 7
        %v189 = vmov %v188
        %191 = vst [vmem:[#allocation7] sm:$0xff] %v189
        loop: start=0, step=1, limit=4
        $region52: #{custom-call.11} parent=49 // loop_pre_header
          _
        $region53: #{custom-call.11} parent=49 // loop_header
          %s193 = sphi 0, %s197
          %p194 = scmp.ge.s32.totalorder %s193, 4
        $region54: #{custom-call.11} parent=49 // loop_header_branch
          %196 = sbr.rel (%p194) target = $region58
        $region55: #{custom-call.11} parent=49 // loop_body
          %v198 = vstv %s193
          %v199 = vlaneseq
          %v200 = vshrl.u32 %v199, 7
          %v201 = vmov %v200
          %v202 = vld [vmem:[#allocation2] sm:$0xff]
          %v203 = vand.u32 2147483647, %v202
          %v205 = vstv %s193
          %vm206 = vcmp.ge.s32.totalorder %v201, %v205
          %vm207 = vcmp.lt.s32.totalorder %v201, 4
          %vm208 = vmand %vm206, %vm207
          %vm209 = vcmp.lt.f32.partialorder -inf, %v203
          %vm210 = vmand %vm208, %vm209
          %v211 = vsel %vm210, %v201, %v198
          %v212 = vsel %vm210, %v203, -inf
          %v213 = vrot.slane %v212, 1
          %v214 = vrot.slane %v211, 1
          %vm215 = vcmp.ge.f32.partialorder %v213, %v212
          %v216 = vsel %vm215, %v213, %v212
          %v217 = vsel %vm215, %v214, %v211
          %v218 = vrot.slane %v213, 1
          %v219 = vrot.slane %v214, 1
          %vm220 = vcmp.ge.f32.partialorder %v218, %v216
          %v221 = vsel %vm220, %v218, %v216
          %v222 = vsel %vm220, %v219, %v217
          %v223 = vrot.slane %v218, 1
          %v224 = vrot.slane %v219, 1
          %vm225 = vcmp.ge.f32.partialorder %v223, %v221
          %v226 = vsel %vm225, %v223, %v221
          %v227 = vsel %vm225, %v224, %v222
          %v228 = vrot.slane %v223, 1
          %v229 = vrot.slane %v224, 1
          %vm230 = vcmp.ge.f32.partialorder %v228, %v226
          %v231 = vsel %vm230, %v228, %v226
          %v232 = vsel %vm230, %v229, %v227
          %v233 = vrot.slane %v228, 1
          %v234 = vrot.slane %v229, 1
          %vm235 = vcmp.ge.f32.partialorder %v233, %v231
          %v236 = vsel %vm235, %v233, %v231
          %v237 = vsel %vm235, %v234, %v232
          %v238 = vrot.slane %v233, 1
          %v239 = vrot.slane %v234, 1
          %vm240 = vcmp.ge.f32.partialorder %v238, %v236
          %v241 = vsel %vm240, %v238, %v236
          %v242 = vsel %vm240, %v239, %v237
          %v243 = vrot.slane %v238, 1
          %v244 = vrot.slane %v239, 1
          %vm245 = vcmp.ge.f32.partialorder %v243, %v241
          %v246 = vsel %vm245, %v243, %v241
          %v247 = vsel %vm245, %v244, %v242
          %s248 = ssub.s32 128, %s193
          %249 = vrot.lane.b32.xlu0 %v247, %s248
          %v250 = vpop.permute.xlu0 %249
          %s251 = vtos %v250
          %v252 = vstv %s193
          %v253 = vlaneseq
          %v254 = vand.u32 %v253, 127
          %vm255 = vcmp.eq.s32.totalorder %v254, %v252
          %v256 = vstv %s251
          %v257 = vld [vmem:[%s183] ss:$0 sm:$0xff]
          %v258 = vsel %vm255, %v256, %v257
          %259 = vst [vmem:[%s183] sm:$0x1] %v258
          %s260 = scalar_lea.vmem [#allocation2], %s193
          %s261 = scalar_lea.vmem [#allocation2], %s251
          %v262 = vld [vmem:[%s260] ss:$0 sm:$0xff]
          %v263 = vld [vmem:[%s261] ss:$0 sm:$0xff]
          %264 = vst [vmem:[%s261] sm:$0x1] %v262
          %265 = vst [vmem:[%s260] sm:$0x1] %v263
          %s266 = scalar_lea.vmem [#allocation7], %s193
          %s267 = scalar_lea.vmem [#allocation7], %s251
          %v268 = vld [vmem:[%s266] ss:$0 sm:$0xff]
          %v269 = vld [vmem:[%s267] ss:$0 sm:$0xff]
          %270 = vst [vmem:[%s267] sm:$0x1] %v268
          %271 = vst [vmem:[%s266] sm:$0x1] %v269
          %vm272 = vcmp.ne.f32.partialorder %v263, 0.0
          %vm273 = vmand %vm255, %vm272
          %v274 = vsel %vm273, %v263, 1.0
          %v275 = vlaneseq
          %v276 = vand.u32 %v275, 127
          %v277 = vstv %s193
          %vm278 = vcmp.gt.s32.totalorder %v276, %v277
          %v279 = vsel %vm278, %v263, 0.0
          %v280 = vlaneseq
          %v281 = vshrl.u32 %v280, 7
          %v282 = vmov %v281
          %v283 = vld [vmem:[#allocation2] sm:$0xff]
          %v285 = vstv %s193
          %vm286 = vcmp.gt.s32.totalorder %v282, %v285
          %v287 = vsel %vm286, %v274, 1.0
          %v288 = vrcp.pop %v287
          %v289 = vmul.f32 %v283, %v288
          %vm290 = vmand %vm286, %vm255
          %v291 = vsel %vm290, %v289, 0.0
          %292 = vadd.xlane.f32.xlu0 %v291
          %v293 = vpop.xlane.xlu0 %292
          %v294 = vmul.f32 %v293, %v279
          %v295 = vsub.f32 %v289, %v294
          %296 = vst [vmem:[#allocation2] sm:$0xff] %v295
        $region56: #{custom-call.11} parent=49 // loop_footer
          %s197 = sadd.s32 1, %s193
        $region57: #{custom-call.11} parent=49 // loop_footer_branch
          %192 = sbr.rel target = $region53
        $region58: #{custom-call.11} parent=49 // loop_exit
          _
        %v297 = vld [vmem:[#allocation7] sm:$0xff]
        %s298 = scalar_lea.vmem [#allocation7], 8
        %s299 = scalar_lea.vmem [#allocation7], 16
        %s300 = scalar_lea.vmem [#allocation7], 24
        %s301 = scalar_lea.vmem [#allocation7], 32
        %s302 = scalar_lea.vmem [#allocation7], 40
        %s303 = scalar_lea.vmem [#allocation7], 48
        %s304 = scalar_lea.vmem [#allocation7], 56
        %s305 = scalar_lea.vmem [#allocation7], 64
        %s306 = scalar_lea.vmem [#allocation7], 72
        %s307 = scalar_lea.vmem [#allocation7], 80
        %s308 = scalar_lea.vmem [#allocation7], 88
        %s309 = scalar_lea.vmem [#allocation7], 96
        %s310 = scalar_lea.vmem [#allocation7], 104
        %s311 = scalar_lea.vmem [#allocation7], 112
        %s312 = scalar_lea.vmem [#allocation7], 120
        %313 = vxpose.xlu0.b32.start [1/16] %v297, 128
        %314 = vxpose.xlu0.b32.cont [2/16] 0, 128
        %315 = vxpose.xlu0.b32.cont [3/16] 0, 128
        %316 = vxpose.xlu0.b32.cont [4/16] 0, 128
        %317 = vxpose.xlu0.b32.cont [5/16] 0, 128
        %318 = vxpose.xlu0.b32.cont [6/16] 0, 128
        %319 = vxpose.xlu0.b32.cont [7/16] 0, 128
        %320 = vxpose.xlu0.b32.cont [8/16] 0, 128
        %321 = vxpose.xlu0.b32.cont [9/16] 0, 128
        %322 = vxpose.xlu0.b32.cont [10/16] 0, 128
        %323 = vxpose.xlu0.b32.cont [11/16] 0, 128
        %324 = vxpose.xlu0.b32.cont [12/16] 0, 128
        %325 = vxpose.xlu0.b32.cont [13/16] 0, 128
        %326 = vxpose.xlu0.b32.cont [14/16] 0, 128
        %327 = vxpose.xlu0.b32.cont [15/16] 0, 128
        %328 = vxpose.xlu0.b32.end [16/16] 0, 128
        %v329 = vpop.trf.xlu0
        %v330 = vpop.trf.xlu0
        %v331 = vpop.trf.xlu0
        %v332 = vpop.trf.xlu0
        %v333 = vpop.trf.xlu0
        %v334 = vpop.trf.xlu0
        %v335 = vpop.trf.xlu0
        %v336 = vpop.trf.xlu0
        %v337 = vpop.trf.xlu0
        %v338 = vpop.trf.xlu0
        %v339 = vpop.trf.xlu0
        %v340 = vpop.trf.xlu0
        %v341 = vpop.trf.xlu0
        %v342 = vpop.trf.xlu0
        %v343 = vpop.trf.xlu0
        %v344 = vpop.trf.xlu0
        %345 = vst [vmem:[%s185] sm:$0x1] %v329
        %s347 = sshll.u32 1, 4
        %s348 = ssub.s32 %s347, 1
        %v350 = vld [vmem:[#allocation2] sm:%s348]
        %s351 = sshll.u32 1, 4
        %s352 = ssub.s32 %s351, 1
        %353 = vst [vmem:[%s159] sm:%s352] %v350
        %s354 = sand.u32 %s14, 1
        %s355 = sand.u32 %s14, 1
        %s356 = smul.addr %s355, 4
        %s357 = scalar_lea.vmem [#allocation3], %s356
        %s358 = sand.u32 %s38, 1
        %s359 = scalar_lea.sflag [#allocation5], %s358
        %s360 = sand.u32 %s38, 1
        %s361 = smul.addr %s360, 8
        %s362 = scalar_lea.vmem [#allocation4], %s361
        %s363 = sand.u32 %s68, 1
        %s364 = sand.u32 %s68, 1
        %s365 = smul.addr %s364, 8
        %s366 = scalar_lea.vmem [#allocation6], %s365
        %s367 = smul.addr %s18, 128
        %s368 = sadd.s32 %s19, %s367
        %s369 = smul.addr %s368, 4
        %s370 = scalar_lea.vmem %s1, %s369
        // Predicated region
        $region59: #{custom-call.11} parent=49 // pred_check
          _
        $region60: #{custom-call.11} parent=49 // pred_check_branch
          %372 = sbr.rel (0) target = $region62
        $region61: #{custom-call.11} parent=49 // pred_region
          // Predicated region
          $region63: #{custom-call.11} parent=61 // pred_check
            _
          $region64: #{custom-call.11} parent=61 // pred_check_branch
            %374 = sbr.rel target = $region66
          $region65: #{custom-call.11} parent=61 // pred_region
            // Predicated region
            $region78: #{custom-call.11} parent=65 // pred_check
              _
            $region79: #{custom-call.11} parent=65 // pred_check_branch
              %390 = sbr.rel (0) target = $region81
            $region80: #{custom-call.11} parent=65 // pred_region
              %s392 = ssub.s32 16, 1
              loop: start=0, step=1, limit=1
              $region82: #{custom-call.11} parent=80 // loop_pre_header
                _
              $region83: #{custom-call.11} parent=80 // loop_header
                %s394 = sphi 0, %s398
                %p395 = scmp.ge.s32.totalorder %s394, 1
                %s399 = sphi %s357, %s357
                %s400 = sphi %s370, %s370
              $region84: #{custom-call.11} parent=80 // loop_header_branch
                %397 = sbr.rel (%p395) target = $region88
              $region85: #{custom-call.11} parent=80 // loop_body
                %v401 = vld [vmem:[%s399] sm:%s392]
                %402 = vst [vmem:[%s400] sm:%s392] %v401
              $region86: #{custom-call.11} parent=80 // loop_footer
                %s398 = sadd.s32 1, %s394
              $region87: #{custom-call.11} parent=80 // loop_footer_branch
                %393 = sbr.rel target = $region83
              $region88: #{custom-call.11} parent=80 // loop_exit
                _
            $region81: #{custom-call.11} parent=65 // pred_fallthru
              _
          $region66: #{custom-call.11} parent=61 // pred_fallthru
            _
          // Predicated region
          $region67: #{custom-call.11} parent=61 // pred_check
            _
          $region68: #{custom-call.11} parent=61 // pred_check_branch
            %376 = sbr.rel (0) target = $region70
          $region69: #{custom-call.11} parent=61 // pred_region
            %s378 = ssub.s32 16, 1
            loop: start=0, step=1, limit=1
            $region71: #{custom-call.11} parent=69 // loop_pre_header
              _
            $region72: #{custom-call.11} parent=69 // loop_header
              %s380 = sphi 0, %s384
              %p381 = scmp.ge.s32.totalorder %s380, 1
              %s385 = sphi %s357, %s357
              %s386 = sphi %s370, %s370
            $region73: #{custom-call.11} parent=69 // loop_header_branch
              %383 = sbr.rel (%p381) target = $region77
            $region74: #{custom-call.11} parent=69 // loop_body
              %v387 = vld [vmem:[%s385] sm:%s378]
              %388 = vst [vmem:[%s386] sm:%s378] %v387
            $region75: #{custom-call.11} parent=69 // loop_footer
              %s384 = sadd.s32 1, %s380
            $region76: #{custom-call.11} parent=69 // loop_footer_branch
              %379 = sbr.rel target = $region72
            $region77: #{custom-call.11} parent=69 // loop_exit
              _
          $region70: #{custom-call.11} parent=61 // pred_fallthru
            _
        $region62: #{custom-call.11} parent=49 // pred_fallthru
          _
        %403 = vnop
        // Predicated region
        $region89: #{custom-call.11} parent=49 // pred_check
          %p404 = pneg %p48
        $region90: #{custom-call.11} parent=49 // pred_check_branch
          %406 = sbr.rel (%p404) target = $region92
        $region91: #{custom-call.11} parent=49 // pred_region
          %s407 = sshrl.u32 %s19, 3
          %s409 = ssub.s32 128, 128
          %410 = vsyncadd %s359, %s409
          %s411 = smul.addr %s18, 16
          %s412 = sadd.s32 %s407, %s411
          %s413 = smul.addr %s412, 128
          %s414 = scalar_lea.hbm %s2, %s413
          %s416 = sshll.u32 %s362, 4
          %s417 = int_to_ptr.vmem [resolvable:$true] %s416
          %419 = dma.vmem_to_hbm [thread:$0]  %s417, 128, %s414, %s359
        $region92: #{custom-call.11} parent=49 // pred_fallthru
          _
        // Predicated region
        $region93: #{custom-call.11} parent=49 // pred_check
          %p420 = pneg %p78
        $region94: #{custom-call.11} parent=49 // pred_check_branch
          %422 = sbr.rel (%p420) target = $region96
        $region95: #{custom-call.11} parent=49 // pred_region
          %s423 = sshrl.u32 %s19, 3
          %s424 = smul.addr %s18, 16
          %s425 = sadd.s32 %s423, %s424
          %s426 = smul.addr %s425, 8
          %s427 = scalar_lea.vmem %s3, %s426
          // Predicated region
          $region97: #{custom-call.11} parent=95 // pred_check
            _
          $region98: #{custom-call.11} parent=95 // pred_check_branch
            %429 = sbr.rel (0) target = $region100
          $region99: #{custom-call.11} parent=95 // pred_region
            // Predicated region
            $region101: #{custom-call.11} parent=99 // pred_check
              _
            $region102: #{custom-call.11} parent=99 // pred_check_branch
              %431 = sbr.rel (0) target = $region104
            $region103: #{custom-call.11} parent=99 // pred_region
              // Predicated region
              $region116: #{custom-call.11} parent=103 // pred_check
                _
              $region117: #{custom-call.11} parent=103 // pred_check_branch
                %447 = sbr.rel (0) target = $region119
              $region118: #{custom-call.11} parent=103 // pred_region
                loop: start=0, step=1, limit=1
                $region120: #{custom-call.11} parent=118 // loop_pre_header
                  _
                $region121: #{custom-call.11} parent=118 // loop_header
                  %s449 = sphi 0, %s453
                  %p450 = scmp.ge.s32.totalorder %s449, 1
                  %s454 = sphi %s366, %s366
                  %s455 = sphi %s427, %s427
                $region122: #{custom-call.11} parent=118 // loop_header_branch
                  %452 = sbr.rel (%p450) target = $region126
                $region123: #{custom-call.11} parent=118 // loop_body
                  %v456 = vld [vmem:[%s454] sm:$0xff]
                  %457 = vst [vmem:[%s455] sm:$0xff] %v456
                $region124: #{custom-call.11} parent=118 // loop_footer
                  %s453 = sadd.s32 1, %s449
                $region125: #{custom-call.11} parent=118 // loop_footer_branch
                  %448 = sbr.rel target = $region121
                $region126: #{custom-call.11} parent=118 // loop_exit
                  _
              $region119: #{custom-call.11} parent=103 // pred_fallthru
                _
              // Predicated region
              $region127: #{custom-call.11} parent=103 // pred_check
                _
              $region128: #{custom-call.11} parent=103 // pred_check_branch
                %459 = sbr.rel target = $region130
              $region129: #{custom-call.11} parent=103 // pred_region
                _
              $region130: #{custom-call.11} parent=103 // pred_fallthru
                _
            $region104: #{custom-call.11} parent=99 // pred_fallthru
              _
            // Predicated region
            $region105: #{custom-call.11} parent=99 // pred_check
              _
            $region106: #{custom-call.11} parent=99 // pred_check_branch
              %433 = sbr.rel target = $region108
            $region107: #{custom-call.11} parent=99 // pred_region
              %s435 = ssub.s32 256, 1
              loop: start=0, step=1, limit=1
              $region109: #{custom-call.11} parent=107 // loop_pre_header
                _
              $region110: #{custom-call.11} parent=107 // loop_header
                %s437 = sphi 0, %s441
                %p438 = scmp.ge.s32.totalorder %s437, 1
                %s442 = sphi %s366, %s366
                %s443 = sphi %s427, %s427
              $region111: #{custom-call.11} parent=107 // loop_header_branch
                %440 = sbr.rel (%p438) target = $region115
              $region112: #{custom-call.11} parent=107 // loop_body
                %v444 = vld [vmem:[%s442] sm:%s435]
                %445 = vst [vmem:[%s443] sm:%s435] %v444
              $region113: #{custom-call.11} parent=107 // loop_footer
                %s441 = sadd.s32 1, %s437
              $region114: #{custom-call.11} parent=107 // loop_footer_branch
                %436 = sbr.rel target = $region110
              $region115: #{custom-call.11} parent=107 // loop_exit
                _
            $region108: #{custom-call.11} parent=99 // pred_fallthru
              _
          $region100: #{custom-call.11} parent=95 // pred_fallthru
            _
          %460 = vnop
        $region96: #{custom-call.11} parent=49 // pred_fallthru
          _
      $region50: #{custom-call.11} parent=5 // pred_fallthru
        _
      %p461 = scmp.le.s32.totalorder 2, %s9
      // Predicated region
      $region131: #{custom-call.11} parent=5 // pred_check
        %p462 = pneg %p461
      $region132: #{custom-call.11} parent=5 // pred_check_branch
        %464 = sbr.rel (%p462) target = $region134
      $region133: #{custom-call.11} parent=5 // pred_region
        %s465 = ssub.s32 %s9, 2
        %s466 = sand.u32 %s15, 1
        %s467 = sand.u32 %s15, 1
        %s468 = smul.addr %s467, 4
        %s469 = scalar_lea.vmem [#allocation3], %s468
        // Predicated region
        $region135: #{custom-call.11} parent=133 // pred_check
          %p470 = pneg %p54
        $region136: #{custom-call.11} parent=133 // pred_check_branch
          %472 = sbr.rel (%p470) target = $region138
        $region137: #{custom-call.11} parent=133 // pred_region
          %s473 = sand.u32 %s39, 1
          %s474 = scalar_lea.sflag [#allocation5], %s473
          %s475 = sand.u32 %s39, 1
          %s476 = smul.addr %s475, 8
          %s477 = scalar_lea.vmem [#allocation4], %s476
          %478 = dma.done %s474, 128
        $region138: #{custom-call.11} parent=133 // pred_fallthru
          _
        // Predicated region
        $region139: #{custom-call.11} parent=133 // pred_check
          %p479 = pneg %p84
        $region140: #{custom-call.11} parent=133 // pred_check_branch
          %481 = sbr.rel (%p479) target = $region142
        $region141: #{custom-call.11} parent=133 // pred_region
          %s482 = sand.u32 %s69, 1
          %s483 = sand.u32 %s69, 1
          %s484 = smul.addr %s483, 8
          %s485 = scalar_lea.vmem [#allocation6], %s484
        $region142: #{custom-call.11} parent=133 // pred_fallthru
          _
      $region134: #{custom-call.11} parent=5 // pred_fallthru
        _
    $region6: #{custom-call.11} parent=1 // loop_footer
      %s13 = sadd.s32 1, %s9
    $region7: #{custom-call.11} parent=1 // loop_footer_branch
      %8 = sbr.rel target = $region3
    $region8: #{custom-call.11} parent=1 // loop_exit
      _
    %486 = vsyncpa [#allocation5], 1
    %s487 = scalar_lea.sflag [#allocation5], 1
    %488 = vsyncpa %s487, 1

// kernel: custom-call.13
$region0: #{custom-call.13}
  %s0 = inlined_call_operand.vmem [shape: f32[2,128,1,4,4], index: 0, kind: input, shape index: {}]
  %s1 = inlined_call_operand.vmem [shape: f32[2,128,1,4,4], index: 1, kind: output, shape index: {}]
  $region1: #{custom-call.13} parent=0
    #allocation0 [shape = 'u8[16384]{0}', space=vmem, size = 0x4000, scoped, tag = 'operand span for operand 0']
    #allocation1 [shape = 'u8[16384]{0}', space=vmem, size = 0x4000, scoped, tag = 'packed  for operand 0']
    #allocation2 [shape = 'u8[16384]{0}', space=vmem, size = 0x4000, scoped, tag = 'operand span for operand 1']
    #allocation3 [shape = 'u8[16384]{0}', space=vmem, size = 0x4000, scoped, tag = 'packed  for operand 1']
    loop: start=0, step=1, limit=4
    $region2: #{custom-call.13} parent=1 // loop_pre_header
      _
    $region3: #{custom-call.13} parent=1 // loop_header
      %s3 = sphi 0, %s7
      %p4 = scmp.ge.s32.totalorder %s3, 4
      %s10 = sphi 0, %s43
      %s11 = sphi 0, %s39
      %s12 = sphi 0, %s35
      %s13 = sphi 0, %s31
      %s14 = sphi 0, %s27
      %s15 = sphi 0, %s10
      %s16 = sphi 0, %s11
      %s17 = sphi 0, %s12
      %s18 = sphi 0, %s13
      %s19 = sphi 0, %s14
      %s20 = sphi 0, %s15
      %s21 = sphi 0, %s16
      %s22 = sphi 0, %s17
      %s23 = sphi 0, %s18
      %s24 = sphi 0, %s19
    $region4: #{custom-call.13} parent=1 // loop_header_branch
      %6 = sbr.rel (%p4) target = $region8
    $region5: #{custom-call.13} parent=1 // loop_body
      %s8 = ssub.s32 %s3, 1
      %s9 = ssub.s32 %s3, 2
      %s25 = sadd.s32 1, %s14
      %p26 = scmp.ge.s32.totalorder %s25, 1
      %s27 = scalar_select %p26, 0, %s25
      %s28 = sadd.s32 1, %s13
      %s29 = scalar_select %p26, %s28, %s13
      %p30 = scmp.ge.s32.totalorder %s29, 1
      %s31 = scalar_select %p30, 0, %s29
      %s32 = sadd.s32 1, %s12
      %s33 = scalar_select %p30, %s32, %s12
      %p34 = scmp.ge.s32.totalorder %s33, 1
      %s35 = scalar_select %p34, 0, %s33
      %s36 = sadd.s32 1, %s11
      %s37 = scalar_select %p34, %s36, %s11
      %p38 = scmp.ge.s32.totalorder %s37, 1
      %s39 = scalar_select %p38, 0, %s37
      %s40 = sadd.s32 1, %s10
      %s41 = scalar_select %p38, %s40, %s10
      %p42 = scmp.ge.s32.totalorder %s41, 2
      %s43 = scalar_select %p42, 0, %s41
      %p44 = scmp.le.s32.totalorder 1, %s3
      %p45 = scmp.lt.s32.totalorder %s3, 3
      %p46 = pnand %p44, %p45
      %p47 = pneg %p46
      // Predicated region
      $region9: #{custom-call.13} parent=5 // pred_check
        _
      $region10: #{custom-call.13} parent=5 // pred_check_branch
        %49 = sbr.rel (%p46) target = $region12
      $region11: #{custom-call.13} parent=5 // pred_region
        %s50 = ssub.s32 %s3, 1
      $region12: #{custom-call.13} parent=5 // pred_fallthru
        _
      %p51 = scmp.lt.s32.totalorder %s3, 2
      // Predicated region
      $region13: #{custom-call.13} parent=5 // pred_check
        %p52 = pneg %p51
      $region14: #{custom-call.13} parent=5 // pred_check_branch
        %54 = sbr.rel (%p52) target = $region16
      $region15: #{custom-call.13} parent=5 // pred_region
        %s55 = sand.u32 %s3, 1
        %s56 = sand.u32 %s3, 1
        %s57 = smul.addr %s56, 16
        %s58 = scalar_lea.vmem [#allocation1], %s57
        %s59 = sadd.s32 %s14, %s13
        %s60 = sadd.s32 %s59, %s12
        %s61 = smul.addr %s11, 4
        %s62 = sadd.s32 %s60, %s61
        %s63 = smul.addr %s10, 4
        %s64 = sadd.s32 %s62, %s63
        %s65 = smul.addr %s64, 4
        %s66 = scalar_lea.vmem %s0, %s65
        // Predicated region
        $region17: #{custom-call.13} parent=15 // pred_check
          _
        $region18: #{custom-call.13} parent=15 // pred_check_branch
          %68 = sbr.rel (0) target = $region20
        $region19: #{custom-call.13} parent=15 // pred_region
          // Predicated region
          $region21: #{custom-call.13} parent=19 // pred_check
            _
          $region22: #{custom-call.13} parent=19 // pred_check_branch
            %70 = sbr.rel target = $region24
          $region23: #{custom-call.13} parent=19 // pred_region
            // Predicated region
            $region36: #{custom-call.13} parent=23 // pred_check
              _
            $region37: #{custom-call.13} parent=23 // pred_check_branch
              %92 = sbr.rel (0) target = $region39
            $region38: #{custom-call.13} parent=23 // pred_region
              loop: start=0, step=1, limit=1
              $region40: #{custom-call.13} parent=38 // loop_pre_header
                _
              $region41: #{custom-call.13} parent=38 // loop_header
                %s94 = sphi 0, %s98
                %p95 = scmp.ge.s32.totalorder %s94, 1
                %s99 = sphi %s66, %s66
                %s100 = sphi %s58, %s58
              $region42: #{custom-call.13} parent=38 // loop_header_branch
                %97 = sbr.rel (%p95) target = $region46
              $region43: #{custom-call.13} parent=38 // loop_body
                _
              $region44: #{custom-call.13} parent=38 // loop_footer
                %s98 = sadd.s32 1, %s94
              $region45: #{custom-call.13} parent=38 // loop_footer_branch
                %93 = sbr.rel target = $region41
              $region46: #{custom-call.13} parent=38 // loop_exit
                _
              %s102 = ssub.s32 16, 1
              loop: start=0, step=1, limit=1
              $region47: #{custom-call.13} parent=38 // loop_pre_header
                _
              $region48: #{custom-call.13} parent=38 // loop_header
                %s104 = sphi 0, %s108
                %p105 = scmp.ge.s32.totalorder %s104, 1
                %s109 = sphi %s66, %s66
                %s110 = sphi %s58, %s58
              $region49: #{custom-call.13} parent=38 // loop_header_branch
                %107 = sbr.rel (%p105) target = $region53
              $region50: #{custom-call.13} parent=38 // loop_body
                %v111 = vld [vmem:[%s109] sm:%s102]
                %112 = vst [vmem:[%s110] sm:%s102] %v111
                %v113 = vld [vmem:[%s109 + $0x4] sm:%s102]
                %114 = vst [vmem:[%s110 + $0x4] sm:%s102] %v113
                %v115 = vld [vmem:[%s109 + $0x8] sm:%s102]
                %116 = vst [vmem:[%s110 + $0x8] sm:%s102] %v115
                %v117 = vld [vmem:[%s109 + $0xc] sm:%s102]
                %118 = vst [vmem:[%s110 + $0xc] sm:%s102] %v117
              $region51: #{custom-call.13} parent=38 // loop_footer
                %s108 = sadd.s32 1, %s104
              $region52: #{custom-call.13} parent=38 // loop_footer_branch
                %103 = sbr.rel target = $region48
              $region53: #{custom-call.13} parent=38 // loop_exit
                _
            $region39: #{custom-call.13} parent=23 // pred_fallthru
              _
          $region24: #{custom-call.13} parent=19 // pred_fallthru
            _
          // Predicated region
          $region25: #{custom-call.13} parent=19 // pred_check
            _
          $region26: #{custom-call.13} parent=19 // pred_check_branch
            %72 = sbr.rel (0) target = $region28
          $region27: #{custom-call.13} parent=19 // pred_region
            %s74 = ssub.s32 16, 1
            loop: start=0, step=1, limit=1
            $region29: #{custom-call.13} parent=27 // loop_pre_header
              _
            $region30: #{custom-call.13} parent=27 // loop_header
              %s76 = sphi 0, %s80
              %p77 = scmp.ge.s32.totalorder %s76, 1
              %s81 = sphi %s66, %s66
              %s82 = sphi %s58, %s58
            $region31: #{custom-call.13} parent=27 // loop_header_branch
              %79 = sbr.rel (%p77) target = $region35
            $region32: #{custom-call.13} parent=27 // loop_body
              %v83 = vld [vmem:[%s81] sm:%s74]
              %84 = vst [vmem:[%s82] sm:%s74] %v83
              %v85 = vld [vmem:[%s81 + $0x4] sm:%s74]
              %86 = vst [vmem:[%s82 + $0x4] sm:%s74] %v85
              %v87 = vld [vmem:[%s81 + $0x8] sm:%s74]
              %88 = vst [vmem:[%s82 + $0x8] sm:%s74] %v87
              %v89 = vld [vmem:[%s81 + $0xc] sm:%s74]
              %90 = vst [vmem:[%s82 + $0xc] sm:%s74] %v89
            $region33: #{custom-call.13} parent=27 // loop_footer
              %s80 = sadd.s32 1, %s76
            $region34: #{custom-call.13} parent=27 // loop_footer_branch
              %75 = sbr.rel target = $region30
            $region35: #{custom-call.13} parent=27 // loop_exit
              _
          $region28: #{custom-call.13} parent=19 // pred_fallthru
            _
        $region20: #{custom-call.13} parent=15 // pred_fallthru
          _
        %119 = vnop
      $region16: #{custom-call.13} parent=5 // pred_fallthru
        _
      %p120 = scmp.le.s32.totalorder 1, %s3
      %p121 = scmp.lt.s32.totalorder %s3, 3
      %p122 = pnand %p120, %p121
      %p123 = pneg %p122
      // Predicated region
      $region54: #{custom-call.13} parent=5 // pred_check
        _
      $region55: #{custom-call.13} parent=5 // pred_check_branch
        %125 = sbr.rel (%p122) target = $region57
      $region56: #{custom-call.13} parent=5 // pred_region
        #allocation4 [shape = 'f32[4,8,128]{2,1,0}', space=vmem, size = 0x4000, scoped, tag = 'rescaled input a']
        #allocation5 [shape = 'f32[8,128]{1,0}', space=vmem, size = 0x1000, scoped, tag = 'row diag scales']
        %s126 = ssub.s32 %s3, 1
        %s127 = sand.u32 %s8, 1
        %s128 = sand.u32 %s8, 1
        %s129 = smul.addr %s128, 16
        %s130 = scalar_lea.vmem [#allocation1], %s129
        %s131 = sand.u32 %s8, 1
        %s132 = sand.u32 %s8, 1
        %s133 = smul.addr %s132, 16
        %s134 = scalar_lea.vmem [#allocation1], %s133
        %s135 = sand.u32 %s8, 1
        %s136 = sand.u32 %s8, 1
        %s137 = smul.addr %s136, 16
        %s138 = scalar_lea.vmem [#allocation3], %s137
        %s140 = sshll.u32 1, 4
        %s141 = ssub.s32 %s140, 1
        %s142 = smul.addr 4, 3
        %s143 = scalar_lea.vmem %s134, %s142 [#allocation1]
        %v144 = vld [vmem:[%s143] sm:%s141]
        %s145 = scalar_lea.vmem [#allocation0], 24
        %146 = vst [vmem:[%s145] sm:%s141] %v144
        %s147 = smul.addr 4, 2
        %s148 = scalar_lea.vmem %s134, %s147 [#allocation1]
        %v149 = vld [vmem:[%s148] sm:%s141]
        %s150 = scalar_lea.vmem [#allocation0], 16
        %151 = vst [vmem:[%s150] sm:%s141] %v149
        %s152 = scalar_lea.vmem %s134, 4 [#allocation1]
        %v153 = vld [vmem:[%s152] sm:%s141]
        %s154 = scalar_lea.vmem [#allocation0], 8
        %155 = vst [vmem:[%s154] sm:%s141] %v153
        %v156 = vld [vmem:[%s134] sm:%s141]
        %157 = vst [vmem:[#allocation0] sm:%s141] %v156
        loop: start=0, step=1, limit=4
        $region58: #{custom-call.13} parent=56 // loop_pre_header
          _
        $region59: #{custom-call.13} parent=56 // loop_header
          %s159 = sphi 0, %s163
          %p160 = scmp.ge.s32.totalorder %s159, 4
        $region60: #{custom-call.13} parent=56 // loop_header_branch
          %162 = sbr.rel (%p160) target = $region64
        $region61: #{custom-call.13} parent=56 // loop_body
          %s164 = smul.addr %s159, 8
          %s165 = sadd.s32 %s159, %s164
          %s166 = scalar_lea.vmem [#allocation0], %s165
          %v167 = vld [vmem:[%s166] ss:$0 sm:$0xff]
          %s168 = scalar_lea.vmem [#allocation5], %s159
          %169 = vst [vmem:[%s168] sm:$0x1] %v167
          %s170 = smul.addr %s159, 8
          %s171 = scalar_lea.vmem [#allocation0], %s170
          %s172 = scalar_lea.vmem [#allocation4], %s170
          %v173 = vld [vmem:[%s171] sm:$0xff]
          %v174 = vlaneseq
          %v175 = vshrl.u32 %v174, 7
          %v177 = vstv %s159
          %vm178 = vcmp.ge.s32.totalorder %v177, %v175
          %vm179 = vcmp.lt.s32.totalorder %v175, 4
          %vm180 = vmand %vm178, %vm179
          %v181 = vsel %vm180, %v173, 0.0
          %v182 = vrcp.pop %v167
          %v183 = vmul.f32 %v181, %v182
          %v184 = vxor.u32 %v183, 2147483648
          %185 = vst [vmem:[%s172] sm:$0xff] %v184
        $region62: #{custom-call.13} parent=56 // loop_footer
          %s163 = sadd.s32 1, %s159
        $region63: #{custom-call.13} parent=56 // loop_footer_branch
          %158 = sbr.rel target = $region59
        $region64: #{custom-call.13} parent=56 // loop_exit
          _
        loop: start=0, step=1, limit=4
        $region65: #{custom-call.13} parent=56 // loop_pre_header
          _
        $region66: #{custom-call.13} parent=56 // loop_header
          %s187 = sphi 0, %s191
          %p188 = scmp.ge.s32.totalorder %s187, 4
        $region67: #{custom-call.13} parent=56 // loop_header_branch
          %190 = sbr.rel (%p188) target = $region71
        $region68: #{custom-call.13} parent=56 // loop_body
          %v192 = vstv %s187
          %v193 = vlaneseq
          %v194 = vshrl.u32 %v193, 7
          %vm196 = vcmp.eq.s32.totalorder %v192, %v194
          %s197 = smul.addr %s187, 8
          %s198 = scalar_lea.vmem [#allocation2], %s197
          %v199 = vsel %vm196, -1.0, 0.0
          %200 = vst [vmem:[%s198] sm:$0xff] %v199
        $region69: #{custom-call.13} parent=56 // loop_footer
          %s191 = sadd.s32 1, %s187
        $region70: #{custom-call.13} parent=56 // loop_footer_branch
          %186 = sbr.rel target = $region66
        $region71: #{custom-call.13} parent=56 // loop_exit
          _
        %201 = vst [vmem:[#allocation2] sm:$0x1] 1.0
        loop: start=1, step=1, limit=4
        $region72: #{custom-call.13} parent=56 // loop_pre_header
          _
        $region73: #{custom-call.13} parent=56 // loop_header
          %s203 = sphi 1, %s207
          %p204 = scmp.ge.s32.totalorder %s203, 4
        $region74: #{custom-call.13} parent=56 // loop_header_branch
          %206 = sbr.rel (%p204) target = $region78
        $region75: #{custom-call.13} parent=56 // loop_body
          %s208 = smul.addr %s203, 8
          %s209 = scalar_lea.vmem [#allocation4], %s208
          %v210 = vld [vmem:[%s209] sm:$0xff]
          %v211 = vld [vmem:[#allocation2] sm:$0xff]
          %v212 = vmul.f32 %v210, %v211
          %s213 = scalar_lea.vmem [#allocation2], %s203
          %v214 = vrot.slane %v212, 4
          %v215 = vadd.f32 %v212, %v214
          %v216 = vrot.slane %v215, 2
          %v217 = vadd.f32 %v215, %v216
          %v218 = vrot.slane %v217, 1
          %v219 = vadd.f32 %v217, %v218
          %220 = vst [vmem:[%s213] sm:$0x1] %v219
          %s221 = smul.addr %s203, 8
          %s222 = scalar_lea.vmem [#allocation4], %s221
          %v223 = vld [vmem:[%s222] sm:$0xff]
          %s224 = scalar_lea.vmem [#allocation2], 8
          %v225 = vld [vmem:[%s224] sm:$0xff]
          %v226 = vmul.f32 %v223, %v225
          %s227 = sadd.s32 %s203, 8
          %s228 = scalar_lea.vmem [#allocation2], %s227
          %v229 = vrot.slane %v226, 4
          %v230 = vadd.f32 %v226, %v229
          %v231 = vrot.slane %v230, 2
          %v232 = vadd.f32 %v230, %v231
          %v233 = vrot.slane %v232, 1
          %v234 = vadd.f32 %v232, %v233
          %235 = vst [vmem:[%s228] sm:$0x1] %v234
          %s236 = smul.addr %s203, 8
          %s237 = scalar_lea.vmem [#allocation4], %s236
          %v238 = vld [vmem:[%s237] sm:$0xff]
          %s239 = scalar_lea.vmem [#allocation2], 16
          %v240 = vld [vmem:[%s239] sm:$0xff]
          %v241 = vmul.f32 %v238, %v240
          %s242 = sadd.s32 %s203, 16
          %s243 = scalar_lea.vmem [#allocation2], %s242
          %v244 = vrot.slane %v241, 4
          %v245 = vadd.f32 %v241, %v244
          %v246 = vrot.slane %v245, 2
          %v247 = vadd.f32 %v245, %v246
          %v248 = vrot.slane %v247, 1
          %v249 = vadd.f32 %v247, %v248
          %250 = vst [vmem:[%s243] sm:$0x1] %v249
          %s251 = smul.addr %s203, 8
          %s252 = scalar_lea.vmem [#allocation4], %s251
          %v253 = vld [vmem:[%s252] sm:$0xff]
          %s254 = scalar_lea.vmem [#allocation2], 24
          %v255 = vld [vmem:[%s254] sm:$0xff]
          %v256 = vmul.f32 %v253, %v255
          %s257 = sadd.s32 %s203, 24
          %s258 = scalar_lea.vmem [#allocation2], %s257
          %v259 = vrot.slane %v256, 4
          %v260 = vadd.f32 %v256, %v259
          %v261 = vrot.slane %v260, 2
          %v262 = vadd.f32 %v260, %v261
          %v263 = vrot.slane %v262, 1
          %v264 = vadd.f32 %v262, %v263
          %265 = vst [vmem:[%s258] sm:$0x1] %v264
        $region76: #{custom-call.13} parent=56 // loop_footer
          %s207 = sadd.s32 1, %s203
        $region77: #{custom-call.13} parent=56 // loop_footer_branch
          %202 = sbr.rel target = $region73
        $region78: #{custom-call.13} parent=56 // loop_exit
          _
        loop: start=0, step=1, limit=4
        $region79: #{custom-call.13} parent=56 // loop_pre_header
          _
        $region80: #{custom-call.13} parent=56 // loop_header
          %s267 = sphi 0, %s271
          %p268 = scmp.ge.s32.totalorder %s267, 4
        $region81: #{custom-call.13} parent=56 // loop_header_branch
          %270 = sbr.rel (%p268) target = $region85
        $region82: #{custom-call.13} parent=56 // loop_body
          %s272 = scalar_lea.vmem [#allocation5], %s267
          %v273 = vld [vmem:[%s272] ss:$0 sm:$0xff]
          %s274 = smul.addr %s267, 8
          %s275 = scalar_lea.vmem [#allocation2], %s274
          %v276 = vld [vmem:[%s275] sm:$0xff]
          %v277 = vrcp.pop %v273
          %v278 = vmul.f32 %v276, %v277
          %vm279 = vweird.f32 %v273
          %v280 = vsel %vm279, %v276, %v278
          %281 = vst [vmem:[%s275] sm:$0xff] %v280
        $region83: #{custom-call.13} parent=56 // loop_footer
          %s271 = sadd.s32 1, %s267
        $region84: #{custom-call.13} parent=56 // loop_footer_branch
          %266 = sbr.rel target = $region80
        $region85: #{custom-call.13} parent=56 // loop_exit
          _
        %s283 = sshll.u32 1, 4
        %s284 = ssub.s32 %s283, 1
        %v286 = vld [vmem:[#allocation2] sm:%s284]
        %s287 = sshll.u32 1, 4
        %s288 = ssub.s32 %s287, 1
        %289 = vst [vmem:[%s138] sm:%s288] %v286
        %s290 = scalar_lea.vmem [#allocation2], 8
        %v291 = vld [vmem:[%s290] sm:%s284]
        %s292 = sshll.u32 1, 4
        %s293 = ssub.s32 %s292, 1
        %s294 = scalar_lea.vmem %s138, 4 [#allocation3]
        %295 = vst [vmem:[%s294] sm:%s293] %v291
        %s296 = scalar_lea.vmem [#allocation2], 16
        %v297 = vld [vmem:[%s296] sm:%s284]
        %s298 = sshll.u32 1, 4
        %s299 = ssub.s32 %s298, 1
        %s300 = smul.addr 4, 2
        %s301 = scalar_lea.vmem %s138, %s300 [#allocation3]
        %302 = vst [vmem:[%s301] sm:%s299] %v297
        %s303 = scalar_lea.vmem [#allocation2], 24
        %v304 = vld [vmem:[%s303] sm:%s284]
        %s305 = sshll.u32 1, 4
        %s306 = ssub.s32 %s305, 1
        %s307 = smul.addr 4, 3
        %s308 = scalar_lea.vmem %s138, %s307 [#allocation3]
        %309 = vst [vmem:[%s308] sm:%s306] %v304
        %s310 = sand.u32 %s8, 1
        %s311 = sand.u32 %s8, 1
        %s312 = smul.addr %s311, 16
        %s313 = scalar_lea.vmem [#allocation3], %s312
        %s314 = sadd.s32 %s19, %s18
        %s315 = sadd.s32 %s314, %s17
        %s316 = smul.addr %s16, 4
        %s317 = sadd.s32 %s315, %s316
        %s318 = smul.addr %s15, 4
        %s319 = sadd.s32 %s317, %s318
        %s320 = smul.addr %s319, 4
        %s321 = scalar_lea.vmem %s1, %s320
        // Predicated region
        $region86: #{custom-call.13} parent=56 // pred_check
          _
        $region87: #{custom-call.13} parent=56 // pred_check_branch
          %323 = sbr.rel (0) target = $region89
        $region88: #{custom-call.13} parent=56 // pred_region
          // Predicated region
          $region90: #{custom-call.13} parent=88 // pred_check
            _
          $region91: #{custom-call.13} parent=88 // pred_check_branch
            %325 = sbr.rel target = $region93
          $region92: #{custom-call.13} parent=88 // pred_region
            // Predicated region
            $region105: #{custom-call.13} parent=92 // pred_check
              _
            $region106: #{custom-call.13} parent=92 // pred_check_branch
              %347 = sbr.rel (0) target = $region108
            $region107: #{custom-call.13} parent=92 // pred_region
              loop: start=0, step=1, limit=1
              $region109: #{custom-call.13} parent=107 // loop_pre_header
                _
              $region110: #{custom-call.13} parent=107 // loop_header
                %s349 = sphi 0, %s353
                %p350 = scmp.ge.s32.totalorder %s349, 1
                %s354 = sphi %s313, %s313
                %s355 = sphi %s321, %s321
              $region111: #{custom-call.13} parent=107 // loop_header_branch
                %352 = sbr.rel (%p350) target = $region115
              $region112: #{custom-call.13} parent=107 // loop_body
                _
              $region113: #{custom-call.13} parent=107 // loop_footer
                %s353 = sadd.s32 1, %s349
              $region114: #{custom-call.13} parent=107 // loop_footer_branch
                %348 = sbr.rel target = $region110
              $region115: #{custom-call.13} parent=107 // loop_exit
                _
              %s357 = ssub.s32 16, 1
              loop: start=0, step=1, limit=1
              $region116: #{custom-call.13} parent=107 // loop_pre_header
                _
              $region117: #{custom-call.13} parent=107 // loop_header
                %s359 = sphi 0, %s363
                %p360 = scmp.ge.s32.totalorder %s359, 1
                %s364 = sphi %s313, %s313
                %s365 = sphi %s321, %s321
              $region118: #{custom-call.13} parent=107 // loop_header_branch
                %362 = sbr.rel (%p360) target = $region122
              $region119: #{custom-call.13} parent=107 // loop_body
                %v366 = vld [vmem:[%s364] sm:%s357]
                %367 = vst [vmem:[%s365] sm:%s357] %v366
                %v368 = vld [vmem:[%s364 + $0x4] sm:%s357]
                %369 = vst [vmem:[%s365 + $0x4] sm:%s357] %v368
                %v370 = vld [vmem:[%s364 + $0x8] sm:%s357]
                %371 = vst [vmem:[%s365 + $0x8] sm:%s357] %v370
                %v372 = vld [vmem:[%s364 + $0xc] sm:%s357]
                %373 = vst [vmem:[%s365 + $0xc] sm:%s357] %v372
              $region120: #{custom-call.13} parent=107 // loop_footer
                %s363 = sadd.s32 1, %s359
              $region121: #{custom-call.13} parent=107 // loop_footer_branch
                %358 = sbr.rel target = $region117
              $region122: #{custom-call.13} parent=107 // loop_exit
                _
            $region108: #{custom-call.13} parent=92 // pred_fallthru
              _
          $region93: #{custom-call.13} parent=88 // pred_fallthru
            _
          // Predicated region
          $region94: #{custom-call.13} parent=88 // pred_check
            _
          $region95: #{custom-call.13} parent=88 // pred_check_branch
            %327 = sbr.rel (0) target = $region97
          $region96: #{custom-call.13} parent=88 // pred_region
            %s329 = ssub.s32 16, 1
            loop: start=0, step=1, limit=1
            $region98: #{custom-call.13} parent=96 // loop_pre_header
              _
            $region99: #{custom-call.13} parent=96 // loop_header
              %s331 = sphi 0, %s335
              %p332 = scmp.ge.s32.totalorder %s331, 1
              %s336 = sphi %s313, %s313
              %s337 = sphi %s321, %s321
            $region100: #{custom-call.13} parent=96 // loop_header_branch
              %334 = sbr.rel (%p332) target = $region104
            $region101: #{custom-call.13} parent=96 // loop_body
              %v338 = vld [vmem:[%s336] sm:%s329]
              %339 = vst [vmem:[%s337] sm:%s329] %v338
              %v340 = vld [vmem:[%s336 + $0x4] sm:%s329]
              %341 = vst [vmem:[%s337 + $0x4] sm:%s329] %v340
              %v342 = vld [vmem:[%s336 + $0x8] sm:%s329]
              %343 = vst [vmem:[%s337 + $0x8] sm:%s329] %v342
              %v344 = vld [vmem:[%s336 + $0xc] sm:%s329]
              %345 = vst [vmem:[%s337 + $0xc] sm:%s329] %v344
            $region102: #{custom-call.13} parent=96 // loop_footer
              %s335 = sadd.s32 1, %s331
            $region103: #{custom-call.13} parent=96 // loop_footer_branch
              %330 = sbr.rel target = $region99
            $region104: #{custom-call.13} parent=96 // loop_exit
              _
          $region97: #{custom-call.13} parent=88 // pred_fallthru
            _
        $region89: #{custom-call.13} parent=56 // pred_fallthru
          _
        %374 = vnop
      $region57: #{custom-call.13} parent=5 // pred_fallthru
        _
      %p375 = scmp.le.s32.totalorder 2, %s3
      // Predicated region
      $region123: #{custom-call.13} parent=5 // pred_check
        %p376 = pneg %p375
      $region124: #{custom-call.13} parent=5 // pred_check_branch
        %378 = sbr.rel (%p376) target = $region126
      $region125: #{custom-call.13} parent=5 // pred_region
        %s379 = ssub.s32 %s3, 2
        %s380 = sand.u32 %s9, 1
        %s381 = sand.u32 %s9, 1
        %s382 = smul.addr %s381, 16
        %s383 = scalar_lea.vmem [#allocation3], %s382
      $region126: #{custom-call.13} parent=5 // pred_fallthru
        _
    $region6: #{custom-call.13} parent=1 // loop_footer
      %s7 = sadd.s32 1, %s3
    $region7: #{custom-call.13} parent=1 // loop_footer_branch
      %2 = sbr.rel target = $region3
    $region8: #{custom-call.13} parent=1 // loop_exit
      _

// kernel: forward_train.2
$region0: #{forward_train.2}
  #allocation0 [shape = 'u32[]', space=smem, size = 0x4, offset = 0x4, fixed_abs, tag = 'smem constant byte address 0x4 - core index']
  #allocation1 [shape = 'u32[144,128]{1,0:T(1,128)}', space=vmem, size = 0x12000, scoped, tag = 'internal scratch']
  %s0 = inlined_call_operand.vmem [shape: f32[2,2,2,3,128], index: 0, kind: input, shape index: {}]
  %s1 = inlined_call_operand.vmem [shape: f32[2,2,2,2,128], index: 1, kind: output, shape index: {}]
  %s2 = sld [smem:[#allocation0]]
  $region41: #{forward_train.2} parent=0
    _
  %s4 = ssub.s32 1, %s2
  %s5 = scalar_select 0, %s4, %s2
  loop: start=0, step=1, limit=4
  $region2: #{forward_train.2} parent=0 // loop_pre_header
    _
  $region3: #{forward_train.2} parent=0 // loop_header
    %s7 = sphi 0, %s11
    %p8 = scmp.ge.s32.totalorder %s7, 4
    %s14 = sphi 0, %s26
    %s15 = sphi 0, %s22
    %s16 = sphi 0, %s14
    %s17 = sphi 0, %s15
    %s18 = sphi 0, %s16
    %s19 = sphi 0, %s17
    %s31 = sphi 0, %s33
    %s34 = sphi 0, %s31
    %s35 = sphi 0, %s34
    %s51 = sphi 0, %s35
    %s57 = sphi 0, %s59
    %s60 = sphi 0, %s57
    %s61 = sphi 0, %s60
    %s77 = sphi 0, %s61
  $region4: #{forward_train.2} parent=0 // loop_header_branch
    %10 = sbr.rel (%p8) target = $region8
  $region5: #{forward_train.2} parent=0 // loop_body
    %s12 = ssub.s32 %s7, 1
    %s13 = ssub.s32 %s7, 2
    %s20 = sadd.s32 1, %s15
    %p21 = scmp.ge.s32.totalorder %s20, 1
    %s22 = scalar_select %p21, 0, %s20
    %s23 = sadd.s32 1, %s14
    %s24 = scalar_select %p21, %s23, %s14
    %p25 = scmp.ge.s32.totalorder %s24, 2
    %s26 = scalar_select %p25, 0, %s24
    %s27 = ssub.s32 %s14, %s26
    %s28 = ssub.s32 %s15, %s22
    %s29 = sor.u32 %s27, %s28
    %p30 = scmp.eq.s32.totalorder %s29, 0
    %s32 = sadd.s32 %s31, 1
    %s33 = scalar_select %p30, %s31, %s32
    %p36 = pneg %p30
    %p37 = scmp.eq.s32.totalorder %s7, 1
    %p38 = por %p36, %p37
    %p39 = scmp.ne.s32.totalorder %s31, %s34
    %p40 = scmp.eq.s32.totalorder %s7, 0
    %p41 = por %p39, %p40
    %p42 = scmp.ne.s32.totalorder %s31, %s34
    %p43 = scmp.eq.s32.totalorder %s12, 1
    %p44 = por %p42, %p43
    %p45 = scmp.ne.s32.totalorder %s34, %s35
    %p46 = scmp.eq.s32.totalorder %s12, 0
    %p47 = por %p45, %p46
    %p48 = scmp.ne.s32.totalorder %s34, %s35
    %p49 = scmp.eq.s32.totalorder %s13, 1
    %p50 = por %p48, %p49
    %p52 = scmp.ne.s32.totalorder %s35, %s51
    %p53 = scmp.eq.s32.totalorder %s13, 0
    %p54 = por %p52, %p53
    %s55 = ssub.s32 %s14, %s26
    %p56 = scmp.eq.s32.totalorder %s55, 0
    %s58 = sadd.s32 %s57, 1
    %s59 = scalar_select %p56, %s57, %s58
    %p62 = pneg %p56
    %p63 = scmp.eq.s32.totalorder %s7, 1
    %p64 = por %p62, %p63
    %p65 = scmp.ne.s32.totalorder %s57, %s60
    %p66 = scmp.eq.s32.totalorder %s7, 0
    %p67 = por %p65, %p66
    %p68 = scmp.ne.s32.totalorder %s57, %s60
    %p69 = scmp.eq.s32.totalorder %s12, 1
    %p70 = por %p68, %p69
    %p71 = scmp.ne.s32.totalorder %s60, %s61
    %p72 = scmp.eq.s32.totalorder %s12, 0
    %p73 = por %p71, %p72
    %p74 = scmp.ne.s32.totalorder %s60, %s61
    %p75 = scmp.eq.s32.totalorder %s13, 1
    %p76 = por %p74, %p75
    %p78 = scmp.ne.s32.totalorder %s61, %s77
    %p79 = scmp.eq.s32.totalorder %s13, 0
    %p80 = por %p78, %p79
    %p81 = scmp.le.s32.totalorder 1, %s7
    %p82 = scmp.lt.s32.totalorder %s7, 3
    %p83 = pnand %p81, %p82
    %p84 = pneg %p83
    // Predicated region
    $region9: #{forward_train.2} parent=5 // pred_check
      _
    $region10: #{forward_train.2} parent=5 // pred_check_branch
      %86 = sbr.rel (%p83) target = $region12
    $region11: #{forward_train.2} parent=5 // pred_region
      %s87 = ssub.s32 %s7, 1
    $region12: #{forward_train.2} parent=5 // pred_fallthru
      _
    %p88 = scmp.lt.s32.totalorder %s7, 2
    // Predicated region
    $region13: #{forward_train.2} parent=5 // pred_check
      %p89 = pneg %p88
    $region14: #{forward_train.2} parent=5 // pred_check_branch
      %91 = sbr.rel (%p89) target = $region16
    $region15: #{forward_train.2} parent=5 // pred_region
      // Predicated region
      $region17: #{forward_train.2} parent=15 // pred_check
        %p92 = pneg %p41
      $region18: #{forward_train.2} parent=15 // pred_check_branch
        %94 = sbr.rel (%p92) target = $region20
      $region19: #{forward_train.2} parent=15 // pred_region
        %p95 = scmp.lt.s32.totalorder %s14, 1
        %s96 = scalar_select %p95, %s14, 1
        %p97 = scmp.lt.s32.totalorder %s15, 0
        %s98 = scalar_select %p97, %s15, 0
        %s99 = smul.addr %s96, 4
        %s100 = sadd.s32 %s98, %s99
        %s101 = smul.addr %s100, 4
        %s102 = scalar_lea.vmem %s0, %s101
      $region20: #{forward_train.2} parent=15 // pred_fallthru
        _
    $region16: #{forward_train.2} parent=5 // pred_fallthru
      _
    %p103 = scmp.le.s32.totalorder 1, %s7
    %p104 = scmp.lt.s32.totalorder %s7, 3
    %p105 = pnand %p103, %p104
    %p106 = pneg %p105
    // Predicated region
    $region21: #{forward_train.2} parent=5 // pred_check
      _
    $region22: #{forward_train.2} parent=5 // pred_check_branch
      %108 = sbr.rel (%p105) target = $region24
    $region23: #{forward_train.2} parent=5 // pred_region
      %s109 = ssub.s32 %s7, 1
      %p110 = scmp.lt.s32.totalorder %s16, 1
      %s111 = scalar_select %p110, %s16, 1
      %p112 = scmp.lt.s32.totalorder %s17, 0
      %s113 = scalar_select %p112, %s17, 0
      %s114 = smul.addr %s111, 4
      %s115 = sadd.s32 %s113, %s114
      %s116 = smul.addr %s115, 4
      %s117 = scalar_lea.vmem %s0, %s116
      %p118 = pneg %p47
      %p119 = pneg %p44
      %p120 = pneg %p73
      %p121 = pneg %p70
      %p122 = scmp.lt.s32.totalorder %s16, 1
      %s123 = scalar_select %p122, %s16, 1
      %s124 = smul.addr %s123, 4
      %s125 = smul.addr %s124, 2
      %s126 = scalar_lea.vmem %s1, %s125
      %p127 = scmp.lt.s32.totalorder %s16, 1
      %s128 = scalar_select %p127, %s16, 1
      %p129 = scmp.lt.s32.totalorder %s17, 0
      %s130 = scalar_select %p129, %s17, 0
      %s131 = smul.addr %s128, 4
      %s132 = sadd.s32 %s130, %s131
      %s133 = smul.addr %s132, 4
      %s134 = scalar_lea.vmem %s0, %s133
      %p135 = scmp.lt.s32.totalorder %s16, 1
      %s136 = scalar_select %p135, %s16, 1
      %s137 = smul.addr %s136, 4
      %s138 = smul.addr %s137, 2
      %s139 = scalar_lea.vmem %s1, %s138
      %p140 = scmp.eq.s32.totalorder %s17, 0
      // Predicated region
      $region25: #{forward_train.2} parent=23 // pred_check
        %p141 = pneg %p140
      $region26: #{forward_train.2} parent=23 // pred_check_branch
        %143 = sbr.rel (%p141) target = $region28
      $region27: #{forward_train.2} parent=23 // pred_region
        %144 = vst [vmem:[%s139] sm:$0x3] 0.0
        %145 = vst [vmem:[%s139 + $0x2] sm:$0x3] 0.0
        %146 = vst [vmem:[%s139 + $0x4] sm:$0x3] 0.0
        %147 = vst [vmem:[%s139 + $0x6] sm:$0x3] 0.0
      $region28: #{forward_train.2} parent=23 // pred_fallthru
        _
      %v148 = vld [vmem:[%s134] sm:$0x7]
      %v149 = vld [vmem:[%s134 + $0x4] sm:$0x7]
      %v150 = vld [vmem:[%s134 + $0x8] sm:$0x7]
      %v151 = vld [vmem:[%s134 + $0xc] sm:$0x7]
      %v152 = vmul.f32 %v148, %v148
      %v153 = vmul.f32 %v148, %v149
      %v154 = vmul.f32 %v149, %v149
      %v155 = vmul.f32 %v150, %v150
      %v156 = vmul.f32 %v150, %v151
      %v157 = vmul.f32 %v151, %v151
      %v158 = vadd.f32 %v152, %v155
      %v159 = vadd.f32 %v153, %v156
      %v160 = vadd.f32 %v154, %v157
      %vm161 = vcmask 1042432
      %v162 = vsel %vm161, %v158, 0.0
      %v163 = vrot.slane %v162, 4
      %v164 = vadd.f32 %v162, %v163
      %v165 = vrot.slane %v164, 2
      %v166 = vadd.f32 %v164, %v165
      %v167 = vrot.slane %v166, 1
      %v168 = vadd.f32 %v166, %v167
      %v169 = vsel %vm161, %v159, 0.0
      %v170 = vrot.slane %v169, 4
      %v171 = vadd.f32 %v169, %v170
      %v172 = vrot.slane %v171, 2
      %v173 = vadd.f32 %v171, %v172
      %v174 = vrot.slane %v173, 1
      %v175 = vadd.f32 %v173, %v174
      %v176 = vsel %vm161, %v160, 0.0
      %v177 = vrot.slane %v176, 4
      %v178 = vadd.f32 %v176, %v177
      %v179 = vrot.slane %v178, 2
      %v180 = vadd.f32 %v178, %v179
      %v181 = vrot.slane %v180, 1
      %v182 = vadd.f32 %v180, %v181
      %v183 = vmul.f32 %v150, %v148
      %v184 = vmul.f32 %v150, %v149
      %v185 = vmul.f32 %v151, %v148
      %v186 = vmul.f32 %v151, %v149
      %v187 = vsub.f32 %v183, %v183
      %v188 = vsub.f32 %v184, %v185
      %v189 = vsub.f32 %v185, %v184
      %v190 = vsub.f32 %v186, %v186
      %v191 = vsel %vm161, %v187, 0.0
      %v192 = vrot.slane %v191, 4
      %v193 = vadd.f32 %v191, %v192
      %v194 = vrot.slane %v193, 2
      %v195 = vadd.f32 %v193, %v194
      %v196 = vrot.slane %v195, 1
      %v197 = vadd.f32 %v195, %v196
      %v198 = vsel %vm161, %v188, 0.0
      %v199 = vrot.slane %v198, 4
      %v200 = vadd.f32 %v198, %v199
      %v201 = vrot.slane %v200, 2
      %v202 = vadd.f32 %v200, %v201
      %v203 = vrot.slane %v202, 1
      %v204 = vadd.f32 %v202, %v203
      %v205 = vsel %vm161, %v189, 0.0
      %v206 = vrot.slane %v205, 4
      %v207 = vadd.f32 %v205, %v206
      %v208 = vrot.slane %v207, 2
      %v209 = vadd.f32 %v207, %v208
      %v210 = vrot.slane %v209, 1
      %v211 = vadd.f32 %v209, %v210
      %v212 = vsel %vm161, %v190, 0.0
      %v213 = vrot.slane %v212, 4
      %v214 = vadd.f32 %v212, %v213
      %v215 = vrot.slane %v214, 2
      %v216 = vadd.f32 %v214, %v215
      %v217 = vrot.slane %v216, 1
      %v218 = vadd.f32 %v216, %v217
      %v219 = vld [vmem:[%s139] sm:$0x3]
      %v220 = vld [vmem:[%s139 + $0x2] sm:$0x3]
      %v221 = vmul.f32 %v168, 0.33333334
      %v222 = vmul.f32 %v175, 0.33333334
      %v223 = vmul.f32 %v182, 0.33333334
      %vm227 = vcmask 1041409
      %v228 = vsel %vm227, %v222, %v221
      %v229 = vsel %vm227, %v223, %v222
      %v232 = vadd.f32 %v219, %v228
      %v233 = vadd.f32 %v220, %v229
      %234 = vst [vmem:[%s139] sm:$0x3] %v232
      %235 = vst [vmem:[%s139 + $0x2] sm:$0x3] %v233
      %s236 = scalar_lea.vmem %s139, 4
      %v237 = vld [vmem:[%s236] sm:$0x3]
      %v238 = vld [vmem:[%s236 + $0x2] sm:$0x3]
      %v239 = vmul.f32 %v197, 0.33333334
      %v240 = vmul.f32 %v204, 0.33333334
      %v241 = vmul.f32 %v211, 0.33333334
      %v242 = vmul.f32 %v218, 0.33333334
      %v247 = vsel %vm227, %v240, %v239
      %v248 = vsel %vm227, %v242, %v241
      %v251 = vadd.f32 %v237, %v247
      %v252 = vadd.f32 %v238, %v248
      %253 = vst [vmem:[%s236] sm:$0x3] %v251
      %254 = vst [vmem:[%s236 + $0x2] sm:$0x3] %v252
      %p255 = scmp.lt.s32.totalorder %s16, 1
      %s256 = scalar_select %p255, %s16, 1
      %s257 = smul.addr %s256, 4
      %s258 = smul.addr %s257, 2
      %s259 = scalar_lea.vmem %s1, %s258
      // Predicated region
      $region29: #{forward_train.2} parent=23 // pred_check
        %p260 = pneg %p70
      $region30: #{forward_train.2} parent=23 // pred_check_branch
        %262 = sbr.rel (%p260) target = $region32
      $region31: #{forward_train.2} parent=23 // pred_region
        _
      $region32: #{forward_train.2} parent=23 // pred_fallthru
        _
    $region24: #{forward_train.2} parent=5 // pred_fallthru
      _
    %p263 = scmp.le.s32.totalorder 2, %s7
    // Predicated region
    $region33: #{forward_train.2} parent=5 // pred_check
      %p264 = pneg %p263
    $region34: #{forward_train.2} parent=5 // pred_check_branch
      %266 = sbr.rel (%p264) target = $region36
    $region35: #{forward_train.2} parent=5 // pred_region
      %s267 = ssub.s32 %s7, 2
      // Predicated region
      $region37: #{forward_train.2} parent=35 // pred_check
        %p268 = pneg %p76
      $region38: #{forward_train.2} parent=35 // pred_check_branch
        %270 = sbr.rel (%p268) target = $region40
      $region39: #{forward_train.2} parent=35 // pred_region
        %p271 = scmp.lt.s32.totalorder %s18, 1
        %s272 = scalar_select %p271, %s18, 1
        %s273 = smul.addr %s272, 4
        %s274 = smul.addr %s273, 2
        %s275 = scalar_lea.vmem %s1, %s274
      $region40: #{forward_train.2} parent=35 // pred_fallthru
        _
    $region36: #{forward_train.2} parent=5 // pred_fallthru
      _
  $region6: #{forward_train.2} parent=0 // loop_footer
    %s11 = sadd.s32 1, %s7
  $region7: #{forward_train.2} parent=0 // loop_footer_branch
    %6 = sbr.rel target = $region3
  $region8: #{forward_train.2} parent=0 // loop_exit
    _

// kernel: custom-call.12
$region0: #{custom-call.12}
  %s0 = inlined_call_operand.vmem [shape: f32[2,128,1,4,4], index: 0, kind: input, shape index: {}]
  %s1 = inlined_call_operand.vmem [shape: f32[2,128,1,4,4], index: 1, kind: output, shape index: {}]
  $region1: #{custom-call.12} parent=0
    #allocation0 [shape = 'u8[16384]{0}', space=vmem, size = 0x4000, scoped, tag = 'operand span for operand 0']
    #allocation1 [shape = 'u8[16384]{0}', space=vmem, size = 0x4000, scoped, tag = 'packed  for operand 0']
    #allocation2 [shape = 'u8[16384]{0}', space=vmem, size = 0x4000, scoped, tag = 'operand span for operand 1']
    #allocation3 [shape = 'u8[16384]{0}', space=vmem, size = 0x4000, scoped, tag = 'packed  for operand 1']
    loop: start=0, step=1, limit=4
    $region2: #{custom-call.12} parent=1 // loop_pre_header
      _
    $region3: #{custom-call.12} parent=1 // loop_header
      %s3 = sphi 0, %s7
      %p4 = scmp.ge.s32.totalorder %s3, 4
      %s10 = sphi 0, %s43
      %s11 = sphi 0, %s39
      %s12 = sphi 0, %s35
      %s13 = sphi 0, %s31
      %s14 = sphi 0, %s27
      %s15 = sphi 0, %s10
      %s16 = sphi 0, %s11
      %s17 = sphi 0, %s12
      %s18 = sphi 0, %s13
      %s19 = sphi 0, %s14
      %s20 = sphi 0, %s15
      %s21 = sphi 0, %s16
      %s22 = sphi 0, %s17
      %s23 = sphi 0, %s18
      %s24 = sphi 0, %s19
    $region4: #{custom-call.12} parent=1 // loop_header_branch
      %6 = sbr.rel (%p4) target = $region8
    $region5: #{custom-call.12} parent=1 // loop_body
      %s8 = ssub.s32 %s3, 1
      %s9 = ssub.s32 %s3, 2
      %s25 = sadd.s32 1, %s14
      %p26 = scmp.ge.s32.totalorder %s25, 1
      %s27 = scalar_select %p26, 0, %s25
      %s28 = sadd.s32 1, %s13
      %s29 = scalar_select %p26, %s28, %s13
      %p30 = scmp.ge.s32.totalorder %s29, 1
      %s31 = scalar_select %p30, 0, %s29
      %s32 = sadd.s32 1, %s12
      %s33 = scalar_select %p30, %s32, %s12
      %p34 = scmp.ge.s32.totalorder %s33, 1
      %s35 = scalar_select %p34, 0, %s33
      %s36 = sadd.s32 1, %s11
      %s37 = scalar_select %p34, %s36, %s11
      %p38 = scmp.ge.s32.totalorder %s37, 1
      %s39 = scalar_select %p38, 0, %s37
      %s40 = sadd.s32 1, %s10
      %s41 = scalar_select %p38, %s40, %s10
      %p42 = scmp.ge.s32.totalorder %s41, 2
      %s43 = scalar_select %p42, 0, %s41
      %p44 = scmp.le.s32.totalorder 1, %s3
      %p45 = scmp.lt.s32.totalorder %s3, 3
      %p46 = pnand %p44, %p45
      %p47 = pneg %p46
      // Predicated region
      $region9: #{custom-call.12} parent=5 // pred_check
        _
      $region10: #{custom-call.12} parent=5 // pred_check_branch
        %49 = sbr.rel (%p46) target = $region12
      $region11: #{custom-call.12} parent=5 // pred_region
        %s50 = ssub.s32 %s3, 1
      $region12: #{custom-call.12} parent=5 // pred_fallthru
        _
      %p51 = scmp.lt.s32.totalorder %s3, 2
      // Predicated region
      $region13: #{custom-call.12} parent=5 // pred_check
        %p52 = pneg %p51
      $region14: #{custom-call.12} parent=5 // pred_check_branch
        %54 = sbr.rel (%p52) target = $region16
      $region15: #{custom-call.12} parent=5 // pred_region
        %s55 = sand.u32 %s3, 1
        %s56 = sand.u32 %s3, 1
        %s57 = smul.addr %s56, 16
        %s58 = scalar_lea.vmem [#allocation1], %s57
        %s59 = sadd.s32 %s14, %s13
        %s60 = sadd.s32 %s59, %s12
        %s61 = smul.addr %s11, 4
        %s62 = sadd.s32 %s60, %s61
        %s63 = smul.addr %s10, 4
        %s64 = sadd.s32 %s62, %s63
        %s65 = smul.addr %s64, 4
        %s66 = scalar_lea.vmem %s0, %s65
        // Predicated region
        $region17: #{custom-call.12} parent=15 // pred_check
          _
        $region18: #{custom-call.12} parent=15 // pred_check_branch
          %68 = sbr.rel (0) target = $region20
        $region19: #{custom-call.12} parent=15 // pred_region
          // Predicated region
          $region21: #{custom-call.12} parent=19 // pred_check
            _
          $region22: #{custom-call.12} parent=19 // pred_check_branch
            %70 = sbr.rel target = $region24
          $region23: #{custom-call.12} parent=19 // pred_region
            // Predicated region
            $region36: #{custom-call.12} parent=23 // pred_check
              _
            $region37: #{custom-call.12} parent=23 // pred_check_branch
              %92 = sbr.rel (0) target = $region39
            $region38: #{custom-call.12} parent=23 // pred_region
              loop: start=0, step=1, limit=1
              $region40: #{custom-call.12} parent=38 // loop_pre_header
                _
              $region41: #{custom-call.12} parent=38 // loop_header
                %s94 = sphi 0, %s98
                %p95 = scmp.ge.s32.totalorder %s94, 1
                %s99 = sphi %s66, %s66
                %s100 = sphi %s58, %s58
              $region42: #{custom-call.12} parent=38 // loop_header_branch
                %97 = sbr.rel (%p95) target = $region46
              $region43: #{custom-call.12} parent=38 // loop_body
                _
              $region44: #{custom-call.12} parent=38 // loop_footer
                %s98 = sadd.s32 1, %s94
              $region45: #{custom-call.12} parent=38 // loop_footer_branch
                %93 = sbr.rel target = $region41
              $region46: #{custom-call.12} parent=38 // loop_exit
                _
              %s102 = ssub.s32 16, 1
              loop: start=0, step=1, limit=1
              $region47: #{custom-call.12} parent=38 // loop_pre_header
                _
              $region48: #{custom-call.12} parent=38 // loop_header
                %s104 = sphi 0, %s108
                %p105 = scmp.ge.s32.totalorder %s104, 1
                %s109 = sphi %s66, %s66
                %s110 = sphi %s58, %s58
              $region49: #{custom-call.12} parent=38 // loop_header_branch
                %107 = sbr.rel (%p105) target = $region53
              $region50: #{custom-call.12} parent=38 // loop_body
                %v111 = vld [vmem:[%s109] sm:%s102]
                %112 = vst [vmem:[%s110] sm:%s102] %v111
                %v113 = vld [vmem:[%s109 + $0x4] sm:%s102]
                %114 = vst [vmem:[%s110 + $0x4] sm:%s102] %v113
                %v115 = vld [vmem:[%s109 + $0x8] sm:%s102]
                %116 = vst [vmem:[%s110 + $0x8] sm:%s102] %v115
                %v117 = vld [vmem:[%s109 + $0xc] sm:%s102]
                %118 = vst [vmem:[%s110 + $0xc] sm:%s102] %v117
              $region51: #{custom-call.12} parent=38 // loop_footer
                %s108 = sadd.s32 1, %s104
              $region52: #{custom-call.12} parent=38 // loop_footer_branch
                %103 = sbr.rel target = $region48
              $region53: #{custom-call.12} parent=38 // loop_exit
                _
            $region39: #{custom-call.12} parent=23 // pred_fallthru
              _
          $region24: #{custom-call.12} parent=19 // pred_fallthru
            _
          // Predicated region
          $region25: #{custom-call.12} parent=19 // pred_check
            _
          $region26: #{custom-call.12} parent=19 // pred_check_branch
            %72 = sbr.rel (0) target = $region28
          $region27: #{custom-call.12} parent=19 // pred_region
            %s74 = ssub.s32 16, 1
            loop: start=0, step=1, limit=1
            $region29: #{custom-call.12} parent=27 // loop_pre_header
              _
            $region30: #{custom-call.12} parent=27 // loop_header
              %s76 = sphi 0, %s80
              %p77 = scmp.ge.s32.totalorder %s76, 1
              %s81 = sphi %s66, %s66
              %s82 = sphi %s58, %s58
            $region31: #{custom-call.12} parent=27 // loop_header_branch
              %79 = sbr.rel (%p77) target = $region35
            $region32: #{custom-call.12} parent=27 // loop_body
              %v83 = vld [vmem:[%s81] sm:%s74]
              %84 = vst [vmem:[%s82] sm:%s74] %v83
              %v85 = vld [vmem:[%s81 + $0x4] sm:%s74]
              %86 = vst [vmem:[%s82 + $0x4] sm:%s74] %v85
              %v87 = vld [vmem:[%s81 + $0x8] sm:%s74]
              %88 = vst [vmem:[%s82 + $0x8] sm:%s74] %v87
              %v89 = vld [vmem:[%s81 + $0xc] sm:%s74]
              %90 = vst [vmem:[%s82 + $0xc] sm:%s74] %v89
            $region33: #{custom-call.12} parent=27 // loop_footer
              %s80 = sadd.s32 1, %s76
            $region34: #{custom-call.12} parent=27 // loop_footer_branch
              %75 = sbr.rel target = $region30
            $region35: #{custom-call.12} parent=27 // loop_exit
              _
          $region28: #{custom-call.12} parent=19 // pred_fallthru
            _
        $region20: #{custom-call.12} parent=15 // pred_fallthru
          _
        %119 = vnop
      $region16: #{custom-call.12} parent=5 // pred_fallthru
        _
      %p120 = scmp.le.s32.totalorder 1, %s3
      %p121 = scmp.lt.s32.totalorder %s3, 3
      %p122 = pnand %p120, %p121
      %p123 = pneg %p122
      // Predicated region
      $region54: #{custom-call.12} parent=5 // pred_check
        _
      $region55: #{custom-call.12} parent=5 // pred_check_branch
        %125 = sbr.rel (%p122) target = $region57
      $region56: #{custom-call.12} parent=5 // pred_region
        #allocation4 [shape = 'f32[4,8,128]{2,1,0}', space=vmem, size = 0x4000, scoped, tag = 'rescaled input a']
        #allocation5 [shape = 'f32[8,128]{1,0}', space=vmem, size = 0x1000, scoped, tag = 'row diag scales']
        %s126 = ssub.s32 %s3, 1
        %s127 = sand.u32 %s8, 1
        %s128 = sand.u32 %s8, 1
        %s129 = smul.addr %s128, 16
        %s130 = scalar_lea.vmem [#allocation1], %s129
        %s131 = sand.u32 %s8, 1
        %s132 = sand.u32 %s8, 1
        %s133 = smul.addr %s132, 16
        %s134 = scalar_lea.vmem [#allocation1], %s133
        %s135 = sand.u32 %s8, 1
        %s136 = sand.u32 %s8, 1
        %s137 = smul.addr %s136, 16
        %s138 = scalar_lea.vmem [#allocation3], %s137
        %s140 = sshll.u32 1, 4
        %s141 = ssub.s32 %s140, 1
        %s142 = smul.addr 4, 3
        %s143 = scalar_lea.vmem %s134, %s142 [#allocation1]
        %v144 = vld [vmem:[%s143] sm:%s141]
        %s145 = scalar_lea.vmem [#allocation0], 24
        %146 = vst [vmem:[%s145] sm:%s141] %v144
        %s147 = smul.addr 4, 2
        %s148 = scalar_lea.vmem %s134, %s147 [#allocation1]
        %v149 = vld [vmem:[%s148] sm:%s141]
        %s150 = scalar_lea.vmem [#allocation0], 16
        %151 = vst [vmem:[%s150] sm:%s141] %v149
        %s152 = scalar_lea.vmem %s134, 4 [#allocation1]
        %v153 = vld [vmem:[%s152] sm:%s141]
        %s154 = scalar_lea.vmem [#allocation0], 8
        %155 = vst [vmem:[%s154] sm:%s141] %v153
        %v156 = vld [vmem:[%s134] sm:%s141]
        %157 = vst [vmem:[#allocation0] sm:%s141] %v156
        loop: start=0, step=1, limit=4
        $region58: #{custom-call.12} parent=56 // loop_pre_header
          _
        $region59: #{custom-call.12} parent=56 // loop_header
          %s159 = sphi 0, %s163
          %p160 = scmp.ge.s32.totalorder %s159, 4
        $region60: #{custom-call.12} parent=56 // loop_header_branch
          %162 = sbr.rel (%p160) target = $region64
        $region61: #{custom-call.12} parent=56 // loop_body
          %s164 = smul.addr %s159, 8
          %s165 = sadd.s32 %s159, %s164
          %s166 = scalar_lea.vmem [#allocation0], %s165
          %v167 = vld [vmem:[%s166] ss:$0 sm:$0xff]
          %s168 = scalar_lea.vmem [#allocation5], %s159
          %169 = vst [vmem:[%s168] sm:$0x1] %v167
          %s170 = smul.addr %s159, 8
          %s171 = scalar_lea.vmem [#allocation0], %s170
          %s172 = scalar_lea.vmem [#allocation4], %s170
          %v173 = vld [vmem:[%s171] sm:$0xff]
          %v174 = vlaneseq
          %v175 = vshrl.u32 %v174, 7
          %v177 = vstv %s159
          %vm178 = vcmp.le.s32.totalorder %v177, %v175
          %vm179 = vcmp.lt.s32.totalorder %v175, 4
          %vm180 = vmand %vm178, %vm179
          %v181 = vsel %vm180, %v173, 0.0
          %v182 = vrcp.pop %v167
          %v183 = vmul.f32 %v181, %v182
          %v184 = vxor.u32 %v183, 2147483648
          %185 = vst [vmem:[%s172] sm:$0xff] %v184
        $region62: #{custom-call.12} parent=56 // loop_footer
          %s163 = sadd.s32 1, %s159
        $region63: #{custom-call.12} parent=56 // loop_footer_branch
          %158 = sbr.rel target = $region59
        $region64: #{custom-call.12} parent=56 // loop_exit
          _
        loop: start=0, step=1, limit=4
        $region65: #{custom-call.12} parent=56 // loop_pre_header
          _
        $region66: #{custom-call.12} parent=56 // loop_header
          %s187 = sphi 0, %s191
          %p188 = scmp.ge.s32.totalorder %s187, 4
        $region67: #{custom-call.12} parent=56 // loop_header_branch
          %190 = sbr.rel (%p188) target = $region71
        $region68: #{custom-call.12} parent=56 // loop_body
          %v192 = vstv %s187
          %v193 = vlaneseq
          %v194 = vshrl.u32 %v193, 7
          %vm196 = vcmp.eq.s32.totalorder %v192, %v194
          %s197 = smul.addr %s187, 8
          %s198 = scalar_lea.vmem [#allocation2], %s197
          %v199 = vsel %vm196, -1.0, 0.0
          %200 = vst [vmem:[%s198] sm:$0xff] %v199
        $region69: #{custom-call.12} parent=56 // loop_footer
          %s191 = sadd.s32 1, %s187
        $region70: #{custom-call.12} parent=56 // loop_footer_branch
          %186 = sbr.rel target = $region66
        $region71: #{custom-call.12} parent=56 // loop_exit
          _
        %s201 = scalar_lea.vmem [#allocation2], 27
        %202 = vst [vmem:[%s201] sm:$0x1] 1.0
        loop: start=1, step=1, limit=4
        $region72: #{custom-call.12} parent=56 // loop_pre_header
          _
        $region73: #{custom-call.12} parent=56 // loop_header
          %s204 = sphi 1, %s208
          %p205 = scmp.ge.s32.totalorder %s204, 4
        $region74: #{custom-call.12} parent=56 // loop_header_branch
          %207 = sbr.rel (%p205) target = $region78
        $region75: #{custom-call.12} parent=56 // loop_body
          %s209 = ssub.s32 3, %s204
          %s210 = smul.addr %s209, 8
          %s211 = scalar_lea.vmem [#allocation4], %s210
          %v212 = vld [vmem:[%s211] sm:$0xff]
          %v213 = vld [vmem:[#allocation2] sm:$0xff]
          %v214 = vmul.f32 %v212, %v213
          %s215 = scalar_lea.vmem [#allocation2], %s209
          %v216 = vrot.slane %v214, 4
          %v217 = vadd.f32 %v214, %v216
          %v218 = vrot.slane %v217, 2
          %v219 = vadd.f32 %v217, %v218
          %v220 = vrot.slane %v219, 1
          %v221 = vadd.f32 %v219, %v220
          %222 = vst [vmem:[%s215] sm:$0x1] %v221
          %s223 = smul.addr %s209, 8
          %s224 = scalar_lea.vmem [#allocation4], %s223
          %v225 = vld [vmem:[%s224] sm:$0xff]
          %s226 = scalar_lea.vmem [#allocation2], 8
          %v227 = vld [vmem:[%s226] sm:$0xff]
          %v228 = vmul.f32 %v225, %v227
          %s229 = sadd.s32 %s209, 8
          %s230 = scalar_lea.vmem [#allocation2], %s229
          %v231 = vrot.slane %v228, 4
          %v232 = vadd.f32 %v228, %v231
          %v233 = vrot.slane %v232, 2
          %v234 = vadd.f32 %v232, %v233
          %v235 = vrot.slane %v234, 1
          %v236 = vadd.f32 %v234, %v235
          %237 = vst [vmem:[%s230] sm:$0x1] %v236
          %s238 = smul.addr %s209, 8
          %s239 = scalar_lea.vmem [#allocation4], %s238
          %v240 = vld [vmem:[%s239] sm:$0xff]
          %s241 = scalar_lea.vmem [#allocation2], 16
          %v242 = vld [vmem:[%s241] sm:$0xff]
          %v243 = vmul.f32 %v240, %v242
          %s244 = sadd.s32 %s209, 16
          %s245 = scalar_lea.vmem [#allocation2], %s244
          %v246 = vrot.slane %v243, 4
          %v247 = vadd.f32 %v243, %v246
          %v248 = vrot.slane %v247, 2
          %v249 = vadd.f32 %v247, %v248
          %v250 = vrot.slane %v249, 1
          %v251 = vadd.f32 %v249, %v250
          %252 = vst [vmem:[%s245] sm:$0x1] %v251
          %s253 = smul.addr %s209, 8
          %s254 = scalar_lea.vmem [#allocation4], %s253
          %v255 = vld [vmem:[%s254] sm:$0xff]
          %s256 = scalar_lea.vmem [#allocation2], 24
          %v257 = vld [vmem:[%s256] sm:$0xff]
          %v258 = vmul.f32 %v255, %v257
          %s259 = sadd.s32 %s209, 24
          %s260 = scalar_lea.vmem [#allocation2], %s259
          %v261 = vrot.slane %v258, 4
          %v262 = vadd.f32 %v258, %v261
          %v263 = vrot.slane %v262, 2
          %v264 = vadd.f32 %v262, %v263
          %v265 = vrot.slane %v264, 1
          %v266 = vadd.f32 %v264, %v265
          %267 = vst [vmem:[%s260] sm:$0x1] %v266
        $region76: #{custom-call.12} parent=56 // loop_footer
          %s208 = sadd.s32 1, %s204
        $region77: #{custom-call.12} parent=56 // loop_footer_branch
          %203 = sbr.rel target = $region73
        $region78: #{custom-call.12} parent=56 // loop_exit
          _
        loop: start=0, step=1, limit=4
        $region79: #{custom-call.12} parent=56 // loop_pre_header
          _
        $region80: #{custom-call.12} parent=56 // loop_header
          %s269 = sphi 0, %s273
          %p270 = scmp.ge.s32.totalorder %s269, 4
        $region81: #{custom-call.12} parent=56 // loop_header_branch
          %272 = sbr.rel (%p270) target = $region85
        $region82: #{custom-call.12} parent=56 // loop_body
          %s274 = scalar_lea.vmem [#allocation5], %s269
          %v275 = vld [vmem:[%s274] ss:$0 sm:$0xff]
          %s276 = smul.addr %s269, 8
          %s277 = scalar_lea.vmem [#allocation2], %s276
          %v278 = vld [vmem:[%s277] sm:$0xff]
          %v279 = vrcp.pop %v275
          %v280 = vmul.f32 %v278, %v279
          %vm281 = vweird.f32 %v275
          %v282 = vsel %vm281, %v278, %v280
          %283 = vst [vmem:[%s277] sm:$0xff] %v282
        $region83: #{custom-call.12} parent=56 // loop_footer
          %s273 = sadd.s32 1, %s269
        $region84: #{custom-call.12} parent=56 // loop_footer_branch
          %268 = sbr.rel target = $region80
        $region85: #{custom-call.12} parent=56 // loop_exit
          _
        %s285 = sshll.u32 1, 4
        %s286 = ssub.s32 %s285, 1
        %v288 = vld [vmem:[#allocation2] sm:%s286]
        %s289 = sshll.u32 1, 4
        %s290 = ssub.s32 %s289, 1
        %291 = vst [vmem:[%s138] sm:%s290] %v288
        %s292 = scalar_lea.vmem [#allocation2], 8
        %v293 = vld [vmem:[%s292] sm:%s286]
        %s294 = sshll.u32 1, 4
        %s295 = ssub.s32 %s294, 1
        %s296 = scalar_lea.vmem %s138, 4 [#allocation3]
        %297 = vst [vmem:[%s296] sm:%s295] %v293
        %s298 = scalar_lea.vmem [#allocation2], 16
        %v299 = vld [vmem:[%s298] sm:%s286]
        %s300 = sshll.u32 1, 4
        %s301 = ssub.s32 %s300, 1
        %s302 = smul.addr 4, 2
        %s303 = scalar_lea.vmem %s138, %s302 [#allocation3]
        %304 = vst [vmem:[%s303] sm:%s301] %v299
        %s305 = scalar_lea.vmem [#allocation2], 24
        %v306 = vld [vmem:[%s305] sm:%s286]
        %s307 = sshll.u32 1, 4
        %s308 = ssub.s32 %s307, 1
        %s309 = smul.addr 4, 3
        %s310 = scalar_lea.vmem %s138, %s309 [#allocation3]
        %311 = vst [vmem:[%s310] sm:%s308] %v306
        %s312 = sand.u32 %s8, 1
        %s313 = sand.u32 %s8, 1
        %s314 = smul.addr %s313, 16
        %s315 = scalar_lea.vmem [#allocation3], %s314
        %s316 = sadd.s32 %s19, %s18
        %s317 = sadd.s32 %s316, %s17
        %s318 = smul.addr %s16, 4
        %s319 = sadd.s32 %s317, %s318
        %s320 = smul.addr %s15, 4
        %s321 = sadd.s32 %s319, %s320
        %s322 = smul.addr %s321, 4
        %s323 = scalar_lea.vmem %s1, %s322
        // Predicated region
        $region86: #{custom-call.12} parent=56 // pred_check
          _
        $region87: #{custom-call.12} parent=56 // pred_check_branch
          %325 = sbr.rel (0) target = $region89
        $region88: #{custom-call.12} parent=56 // pred_region
          // Predicated region
          $region90: #{custom-call.12} parent=88 // pred_check
            _
          $region91: #{custom-call.12} parent=88 // pred_check_branch
            %327 = sbr.rel target = $region93
          $region92: #{custom-call.12} parent=88 // pred_region
            // Predicated region
            $region105: #{custom-call.12} parent=92 // pred_check
              _
            $region106: #{custom-call.12} parent=92 // pred_check_branch
              %349 = sbr.rel (0) target = $region108
            $region107: #{custom-call.12} parent=92 // pred_region
              loop: start=0, step=1, limit=1
              $region109: #{custom-call.12} parent=107 // loop_pre_header
                _
              $region110: #{custom-call.12} parent=107 // loop_header
                %s351 = sphi 0, %s355
                %p352 = scmp.ge.s32.totalorder %s351, 1
                %s356 = sphi %s315, %s315
                %s357 = sphi %s323, %s323
              $region111: #{custom-call.12} parent=107 // loop_header_branch
                %354 = sbr.rel (%p352) target = $region115
              $region112: #{custom-call.12} parent=107 // loop_body
                _
              $region113: #{custom-call.12} parent=107 // loop_footer
                %s355 = sadd.s32 1, %s351
              $region114: #{custom-call.12} parent=107 // loop_footer_branch
                %350 = sbr.rel target = $region110
              $region115: #{custom-call.12} parent=107 // loop_exit
                _
              %s359 = ssub.s32 16, 1
              loop: start=0, step=1, limit=1
              $region116: #{custom-call.12} parent=107 // loop_pre_header
                _
              $region117: #{custom-call.12} parent=107 // loop_header
                %s361 = sphi 0, %s365
                %p362 = scmp.ge.s32.totalorder %s361, 1
                %s366 = sphi %s315, %s315
                %s367 = sphi %s323, %s323
              $region118: #{custom-call.12} parent=107 // loop_header_branch
                %364 = sbr.rel (%p362) target = $region122
              $region119: #{custom-call.12} parent=107 // loop_body
                %v368 = vld [vmem:[%s366] sm:%s359]
                %369 = vst [vmem:[%s367] sm:%s359] %v368
                %v370 = vld [vmem:[%s366 + $0x4] sm:%s359]
                %371 = vst [vmem:[%s367 + $0x4] sm:%s359] %v370
                %v372 = vld [vmem:[%s366 + $0x8] sm:%s359]
                %373 = vst [vmem:[%s367 + $0x8] sm:%s359] %v372
                %v374 = vld [vmem:[%s366 + $0xc] sm:%s359]
                %375 = vst [vmem:[%s367 + $0xc] sm:%s359] %v374
              $region120: #{custom-call.12} parent=107 // loop_footer
                %s365 = sadd.s32 1, %s361
              $region121: #{custom-call.12} parent=107 // loop_footer_branch
                %360 = sbr.rel target = $region117
              $region122: #{custom-call.12} parent=107 // loop_exit
                _
            $region108: #{custom-call.12} parent=92 // pred_fallthru
              _
          $region93: #{custom-call.12} parent=88 // pred_fallthru
            _
          // Predicated region
          $region94: #{custom-call.12} parent=88 // pred_check
            _
          $region95: #{custom-call.12} parent=88 // pred_check_branch
            %329 = sbr.rel (0) target = $region97
          $region96: #{custom-call.12} parent=88 // pred_region
            %s331 = ssub.s32 16, 1
            loop: start=0, step=1, limit=1
            $region98: #{custom-call.12} parent=96 // loop_pre_header
              _
            $region99: #{custom-call.12} parent=96 // loop_header
              %s333 = sphi 0, %s337
              %p334 = scmp.ge.s32.totalorder %s333, 1
              %s338 = sphi %s315, %s315
              %s339 = sphi %s323, %s323
            $region100: #{custom-call.12} parent=96 // loop_header_branch
              %336 = sbr.rel (%p334) target = $region104
            $region101: #{custom-call.12} parent=96 // loop_body
              %v340 = vld [vmem:[%s338] sm:%s331]
              %341 = vst [vmem:[%s339] sm:%s331] %v340
              %v342 = vld [vmem:[%s338 + $0x4] sm:%s331]
              %343 = vst [vmem:[%s339 + $0x4] sm:%s331] %v342
              %v344 = vld [vmem:[%s338 + $0x8] sm:%s331]
              %345 = vst [vmem:[%s339 + $0x8] sm:%s331] %v344
              %v346 = vld [vmem:[%s338 + $0xc] sm:%s331]
              %347 = vst [vmem:[%s339 + $0xc] sm:%s331] %v346
            $region102: #{custom-call.12} parent=96 // loop_footer
              %s337 = sadd.s32 1, %s333
            $region103: #{custom-call.12} parent=96 // loop_footer_branch
              %332 = sbr.rel target = $region99
            $region104: #{custom-call.12} parent=96 // loop_exit
              _
          $region97: #{custom-call.12} parent=88 // pred_fallthru
            _
        $region89: #{custom-call.12} parent=56 // pred_fallthru
          _
        %376 = vnop
      $region57: #{custom-call.12} parent=5 // pred_fallthru
        _
      %p377 = scmp.le.s32.totalorder 2, %s3
      // Predicated region
      $region123: #{custom-call.12} parent=5 // pred_check
        %p378 = pneg %p377
      $region124: #{custom-call.12} parent=5 // pred_check_branch
        %380 = sbr.rel (%p378) target = $region126
      $region125: #{custom-call.12} parent=5 // pred_region
        %s381 = ssub.s32 %s3, 2
        %s382 = sand.u32 %s9, 1
        %s383 = sand.u32 %s9, 1
        %s384 = smul.addr %s383, 16
        %s385 = scalar_lea.vmem [#allocation3], %s384
      $region126: #{custom-call.12} parent=5 // pred_fallthru
        _
    $region6: #{custom-call.12} parent=1 // loop_footer
      %s7 = sadd.s32 1, %s3
    $region7: #{custom-call.12} parent=1 // loop_footer_branch
      %2 = sbr.rel target = $region3
    $region8: #{custom-call.12} parent=1 // loop_exit
      _

// kernel: forward_train.3
$region0: #{forward_train.3}
  #allocation0 [shape = 'u32[]', space=smem, size = 0x4, offset = 0x4, fixed_abs, tag = 'smem constant byte address 0x4 - core index']
  #allocation1 [shape = 'u32[144,128]{1,0:T(1,128)}', space=vmem, size = 0x12000, scoped, tag = 'internal scratch']
  %s0 = inlined_call_operand.smem [shape: u32[31], index: -1, kind: input, shape index: {}]
  %s1 = sld [smem:[%s0]]
  %s2 = scalar_lea.smem %s0, 1
  %s3 = sld [smem:[%s2]]
  %s4 = scalar_lea.smem %s0, 2
  %s5 = sld [smem:[%s4]]
  %s6 = scalar_lea.smem %s0, 3
  %s7 = sld [smem:[%s6]]
  %s8 = scalar_lea.smem %s0, 4
  %s9 = sld [smem:[%s8]]
  %s10 = scalar_lea.smem %s0, 5
  %s11 = sld [smem:[%s10]]
  %s12 = scalar_lea.smem %s0, 6
  %s13 = sld [smem:[%s12]]
  %s14 = scalar_lea.smem %s0, 7
  %s15 = sld [smem:[%s14]]
  %s16 = scalar_lea.smem %s0, 8
  %s17 = sld [smem:[%s16]]
  %s18 = scalar_lea.smem %s0, 9
  %s19 = sld [smem:[%s18]]
  %s20 = scalar_lea.smem %s0, 10
  %s21 = sld [smem:[%s20]]
  %s22 = scalar_lea.smem %s0, 11
  %s23 = sld [smem:[%s22]]
  %s24 = scalar_lea.smem %s0, 12
  %s25 = sld [smem:[%s24]]
  %s26 = scalar_lea.smem %s0, 13
  %s27 = sld [smem:[%s26]]
  %s28 = scalar_lea.smem %s0, 14
  %s29 = sld [smem:[%s28]]
  %s30 = scalar_lea.smem %s0, 15
  %s31 = sld [smem:[%s30]]
  %s32 = scalar_lea.smem %s0, 16
  %s33 = sld [smem:[%s32]]
  %s34 = scalar_lea.smem %s0, 17
  %s35 = sld [smem:[%s34]]
  %s36 = scalar_lea.smem %s0, 18
  %s37 = sld [smem:[%s36]]
  %s38 = scalar_lea.smem %s0, 19
  %s39 = sld [smem:[%s38]]
  %s40 = scalar_lea.smem %s0, 20
  %s41 = sld [smem:[%s40]]
  %s42 = scalar_lea.smem %s0, 21
  %s43 = sld [smem:[%s42]]
  %s44 = scalar_lea.smem %s0, 22
  %s45 = sld [smem:[%s44]]
  %s46 = scalar_lea.smem %s0, 23
  %s47 = sld [smem:[%s46]]
  %s48 = scalar_lea.smem %s0, 24
  %s49 = sld [smem:[%s48]]
  %s50 = scalar_lea.smem %s0, 25
  %s51 = sld [smem:[%s50]]
  %s52 = scalar_lea.smem %s0, 26
  %s53 = sld [smem:[%s52]]
  %s54 = scalar_lea.smem %s0, 27
  %s55 = sld [smem:[%s54]]
  %s56 = scalar_lea.smem %s0, 28
  %s57 = sld [smem:[%s56]]
  %s58 = scalar_lea.smem %s0, 29
  %s59 = sld [smem:[%s58]]
  %s60 = scalar_lea.smem %s0, 30
  %s61 = sld [smem:[%s60]]
  %62 = xla_tuple %s59, %s61
  %s63 = sld [smem:[#allocation0]]
  $region157: #{forward_train.3} parent=0
    _
  %s65 = ssub.s32 1, %s63
  %s66 = scalar_select 0, %s65, %s63
  loop: start=0, step=1, limit=4
  $region2: #{forward_train.3} parent=0 // loop_pre_header
    _
  $region3: #{forward_train.3} parent=0 // loop_header
    %s68 = sphi 0, %s72
    %p69 = scmp.ge.s32.totalorder %s68, 4
    %s75 = sphi 0, %s87
    %s76 = sphi 0, %s83
    %s77 = sphi 0, %s75
    %s78 = sphi 0, %s76
    %s79 = sphi 0, %s77
    %s80 = sphi 0, %s78
    %s92 = sphi 0, %s94
    %s95 = sphi 0, %s92
    %s96 = sphi 0, %s95
    %s112 = sphi 0, %s96
    %s120 = sphi 0, %s122
    %s123 = sphi 0, %s120
    %s124 = sphi 0, %s123
    %s140 = sphi 0, %s124
    %s146 = sphi 0, %s148
    %s149 = sphi 0, %s146
    %s150 = sphi 0, %s149
    %s166 = sphi 0, %s150
    %s170 = sphi 0, %s170
    %s172 = sphi 0, %s170
    %s173 = sphi 0, %s172
    %s187 = sphi 0, %s173
    %s191 = sphi 0, %s191
    %s193 = sphi 0, %s191
    %s194 = sphi 0, %s193
    %s208 = sphi 0, %s194
    %s212 = sphi 0, %s212
    %s214 = sphi 0, %s212
    %s215 = sphi 0, %s214
    %s229 = sphi 0, %s215
    %s233 = sphi 0, %s233
    %s235 = sphi 0, %s233
    %s236 = sphi 0, %s235
    %s250 = sphi 0, %s236
    %s254 = sphi 0, %s254
    %s256 = sphi 0, %s254
    %s257 = sphi 0, %s256
    %s271 = sphi 0, %s257
    %s275 = sphi 0, %s275
    %s277 = sphi 0, %s275
    %s278 = sphi 0, %s277
    %s292 = sphi 0, %s278
    %s296 = sphi 0, %s296
    %s298 = sphi 0, %s296
    %s299 = sphi 0, %s298
    %s313 = sphi 0, %s299
    %s317 = sphi 0, %s317
    %s319 = sphi 0, %s317
    %s320 = sphi 0, %s319
    %s334 = sphi 0, %s320
    %s338 = sphi 0, %s338
    %s340 = sphi 0, %s338
    %s341 = sphi 0, %s340
    %s355 = sphi 0, %s341
    %s359 = sphi 0, %s359
    %s361 = sphi 0, %s359
    %s362 = sphi 0, %s361
    %s376 = sphi 0, %s362
    %s380 = sphi 0, %s380
    %s382 = sphi 0, %s380
    %s383 = sphi 0, %s382
    %s397 = sphi 0, %s383
    %s401 = sphi 0, %s401
    %s403 = sphi 0, %s401
    %s404 = sphi 0, %s403
    %s418 = sphi 0, %s404
    %s422 = sphi 0, %s422
    %s424 = sphi 0, %s422
    %s425 = sphi 0, %s424
    %s439 = sphi 0, %s425
    %s443 = sphi 0, %s443
    %s445 = sphi 0, %s443
    %s446 = sphi 0, %s445
    %s460 = sphi 0, %s446
    %s464 = sphi 0, %s464
    %s466 = sphi 0, %s464
    %s467 = sphi 0, %s466
    %s481 = sphi 0, %s467
    %s485 = sphi 0, %s485
    %s487 = sphi 0, %s485
    %s488 = sphi 0, %s487
    %s502 = sphi 0, %s488
    %s506 = sphi 0, %s506
    %s508 = sphi 0, %s506
    %s509 = sphi 0, %s508
    %s523 = sphi 0, %s509
    %s527 = sphi 0, %s527
    %s529 = sphi 0, %s527
    %s530 = sphi 0, %s529
    %s544 = sphi 0, %s530
    %s548 = sphi 0, %s548
    %s550 = sphi 0, %s548
    %s551 = sphi 0, %s550
    %s565 = sphi 0, %s551
    %s569 = sphi 0, %s569
    %s571 = sphi 0, %s569
    %s572 = sphi 0, %s571
    %s586 = sphi 0, %s572
    %s590 = sphi 0, %s590
    %s592 = sphi 0, %s590
    %s593 = sphi 0, %s592
    %s607 = sphi 0, %s593
    %s611 = sphi 0, %s611
    %s613 = sphi 0, %s611
    %s614 = sphi 0, %s613
    %s628 = sphi 0, %s614
    %s632 = sphi 0, %s632
    %s634 = sphi 0, %s632
    %s635 = sphi 0, %s634
    %s649 = sphi 0, %s635
    %s653 = sphi 0, %s653
    %s655 = sphi 0, %s653
    %s656 = sphi 0, %s655
    %s670 = sphi 0, %s656
    %s674 = sphi 0, %s674
    %s676 = sphi 0, %s674
    %s677 = sphi 0, %s676
    %s691 = sphi 0, %s677
    %s695 = sphi 0, %s695
    %s697 = sphi 0, %s695
    %s698 = sphi 0, %s697
    %s712 = sphi 0, %s698
    %s720 = sphi 0, %s722
    %s723 = sphi 0, %s720
    %s724 = sphi 0, %s723
    %s740 = sphi 0, %s724
    %s748 = sphi 0, %s750
    %s751 = sphi 0, %s748
    %s752 = sphi 0, %s751
    %s768 = sphi 0, %s752
  $region4: #{forward_train.3} parent=0 // loop_header_branch
    %71 = sbr.rel (%p69) target = $region8
  $region5: #{forward_train.3} parent=0 // loop_body
    %s73 = ssub.s32 %s68, 1
    %s74 = ssub.s32 %s68, 2
    %s81 = sadd.s32 1, %s76
    %p82 = scmp.ge.s32.totalorder %s81, 1
    %s83 = scalar_select %p82, 0, %s81
    %s84 = sadd.s32 1, %s75
    %s85 = scalar_select %p82, %s84, %s75
    %p86 = scmp.ge.s32.totalorder %s85, 2
    %s87 = scalar_select %p86, 0, %s85
    %s88 = ssub.s32 %s75, %s87
    %s89 = ssub.s32 %s76, %s83
    %s90 = sor.u32 %s88, %s89
    %p91 = scmp.eq.s32.totalorder %s90, 0
    %s93 = sadd.s32 %s92, 1
    %s94 = scalar_select %p91, %s92, %s93
    %p97 = pneg %p91
    %p98 = scmp.eq.s32.totalorder %s68, 1
    %p99 = por %p97, %p98
    %p100 = scmp.ne.s32.totalorder %s92, %s95
    %p101 = scmp.eq.s32.totalorder %s68, 0
    %p102 = por %p100, %p101
    %p103 = scmp.ne.s32.totalorder %s92, %s95
    %p104 = scmp.eq.s32.totalorder %s73, 1
    %p105 = por %p103, %p104
    %p106 = scmp.ne.s32.totalorder %s95, %s96
    %p107 = scmp.eq.s32.totalorder %s73, 0
    %p108 = por %p106, %p107
    %p109 = scmp.ne.s32.totalorder %s95, %s96
    %p110 = scmp.eq.s32.totalorder %s74, 1
    %p111 = por %p109, %p110
    %p113 = scmp.ne.s32.totalorder %s96, %s112
    %p114 = scmp.eq.s32.totalorder %s74, 0
    %p115 = por %p113, %p114
    %s116 = ssub.s32 %s75, %s87
    %s117 = ssub.s32 %s76, %s83
    %s118 = sor.u32 %s116, %s117
    %p119 = scmp.eq.s32.totalorder %s118, 0
    %s121 = sadd.s32 %s120, 1
    %s122 = scalar_select %p119, %s120, %s121
    %p125 = pneg %p119
    %p126 = scmp.eq.s32.totalorder %s68, 1
    %p127 = por %p125, %p126
    %p128 = scmp.ne.s32.totalorder %s120, %s123
    %p129 = scmp.eq.s32.totalorder %s68, 0
    %p130 = por %p128, %p129
    %p131 = scmp.ne.s32.totalorder %s120, %s123
    %p132 = scmp.eq.s32.totalorder %s73, 1
    %p133 = por %p131, %p132
    %p134 = scmp.ne.s32.totalorder %s123, %s124
    %p135 = scmp.eq.s32.totalorder %s73, 0
    %p136 = por %p134, %p135
    %p137 = scmp.ne.s32.totalorder %s123, %s124
    %p138 = scmp.eq.s32.totalorder %s74, 1
    %p139 = por %p137, %p138
    %p141 = scmp.ne.s32.totalorder %s124, %s140
    %p142 = scmp.eq.s32.totalorder %s74, 0
    %p143 = por %p141, %p142
    %s144 = ssub.s32 %s75, %s87
    %p145 = scmp.eq.s32.totalorder %s144, 0
    %s147 = sadd.s32 %s146, 1
    %s148 = scalar_select %p145, %s146, %s147
    %p151 = pneg %p145
    %p152 = scmp.eq.s32.totalorder %s68, 1
    %p153 = por %p151, %p152
    %p154 = scmp.ne.s32.totalorder %s146, %s149
    %p155 = scmp.eq.s32.totalorder %s68, 0
    %p156 = por %p154, %p155
    %p157 = scmp.ne.s32.totalorder %s146, %s149
    %p158 = scmp.eq.s32.totalorder %s73, 1
    %p159 = por %p157, %p158
    %p160 = scmp.ne.s32.totalorder %s149, %s150
    %p161 = scmp.eq.s32.totalorder %s73, 0
    %p162 = por %p160, %p161
    %p163 = scmp.ne.s32.totalorder %s149, %s150
    %p164 = scmp.eq.s32.totalorder %s74, 1
    %p165 = por %p163, %p164
    %p167 = scmp.ne.s32.totalorder %s150, %s166
    %p168 = scmp.eq.s32.totalorder %s74, 0
    %p169 = por %p167, %p168
    %s171 = sadd.s32 %s170, 1
    %p174 = scmp.eq.s32.totalorder %s68, 1
    %p175 = scmp.ne.s32.totalorder %s170, %s172
    %p176 = scmp.eq.s32.totalorder %s68, 0
    %p177 = por %p175, %p176
    %p178 = scmp.ne.s32.totalorder %s170, %s172
    %p179 = scmp.eq.s32.totalorder %s73, 1
    %p180 = por %p178, %p179
    %p181 = scmp.ne.s32.totalorder %s172, %s173
    %p182 = scmp.eq.s32.totalorder %s73, 0
    %p183 = por %p181, %p182
    %p184 = scmp.ne.s32.totalorder %s172, %s173
    %p185 = scmp.eq.s32.totalorder %s74, 1
    %p186 = por %p184, %p185
    %p188 = scmp.ne.s32.totalorder %s173, %s187
    %p189 = scmp.eq.s32.totalorder %s74, 0
    %p190 = por %p188, %p189
    %s192 = sadd.s32 %s191, 1
    %p195 = scmp.eq.s32.totalorder %s68, 1
    %p196 = scmp.ne.s32.totalorder %s191, %s193
    %p197 = scmp.eq.s32.totalorder %s68, 0
    %p198 = por %p196, %p197
    %p199 = scmp.ne.s32.totalorder %s191, %s193
    %p200 = scmp.eq.s32.totalorder %s73, 1
    %p201 = por %p199, %p200
    %p202 = scmp.ne.s32.totalorder %s193, %s194
    %p203 = scmp.eq.s32.totalorder %s73, 0
    %p204 = por %p202, %p203
    %p205 = scmp.ne.s32.totalorder %s193, %s194
    %p206 = scmp.eq.s32.totalorder %s74, 1
    %p207 = por %p205, %p206
    %p209 = scmp.ne.s32.totalorder %s194, %s208
    %p210 = scmp.eq.s32.totalorder %s74, 0
    %p211 = por %p209, %p210
    %s213 = sadd.s32 %s212, 1
    %p216 = scmp.eq.s32.totalorder %s68, 1
    %p217 = scmp.ne.s32.totalorder %s212, %s214
    %p218 = scmp.eq.s32.totalorder %s68, 0
    %p219 = por %p217, %p218
    %p220 = scmp.ne.s32.totalorder %s212, %s214
    %p221 = scmp.eq.s32.totalorder %s73, 1
    %p222 = por %p220, %p221
    %p223 = scmp.ne.s32.totalorder %s214, %s215
    %p224 = scmp.eq.s32.totalorder %s73, 0
    %p225 = por %p223, %p224
    %p226 = scmp.ne.s32.totalorder %s214, %s215
    %p227 = scmp.eq.s32.totalorder %s74, 1
    %p228 = por %p226, %p227
    %p230 = scmp.ne.s32.totalorder %s215, %s229
    %p231 = scmp.eq.s32.totalorder %s74, 0
    %p232 = por %p230, %p231
    %s234 = sadd.s32 %s233, 1
    %p237 = scmp.eq.s32.totalorder %s68, 1
    %p238 = scmp.ne.s32.totalorder %s233, %s235
    %p239 = scmp.eq.s32.totalorder %s68, 0
    %p240 = por %p238, %p239
    %p241 = scmp.ne.s32.totalorder %s233, %s235
    %p242 = scmp.eq.s32.totalorder %s73, 1
    %p243 = por %p241, %p242
    %p244 = scmp.ne.s32.totalorder %s235, %s236
    %p245 = scmp.eq.s32.totalorder %s73, 0
    %p246 = por %p244, %p245
    %p247 = scmp.ne.s32.totalorder %s235, %s236
    %p248 = scmp.eq.s32.totalorder %s74, 1
    %p249 = por %p247, %p248
    %p251 = scmp.ne.s32.totalorder %s236, %s250
    %p252 = scmp.eq.s32.totalorder %s74, 0
    %p253 = por %p251, %p252
    %s255 = sadd.s32 %s254, 1
    %p258 = scmp.eq.s32.totalorder %s68, 1
    %p259 = scmp.ne.s32.totalorder %s254, %s256
    %p260 = scmp.eq.s32.totalorder %s68, 0
    %p261 = por %p259, %p260
    %p262 = scmp.ne.s32.totalorder %s254, %s256
    %p263 = scmp.eq.s32.totalorder %s73, 1
    %p264 = por %p262, %p263
    %p265 = scmp.ne.s32.totalorder %s256, %s257
    %p266 = scmp.eq.s32.totalorder %s73, 0
    %p267 = por %p265, %p266
    %p268 = scmp.ne.s32.totalorder %s256, %s257
    %p269 = scmp.eq.s32.totalorder %s74, 1
    %p270 = por %p268, %p269
    %p272 = scmp.ne.s32.totalorder %s257, %s271
    %p273 = scmp.eq.s32.totalorder %s74, 0
    %p274 = por %p272, %p273
    %s276 = sadd.s32 %s275, 1
    %p279 = scmp.eq.s32.totalorder %s68, 1
    %p280 = scmp.ne.s32.totalorder %s275, %s277
    %p281 = scmp.eq.s32.totalorder %s68, 0
    %p282 = por %p280, %p281
    %p283 = scmp.ne.s32.totalorder %s275, %s277
    %p284 = scmp.eq.s32.totalorder %s73, 1
    %p285 = por %p283, %p284
    %p286 = scmp.ne.s32.totalorder %s277, %s278
    %p287 = scmp.eq.s32.totalorder %s73, 0
    %p288 = por %p286, %p287
    %p289 = scmp.ne.s32.totalorder %s277, %s278
    %p290 = scmp.eq.s32.totalorder %s74, 1
    %p291 = por %p289, %p290
    %p293 = scmp.ne.s32.totalorder %s278, %s292
    %p294 = scmp.eq.s32.totalorder %s74, 0
    %p295 = por %p293, %p294
    %s297 = sadd.s32 %s296, 1
    %p300 = scmp.eq.s32.totalorder %s68, 1
    %p301 = scmp.ne.s32.totalorder %s296, %s298
    %p302 = scmp.eq.s32.totalorder %s68, 0
    %p303 = por %p301, %p302
    %p304 = scmp.ne.s32.totalorder %s296, %s298
    %p305 = scmp.eq.s32.totalorder %s73, 1
    %p306 = por %p304, %p305
    %p307 = scmp.ne.s32.totalorder %s298, %s299
    %p308 = scmp.eq.s32.totalorder %s73, 0
    %p309 = por %p307, %p308
    %p310 = scmp.ne.s32.totalorder %s298, %s299
    %p311 = scmp.eq.s32.totalorder %s74, 1
    %p312 = por %p310, %p311
    %p314 = scmp.ne.s32.totalorder %s299, %s313
    %p315 = scmp.eq.s32.totalorder %s74, 0
    %p316 = por %p314, %p315
    %s318 = sadd.s32 %s317, 1
    %p321 = scmp.eq.s32.totalorder %s68, 1
    %p322 = scmp.ne.s32.totalorder %s317, %s319
    %p323 = scmp.eq.s32.totalorder %s68, 0
    %p324 = por %p322, %p323
    %p325 = scmp.ne.s32.totalorder %s317, %s319
    %p326 = scmp.eq.s32.totalorder %s73, 1
    %p327 = por %p325, %p326
    %p328 = scmp.ne.s32.totalorder %s319, %s320
    %p329 = scmp.eq.s32.totalorder %s73, 0
    %p330 = por %p328, %p329
    %p331 = scmp.ne.s32.totalorder %s319, %s320
    %p332 = scmp.eq.s32.totalorder %s74, 1
    %p333 = por %p331, %p332
    %p335 = scmp.ne.s32.totalorder %s320, %s334
    %p336 = scmp.eq.s32.totalorder %s74, 0
    %p337 = por %p335, %p336
    %s339 = sadd.s32 %s338, 1
    %p342 = scmp.eq.s32.totalorder %s68, 1
    %p343 = scmp.ne.s32.totalorder %s338, %s340
    %p344 = scmp.eq.s32.totalorder %s68, 0
    %p345 = por %p343, %p344
    %p346 = scmp.ne.s32.totalorder %s338, %s340
    %p347 = scmp.eq.s32.totalorder %s73, 1
    %p348 = por %p346, %p347
    %p349 = scmp.ne.s32.totalorder %s340, %s341
    %p350 = scmp.eq.s32.totalorder %s73, 0
    %p351 = por %p349, %p350
    %p352 = scmp.ne.s32.totalorder %s340, %s341
    %p353 = scmp.eq.s32.totalorder %s74, 1
    %p354 = por %p352, %p353
    %p356 = scmp.ne.s32.totalorder %s341, %s355
    %p357 = scmp.eq.s32.totalorder %s74, 0
    %p358 = por %p356, %p357
    %s360 = sadd.s32 %s359, 1
    %p363 = scmp.eq.s32.totalorder %s68, 1
    %p364 = scmp.ne.s32.totalorder %s359, %s361
    %p365 = scmp.eq.s32.totalorder %s68, 0
    %p366 = por %p364, %p365
    %p367 = scmp.ne.s32.totalorder %s359, %s361
    %p368 = scmp.eq.s32.totalorder %s73, 1
    %p369 = por %p367, %p368
    %p370 = scmp.ne.s32.totalorder %s361, %s362
    %p371 = scmp.eq.s32.totalorder %s73, 0
    %p372 = por %p370, %p371
    %p373 = scmp.ne.s32.totalorder %s361, %s362
    %p374 = scmp.eq.s32.totalorder %s74, 1
    %p375 = por %p373, %p374
    %p377 = scmp.ne.s32.totalorder %s362, %s376
    %p378 = scmp.eq.s32.totalorder %s74, 0
    %p379 = por %p377, %p378
    %s381 = sadd.s32 %s380, 1
    %p384 = scmp.eq.s32.totalorder %s68, 1
    %p385 = scmp.ne.s32.totalorder %s380, %s382
    %p386 = scmp.eq.s32.totalorder %s68, 0
    %p387 = por %p385, %p386
    %p388 = scmp.ne.s32.totalorder %s380, %s382
    %p389 = scmp.eq.s32.totalorder %s73, 1
    %p390 = por %p388, %p389
    %p391 = scmp.ne.s32.totalorder %s382, %s383
    %p392 = scmp.eq.s32.totalorder %s73, 0
    %p393 = por %p391, %p392
    %p394 = scmp.ne.s32.totalorder %s382, %s383
    %p395 = scmp.eq.s32.totalorder %s74, 1
    %p396 = por %p394, %p395
    %p398 = scmp.ne.s32.totalorder %s383, %s397
    %p399 = scmp.eq.s32.totalorder %s74, 0
    %p400 = por %p398, %p399
    %s402 = sadd.s32 %s401, 1
    %p405 = scmp.eq.s32.totalorder %s68, 1
    %p406 = scmp.ne.s32.totalorder %s401, %s403
    %p407 = scmp.eq.s32.totalorder %s68, 0
    %p408 = por %p406, %p407
    %p409 = scmp.ne.s32.totalorder %s401, %s403
    %p410 = scmp.eq.s32.totalorder %s73, 1
    %p411 = por %p409, %p410
    %p412 = scmp.ne.s32.totalorder %s403, %s404
    %p413 = scmp.eq.s32.totalorder %s73, 0
    %p414 = por %p412, %p413
    %p415 = scmp.ne.s32.totalorder %s403, %s404
    %p416 = scmp.eq.s32.totalorder %s74, 1
    %p417 = por %p415, %p416
    %p419 = scmp.ne.s32.totalorder %s404, %s418
    %p420 = scmp.eq.s32.totalorder %s74, 0
    %p421 = por %p419, %p420
    %s423 = sadd.s32 %s422, 1
    %p426 = scmp.eq.s32.totalorder %s68, 1
    %p427 = scmp.ne.s32.totalorder %s422, %s424
    %p428 = scmp.eq.s32.totalorder %s68, 0
    %p429 = por %p427, %p428
    %p430 = scmp.ne.s32.totalorder %s422, %s424
    %p431 = scmp.eq.s32.totalorder %s73, 1
    %p432 = por %p430, %p431
    %p433 = scmp.ne.s32.totalorder %s424, %s425
    %p434 = scmp.eq.s32.totalorder %s73, 0
    %p435 = por %p433, %p434
    %p436 = scmp.ne.s32.totalorder %s424, %s425
    %p437 = scmp.eq.s32.totalorder %s74, 1
    %p438 = por %p436, %p437
    %p440 = scmp.ne.s32.totalorder %s425, %s439
    %p441 = scmp.eq.s32.totalorder %s74, 0
    %p442 = por %p440, %p441
    %s444 = sadd.s32 %s443, 1
    %p447 = scmp.eq.s32.totalorder %s68, 1
    %p448 = scmp.ne.s32.totalorder %s443, %s445
    %p449 = scmp.eq.s32.totalorder %s68, 0
    %p450 = por %p448, %p449
    %p451 = scmp.ne.s32.totalorder %s443, %s445
    %p452 = scmp.eq.s32.totalorder %s73, 1
    %p453 = por %p451, %p452
    %p454 = scmp.ne.s32.totalorder %s445, %s446
    %p455 = scmp.eq.s32.totalorder %s73, 0
    %p456 = por %p454, %p455
    %p457 = scmp.ne.s32.totalorder %s445, %s446
    %p458 = scmp.eq.s32.totalorder %s74, 1
    %p459 = por %p457, %p458
    %p461 = scmp.ne.s32.totalorder %s446, %s460
    %p462 = scmp.eq.s32.totalorder %s74, 0
    %p463 = por %p461, %p462
    %s465 = sadd.s32 %s464, 1
    %p468 = scmp.eq.s32.totalorder %s68, 1
    %p469 = scmp.ne.s32.totalorder %s464, %s466
    %p470 = scmp.eq.s32.totalorder %s68, 0
    %p471 = por %p469, %p470
    %p472 = scmp.ne.s32.totalorder %s464, %s466
    %p473 = scmp.eq.s32.totalorder %s73, 1
    %p474 = por %p472, %p473
    %p475 = scmp.ne.s32.totalorder %s466, %s467
    %p476 = scmp.eq.s32.totalorder %s73, 0
    %p477 = por %p475, %p476
    %p478 = scmp.ne.s32.totalorder %s466, %s467
    %p479 = scmp.eq.s32.totalorder %s74, 1
    %p480 = por %p478, %p479
    %p482 = scmp.ne.s32.totalorder %s467, %s481
    %p483 = scmp.eq.s32.totalorder %s74, 0
    %p484 = por %p482, %p483
    %s486 = sadd.s32 %s485, 1
    %p489 = scmp.eq.s32.totalorder %s68, 1
    %p490 = scmp.ne.s32.totalorder %s485, %s487
    %p491 = scmp.eq.s32.totalorder %s68, 0
    %p492 = por %p490, %p491
    %p493 = scmp.ne.s32.totalorder %s485, %s487
    %p494 = scmp.eq.s32.totalorder %s73, 1
    %p495 = por %p493, %p494
    %p496 = scmp.ne.s32.totalorder %s487, %s488
    %p497 = scmp.eq.s32.totalorder %s73, 0
    %p498 = por %p496, %p497
    %p499 = scmp.ne.s32.totalorder %s487, %s488
    %p500 = scmp.eq.s32.totalorder %s74, 1
    %p501 = por %p499, %p500
    %p503 = scmp.ne.s32.totalorder %s488, %s502
    %p504 = scmp.eq.s32.totalorder %s74, 0
    %p505 = por %p503, %p504
    %s507 = sadd.s32 %s506, 1
    %p510 = scmp.eq.s32.totalorder %s68, 1
    %p511 = scmp.ne.s32.totalorder %s506, %s508
    %p512 = scmp.eq.s32.totalorder %s68, 0
    %p513 = por %p511, %p512
    %p514 = scmp.ne.s32.totalorder %s506, %s508
    %p515 = scmp.eq.s32.totalorder %s73, 1
    %p516 = por %p514, %p515
    %p517 = scmp.ne.s32.totalorder %s508, %s509
    %p518 = scmp.eq.s32.totalorder %s73, 0
    %p519 = por %p517, %p518
    %p520 = scmp.ne.s32.totalorder %s508, %s509
    %p521 = scmp.eq.s32.totalorder %s74, 1
    %p522 = por %p520, %p521
    %p524 = scmp.ne.s32.totalorder %s509, %s523
    %p525 = scmp.eq.s32.totalorder %s74, 0
    %p526 = por %p524, %p525
    %s528 = sadd.s32 %s527, 1
    %p531 = scmp.eq.s32.totalorder %s68, 1
    %p532 = scmp.ne.s32.totalorder %s527, %s529
    %p533 = scmp.eq.s32.totalorder %s68, 0
    %p534 = por %p532, %p533
    %p535 = scmp.ne.s32.totalorder %s527, %s529
    %p536 = scmp.eq.s32.totalorder %s73, 1
    %p537 = por %p535, %p536
    %p538 = scmp.ne.s32.totalorder %s529, %s530
    %p539 = scmp.eq.s32.totalorder %s73, 0
    %p540 = por %p538, %p539
    %p541 = scmp.ne.s32.totalorder %s529, %s530
    %p542 = scmp.eq.s32.totalorder %s74, 1
    %p543 = por %p541, %p542
    %p545 = scmp.ne.s32.totalorder %s530, %s544
    %p546 = scmp.eq.s32.totalorder %s74, 0
    %p547 = por %p545, %p546
    %s549 = sadd.s32 %s548, 1
    %p552 = scmp.eq.s32.totalorder %s68, 1
    %p553 = scmp.ne.s32.totalorder %s548, %s550
    %p554 = scmp.eq.s32.totalorder %s68, 0
    %p555 = por %p553, %p554
    %p556 = scmp.ne.s32.totalorder %s548, %s550
    %p557 = scmp.eq.s32.totalorder %s73, 1
    %p558 = por %p556, %p557
    %p559 = scmp.ne.s32.totalorder %s550, %s551
    %p560 = scmp.eq.s32.totalorder %s73, 0
    %p561 = por %p559, %p560
    %p562 = scmp.ne.s32.totalorder %s550, %s551
    %p563 = scmp.eq.s32.totalorder %s74, 1
    %p564 = por %p562, %p563
    %p566 = scmp.ne.s32.totalorder %s551, %s565
    %p567 = scmp.eq.s32.totalorder %s74, 0
    %p568 = por %p566, %p567
    %s570 = sadd.s32 %s569, 1
    %p573 = scmp.eq.s32.totalorder %s68, 1
    %p574 = scmp.ne.s32.totalorder %s569, %s571
    %p575 = scmp.eq.s32.totalorder %s68, 0
    %p576 = por %p574, %p575
    %p577 = scmp.ne.s32.totalorder %s569, %s571
    %p578 = scmp.eq.s32.totalorder %s73, 1
    %p579 = por %p577, %p578
    %p580 = scmp.ne.s32.totalorder %s571, %s572
    %p581 = scmp.eq.s32.totalorder %s73, 0
    %p582 = por %p580, %p581
    %p583 = scmp.ne.s32.totalorder %s571, %s572
    %p584 = scmp.eq.s32.totalorder %s74, 1
    %p585 = por %p583, %p584
    %p587 = scmp.ne.s32.totalorder %s572, %s586
    %p588 = scmp.eq.s32.totalorder %s74, 0
    %p589 = por %p587, %p588
    %s591 = sadd.s32 %s590, 1
    %p594 = scmp.eq.s32.totalorder %s68, 1
    %p595 = scmp.ne.s32.totalorder %s590, %s592
    %p596 = scmp.eq.s32.totalorder %s68, 0
    %p597 = por %p595, %p596
    %p598 = scmp.ne.s32.totalorder %s590, %s592
    %p599 = scmp.eq.s32.totalorder %s73, 1
    %p600 = por %p598, %p599
    %p601 = scmp.ne.s32.totalorder %s592, %s593
    %p602 = scmp.eq.s32.totalorder %s73, 0
    %p603 = por %p601, %p602
    %p604 = scmp.ne.s32.totalorder %s592, %s593
    %p605 = scmp.eq.s32.totalorder %s74, 1
    %p606 = por %p604, %p605
    %p608 = scmp.ne.s32.totalorder %s593, %s607
    %p609 = scmp.eq.s32.totalorder %s74, 0
    %p610 = por %p608, %p609
    %s612 = sadd.s32 %s611, 1
    %p615 = scmp.eq.s32.totalorder %s68, 1
    %p616 = scmp.ne.s32.totalorder %s611, %s613
    %p617 = scmp.eq.s32.totalorder %s68, 0
    %p618 = por %p616, %p617
    %p619 = scmp.ne.s32.totalorder %s611, %s613
    %p620 = scmp.eq.s32.totalorder %s73, 1
    %p621 = por %p619, %p620
    %p622 = scmp.ne.s32.totalorder %s613, %s614
    %p623 = scmp.eq.s32.totalorder %s73, 0
    %p624 = por %p622, %p623
    %p625 = scmp.ne.s32.totalorder %s613, %s614
    %p626 = scmp.eq.s32.totalorder %s74, 1
    %p627 = por %p625, %p626
    %p629 = scmp.ne.s32.totalorder %s614, %s628
    %p630 = scmp.eq.s32.totalorder %s74, 0
    %p631 = por %p629, %p630
    %s633 = sadd.s32 %s632, 1
    %p636 = scmp.eq.s32.totalorder %s68, 1
    %p637 = scmp.ne.s32.totalorder %s632, %s634
    %p638 = scmp.eq.s32.totalorder %s68, 0
    %p639 = por %p637, %p638
    %p640 = scmp.ne.s32.totalorder %s632, %s634
    %p641 = scmp.eq.s32.totalorder %s73, 1
    %p642 = por %p640, %p641
    %p643 = scmp.ne.s32.totalorder %s634, %s635
    %p644 = scmp.eq.s32.totalorder %s73, 0
    %p645 = por %p643, %p644
    %p646 = scmp.ne.s32.totalorder %s634, %s635
    %p647 = scmp.eq.s32.totalorder %s74, 1
    %p648 = por %p646, %p647
    %p650 = scmp.ne.s32.totalorder %s635, %s649
    %p651 = scmp.eq.s32.totalorder %s74, 0
    %p652 = por %p650, %p651
    %s654 = sadd.s32 %s653, 1
    %p657 = scmp.eq.s32.totalorder %s68, 1
    %p658 = scmp.ne.s32.totalorder %s653, %s655
    %p659 = scmp.eq.s32.totalorder %s68, 0
    %p660 = por %p658, %p659
    %p661 = scmp.ne.s32.totalorder %s653, %s655
    %p662 = scmp.eq.s32.totalorder %s73, 1
    %p663 = por %p661, %p662
    %p664 = scmp.ne.s32.totalorder %s655, %s656
    %p665 = scmp.eq.s32.totalorder %s73, 0
    %p666 = por %p664, %p665
    %p667 = scmp.ne.s32.totalorder %s655, %s656
    %p668 = scmp.eq.s32.totalorder %s74, 1
    %p669 = por %p667, %p668
    %p671 = scmp.ne.s32.totalorder %s656, %s670
    %p672 = scmp.eq.s32.totalorder %s74, 0
    %p673 = por %p671, %p672
    %s675 = sadd.s32 %s674, 1
    %p678 = scmp.eq.s32.totalorder %s68, 1
    %p679 = scmp.ne.s32.totalorder %s674, %s676
    %p680 = scmp.eq.s32.totalorder %s68, 0
    %p681 = por %p679, %p680
    %p682 = scmp.ne.s32.totalorder %s674, %s676
    %p683 = scmp.eq.s32.totalorder %s73, 1
    %p684 = por %p682, %p683
    %p685 = scmp.ne.s32.totalorder %s676, %s677
    %p686 = scmp.eq.s32.totalorder %s73, 0
    %p687 = por %p685, %p686
    %p688 = scmp.ne.s32.totalorder %s676, %s677
    %p689 = scmp.eq.s32.totalorder %s74, 1
    %p690 = por %p688, %p689
    %p692 = scmp.ne.s32.totalorder %s677, %s691
    %p693 = scmp.eq.s32.totalorder %s74, 0
    %p694 = por %p692, %p693
    %s696 = sadd.s32 %s695, 1
    %p699 = scmp.eq.s32.totalorder %s68, 1
    %p700 = scmp.ne.s32.totalorder %s695, %s697
    %p701 = scmp.eq.s32.totalorder %s68, 0
    %p702 = por %p700, %p701
    %p703 = scmp.ne.s32.totalorder %s695, %s697
    %p704 = scmp.eq.s32.totalorder %s73, 1
    %p705 = por %p703, %p704
    %p706 = scmp.ne.s32.totalorder %s697, %s698
    %p707 = scmp.eq.s32.totalorder %s73, 0
    %p708 = por %p706, %p707
    %p709 = scmp.ne.s32.totalorder %s697, %s698
    %p710 = scmp.eq.s32.totalorder %s74, 1
    %p711 = por %p709, %p710
    %p713 = scmp.ne.s32.totalorder %s698, %s712
    %p714 = scmp.eq.s32.totalorder %s74, 0
    %p715 = por %p713, %p714
    %s716 = ssub.s32 %s75, %s87
    %s717 = ssub.s32 %s76, %s83
    %s718 = sor.u32 %s716, %s717
    %p719 = scmp.eq.s32.totalorder %s718, 0
    %s721 = sadd.s32 %s720, 1
    %s722 = scalar_select %p719, %s720, %s721
    %p725 = pneg %p719
    %p726 = scmp.eq.s32.totalorder %s68, 1
    %p727 = por %p725, %p726
    %p728 = scmp.ne.s32.totalorder %s720, %s723
    %p729 = scmp.eq.s32.totalorder %s68, 0
    %p730 = por %p728, %p729
    %p731 = scmp.ne.s32.totalorder %s720, %s723
    %p732 = scmp.eq.s32.totalorder %s73, 1
    %p733 = por %p731, %p732
    %p734 = scmp.ne.s32.totalorder %s723, %s724
    %p735 = scmp.eq.s32.totalorder %s73, 0
    %p736 = por %p734, %p735
    %p737 = scmp.ne.s32.totalorder %s723, %s724
    %p738 = scmp.eq.s32.totalorder %s74, 1
    %p739 = por %p737, %p738
    %p741 = scmp.ne.s32.totalorder %s724, %s740
    %p742 = scmp.eq.s32.totalorder %s74, 0
    %p743 = por %p741, %p742
    %s744 = ssub.s32 %s75, %s87
    %s745 = ssub.s32 %s76, %s83
    %s746 = sor.u32 %s744, %s745
    %p747 = scmp.eq.s32.totalorder %s746, 0
    %s749 = sadd.s32 %s748, 1
    %s750 = scalar_select %p747, %s748, %s749
    %p753 = pneg %p747
    %p754 = scmp.eq.s32.totalorder %s68, 1
    %p755 = por %p753, %p754
    %p756 = scmp.ne.s32.totalorder %s748, %s751
    %p757 = scmp.eq.s32.totalorder %s68, 0
    %p758 = por %p756, %p757
    %p759 = scmp.ne.s32.totalorder %s748, %s751
    %p760 = scmp.eq.s32.totalorder %s73, 1
    %p761 = por %p759, %p760
    %p762 = scmp.ne.s32.totalorder %s751, %s752
    %p763 = scmp.eq.s32.totalorder %s73, 0
    %p764 = por %p762, %p763
    %p765 = scmp.ne.s32.totalorder %s751, %s752
    %p766 = scmp.eq.s32.totalorder %s74, 1
    %p767 = por %p765, %p766
    %p769 = scmp.ne.s32.totalorder %s752, %s768
    %p770 = scmp.eq.s32.totalorder %s74, 0
    %p771 = por %p769, %p770
    %p772 = scmp.le.s32.totalorder 1, %s68
    %p773 = scmp.lt.s32.totalorder %s68, 3
    %p774 = pnand %p772, %p773
    %p775 = pneg %p774
    // Predicated region
    $region9: #{forward_train.3} parent=5 // pred_check
      _
    $region10: #{forward_train.3} parent=5 // pred_check_branch
      %777 = sbr.rel (%p774) target = $region12
    $region11: #{forward_train.3} parent=5 // pred_region
      %s778 = ssub.s32 %s68, 1
      // Predicated region
      $region13: #{forward_train.3} parent=11 // pred_check
        %p779 = pneg %p183
      $region14: #{forward_train.3} parent=11 // pred_check_branch
        %781 = sbr.rel (%p779) target = $region16
      $region15: #{forward_train.3} parent=11 // pred_region
        _
      $region16: #{forward_train.3} parent=11 // pred_fallthru
        _
      // Predicated region
      $region17: #{forward_train.3} parent=11 // pred_check
        %p782 = pneg %p204
      $region18: #{forward_train.3} parent=11 // pred_check_branch
        %784 = sbr.rel (%p782) target = $region20
      $region19: #{forward_train.3} parent=11 // pred_region
        _
      $region20: #{forward_train.3} parent=11 // pred_fallthru
        _
      // Predicated region
      $region21: #{forward_train.3} parent=11 // pred_check
        %p785 = pneg %p225
      $region22: #{forward_train.3} parent=11 // pred_check_branch
        %787 = sbr.rel (%p785) target = $region24
      $region23: #{forward_train.3} parent=11 // pred_region
        _
      $region24: #{forward_train.3} parent=11 // pred_fallthru
        _
      // Predicated region
      $region25: #{forward_train.3} parent=11 // pred_check
        %p788 = pneg %p246
      $region26: #{forward_train.3} parent=11 // pred_check_branch
        %790 = sbr.rel (%p788) target = $region28
      $region27: #{forward_train.3} parent=11 // pred_region
        _
      $region28: #{forward_train.3} parent=11 // pred_fallthru
        _
      // Predicated region
      $region29: #{forward_train.3} parent=11 // pred_check
        %p791 = pneg %p267
      $region30: #{forward_train.3} parent=11 // pred_check_branch
        %793 = sbr.rel (%p791) target = $region32
      $region31: #{forward_train.3} parent=11 // pred_region
        _
      $region32: #{forward_train.3} parent=11 // pred_fallthru
        _
      // Predicated region
      $region33: #{forward_train.3} parent=11 // pred_check
        %p794 = pneg %p288
      $region34: #{forward_train.3} parent=11 // pred_check_branch
        %796 = sbr.rel (%p794) target = $region36
      $region35: #{forward_train.3} parent=11 // pred_region
        _
      $region36: #{forward_train.3} parent=11 // pred_fallthru
        _
      // Predicated region
      $region37: #{forward_train.3} parent=11 // pred_check
        %p797 = pneg %p309
      $region38: #{forward_train.3} parent=11 // pred_check_branch
        %799 = sbr.rel (%p797) target = $region40
      $region39: #{forward_train.3} parent=11 // pred_region
        _
      $region40: #{forward_train.3} parent=11 // pred_fallthru
        _
      // Predicated region
      $region41: #{forward_train.3} parent=11 // pred_check
        %p800 = pneg %p330
      $region42: #{forward_train.3} parent=11 // pred_check_branch
        %802 = sbr.rel (%p800) target = $region44
      $region43: #{forward_train.3} parent=11 // pred_region
        _
      $region44: #{forward_train.3} parent=11 // pred_fallthru
        _
      // Predicated region
      $region45: #{forward_train.3} parent=11 // pred_check
        %p803 = pneg %p351
      $region46: #{forward_train.3} parent=11 // pred_check_branch
        %805 = sbr.rel (%p803) target = $region48
      $region47: #{forward_train.3} parent=11 // pred_region
        _
      $region48: #{forward_train.3} parent=11 // pred_fallthru
        _
      // Predicated region
      $region49: #{forward_train.3} parent=11 // pred_check
        %p806 = pneg %p372
      $region50: #{forward_train.3} parent=11 // pred_check_branch
        %808 = sbr.rel (%p806) target = $region52
      $region51: #{forward_train.3} parent=11 // pred_region
        _
      $region52: #{forward_train.3} parent=11 // pred_fallthru
        _
      // Predicated region
      $region53: #{forward_train.3} parent=11 // pred_check
        %p809 = pneg %p393
      $region54: #{forward_train.3} parent=11 // pred_check_branch
        %811 = sbr.rel (%p809) target = $region56
      $region55: #{forward_train.3} parent=11 // pred_region
        _
      $region56: #{forward_train.3} parent=11 // pred_fallthru
        _
      // Predicated region
      $region57: #{forward_train.3} parent=11 // pred_check
        %p812 = pneg %p414
      $region58: #{forward_train.3} parent=11 // pred_check_branch
        %814 = sbr.rel (%p812) target = $region60
      $region59: #{forward_train.3} parent=11 // pred_region
        _
      $region60: #{forward_train.3} parent=11 // pred_fallthru
        _
      // Predicated region
      $region61: #{forward_train.3} parent=11 // pred_check
        %p815 = pneg %p435
      $region62: #{forward_train.3} parent=11 // pred_check_branch
        %817 = sbr.rel (%p815) target = $region64
      $region63: #{forward_train.3} parent=11 // pred_region
        _
      $region64: #{forward_train.3} parent=11 // pred_fallthru
        _
      // Predicated region
      $region65: #{forward_train.3} parent=11 // pred_check
        %p818 = pneg %p456
      $region66: #{forward_train.3} parent=11 // pred_check_branch
        %820 = sbr.rel (%p818) target = $region68
      $region67: #{forward_train.3} parent=11 // pred_region
        _
      $region68: #{forward_train.3} parent=11 // pred_fallthru
        _
      // Predicated region
      $region69: #{forward_train.3} parent=11 // pred_check
        %p821 = pneg %p477
      $region70: #{forward_train.3} parent=11 // pred_check_branch
        %823 = sbr.rel (%p821) target = $region72
      $region71: #{forward_train.3} parent=11 // pred_region
        _
      $region72: #{forward_train.3} parent=11 // pred_fallthru
        _
      // Predicated region
      $region73: #{forward_train.3} parent=11 // pred_check
        %p824 = pneg %p498
      $region74: #{forward_train.3} parent=11 // pred_check_branch
        %826 = sbr.rel (%p824) target = $region76
      $region75: #{forward_train.3} parent=11 // pred_region
        _
      $region76: #{forward_train.3} parent=11 // pred_fallthru
        _
      // Predicated region
      $region77: #{forward_train.3} parent=11 // pred_check
        %p827 = pneg %p519
      $region78: #{forward_train.3} parent=11 // pred_check_branch
        %829 = sbr.rel (%p827) target = $region80
      $region79: #{forward_train.3} parent=11 // pred_region
        _
      $region80: #{forward_train.3} parent=11 // pred_fallthru
        _
      // Predicated region
      $region81: #{forward_train.3} parent=11 // pred_check
        %p830 = pneg %p540
      $region82: #{forward_train.3} parent=11 // pred_check_branch
        %832 = sbr.rel (%p830) target = $region84
      $region83: #{forward_train.3} parent=11 // pred_region
        _
      $region84: #{forward_train.3} parent=11 // pred_fallthru
        _
      // Predicated region
      $region85: #{forward_train.3} parent=11 // pred_check
        %p833 = pneg %p561
      $region86: #{forward_train.3} parent=11 // pred_check_branch
        %835 = sbr.rel (%p833) target = $region88
      $region87: #{forward_train.3} parent=11 // pred_region
        _
      $region88: #{forward_train.3} parent=11 // pred_fallthru
        _
      // Predicated region
      $region89: #{forward_train.3} parent=11 // pred_check
        %p836 = pneg %p582
      $region90: #{forward_train.3} parent=11 // pred_check_branch
        %838 = sbr.rel (%p836) target = $region92
      $region91: #{forward_train.3} parent=11 // pred_region
        _
      $region92: #{forward_train.3} parent=11 // pred_fallthru
        _
      // Predicated region
      $region93: #{forward_train.3} parent=11 // pred_check
        %p839 = pneg %p603
      $region94: #{forward_train.3} parent=11 // pred_check_branch
        %841 = sbr.rel (%p839) target = $region96
      $region95: #{forward_train.3} parent=11 // pred_region
        _
      $region96: #{forward_train.3} parent=11 // pred_fallthru
        _
      // Predicated region
      $region97: #{forward_train.3} parent=11 // pred_check
        %p842 = pneg %p624
      $region98: #{forward_train.3} parent=11 // pred_check_branch
        %844 = sbr.rel (%p842) target = $region100
      $region99: #{forward_train.3} parent=11 // pred_region
        _
      $region100: #{forward_train.3} parent=11 // pred_fallthru
        _
      // Predicated region
      $region101: #{forward_train.3} parent=11 // pred_check
        %p845 = pneg %p645
      $region102: #{forward_train.3} parent=11 // pred_check_branch
        %847 = sbr.rel (%p845) target = $region104
      $region103: #{forward_train.3} parent=11 // pred_region
        _
      $region104: #{forward_train.3} parent=11 // pred_fallthru
        _
      // Predicated region
      $region105: #{forward_train.3} parent=11 // pred_check
        %p848 = pneg %p666
      $region106: #{forward_train.3} parent=11 // pred_check_branch
        %850 = sbr.rel (%p848) target = $region108
      $region107: #{forward_train.3} parent=11 // pred_region
        _
      $region108: #{forward_train.3} parent=11 // pred_fallthru
        _
      // Predicated region
      $region109: #{forward_train.3} parent=11 // pred_check
        %p851 = pneg %p687
      $region110: #{forward_train.3} parent=11 // pred_check_branch
        %853 = sbr.rel (%p851) target = $region112
      $region111: #{forward_train.3} parent=11 // pred_region
        _
      $region112: #{forward_train.3} parent=11 // pred_fallthru
        _
      // Predicated region
      $region113: #{forward_train.3} parent=11 // pred_check
        %p854 = pneg %p708
      $region114: #{forward_train.3} parent=11 // pred_check_branch
        %856 = sbr.rel (%p854) target = $region116
      $region115: #{forward_train.3} parent=11 // pred_region
        _
      $region116: #{forward_train.3} parent=11 // pred_fallthru
        _
    $region12: #{forward_train.3} parent=5 // pred_fallthru
      _
    %p857 = scmp.lt.s32.totalorder %s68, 2
    // Predicated region
    $region117: #{forward_train.3} parent=5 // pred_check
      %p858 = pneg %p857
    $region118: #{forward_train.3} parent=5 // pred_check_branch
      %860 = sbr.rel (%p858) target = $region120
    $region119: #{forward_train.3} parent=5 // pred_region
      // Predicated region
      $region121: #{forward_train.3} parent=119 // pred_check
        %p861 = pneg %p102
      $region122: #{forward_train.3} parent=119 // pred_check_branch
        %863 = sbr.rel (%p861) target = $region124
      $region123: #{forward_train.3} parent=119 // pred_region
        %p864 = scmp.lt.s32.totalorder %s75, 1
        %s865 = scalar_select %p864, %s75, 1
        %p866 = scmp.lt.s32.totalorder %s76, 0
        %s867 = scalar_select %p866, %s76, 0
        %s868 = smul.addr %s865, 4
        %s869 = sadd.s32 %s867, %s868
        %s870 = smul.addr %s869, 4
        %s871 = scalar_lea.vmem %s1, %s870
      $region124: #{forward_train.3} parent=119 // pred_fallthru
        _
      // Predicated region
      $region125: #{forward_train.3} parent=119 // pred_check
        %p872 = pneg %p130
      $region126: #{forward_train.3} parent=119 // pred_check_branch
        %874 = sbr.rel (%p872) target = $region128
      $region127: #{forward_train.3} parent=119 // pred_region
        %p875 = scmp.lt.s32.totalorder %s75, 1
        %s876 = scalar_select %p875, %s75, 1
        %p877 = scmp.lt.s32.totalorder %s76, 0
        %s878 = scalar_select %p877, %s76, 0
        %s879 = smul.addr %s876, 4
        %s880 = sadd.s32 %s878, %s879
        %s881 = smul.addr %s880, 4
        %s882 = scalar_lea.vmem %s3, %s881
      $region128: #{forward_train.3} parent=119 // pred_fallthru
        _
      // Predicated region
      $region129: #{forward_train.3} parent=119 // pred_check
        %p883 = pneg %p156
      $region130: #{forward_train.3} parent=119 // pred_check_branch
        %885 = sbr.rel (%p883) target = $region132
      $region131: #{forward_train.3} parent=119 // pred_region
        %p886 = scmp.lt.s32.totalorder %s75, 1
        %s887 = scalar_select %p886, %s75, 1
        %s888 = smul.addr %s887, 4
        %s889 = smul.addr %s888, 2
        %s890 = scalar_lea.vmem %s5, %s889
      $region132: #{forward_train.3} parent=119 // pred_fallthru
        _
    $region120: #{forward_train.3} parent=5 // pred_fallthru
      _
    %p891 = scmp.le.s32.totalorder 1, %s68
    %p892 = scmp.lt.s32.totalorder %s68, 3
    %p893 = pnand %p891, %p892
    %p894 = pneg %p893
    // Predicated region
    $region133: #{forward_train.3} parent=5 // pred_check
      _
    $region134: #{forward_train.3} parent=5 // pred_check_branch
      %896 = sbr.rel (%p893) target = $region136
    $region135: #{forward_train.3} parent=5 // pred_region
      %s897 = ssub.s32 %s68, 1
      %p898 = scmp.lt.s32.totalorder %s77, 1
      %s899 = scalar_select %p898, %s77, 1
      %p900 = scmp.lt.s32.totalorder %s78, 0
      %s901 = scalar_select %p900, %s78, 0
      %s902 = smul.addr %s899, 4
      %s903 = sadd.s32 %s901, %s902
      %s904 = smul.addr %s903, 4
      %s905 = scalar_lea.vmem %s1, %s904
      %p906 = pneg %p108
      %p907 = pneg %p105
      %p908 = scmp.lt.s32.totalorder %s77, 1
      %s909 = scalar_select %p908, %s77, 1
      %p910 = scmp.lt.s32.totalorder %s78, 0
      %s911 = scalar_select %p910, %s78, 0
      %s912 = smul.addr %s909, 4
      %s913 = sadd.s32 %s911, %s912
      %s914 = smul.addr %s913, 4
      %s915 = scalar_lea.vmem %s3, %s914
      %p916 = pneg %p136
      %p917 = pneg %p133
      %p918 = scmp.lt.s32.totalorder %s77, 1
      %s919 = scalar_select %p918, %s77, 1
      %s920 = smul.addr %s919, 4
      %s921 = smul.addr %s920, 2
      %s922 = scalar_lea.vmem %s5, %s921
      %p923 = pneg %p162
      %p924 = pneg %p159
      %p925 = pneg %p183
      %p926 = pneg %p180
      %p927 = pneg %p204
      %p928 = pneg %p201
      %p929 = pneg %p225
      %p930 = pneg %p222
      %p931 = pneg %p246
      %p932 = pneg %p243
      %p933 = pneg %p267
      %p934 = pneg %p264
      %p935 = pneg %p288
      %p936 = pneg %p285
      %p937 = pneg %p309
      %p938 = pneg %p306
      %p939 = pneg %p330
      %p940 = pneg %p327
      %p941 = pneg %p351
      %p942 = pneg %p348
      %p943 = pneg %p372
      %p944 = pneg %p369
      %p945 = pneg %p393
      %p946 = pneg %p390
      %p947 = pneg %p414
      %p948 = pneg %p411
      %p949 = pneg %p435
      %p950 = pneg %p432
      %p951 = pneg %p456
      %p952 = pneg %p453
      %p953 = pneg %p477
      %p954 = pneg %p474
      %p955 = pneg %p498
      %p956 = pneg %p495
      %p957 = pneg %p519
      %p958 = pneg %p516
      %p959 = pneg %p540
      %p960 = pneg %p537
      %p961 = pneg %p561
      %p962 = pneg %p558
      %p963 = pneg %p582
      %p964 = pneg %p579
      %p965 = pneg %p603
      %p966 = pneg %p600
      %p967 = pneg %p624
      %p968 = pneg %p621
      %p969 = pneg %p645
      %p970 = pneg %p642
      %p971 = pneg %p666
      %p972 = pneg %p663
      %p973 = pneg %p687
      %p974 = pneg %p684
      %p975 = pneg %p708
      %p976 = pneg %p705
      %p977 = pneg %p736
      %p978 = pneg %p733
      %p979 = scmp.lt.s32.totalorder %s77, 1
      %s980 = scalar_select %p979, %s77, 1
      %p981 = scmp.lt.s32.totalorder %s78, 0
      %s982 = scalar_select %p981, %s78, 0
      %s983 = smul.addr %s980, 4
      %s984 = sadd.s32 %s982, %s983
      %s985 = smul.addr %s984, 4
      %s986 = scalar_lea.vmem %s59, %s985
      %p987 = pneg %p764
      %p988 = pneg %p761
      %p989 = scmp.lt.s32.totalorder %s77, 1
      %s990 = scalar_select %p989, %s77, 1
      %p991 = scmp.lt.s32.totalorder %s78, 0
      %s992 = scalar_select %p991, %s78, 0
      %s993 = smul.addr %s990, 4
      %s994 = sadd.s32 %s992, %s993
      %s995 = smul.addr %s994, 4
      %s996 = scalar_lea.vmem %s61, %s995
      %p997 = scmp.lt.s32.totalorder %s77, 1
      %s998 = scalar_select %p997, %s77, 1
      %p999 = scmp.lt.s32.totalorder %s78, 0
      %s1000 = scalar_select %p999, %s78, 0
      %s1001 = smul.addr %s998, 4
      %s1002 = sadd.s32 %s1000, %s1001
      %s1003 = smul.addr %s1002, 4
      %s1004 = scalar_lea.vmem %s1, %s1003
      %p1005 = scmp.lt.s32.totalorder %s77, 1
      %s1006 = scalar_select %p1005, %s77, 1
      %p1007 = scmp.lt.s32.totalorder %s78, 0
      %s1008 = scalar_select %p1007, %s78, 0
      %s1009 = smul.addr %s1006, 4
      %s1010 = sadd.s32 %s1008, %s1009
      %s1011 = smul.addr %s1010, 4
      %s1012 = scalar_lea.vmem %s3, %s1011
      %p1013 = scmp.lt.s32.totalorder %s77, 1
      %s1014 = scalar_select %p1013, %s77, 1
      %s1015 = smul.addr %s1014, 4
      %s1016 = smul.addr %s1015, 2
      %s1017 = scalar_lea.vmem %s5, %s1016
      %p1018 = scmp.lt.s32.totalorder %s77, 1
      %s1019 = scalar_select %p1018, %s77, 1
      %p1020 = scmp.lt.s32.totalorder %s78, 0
      %s1021 = scalar_select %p1020, %s78, 0
      %s1022 = smul.addr %s1019, 4
      %s1023 = sadd.s32 %s1021, %s1022
      %s1024 = smul.addr %s1023, 4
      %s1025 = scalar_lea.vmem %s59, %s1024
      %p1026 = scmp.lt.s32.totalorder %s77, 1
      %s1027 = scalar_select %p1026, %s77, 1
      %p1028 = scmp.lt.s32.totalorder %s78, 0
      %s1029 = scalar_select %p1028, %s78, 0
      %s1030 = smul.addr %s1027, 4
      %s1031 = sadd.s32 %s1029, %s1030
      %s1032 = smul.addr %s1031, 4
      %s1033 = scalar_lea.vmem %s61, %s1032
      %v1034 = vld [vmem:[%s7] sm:$0xff]
      %v1035 = vld [vmem:[%s9] sm:$0xff]
      %v1036 = vld [vmem:[%s11] sm:$0xff]
      %v1037 = vld [vmem:[%s13] sm:$0xff]
      %v1038 = vld [vmem:[%s15] sm:$0xff]
      %v1039 = vld [vmem:[%s17] sm:$0xff]
      %v1040 = vld [vmem:[%s19] sm:$0xff]
      %v1041 = vld [vmem:[%s21] sm:$0xff]
      %v1042 = vld [vmem:[%s23] sm:$0xff]
      %v1043 = vld [vmem:[%s25] sm:$0xff]
      %v1044 = vld [vmem:[%s27] sm:$0xff]
      %v1045 = vld [vmem:[%s29] sm:$0xff]
      %v1046 = vld [vmem:[%s31] sm:$0xff]
      %v1047 = vld [vmem:[%s33] sm:$0xff]
      %v1048 = vld [vmem:[%s35] sm:$0xff]
      %v1049 = vld [vmem:[%s37] sm:$0xff]
      %v1050 = vld [vmem:[%s39] sm:$0xff]
      %v1051 = vld [vmem:[%s41] sm:$0xff]
      %v1052 = vld [vmem:[%s43] sm:$0xff]
      %v1053 = vld [vmem:[%s45] sm:$0xff]
      %v1054 = vld [vmem:[%s47] sm:$0xff]
      %v1055 = vld [vmem:[%s49] sm:$0xff]
      %v1056 = vld [vmem:[%s51] sm:$0xff]
      %v1057 = vld [vmem:[%s53] sm:$0xff]
      %v1058 = vld [vmem:[%s55] sm:$0xf]
      %v1059 = vld [vmem:[%s57] sm:$0xf]
      %v1060 = vld [vmem:[%s1004] sm:$0x7]
      %v1061 = vld [vmem:[%s1004 + $0x4] sm:$0x7]
      %v1062 = vld [vmem:[%s1004 + $0x8] sm:$0x7]
      %v1063 = vld [vmem:[%s1004 + $0xc] sm:$0x7]
      %v1064 = vld [vmem:[%s1012] sm:$0x7]
      %v1065 = vld [vmem:[%s1012 + $0x4] sm:$0x7]
      %v1066 = vld [vmem:[%s1012 + $0x8] sm:$0x7]
      %v1067 = vld [vmem:[%s1012 + $0xc] sm:$0x7]
      %v1068 = vld [vmem:[%s1017] sm:$0x3]
      %v1069 = vld [vmem:[%s1017 + $0x2] sm:$0x3]
      %s1070 = scalar_lea.vmem %s1017, 4
      %v1071 = vld [vmem:[%s1070] sm:$0x3]
      %v1072 = vld [vmem:[%s1070 + $0x2] sm:$0x3]
      %v1073 = vlaneseq
      %v1074 = vshrl.u32 %v1073, 7
      %vm1075 = vcmp.eq.s32.totalorder %v1074, 0
      %vm1076 = vcmp.eq.s32.totalorder %v1074, 1
      %v1077 = vsel %vm1075, 0.5, 0.0
      %v1078 = vsel %vm1076, 0.5, 0.0
      %p1079 = scmp.eq.s32.totalorder %s78, 0
      %s1080 = scalar_select %p1079, 1, 0
      %s1081 = scvt.s32.f32 %s1080
      %v1082 = vlaneseq
      %v1083 = vshrl.u32 %v1082, 7
      %v1084 = vsub.s32 0, %v1083
      %v1085 = vrot.slane %v1064, %v1084
      %v1086 = vlaneseq
      %v1087 = vshrl.u32 %v1086, 7
      %v1088 = vsub.s32 0, %v1087
      %v1089 = vrot.slane %v1065, %v1088
      %v1092 = vrot.slane %v1065, 7
      %vm1093 = vcmask 1041409
      %v1094 = vsel %vm1093, %v1092, %v1064
      %v1096 = vmul.f32 %v1085, %v1094
      %v1097 = vmul.f32 %v1089, %v1094
      %v1098 = vlaneseq
      %v1099 = vshrl.u32 %v1098, 7
      %v1100 = vsub.s32 0, %v1099
      %v1101 = vrot.slane %v1066, %v1100
      %v1102 = vlaneseq
      %v1103 = vshrl.u32 %v1102, 7
      %v1104 = vsub.s32 0, %v1103
      %v1105 = vrot.slane %v1067, %v1104
      %v1108 = vrot.slane %v1067, 7
      %v1109 = vsel %vm1093, %v1108, %v1066
      %v1111 = vmul.f32 %v1101, %v1109
      %v1112 = vmul.f32 %v1105, %v1109
      %v1113 = vadd.f32 %v1096, %v1111
      %v1114 = vadd.f32 %v1097, %v1112
      %v1115 = vmul.f32 %v1101, %v1094
      %v1116 = vmul.f32 %v1105, %v1094
      %v1117 = vmul.f32 %v1085, %v1109
      %v1118 = vmul.f32 %v1089, %v1109
      %v1119 = vsub.f32 %v1115, %v1117
      %v1120 = vsub.f32 %v1116, %v1118
      %v1124 = vunpack.c.l.s4 1966171168
      %v1125 = vunpack.c.0.s8 %v1124
      %v1126 = vlaneseq
      %v1127 = vshrl.u32 %v1126, 7
      %v1128 = vsub.s32 %v1125, %v1127
      %v1129 = vrot.slane %v1068, %v1128
      %v1130 = vcombine.high %v1129, %v1129
      %v1132 = vunpack.c.l.s4 1966171168
      %v1133 = vunpack.c.0.s8 %v1132
      %v1134 = vlaneseq
      %v1135 = vshrl.u32 %v1134, 7
      %v1136 = vsub.s32 %v1133, %v1135
      %v1137 = vrot.slane %v1129, %v1136
      %v1139 = vunpack.c.l.s4 1966171168
      %v1140 = vunpack.c.0.s8 %v1139
      %v1141 = vlaneseq
      %v1142 = vshrl.u32 %v1141, 7
      %v1143 = vsub.s32 %v1140, %v1142
      %v1144 = vrot.slane %v1130, %v1143
      %v1146 = vunpack.c.l.s4 1966171168
      %v1147 = vunpack.c.0.s8 %v1146
      %v1148 = vlaneseq
      %v1149 = vshrl.u32 %v1148, 7
      %v1150 = vsub.s32 %v1147, %v1149
      %v1151 = vrot.slane %v1069, %v1150
      %v1152 = vcombine.high %v1151, %v1151
      %v1154 = vunpack.c.l.s4 1966171168
      %v1155 = vunpack.c.0.s8 %v1154
      %v1156 = vlaneseq
      %v1157 = vshrl.u32 %v1156, 7
      %v1158 = vsub.s32 %v1155, %v1157
      %v1159 = vrot.slane %v1151, %v1158
      %v1161 = vunpack.c.l.s4 1966171168
      %v1162 = vunpack.c.0.s8 %v1161
      %v1163 = vlaneseq
      %v1164 = vshrl.u32 %v1163, 7
      %v1165 = vsub.s32 %v1162, %v1164
      %v1166 = vrot.slane %v1152, %v1165
      %v1167 = vlaneseq
      %v1168 = vshrl.u32 %v1167, 7
      %v1169 = vsub.s32 0, %v1168
      %v1170 = vrot.slane %v1137, %v1169
      %v1171 = vlaneseq
      %v1172 = vshrl.u32 %v1171, 7
      %v1173 = vsub.s32 0, %v1172
      %v1174 = vrot.slane %v1144, %v1173
      %v1175 = vlaneseq
      %v1176 = vshrl.u32 %v1175, 7
      %v1177 = vsub.s32 0, %v1176
      %v1178 = vrot.slane %v1159, %v1177
      %v1179 = vlaneseq
      %v1180 = vshrl.u32 %v1179, 7
      %v1181 = vsub.s32 0, %v1180
      %v1182 = vrot.slane %v1166, %v1181
      %v1187 = vmul.f32 %v1170, %v1113
      %v1188 = vmul.f32 %v1174, %v1114
      %v1189 = vmul.f32 %v1178, %v1113
      %v1190 = vmul.f32 %v1182, %v1114
      %v1194 = vunpack.c.l.s4 1966171168
      %v1195 = vunpack.c.0.s8 %v1194
      %v1196 = vlaneseq
      %v1197 = vshrl.u32 %v1196, 7
      %v1198 = vsub.s32 %v1195, %v1197
      %v1199 = vrot.slane %v1071, %v1198
      %v1200 = vcombine.high %v1199, %v1199
      %v1202 = vunpack.c.l.s4 1966171168
      %v1203 = vunpack.c.0.s8 %v1202
      %v1204 = vlaneseq
      %v1205 = vshrl.u32 %v1204, 7
      %v1206 = vsub.s32 %v1203, %v1205
      %v1207 = vrot.slane %v1199, %v1206
      %v1209 = vunpack.c.l.s4 1966171168
      %v1210 = vunpack.c.0.s8 %v1209
      %v1211 = vlaneseq
      %v1212 = vshrl.u32 %v1211, 7
      %v1213 = vsub.s32 %v1210, %v1212
      %v1214 = vrot.slane %v1200, %v1213
      %v1216 = vunpack.c.l.s4 1966171168
      %v1217 = vunpack.c.0.s8 %v1216
      %v1218 = vlaneseq
      %v1219 = vshrl.u32 %v1218, 7
      %v1220 = vsub.s32 %v1217, %v1219
      %v1221 = vrot.slane %v1072, %v1220
      %v1222 = vcombine.high %v1221, %v1221
      %v1224 = vunpack.c.l.s4 1966171168
      %v1225 = vunpack.c.0.s8 %v1224
      %v1226 = vlaneseq
      %v1227 = vshrl.u32 %v1226, 7
      %v1228 = vsub.s32 %v1225, %v1227
      %v1229 = vrot.slane %v1221, %v1228
      %v1231 = vunpack.c.l.s4 1966171168
      %v1232 = vunpack.c.0.s8 %v1231
      %v1233 = vlaneseq
      %v1234 = vshrl.u32 %v1233, 7
      %v1235 = vsub.s32 %v1232, %v1234
      %v1236 = vrot.slane %v1222, %v1235
      %v1237 = vlaneseq
      %v1238 = vshrl.u32 %v1237, 7
      %v1239 = vsub.s32 0, %v1238
      %v1240 = vrot.slane %v1207, %v1239
      %v1241 = vlaneseq
      %v1242 = vshrl.u32 %v1241, 7
      %v1243 = vsub.s32 0, %v1242
      %v1244 = vrot.slane %v1214, %v1243
      %v1245 = vlaneseq
      %v1246 = vshrl.u32 %v1245, 7
      %v1247 = vsub.s32 0, %v1246
      %v1248 = vrot.slane %v1229, %v1247
      %v1249 = vlaneseq
      %v1250 = vshrl.u32 %v1249, 7
      %v1251 = vsub.s32 0, %v1250
      %v1252 = vrot.slane %v1236, %v1251
      %v1257 = vmul.f32 %v1240, %v1119
      %v1258 = vmul.f32 %v1244, %v1120
      %v1259 = vmul.f32 %v1248, %v1119
      %v1260 = vmul.f32 %v1252, %v1120
      %v1261 = vsub.f32 %v1187, %v1257
      %v1262 = vsub.f32 %v1188, %v1258
      %v1263 = vsub.f32 %v1189, %v1259
      %v1264 = vsub.f32 %v1190, %v1260
      %vm1265 = vcmask 1041408
      %v1266 = vsel %vm1265, %v1261, 0.0
      %v1267 = vsel %vm1265, %v1262, 0.0
      %v1268 = vadd.f32 %v1266, %v1267
      %v1269 = vsel %vm1265, %v1263, 0.0
      %v1270 = vsel %vm1265, %v1264, 0.0
      %v1271 = vadd.f32 %v1269, %v1270
      %v1272 = vmul.f32 %v1170, %v1119
      %v1273 = vmul.f32 %v1174, %v1120
      %v1274 = vmul.f32 %v1178, %v1119
      %v1275 = vmul.f32 %v1182, %v1120
      %v1276 = vmul.f32 %v1240, %v1113
      %v1277 = vmul.f32 %v1244, %v1114
      %v1278 = vmul.f32 %v1248, %v1113
      %v1279 = vmul.f32 %v1252, %v1114
      %v1280 = vadd.f32 %v1272, %v1276
      %v1281 = vadd.f32 %v1273, %v1277
      %v1282 = vadd.f32 %v1274, %v1278
      %v1283 = vadd.f32 %v1275, %v1279
      %v1284 = vsel %vm1265, %v1280, 0.0
      %v1285 = vsel %vm1265, %v1281, 0.0
      %v1286 = vadd.f32 %v1284, %v1285
      %v1287 = vsel %vm1265, %v1282, 0.0
      %v1288 = vsel %vm1265, %v1283, 0.0
      %v1289 = vadd.f32 %v1287, %v1288
      %v1290 = vstv %s1081
      %v1291 = vmul.f32 %v1290, %v1077
      %v1292 = vmul.f32 %v1290, %v1078
      %s1293 = ssub.f32 1.0, %s1081
      %v1294 = vstv %s1293
      %v1295 = vmul.f32 %v1294, %v1268
      %v1296 = vmul.f32 %v1294, %v1271
      %v1297 = vadd.f32 %v1291, %v1295
      %v1298 = vadd.f32 %v1292, %v1296
      %v1299 = vmul.f32 %v1294, %v1286
      %v1300 = vmul.f32 %v1294, %v1289
      %v1301 = vadd.f32 %v1291, %v1299
      %v1302 = vadd.f32 %v1292, %v1300
      %v1303 = vlaneseq
      %v1304 = vshrl.u32 %v1303, 7
      %v1305 = vsub.s32 0, %v1304
      %v1306 = vrot.slane %v1060, %v1305
      %v1307 = vlaneseq
      %v1308 = vshrl.u32 %v1307, 7
      %v1309 = vsub.s32 0, %v1308
      %v1310 = vrot.slane %v1061, %v1309
      %v1311 = vmul.f32 %v1297, %v1306
      %v1312 = vmul.f32 %v1298, %v1310
      %v1313 = vlaneseq
      %v1314 = vshrl.u32 %v1313, 7
      %v1315 = vsub.s32 0, %v1314
      %v1316 = vrot.slane %v1062, %v1315
      %v1317 = vlaneseq
      %v1318 = vshrl.u32 %v1317, 7
      %v1319 = vsub.s32 0, %v1318
      %v1320 = vrot.slane %v1063, %v1319
      %v1321 = vmul.f32 %v1301, %v1316
      %v1322 = vmul.f32 %v1302, %v1320
      %v1323 = vadd.f32 %v1311, %v1321
      %v1324 = vadd.f32 %v1312, %v1322
      %v1325 = vsel %vm1265, %v1323, 0.0
      %v1326 = vsel %vm1265, %v1324, 0.0
      %v1327 = vadd.f32 %v1325, %v1326
      %v1328 = vmul.f32 %v1297, %v1316
      %v1329 = vmul.f32 %v1298, %v1320
      %v1330 = vmul.f32 %v1301, %v1306
      %v1331 = vmul.f32 %v1302, %v1310
      %v1332 = vsub.f32 %v1328, %v1330
      %v1333 = vsub.f32 %v1329, %v1331
      %v1334 = vsel %vm1265, %v1332, 0.0
      %v1335 = vsel %vm1265, %v1333, 0.0
      %v1336 = vadd.f32 %v1334, %v1335
      %v1339 = vrot.slane %v1061, 7
      %v1340 = vsel %vm1093, %v1339, %v1060
      %v1344 = vrot.slane %v1062, 6
      %v1345 = vrot.slane %v1063, 5
      %vm1346 = vcmask 1043459
      %v1347 = vsel %vm1346, %v1345, %v1344
      %v1349 = vsel %vm1265, %v1340, %v1347
      %v1351 = vrot.slane %v1336, 6
      %v1353 = vsel %vm1265, %v1327, %v1351
      %1354 = vrot.lane.b32.xlu0 %v1349, 1
      %v1355 = vpop.permute.xlu0 %1354
      %v1356 = vlaneseq
      %v1357 = vand.u32 %v1356, 127
      %vm1358 = vcmp.ge.s32.totalorder %v1357, 1
      %v1359 = vsel %vm1358, %v1355, 0.0
      %1360 = vrot.lane.b32.xlu0 %v1349, 127
      %v1361 = vpop.permute.xlu0 %1360
      %vm1362 = vcmp.lt.s32.totalorder %v1357, 127
      %v1363 = vsel %vm1362, %v1361, 0.0
      %v1365 = vrot.slane %v1349, 4
      %vm1367 = vcmask 1043456
      %v1368 = vsel %vm1367, %v1359, %v1365
      %1370 = vset.pattern.permute.xlu0 0
      %1371 = vperm.xlu0 %1370, %v1040
      %v1372 = vpop.permute.xlu0 %1371
      %vm1374 = vcmask 97280
      %v1376 = vsel %vm1374, %v1034, 0
      %v1379 = vsel %vm1367, %v1363, 0
      %1381 = vmatprep.subr.mxu0 0.0
      %1382 = vmatpush1.msra.mxu0 0.0
      %1383 = vmatprep.subr.mxu0 0.0
      %1384 = vmatpush1.msra.mxu0 0.0
      %1385 = vmatprep.subr.mxu0 0.0
      %1386 = vmatpush1.msra.mxu0 0.0
      %1387 = vmatprep.subr.mxu0 0.0
      %1388 = vmatpush1.msra.mxu0 0.0
      %1389 = vmatprep.subr.mxu0 0.0
      %1390 = vmatpush1.msra.mxu0 0.0
      %1391 = vmatprep.subr.mxu0 0.0
      %1392 = vmatpush1.msra.mxu0 0.0
      %1393 = vmatprep.subr.mxu0 0.0
      %1394 = vmatpush1.msra.mxu0 0.0
      %1395 = vmatprep.subr.mxu0 0.0
      %1396 = vmatpush1.msra.mxu0 0.0
      %1397 = vmatprep.subr.mxu0 0.0
      %1398 = vmatpush1.msra.mxu0 0.0
      %1399 = vmatprep.subr.mxu0 0.0
      %1400 = vmatpush1.msra.mxu0 0.0
      %1401 = vmatprep.subr.mxu0 0.0
      %1402 = vmatpush1.msra.mxu0 0.0
      %1403 = vmatprep.subr.mxu0 0.0
      %1404 = vmatpush1.msra.mxu0 0.0
      %1405 = vmatprep.subr.mxu0 0.0
      %1406 = vmatpush1.msra.mxu0 0.0
      %1407 = vmatprep.subr.mxu0 0.0
      %1408 = vmatpush1.msra.mxu0 0.0
      %1409 = vmatprep.subr.mxu0 0.0
      %1410 = vmatpush1.msra.mxu0 %v1379
      %1411 = vmatprep.subr.mxu0 0.0
      %1412 = vmatpush1.msra.mxu0 %v1368
      %1413 = vmatprep.subr.mxu0 0.0
      %1414 = vmatpush2.msra.mxu0 0.0
      %1415 = vmatprep.subr.mxu0 0.0
      %1416 = vmatpush2.msra.mxu0 0.0
      %1417 = vmatprep.subr.mxu0 0.0
      %1418 = vmatpush2.msra.mxu0 0.0
      %1419 = vmatprep.subr.mxu0 0.0
      %1420 = vmatpush2.msra.mxu0 0.0
      %1421 = vmatprep.subr.mxu0 0.0
      %1422 = vmatpush2.msra.mxu0 0.0
      %1423 = vmatprep.subr.mxu0 0.0
      %1424 = vmatpush2.msra.mxu0 0.0
      %1425 = vmatprep.subr.mxu0 0.0
      %1426 = vmatpush2.msra.mxu0 0.0
      %1427 = vmatprep.subr.mxu0 0.0
      %1428 = vmatpush2.msra.mxu0 0.0
      %1429 = vmatprep.subr.mxu0 0.0
      %1430 = vmatpush2.msra.mxu0 0.0
      %1431 = vmatprep.subr.mxu0 0.0
      %1432 = vmatpush2.msra.mxu0 0.0
      %1433 = vmatprep.subr.mxu0 0.0
      %1434 = vmatpush2.msra.mxu0 0.0
      %1435 = vmatprep.subr.mxu0 0.0
      %1436 = vmatpush2.msra.mxu0 0.0
      %1437 = vmatprep.subr.mxu0 0.0
      %1438 = vmatpush2.msra.mxu0 0.0
      %1439 = vmatprep.subr.mxu0 0.0
      %1440 = vmatpush2.msra.mxu0 0.0
      %1441 = vmatprep.subr.mxu0 0.0
      %1442 = vmatpush2.msra.mxu0 0.0
      %1443 = vmatprep.subr.mxu0 0.0
      %1444 = vmatpush2.msra.mxu0 0.0
      %1445 = vmatprep.mubr.f32.mxu0 0.0
      %1446 = vmatmul.mubr.f32.gmra.mxu0 %v1376
      %v1447 = vpop.f32.mrf.mxu0
      %v1448 = vadd.f32 %v1372, %v1447
      %v1449 = vpop.f32.mrf.mxu0
      %1450 = vdwg.mxu0
      %v1451 = vmax.f32 %v1448, 0.0
      %1452 = vrot.lane.b32.xlu0 %v1451, 2
      %v1453 = vpop.permute.xlu0 %1452
      %vm1454 = vcmp.ge.s32.totalorder %v1357, 2
      %v1455 = vsel %vm1454, %v1453, 0.0
      %1456 = vrot.lane.b32.xlu0 %v1451, 126
      %v1457 = vpop.permute.xlu0 %1456
      %vm1458 = vcmp.lt.s32.totalorder %v1357, 126
      %v1459 = vsel %vm1458, %v1457, 0.0
      %1461 = vset.pattern.permute.xlu0 0
      %1462 = vperm.xlu0 %1461, %v1041
      %v1463 = vpop.permute.xlu0 %1462
      %vm1465 = vcmask 195584
      %v1467 = vsel %vm1465, %v1035, 0
      %1469 = vmatprep.subr.mxu0 0.0
      %1470 = vmatpush1.msra.mxu0 0.0
      %1471 = vmatprep.subr.mxu0 0.0
      %1472 = vmatpush1.msra.mxu0 0.0
      %1473 = vmatprep.subr.mxu0 0.0
      %1474 = vmatpush1.msra.mxu0 0.0
      %1475 = vmatprep.subr.mxu0 0.0
      %1476 = vmatpush1.msra.mxu0 0.0
      %1477 = vmatprep.subr.mxu0 0.0
      %1478 = vmatpush1.msra.mxu0 0.0
      %1479 = vmatprep.subr.mxu0 0.0
      %1480 = vmatpush1.msra.mxu0 0.0
      %1481 = vmatprep.subr.mxu0 0.0
      %1482 = vmatpush1.msra.mxu0 0.0
      %1483 = vmatprep.subr.mxu0 0.0
      %1484 = vmatpush1.msra.mxu0 0.0
      %1485 = vmatprep.subr.mxu0 0.0
      %1486 = vmatpush1.msra.mxu0 0.0
      %1487 = vmatprep.subr.mxu0 0.0
      %1488 = vmatpush1.msra.mxu0 0.0
      %1489 = vmatprep.subr.mxu0 0.0
      %1490 = vmatpush1.msra.mxu0 0.0
      %1491 = vmatprep.subr.mxu0 0.0
      %1492 = vmatpush1.msra.mxu0 0.0
      %1493 = vmatprep.subr.mxu0 0.0
      %1494 = vmatpush1.msra.mxu0 0.0
      %1495 = vmatprep.subr.mxu0 0.0
      %1496 = vmatpush1.msra.mxu0 %v1459
      %1497 = vmatprep.subr.mxu0 0.0
      %1498 = vmatpush1.msra.mxu0 %v1451
      %1499 = vmatprep.subr.mxu0 0.0
      %1500 = vmatpush1.msra.mxu0 %v1455
      %1501 = vmatprep.subr.mxu0 0.0
      %1502 = vmatpush2.msra.mxu0 0.0
      %1503 = vmatprep.subr.mxu0 0.0
      %1504 = vmatpush2.msra.mxu0 0.0
      %1505 = vmatprep.subr.mxu0 0.0
      %1506 = vmatpush2.msra.mxu0 0.0
      %1507 = vmatprep.subr.mxu0 0.0
      %1508 = vmatpush2.msra.mxu0 0.0
      %1509 = vmatprep.subr.mxu0 0.0
      %1510 = vmatpush2.msra.mxu0 0.0
      %1511 = vmatprep.subr.mxu0 0.0
      %1512 = vmatpush2.msra.mxu0 0.0
      %1513 = vmatprep.subr.mxu0 0.0
      %1514 = vmatpush2.msra.mxu0 0.0
      %1515 = vmatprep.subr.mxu0 0.0
      %1516 = vmatpush2.msra.mxu0 0.0
      %1517 = vmatprep.subr.mxu0 0.0
      %1518 = vmatpush2.msra.mxu0 0.0
      %1519 = vmatprep.subr.mxu0 0.0
      %1520 = vmatpush2.msra.mxu0 0.0
      %1521 = vmatprep.subr.mxu0 0.0
      %1522 = vmatpush2.msra.mxu0 0.0
      %1523 = vmatprep.subr.mxu0 0.0
      %1524 = vmatpush2.msra.mxu0 0.0
      %1525 = vmatprep.subr.mxu0 0.0
      %1526 = vmatpush2.msra.mxu0 0.0
      %1527 = vmatprep.subr.mxu0 0.0
      %1528 = vmatpush2.msra.mxu0 0.0
      %1529 = vmatprep.subr.mxu0 0.0
      %1530 = vmatpush2.msra.mxu0 0.0
      %1531 = vmatprep.subr.mxu0 0.0
      %1532 = vmatpush2.msra.mxu0 0.0
      %1533 = vmatprep.mubr.f32.mxu0 0.0
      %1534 = vmatmul.mubr.f32.gmra.mxu0 %v1467
      %v1535 = vpop.f32.mrf.mxu0
      %v1536 = vadd.f32 %v1463, %v1535
      %v1537 = vpop.f32.mrf.mxu0
      %1538 = vdwg.mxu0
      %v1539 = vmax.f32 %v1536, 0.0
      %1540 = vrot.lane.b32.xlu0 %v1539, 4
      %v1541 = vpop.permute.xlu0 %1540
      %vm1542 = vcmp.ge.s32.totalorder %v1357, 4
      %v1543 = vsel %vm1542, %v1541, 0.0
      %1544 = vrot.lane.b32.xlu0 %v1539, 124
      %v1545 = vpop.permute.xlu0 %1544
      %vm1546 = vcmp.lt.s32.totalorder %v1357, 124
      %v1547 = vsel %vm1546, %v1545, 0.0
      %1549 = vset.pattern.permute.xlu0 0
      %1550 = vperm.xlu0 %1549, %v1042
      %v1551 = vpop.permute.xlu0 %1550
      %v1554 = vsel %vm1465, %v1036, 0
      %1556 = vmatprep.subr.mxu0 0.0
      %1557 = vmatpush1.msra.mxu0 0.0
      %1558 = vmatprep.subr.mxu0 0.0
      %1559 = vmatpush1.msra.mxu0 0.0
      %1560 = vmatprep.subr.mxu0 0.0
      %1561 = vmatpush1.msra.mxu0 0.0
      %1562 = vmatprep.subr.mxu0 0.0
      %1563 = vmatpush1.msra.mxu0 0.0
      %1564 = vmatprep.subr.mxu0 0.0
      %1565 = vmatpush1.msra.mxu0 0.0
      %1566 = vmatprep.subr.mxu0 0.0
      %1567 = vmatpush1.msra.mxu0 0.0
      %1568 = vmatprep.subr.mxu0 0.0
      %1569 = vmatpush1.msra.mxu0 0.0
      %1570 = vmatprep.subr.mxu0 0.0
      %1571 = vmatpush1.msra.mxu0 0.0
      %1572 = vmatprep.subr.mxu0 0.0
      %1573 = vmatpush1.msra.mxu0 0.0
      %1574 = vmatprep.subr.mxu0 0.0
      %1575 = vmatpush1.msra.mxu0 0.0
      %1576 = vmatprep.subr.mxu0 0.0
      %1577 = vmatpush1.msra.mxu0 0.0
      %1578 = vmatprep.subr.mxu0 0.0
      %1579 = vmatpush1.msra.mxu0 0.0
      %1580 = vmatprep.subr.mxu0 0.0
      %1581 = vmatpush1.msra.mxu0 0.0
      %1582 = vmatprep.subr.mxu0 0.0
      %1583 = vmatpush1.msra.mxu0 %v1547
      %1584 = vmatprep.subr.mxu0 0.0
      %1585 = vmatpush1.msra.mxu0 %v1539
      %1586 = vmatprep.subr.mxu0 0.0
      %1587 = vmatpush1.msra.mxu0 %v1543
      %1588 = vmatprep.subr.mxu0 0.0
      %1589 = vmatpush2.msra.mxu0 0.0
      %1590 = vmatprep.subr.mxu0 0.0
      %1591 = vmatpush2.msra.mxu0 0.0
      %1592 = vmatprep.subr.mxu0 0.0
      %1593 = vmatpush2.msra.mxu0 0.0
      %1594 = vmatprep.subr.mxu0 0.0
      %1595 = vmatpush2.msra.mxu0 0.0
      %1596 = vmatprep.subr.mxu0 0.0
      %1597 = vmatpush2.msra.mxu0 0.0
      %1598 = vmatprep.subr.mxu0 0.0
      %1599 = vmatpush2.msra.mxu0 0.0
      %1600 = vmatprep.subr.mxu0 0.0
      %1601 = vmatpush2.msra.mxu0 0.0
      %1602 = vmatprep.subr.mxu0 0.0
      %1603 = vmatpush2.msra.mxu0 0.0
      %1604 = vmatprep.subr.mxu0 0.0
      %1605 = vmatpush2.msra.mxu0 0.0
      %1606 = vmatprep.subr.mxu0 0.0
      %1607 = vmatpush2.msra.mxu0 0.0
      %1608 = vmatprep.subr.mxu0 0.0
      %1609 = vmatpush2.msra.mxu0 0.0
      %1610 = vmatprep.subr.mxu0 0.0
      %1611 = vmatpush2.msra.mxu0 0.0
      %1612 = vmatprep.subr.mxu0 0.0
      %1613 = vmatpush2.msra.mxu0 0.0
      %1614 = vmatprep.subr.mxu0 0.0
      %1615 = vmatpush2.msra.mxu0 0.0
      %1616 = vmatprep.subr.mxu0 0.0
      %1617 = vmatpush2.msra.mxu0 0.0
      %1618 = vmatprep.subr.mxu0 0.0
      %1619 = vmatpush2.msra.mxu0 0.0
      %1620 = vmatprep.mubr.f32.mxu0 0.0
      %1621 = vmatmul.mubr.f32.gmra.mxu0 %v1554
      %v1622 = vpop.f32.mrf.mxu0
      %v1623 = vadd.f32 %v1551, %v1622
      %v1624 = vpop.f32.mrf.mxu0
      %1625 = vdwg.mxu0
      %v1626 = vmax.f32 %v1623, 0.0
      %1627 = vrot.lane.b32.xlu0 %v1626, 4
      %v1628 = vpop.permute.xlu0 %1627
      %v1629 = vsel %vm1542, %v1628, 0.0
      %1630 = vrot.lane.b32.xlu0 %v1626, 124
      %v1631 = vpop.permute.xlu0 %1630
      %v1632 = vsel %vm1546, %v1631, 0.0
      %1634 = vset.pattern.permute.xlu0 0
      %1635 = vperm.xlu0 %1634, %v1043
      %v1636 = vpop.permute.xlu0 %1635
      %v1639 = vsel %vm1465, %v1037, 0
      %1641 = vmatprep.subr.mxu0 0.0
      %1642 = vmatpush1.msra.mxu0 0.0
      %1643 = vmatprep.subr.mxu0 0.0
      %1644 = vmatpush1.msra.mxu0 0.0
      %1645 = vmatprep.subr.mxu0 0.0
      %1646 = vmatpush1.msra.mxu0 0.0
      %1647 = vmatprep.subr.mxu0 0.0
      %1648 = vmatpush1.msra.mxu0 0.0
      %1649 = vmatprep.subr.mxu0 0.0
      %1650 = vmatpush1.msra.mxu0 0.0
      %1651 = vmatprep.subr.mxu0 0.0
      %1652 = vmatpush1.msra.mxu0 0.0
      %1653 = vmatprep.subr.mxu0 0.0
      %1654 = vmatpush1.msra.mxu0 0.0
      %1655 = vmatprep.subr.mxu0 0.0
      %1656 = vmatpush1.msra.mxu0 0.0
      %1657 = vmatprep.subr.mxu0 0.0
      %1658 = vmatpush1.msra.mxu0 0.0
      %1659 = vmatprep.subr.mxu0 0.0
      %1660 = vmatpush1.msra.mxu0 0.0
      %1661 = vmatprep.subr.mxu0 0.0
      %1662 = vmatpush1.msra.mxu0 0.0
      %1663 = vmatprep.subr.mxu0 0.0
      %1664 = vmatpush1.msra.mxu0 0.0
      %1665 = vmatprep.subr.mxu0 0.0
      %1666 = vmatpush1.msra.mxu0 0.0
      %1667 = vmatprep.subr.mxu0 0.0
      %1668 = vmatpush1.msra.mxu0 %v1632
      %1669 = vmatprep.subr.mxu0 0.0
      %1670 = vmatpush1.msra.mxu0 %v1626
      %1671 = vmatprep.subr.mxu0 0.0
      %1672 = vmatpush1.msra.mxu0 %v1629
      %1673 = vmatprep.subr.mxu0 0.0
      %1674 = vmatpush2.msra.mxu0 0.0
      %1675 = vmatprep.subr.mxu0 0.0
      %1676 = vmatpush2.msra.mxu0 0.0
      %1677 = vmatprep.subr.mxu0 0.0
      %1678 = vmatpush2.msra.mxu0 0.0
      %1679 = vmatprep.subr.mxu0 0.0
      %1680 = vmatpush2.msra.mxu0 0.0
      %1681 = vmatprep.subr.mxu0 0.0
      %1682 = vmatpush2.msra.mxu0 0.0
      %1683 = vmatprep.subr.mxu0 0.0
      %1684 = vmatpush2.msra.mxu0 0.0
      %1685 = vmatprep.subr.mxu0 0.0
      %1686 = vmatpush2.msra.mxu0 0.0
      %1687 = vmatprep.subr.mxu0 0.0
      %1688 = vmatpush2.msra.mxu0 0.0
      %1689 = vmatprep.subr.mxu0 0.0
      %1690 = vmatpush2.msra.mxu0 0.0
      %1691 = vmatprep.subr.mxu0 0.0
      %1692 = vmatpush2.msra.mxu0 0.0
      %1693 = vmatprep.subr.mxu0 0.0
      %1694 = vmatpush2.msra.mxu0 0.0
      %1695 = vmatprep.subr.mxu0 0.0
      %1696 = vmatpush2.msra.mxu0 0.0
      %1697 = vmatprep.subr.mxu0 0.0
      %1698 = vmatpush2.msra.mxu0 0.0
      %1699 = vmatprep.subr.mxu0 0.0
      %1700 = vmatpush2.msra.mxu0 0.0
      %1701 = vmatprep.subr.mxu0 0.0
      %1702 = vmatpush2.msra.mxu0 0.0
      %1703 = vmatprep.subr.mxu0 0.0
      %1704 = vmatpush2.msra.mxu0 0.0
      %1705 = vmatprep.mubr.f32.mxu0 0.0
      %1706 = vmatmul.mubr.f32.gmra.mxu0 %v1639
      %v1707 = vpop.f32.mrf.mxu0
      %v1708 = vadd.f32 %v1636, %v1707
      %v1709 = vpop.f32.mrf.mxu0
      %1710 = vdwg.mxu0
      %v1711 = vmax.f32 %v1708, 0.0
      %1712 = vrot.lane.b32.xlu0 %v1711, 2
      %v1713 = vpop.permute.xlu0 %1712
      %1714 = vrot.lane.b32.xlu0 %v1539, 2
      %v1715 = vpop.permute.xlu0 %1714
      %v1716 = vsel %vm1454, %v1713, 0.0
      %v1717 = vsel %vm1454, %v1715, 0.0
      %1718 = vrot.lane.b32.xlu0 %v1711, 126
      %v1719 = vpop.permute.xlu0 %1718
      %1720 = vrot.lane.b32.xlu0 %v1539, 126
      %v1721 = vpop.permute.xlu0 %1720
      %v1722 = vsel %vm1458, %v1719, 0.0
      %v1723 = vsel %vm1458, %v1721, 0.0
      %1725 = vset.pattern.permute.xlu0 0
      %1726 = vperm.xlu0 %1725, %v1044
      %v1727 = vpop.permute.xlu0 %1726
      %vm1729 = vcmask 392192
      %v1731 = vsel %vm1729, %v1038, 0
      %1733 = vmatprep.subr.mxu0 0.0
      %1734 = vmatpush1.msra.mxu0 0.0
      %1735 = vmatprep.subr.mxu0 0.0
      %1736 = vmatpush1.msra.mxu0 0.0
      %1737 = vmatprep.subr.mxu0 0.0
      %1738 = vmatpush1.msra.mxu0 0.0
      %1739 = vmatprep.subr.mxu0 0.0
      %1740 = vmatpush1.msra.mxu0 0.0
      %1741 = vmatprep.subr.mxu0 0.0
      %1742 = vmatpush1.msra.mxu0 0.0
      %1743 = vmatprep.subr.mxu0 0.0
      %1744 = vmatpush1.msra.mxu0 0.0
      %1745 = vmatprep.subr.mxu0 0.0
      %1746 = vmatpush1.msra.mxu0 0.0
      %1747 = vmatprep.subr.mxu0 0.0
      %1748 = vmatpush1.msra.mxu0 0.0
      %1749 = vmatprep.subr.mxu0 0.0
      %1750 = vmatpush1.msra.mxu0 0.0
      %1751 = vmatprep.subr.mxu0 0.0
      %1752 = vmatpush1.msra.mxu0 0.0
      %1753 = vmatprep.subr.mxu0 0.0
      %1754 = vmatpush1.msra.mxu0 %v1723
      %1755 = vmatprep.subr.mxu0 0.0
      %1756 = vmatpush1.msra.mxu0 %v1722
      %1757 = vmatprep.subr.mxu0 0.0
      %1758 = vmatpush1.msra.mxu0 %v1539
      %1759 = vmatprep.subr.mxu0 0.0
      %1760 = vmatpush1.msra.mxu0 %v1711
      %1761 = vmatprep.subr.mxu0 0.0
      %1762 = vmatpush1.msra.mxu0 %v1717
      %1763 = vmatprep.subr.mxu0 0.0
      %1764 = vmatpush1.msra.mxu0 %v1716
      %1765 = vmatprep.subr.mxu0 0.0
      %1766 = vmatpush2.msra.mxu0 0.0
      %1767 = vmatprep.subr.mxu0 0.0
      %1768 = vmatpush2.msra.mxu0 0.0
      %1769 = vmatprep.subr.mxu0 0.0
      %1770 = vmatpush2.msra.mxu0 0.0
      %1771 = vmatprep.subr.mxu0 0.0
      %1772 = vmatpush2.msra.mxu0 0.0
      %1773 = vmatprep.subr.mxu0 0.0
      %1774 = vmatpush2.msra.mxu0 0.0
      %1775 = vmatprep.subr.mxu0 0.0
      %1776 = vmatpush2.msra.mxu0 0.0
      %1777 = vmatprep.subr.mxu0 0.0
      %1778 = vmatpush2.msra.mxu0 0.0
      %1779 = vmatprep.subr.mxu0 0.0
      %1780 = vmatpush2.msra.mxu0 0.0
      %1781 = vmatprep.subr.mxu0 0.0
      %1782 = vmatpush2.msra.mxu0 0.0
      %1783 = vmatprep.subr.mxu0 0.0
      %1784 = vmatpush2.msra.mxu0 0.0
      %1785 = vmatprep.subr.mxu0 0.0
      %1786 = vmatpush2.msra.mxu0 0.0
      %1787 = vmatprep.subr.mxu0 0.0
      %1788 = vmatpush2.msra.mxu0 0.0
      %1789 = vmatprep.subr.mxu0 0.0
      %1790 = vmatpush2.msra.mxu0 0.0
      %1791 = vmatprep.subr.mxu0 0.0
      %1792 = vmatpush2.msra.mxu0 0.0
      %1793 = vmatprep.subr.mxu0 0.0
      %1794 = vmatpush2.msra.mxu0 0.0
      %1795 = vmatprep.subr.mxu0 0.0
      %1796 = vmatpush2.msra.mxu0 0.0
      %1797 = vmatprep.mubr.f32.mxu0 0.0
      %1798 = vmatmul.mubr.f32.gmra.mxu0 %v1731
      %v1799 = vpop.f32.mrf.mxu0
      %v1800 = vadd.f32 %v1727, %v1799
      %v1801 = vpop.f32.mrf.mxu0
      %1802 = vdwg.mxu0
      %v1803 = vmax.f32 %v1800, 0.0
      %1804 = vrot.lane.b32.xlu0 %v1803, 1
      %v1805 = vpop.permute.xlu0 %1804
      %1806 = vrot.lane.b32.xlu0 %v1451, 1
      %v1807 = vpop.permute.xlu0 %1806
      %v1808 = vsel %vm1358, %v1805, 0.0
      %v1809 = vsel %vm1358, %v1807, 0.0
      %1810 = vrot.lane.b32.xlu0 %v1803, 127
      %v1811 = vpop.permute.xlu0 %1810
      %1812 = vrot.lane.b32.xlu0 %v1451, 127
      %v1813 = vpop.permute.xlu0 %1812
      %v1814 = vsel %vm1362, %v1811, 0.0
      %v1815 = vsel %vm1362, %v1813, 0.0
      %1817 = vset.pattern.permute.xlu0 0
      %1818 = vperm.xlu0 %1817, %v1045
      %v1819 = vpop.permute.xlu0 %1818
      %v1822 = vsel %vm1729, %v1039, 0
      %1824 = vmatprep.subr.mxu0 0.0
      %1825 = vmatpush1.msra.mxu0 0.0
      %1826 = vmatprep.subr.mxu0 0.0
      %1827 = vmatpush1.msra.mxu0 0.0
      %1828 = vmatprep.subr.mxu0 0.0
      %1829 = vmatpush1.msra.mxu0 0.0
      %1830 = vmatprep.subr.mxu0 0.0
      %1831 = vmatpush1.msra.mxu0 0.0
      %1832 = vmatprep.subr.mxu0 0.0
      %1833 = vmatpush1.msra.mxu0 0.0
      %1834 = vmatprep.subr.mxu0 0.0
      %1835 = vmatpush1.msra.mxu0 0.0
      %1836 = vmatprep.subr.mxu0 0.0
      %1837 = vmatpush1.msra.mxu0 0.0
      %1838 = vmatprep.subr.mxu0 0.0
      %1839 = vmatpush1.msra.mxu0 0.0
      %1840 = vmatprep.subr.mxu0 0.0
      %1841 = vmatpush1.msra.mxu0 0.0
      %1842 = vmatprep.subr.mxu0 0.0
      %1843 = vmatpush1.msra.mxu0 0.0
      %1844 = vmatprep.subr.mxu0 0.0
      %1845 = vmatpush1.msra.mxu0 %v1815
      %1846 = vmatprep.subr.mxu0 0.0
      %1847 = vmatpush1.msra.mxu0 %v1814
      %1848 = vmatprep.subr.mxu0 0.0
      %1849 = vmatpush1.msra.mxu0 %v1451
      %1850 = vmatprep.subr.mxu0 0.0
      %1851 = vmatpush1.msra.mxu0 %v1803
      %1852 = vmatprep.subr.mxu0 0.0
      %1853 = vmatpush1.msra.mxu0 %v1809
      %1854 = vmatprep.subr.mxu0 0.0
      %1855 = vmatpush1.msra.mxu0 %v1808
      %1856 = vmatprep.subr.mxu0 0.0
      %1857 = vmatpush2.msra.mxu0 0.0
      %1858 = vmatprep.subr.mxu0 0.0
      %1859 = vmatpush2.msra.mxu0 0.0
      %1860 = vmatprep.subr.mxu0 0.0
      %1861 = vmatpush2.msra.mxu0 0.0
      %1862 = vmatprep.subr.mxu0 0.0
      %1863 = vmatpush2.msra.mxu0 0.0
      %1864 = vmatprep.subr.mxu0 0.0
      %1865 = vmatpush2.msra.mxu0 0.0
      %1866 = vmatprep.subr.mxu0 0.0
      %1867 = vmatpush2.msra.mxu0 0.0
      %1868 = vmatprep.subr.mxu0 0.0
      %1869 = vmatpush2.msra.mxu0 0.0
      %1870 = vmatprep.subr.mxu0 0.0
      %1871 = vmatpush2.msra.mxu0 0.0
      %1872 = vmatprep.subr.mxu0 0.0
      %1873 = vmatpush2.msra.mxu0 0.0
      %1874 = vmatprep.subr.mxu0 0.0
      %1875 = vmatpush2.msra.mxu0 0.0
      %1876 = vmatprep.subr.mxu0 0.0
      %1877 = vmatpush2.msra.mxu0 0.0
      %1878 = vmatprep.subr.mxu0 0.0
      %1879 = vmatpush2.msra.mxu0 0.0
      %1880 = vmatprep.subr.mxu0 0.0
      %1881 = vmatpush2.msra.mxu0 0.0
      %1882 = vmatprep.subr.mxu0 0.0
      %1883 = vmatpush2.msra.mxu0 0.0
      %1884 = vmatprep.subr.mxu0 0.0
      %1885 = vmatpush2.msra.mxu0 0.0
      %1886 = vmatprep.subr.mxu0 0.0
      %1887 = vmatpush2.msra.mxu0 0.0
      %1888 = vmatprep.mubr.f32.mxu0 0.0
      %1889 = vmatmul.mubr.f32.gmra.mxu0 %v1822
      %v1890 = vpop.f32.mrf.mxu0
      %v1891 = vadd.f32 %v1819, %v1890
      %v1892 = vpop.f32.mrf.mxu0
      %1893 = vdwg.mxu0
      %v1894 = vmax.f32 %v1891, 0.0
      %1895 = vrot.lane.b32.xlu0 %v1353, 1
      %v1896 = vpop.permute.xlu0 %1895
      %v1897 = vsel %vm1358, %v1896, 0.0
      %1898 = vrot.lane.b32.xlu0 %v1353, 127
      %v1899 = vpop.permute.xlu0 %1898
      %v1900 = vsel %vm1362, %v1899, 0.0
      %v1902 = vrot.slane %v1353, 4
      %v1904 = vsel %vm1367, %v1897, %v1902
      %1906 = vset.pattern.permute.xlu0 0
      %1907 = vperm.xlu0 %1906, %v1052
      %v1908 = vpop.permute.xlu0 %1907
      %v1911 = vsel %vm1374, %v1046, 0
      %v1914 = vsel %vm1367, %v1900, 0
      %1916 = vmatprep.subr.mxu0 0.0
      %1917 = vmatpush1.msra.mxu0 0.0
      %1918 = vmatprep.subr.mxu0 0.0
      %1919 = vmatpush1.msra.mxu0 0.0
      %1920 = vmatprep.subr.mxu0 0.0
      %1921 = vmatpush1.msra.mxu0 0.0
      %1922 = vmatprep.subr.mxu0 0.0
      %1923 = vmatpush1.msra.mxu0 0.0
      %1924 = vmatprep.subr.mxu0 0.0
      %1925 = vmatpush1.msra.mxu0 0.0
      %1926 = vmatprep.subr.mxu0 0.0
      %1927 = vmatpush1.msra.mxu0 0.0
      %1928 = vmatprep.subr.mxu0 0.0
      %1929 = vmatpush1.msra.mxu0 0.0
      %1930 = vmatprep.subr.mxu0 0.0
      %1931 = vmatpush1.msra.mxu0 0.0
      %1932 = vmatprep.subr.mxu0 0.0
      %1933 = vmatpush1.msra.mxu0 0.0
      %1934 = vmatprep.subr.mxu0 0.0
      %1935 = vmatpush1.msra.mxu0 0.0
      %1936 = vmatprep.subr.mxu0 0.0
      %1937 = vmatpush1.msra.mxu0 0.0
      %1938 = vmatprep.subr.mxu0 0.0
      %1939 = vmatpush1.msra.mxu0 0.0
      %1940 = vmatprep.subr.mxu0 0.0
      %1941 = vmatpush1.msra.mxu0 0.0
      %1942 = vmatprep.subr.mxu0 0.0
      %1943 = vmatpush1.msra.mxu0 0.0
      %1944 = vmatprep.subr.mxu0 0.0
      %1945 = vmatpush1.msra.mxu0 %v1914
      %1946 = vmatprep.subr.mxu0 0.0
      %1947 = vmatpush1.msra.mxu0 %v1904
      %1948 = vmatprep.subr.mxu0 0.0
      %1949 = vmatpush2.msra.mxu0 0.0
      %1950 = vmatprep.subr.mxu0 0.0
      %1951 = vmatpush2.msra.mxu0 0.0
      %1952 = vmatprep.subr.mxu0 0.0
      %1953 = vmatpush2.msra.mxu0 0.0
      %1954 = vmatprep.subr.mxu0 0.0
      %1955 = vmatpush2.msra.mxu0 0.0
      %1956 = vmatprep.subr.mxu0 0.0
      %1957 = vmatpush2.msra.mxu0 0.0
      %1958 = vmatprep.subr.mxu0 0.0
      %1959 = vmatpush2.msra.mxu0 0.0
      %1960 = vmatprep.subr.mxu0 0.0
      %1961 = vmatpush2.msra.mxu0 0.0
      %1962 = vmatprep.subr.mxu0 0.0
      %1963 = vmatpush2.msra.mxu0 0.0
      %1964 = vmatprep.subr.mxu0 0.0
      %1965 = vmatpush2.msra.mxu0 0.0
      %1966 = vmatprep.subr.mxu0 0.0
      %1967 = vmatpush2.msra.mxu0 0.0
      %1968 = vmatprep.subr.mxu0 0.0
      %1969 = vmatpush2.msra.mxu0 0.0
      %1970 = vmatprep.subr.mxu0 0.0
      %1971 = vmatpush2.msra.mxu0 0.0
      %1972 = vmatprep.subr.mxu0 0.0
      %1973 = vmatpush2.msra.mxu0 0.0
      %1974 = vmatprep.subr.mxu0 0.0
      %1975 = vmatpush2.msra.mxu0 0.0
      %1976 = vmatprep.subr.mxu0 0.0
      %1977 = vmatpush2.msra.mxu0 0.0
      %1978 = vmatprep.subr.mxu0 0.0
      %1979 = vmatpush2.msra.mxu0 0.0
      %1980 = vmatprep.mubr.f32.mxu0 0.0
      %1981 = vmatmul.mubr.f32.gmra.mxu0 %v1911
      %v1982 = vpop.f32.mrf.mxu0
      %v1983 = vadd.f32 %v1908, %v1982
      %v1984 = vpop.f32.mrf.mxu0
      %1985 = vdwg.mxu0
      %v1986 = vmax.f32 %v1983, 0.0
      %1987 = vrot.lane.b32.xlu0 %v1986, 2
      %v1988 = vpop.permute.xlu0 %1987
      %v1989 = vsel %vm1454, %v1988, 0.0
      %1990 = vrot.lane.b32.xlu0 %v1986, 126
      %v1991 = vpop.permute.xlu0 %1990
      %v1992 = vsel %vm1458, %v1991, 0.0
      %1994 = vset.pattern.permute.xlu0 0
      %1995 = vperm.xlu0 %1994, %v1053
      %v1996 = vpop.permute.xlu0 %1995
      %v1999 = vsel %vm1465, %v1047, 0
      %2001 = vmatprep.subr.mxu0 0.0
      %2002 = vmatpush1.msra.mxu0 0.0
      %2003 = vmatprep.subr.mxu0 0.0
      %2004 = vmatpush1.msra.mxu0 0.0
      %2005 = vmatprep.subr.mxu0 0.0
      %2006 = vmatpush1.msra.mxu0 0.0
      %2007 = vmatprep.subr.mxu0 0.0
      %2008 = vmatpush1.msra.mxu0 0.0
      %2009 = vmatprep.subr.mxu0 0.0
      %2010 = vmatpush1.msra.mxu0 0.0
      %2011 = vmatprep.subr.mxu0 0.0
      %2012 = vmatpush1.msra.mxu0 0.0
      %2013 = vmatprep.subr.mxu0 0.0
      %2014 = vmatpush1.msra.mxu0 0.0
      %2015 = vmatprep.subr.mxu0 0.0
      %2016 = vmatpush1.msra.mxu0 0.0
      %2017 = vmatprep.subr.mxu0 0.0
      %2018 = vmatpush1.msra.mxu0 0.0
      %2019 = vmatprep.subr.mxu0 0.0
      %2020 = vmatpush1.msra.mxu0 0.0
      %2021 = vmatprep.subr.mxu0 0.0
      %2022 = vmatpush1.msra.mxu0 0.0
      %2023 = vmatprep.subr.mxu0 0.0
      %2024 = vmatpush1.msra.mxu0 0.0
      %2025 = vmatprep.subr.mxu0 0.0
      %2026 = vmatpush1.msra.mxu0 0.0
      %2027 = vmatprep.subr.mxu0 0.0
      %2028 = vmatpush1.msra.mxu0 %v1992
      %2029 = vmatprep.subr.mxu0 0.0
      %2030 = vmatpush1.msra.mxu0 %v1986
      %2031 = vmatprep.subr.mxu0 0.0
      %2032 = vmatpush1.msra.mxu0 %v1989
      %2033 = vmatprep.subr.mxu0 0.0
      %2034 = vmatpush2.msra.mxu0 0.0
      %2035 = vmatprep.subr.mxu0 0.0
      %2036 = vmatpush2.msra.mxu0 0.0
      %2037 = vmatprep.subr.mxu0 0.0
      %2038 = vmatpush2.msra.mxu0 0.0
      %2039 = vmatprep.subr.mxu0 0.0
      %2040 = vmatpush2.msra.mxu0 0.0
      %2041 = vmatprep.subr.mxu0 0.0
      %2042 = vmatpush2.msra.mxu0 0.0
      %2043 = vmatprep.subr.mxu0 0.0
      %2044 = vmatpush2.msra.mxu0 0.0
      %2045 = vmatprep.subr.mxu0 0.0
      %2046 = vmatpush2.msra.mxu0 0.0
      %2047 = vmatprep.subr.mxu0 0.0
      %2048 = vmatpush2.msra.mxu0 0.0
      %2049 = vmatprep.subr.mxu0 0.0
      %2050 = vmatpush2.msra.mxu0 0.0
      %2051 = vmatprep.subr.mxu0 0.0
      %2052 = vmatpush2.msra.mxu0 0.0
      %2053 = vmatprep.subr.mxu0 0.0
      %2054 = vmatpush2.msra.mxu0 0.0
      %2055 = vmatprep.subr.mxu0 0.0
      %2056 = vmatpush2.msra.mxu0 0.0
      %2057 = vmatprep.subr.mxu0 0.0
      %2058 = vmatpush2.msra.mxu0 0.0
      %2059 = vmatprep.subr.mxu0 0.0
      %2060 = vmatpush2.msra.mxu0 0.0
      %2061 = vmatprep.subr.mxu0 0.0
      %2062 = vmatpush2.msra.mxu0 0.0
      %2063 = vmatprep.subr.mxu0 0.0
      %2064 = vmatpush2.msra.mxu0 0.0
      %2065 = vmatprep.mubr.f32.mxu0 0.0
      %2066 = vmatmul.mubr.f32.gmra.mxu0 %v1999
      %v2067 = vpop.f32.mrf.mxu0
      %v2068 = vadd.f32 %v1996, %v2067
      %v2069 = vpop.f32.mrf.mxu0
      %2070 = vdwg.mxu0
      %v2071 = vmax.f32 %v2068, 0.0
      %2072 = vrot.lane.b32.xlu0 %v2071, 4
      %v2073 = vpop.permute.xlu0 %2072
      %v2074 = vsel %vm1542, %v2073, 0.0
      %2075 = vrot.lane.b32.xlu0 %v2071, 124
      %v2076 = vpop.permute.xlu0 %2075
      %v2077 = vsel %vm1546, %v2076, 0.0
      %2079 = vset.pattern.permute.xlu0 0
      %2080 = vperm.xlu0 %2079, %v1054
      %v2081 = vpop.permute.xlu0 %2080
      %v2084 = vsel %vm1465, %v1048, 0
      %2086 = vmatprep.subr.mxu0 0.0
      %2087 = vmatpush1.msra.mxu0 0.0
      %2088 = vmatprep.subr.mxu0 0.0
      %2089 = vmatpush1.msra.mxu0 0.0
      %2090 = vmatprep.subr.mxu0 0.0
      %2091 = vmatpush1.msra.mxu0 0.0
      %2092 = vmatprep.subr.mxu0 0.0
      %2093 = vmatpush1.msra.mxu0 0.0
      %2094 = vmatprep.subr.mxu0 0.0
      %2095 = vmatpush1.msra.mxu0 0.0
      %2096 = vmatprep.subr.mxu0 0.0
      %2097 = vmatpush1.msra.mxu0 0.0
      %2098 = vmatprep.subr.mxu0 0.0
      %2099 = vmatpush1.msra.mxu0 0.0
      %2100 = vmatprep.subr.mxu0 0.0
      %2101 = vmatpush1.msra.mxu0 0.0
      %2102 = vmatprep.subr.mxu0 0.0
      %2103 = vmatpush1.msra.mxu0 0.0
      %2104 = vmatprep.subr.mxu0 0.0
      %2105 = vmatpush1.msra.mxu0 0.0
      %2106 = vmatprep.subr.mxu0 0.0
      %2107 = vmatpush1.msra.mxu0 0.0
      %2108 = vmatprep.subr.mxu0 0.0
      %2109 = vmatpush1.msra.mxu0 0.0
      %2110 = vmatprep.subr.mxu0 0.0
      %2111 = vmatpush1.msra.mxu0 0.0
      %2112 = vmatprep.subr.mxu0 0.0
      %2113 = vmatpush1.msra.mxu0 %v2077
      %2114 = vmatprep.subr.mxu0 0.0
      %2115 = vmatpush1.msra.mxu0 %v2071
      %2116 = vmatprep.subr.mxu0 0.0
      %2117 = vmatpush1.msra.mxu0 %v2074
      %2118 = vmatprep.subr.mxu0 0.0
      %2119 = vmatpush2.msra.mxu0 0.0
      %2120 = vmatprep.subr.mxu0 0.0
      %2121 = vmatpush2.msra.mxu0 0.0
      %2122 = vmatprep.subr.mxu0 0.0
      %2123 = vmatpush2.msra.mxu0 0.0
      %2124 = vmatprep.subr.mxu0 0.0
      %2125 = vmatpush2.msra.mxu0 0.0
      %2126 = vmatprep.subr.mxu0 0.0
      %2127 = vmatpush2.msra.mxu0 0.0
      %2128 = vmatprep.subr.mxu0 0.0
      %2129 = vmatpush2.msra.mxu0 0.0
      %2130 = vmatprep.subr.mxu0 0.0
      %2131 = vmatpush2.msra.mxu0 0.0
      %2132 = vmatprep.subr.mxu0 0.0
      %2133 = vmatpush2.msra.mxu0 0.0
      %2134 = vmatprep.subr.mxu0 0.0
      %2135 = vmatpush2.msra.mxu0 0.0
      %2136 = vmatprep.subr.mxu0 0.0
      %2137 = vmatpush2.msra.mxu0 0.0
      %2138 = vmatprep.subr.mxu0 0.0
      %2139 = vmatpush2.msra.mxu0 0.0
      %2140 = vmatprep.subr.mxu0 0.0
      %2141 = vmatpush2.msra.mxu0 0.0
      %2142 = vmatprep.subr.mxu0 0.0
      %2143 = vmatpush2.msra.mxu0 0.0
      %2144 = vmatprep.subr.mxu0 0.0
      %2145 = vmatpush2.msra.mxu0 0.0
      %2146 = vmatprep.subr.mxu0 0.0
      %2147 = vmatpush2.msra.mxu0 0.0
      %2148 = vmatprep.subr.mxu0 0.0
      %2149 = vmatpush2.msra.mxu0 0.0
      %2150 = vmatprep.mubr.f32.mxu0 0.0
      %2151 = vmatmul.mubr.f32.gmra.mxu0 %v2084
      %v2152 = vpop.f32.mrf.mxu0
      %v2153 = vadd.f32 %v2081, %v2152
      %v2154 = vpop.f32.mrf.mxu0
      %2155 = vdwg.mxu0
      %v2156 = vmax.f32 %v2153, 0.0
      %2157 = vrot.lane.b32.xlu0 %v2156, 4
      %v2158 = vpop.permute.xlu0 %2157
      %v2159 = vsel %vm1542, %v2158, 0.0
      %2160 = vrot.lane.b32.xlu0 %v2156, 124
      %v2161 = vpop.permute.xlu0 %2160
      %v2162 = vsel %vm1546, %v2161, 0.0
      %2164 = vset.pattern.permute.xlu0 0
      %2165 = vperm.xlu0 %2164, %v1055
      %v2166 = vpop.permute.xlu0 %2165
      %v2169 = vsel %vm1465, %v1049, 0
      %2171 = vmatprep.subr.mxu0 0.0
      %2172 = vmatpush1.msra.mxu0 0.0
      %2173 = vmatprep.subr.mxu0 0.0
      %2174 = vmatpush1.msra.mxu0 0.0
      %2175 = vmatprep.subr.mxu0 0.0
      %2176 = vmatpush1.msra.mxu0 0.0
      %2177 = vmatprep.subr.mxu0 0.0
      %2178 = vmatpush1.msra.mxu0 0.0
      %2179 = vmatprep.subr.mxu0 0.0
      %2180 = vmatpush1.msra.mxu0 0.0
      %2181 = vmatprep.subr.mxu0 0.0
      %2182 = vmatpush1.msra.mxu0 0.0
      %2183 = vmatprep.subr.mxu0 0.0
      %2184 = vmatpush1.msra.mxu0 0.0
      %2185 = vmatprep.subr.mxu0 0.0
      %2186 = vmatpush1.msra.mxu0 0.0
      %2187 = vmatprep.subr.mxu0 0.0
      %2188 = vmatpush1.msra.mxu0 0.0
      %2189 = vmatprep.subr.mxu0 0.0
      %2190 = vmatpush1.msra.mxu0 0.0
      %2191 = vmatprep.subr.mxu0 0.0
      %2192 = vmatpush1.msra.mxu0 0.0
      %2193 = vmatprep.subr.mxu0 0.0
      %2194 = vmatpush1.msra.mxu0 0.0
      %2195 = vmatprep.subr.mxu0 0.0
      %2196 = vmatpush1.msra.mxu0 0.0
      %2197 = vmatprep.subr.mxu0 0.0
      %2198 = vmatpush1.msra.mxu0 %v2162
      %2199 = vmatprep.subr.mxu0 0.0
      %2200 = vmatpush1.msra.mxu0 %v2156
      %2201 = vmatprep.subr.mxu0 0.0
      %2202 = vmatpush1.msra.mxu0 %v2159
      %2203 = vmatprep.subr.mxu0 0.0
      %2204 = vmatpush2.msra.mxu0 0.0
      %2205 = vmatprep.subr.mxu0 0.0
      %2206 = vmatpush2.msra.mxu0 0.0
      %2207 = vmatprep.subr.mxu0 0.0
      %2208 = vmatpush2.msra.mxu0 0.0
      %2209 = vmatprep.subr.mxu0 0.0
      %2210 = vmatpush2.msra.mxu0 0.0
      %2211 = vmatprep.subr.mxu0 0.0
      %2212 = vmatpush2.msra.mxu0 0.0
      %2213 = vmatprep.subr.mxu0 0.0
      %2214 = vmatpush2.msra.mxu0 0.0
      %2215 = vmatprep.subr.mxu0 0.0
      %2216 = vmatpush2.msra.mxu0 0.0
      %2217 = vmatprep.subr.mxu0 0.0
      %2218 = vmatpush2.msra.mxu0 0.0
      %2219 = vmatprep.subr.mxu0 0.0
      %2220 = vmatpush2.msra.mxu0 0.0
      %2221 = vmatprep.subr.mxu0 0.0
      %2222 = vmatpush2.msra.mxu0 0.0
      %2223 = vmatprep.subr.mxu0 0.0
      %2224 = vmatpush2.msra.mxu0 0.0
      %2225 = vmatprep.subr.mxu0 0.0
      %2226 = vmatpush2.msra.mxu0 0.0
      %2227 = vmatprep.subr.mxu0 0.0
      %2228 = vmatpush2.msra.mxu0 0.0
      %2229 = vmatprep.subr.mxu0 0.0
      %2230 = vmatpush2.msra.mxu0 0.0
      %2231 = vmatprep.subr.mxu0 0.0
      %2232 = vmatpush2.msra.mxu0 0.0
      %2233 = vmatprep.subr.mxu0 0.0
      %2234 = vmatpush2.msra.mxu0 0.0
      %2235 = vmatprep.mubr.f32.mxu0 0.0
      %2236 = vmatmul.mubr.f32.gmra.mxu0 %v2169
      %v2237 = vpop.f32.mrf.mxu0
      %v2238 = vadd.f32 %v2166, %v2237
      %v2239 = vpop.f32.mrf.mxu0
      %2240 = vdwg.mxu0
      %v2241 = vmax.f32 %v2238, 0.0
      %2242 = vrot.lane.b32.xlu0 %v2241, 2
      %v2243 = vpop.permute.xlu0 %2242
      %2244 = vrot.lane.b32.xlu0 %v2071, 2
      %v2245 = vpop.permute.xlu0 %2244
      %v2246 = vsel %vm1454, %v2243, 0.0
      %v2247 = vsel %vm1454, %v2245, 0.0
      %2248 = vrot.lane.b32.xlu0 %v2241, 126
      %v2249 = vpop.permute.xlu0 %2248
      %2250 = vrot.lane.b32.xlu0 %v2071, 126
      %v2251 = vpop.permute.xlu0 %2250
      %v2252 = vsel %vm1458, %v2249, 0.0
      %v2253 = vsel %vm1458, %v2251, 0.0
      %2255 = vset.pattern.permute.xlu0 0
      %2256 = vperm.xlu0 %2255, %v1056
      %v2257 = vpop.permute.xlu0 %2256
      %v2260 = vsel %vm1729, %v1050, 0
      %2262 = vmatprep.subr.mxu0 0.0
      %2263 = vmatpush1.msra.mxu0 0.0
      %2264 = vmatprep.subr.mxu0 0.0
      %2265 = vmatpush1.msra.mxu0 0.0
      %2266 = vmatprep.subr.mxu0 0.0
      %2267 = vmatpush1.msra.mxu0 0.0
      %2268 = vmatprep.subr.mxu0 0.0
      %2269 = vmatpush1.msra.mxu0 0.0
      %2270 = vmatprep.subr.mxu0 0.0
      %2271 = vmatpush1.msra.mxu0 0.0
      %2272 = vmatprep.subr.mxu0 0.0
      %2273 = vmatpush1.msra.mxu0 0.0
      %2274 = vmatprep.subr.mxu0 0.0
      %2275 = vmatpush1.msra.mxu0 0.0
      %2276 = vmatprep.subr.mxu0 0.0
      %2277 = vmatpush1.msra.mxu0 0.0
      %2278 = vmatprep.subr.mxu0 0.0
      %2279 = vmatpush1.msra.mxu0 0.0
      %2280 = vmatprep.subr.mxu0 0.0
      %2281 = vmatpush1.msra.mxu0 0.0
      %2282 = vmatprep.subr.mxu0 0.0
      %2283 = vmatpush1.msra.mxu0 %v2253
      %2284 = vmatprep.subr.mxu0 0.0
      %2285 = vmatpush1.msra.mxu0 %v2252
      %2286 = vmatprep.subr.mxu0 0.0
      %2287 = vmatpush1.msra.mxu0 %v2071
      %2288 = vmatprep.subr.mxu0 0.0
      %2289 = vmatpush1.msra.mxu0 %v2241
      %2290 = vmatprep.subr.mxu0 0.0
      %2291 = vmatpush1.msra.mxu0 %v2247
      %2292 = vmatprep.subr.mxu0 0.0
      %2293 = vmatpush1.msra.mxu0 %v2246
      %2294 = vmatprep.subr.mxu0 0.0
      %2295 = vmatpush2.msra.mxu0 0.0
      %2296 = vmatprep.subr.mxu0 0.0
      %2297 = vmatpush2.msra.mxu0 0.0
      %2298 = vmatprep.subr.mxu0 0.0
      %2299 = vmatpush2.msra.mxu0 0.0
      %2300 = vmatprep.subr.mxu0 0.0
      %2301 = vmatpush2.msra.mxu0 0.0
      %2302 = vmatprep.subr.mxu0 0.0
      %2303 = vmatpush2.msra.mxu0 0.0
      %2304 = vmatprep.subr.mxu0 0.0
      %2305 = vmatpush2.msra.mxu0 0.0
      %2306 = vmatprep.subr.mxu0 0.0
      %2307 = vmatpush2.msra.mxu0 0.0
      %2308 = vmatprep.subr.mxu0 0.0
      %2309 = vmatpush2.msra.mxu0 0.0
      %2310 = vmatprep.subr.mxu0 0.0
      %2311 = vmatpush2.msra.mxu0 0.0
      %2312 = vmatprep.subr.mxu0 0.0
      %2313 = vmatpush2.msra.mxu0 0.0
      %2314 = vmatprep.subr.mxu0 0.0
      %2315 = vmatpush2.msra.mxu0 0.0
      %2316 = vmatprep.subr.mxu0 0.0
      %2317 = vmatpush2.msra.mxu0 0.0
      %2318 = vmatprep.subr.mxu0 0.0
      %2319 = vmatpush2.msra.mxu0 0.0
      %2320 = vmatprep.subr.mxu0 0.0
      %2321 = vmatpush2.msra.mxu0 0.0
      %2322 = vmatprep.subr.mxu0 0.0
      %2323 = vmatpush2.msra.mxu0 0.0
      %2324 = vmatprep.subr.mxu0 0.0
      %2325 = vmatpush2.msra.mxu0 0.0
      %2326 = vmatprep.mubr.f32.mxu0 0.0
      %2327 = vmatmul.mubr.f32.gmra.mxu0 %v2260
      %v2328 = vpop.f32.mrf.mxu0
      %v2329 = vadd.f32 %v2257, %v2328
      %v2330 = vpop.f32.mrf.mxu0
      %2331 = vdwg.mxu0
      %v2332 = vmax.f32 %v2329, 0.0
      %2333 = vrot.lane.b32.xlu0 %v2332, 1
      %v2334 = vpop.permute.xlu0 %2333
      %2335 = vrot.lane.b32.xlu0 %v1986, 1
      %v2336 = vpop.permute.xlu0 %2335
      %v2337 = vsel %vm1358, %v2334, 0.0
      %v2338 = vsel %vm1358, %v2336, 0.0
      %2339 = vrot.lane.b32.xlu0 %v2332, 127
      %v2340 = vpop.permute.xlu0 %2339
      %2341 = vrot.lane.b32.xlu0 %v1986, 127
      %v2342 = vpop.permute.xlu0 %2341
      %v2343 = vsel %vm1362, %v2340, 0.0
      %v2344 = vsel %vm1362, %v2342, 0.0
      %2346 = vset.pattern.permute.xlu0 0
      %2347 = vperm.xlu0 %2346, %v1057
      %v2348 = vpop.permute.xlu0 %2347
      %v2351 = vsel %vm1729, %v1051, 0
      %2353 = vmatprep.subr.mxu0 0.0
      %2354 = vmatpush1.msra.mxu0 0.0
      %2355 = vmatprep.subr.mxu0 0.0
      %2356 = vmatpush1.msra.mxu0 0.0
      %2357 = vmatprep.subr.mxu0 0.0
      %2358 = vmatpush1.msra.mxu0 0.0
      %2359 = vmatprep.subr.mxu0 0.0
      %2360 = vmatpush1.msra.mxu0 0.0
      %2361 = vmatprep.subr.mxu0 0.0
      %2362 = vmatpush1.msra.mxu0 0.0
      %2363 = vmatprep.subr.mxu0 0.0
      %2364 = vmatpush1.msra.mxu0 0.0
      %2365 = vmatprep.subr.mxu0 0.0
      %2366 = vmatpush1.msra.mxu0 0.0
      %2367 = vmatprep.subr.mxu0 0.0
      %2368 = vmatpush1.msra.mxu0 0.0
      %2369 = vmatprep.subr.mxu0 0.0
      %2370 = vmatpush1.msra.mxu0 0.0
      %2371 = vmatprep.subr.mxu0 0.0
      %2372 = vmatpush1.msra.mxu0 0.0
      %2373 = vmatprep.subr.mxu0 0.0
      %2374 = vmatpush1.msra.mxu0 %v2344
      %2375 = vmatprep.subr.mxu0 0.0
      %2376 = vmatpush1.msra.mxu0 %v2343
      %2377 = vmatprep.subr.mxu0 0.0
      %2378 = vmatpush1.msra.mxu0 %v1986
      %2379 = vmatprep.subr.mxu0 0.0
      %2380 = vmatpush1.msra.mxu0 %v2332
      %2381 = vmatprep.subr.mxu0 0.0
      %2382 = vmatpush1.msra.mxu0 %v2338
      %2383 = vmatprep.subr.mxu0 0.0
      %2384 = vmatpush1.msra.mxu0 %v2337
      %2385 = vmatprep.subr.mxu0 0.0
      %2386 = vmatpush2.msra.mxu0 0.0
      %2387 = vmatprep.subr.mxu0 0.0
      %2388 = vmatpush2.msra.mxu0 0.0
      %2389 = vmatprep.subr.mxu0 0.0
      %2390 = vmatpush2.msra.mxu0 0.0
      %2391 = vmatprep.subr.mxu0 0.0
      %2392 = vmatpush2.msra.mxu0 0.0
      %2393 = vmatprep.subr.mxu0 0.0
      %2394 = vmatpush2.msra.mxu0 0.0
      %2395 = vmatprep.subr.mxu0 0.0
      %2396 = vmatpush2.msra.mxu0 0.0
      %2397 = vmatprep.subr.mxu0 0.0
      %2398 = vmatpush2.msra.mxu0 0.0
      %2399 = vmatprep.subr.mxu0 0.0
      %2400 = vmatpush2.msra.mxu0 0.0
      %2401 = vmatprep.subr.mxu0 0.0
      %2402 = vmatpush2.msra.mxu0 0.0
      %2403 = vmatprep.subr.mxu0 0.0
      %2404 = vmatpush2.msra.mxu0 0.0
      %2405 = vmatprep.subr.mxu0 0.0
      %2406 = vmatpush2.msra.mxu0 0.0
      %2407 = vmatprep.subr.mxu0 0.0
      %2408 = vmatpush2.msra.mxu0 0.0
      %2409 = vmatprep.subr.mxu0 0.0
      %2410 = vmatpush2.msra.mxu0 0.0
      %2411 = vmatprep.subr.mxu0 0.0
      %2412 = vmatpush2.msra.mxu0 0.0
      %2413 = vmatprep.subr.mxu0 0.0
      %2414 = vmatpush2.msra.mxu0 0.0
      %2415 = vmatprep.subr.mxu0 0.0
      %2416 = vmatpush2.msra.mxu0 0.0
      %2417 = vmatprep.mubr.f32.mxu0 0.0
      %2418 = vmatmul.mubr.f32.gmra.mxu0 %v2351
      %v2419 = vpop.f32.mrf.mxu0
      %v2420 = vadd.f32 %v2348, %v2419
      %v2421 = vpop.f32.mrf.mxu0
      %2422 = vdwg.mxu0
      %v2423 = vmax.f32 %v2420, 0.0
      %2425 = vset.pattern.permute.xlu0 0
      %2426 = vperm.xlu0 %2425, %v1059
      %v2427 = vpop.permute.xlu0 %2426
      %vm2429 = vcmask 130048
      %v2431 = vsel %vm2429, %v1058, 0
      %2433 = vmatprep.subr.mxu0 0.0
      %2434 = vmatpush1.msra.mxu0 0.0
      %2435 = vmatprep.subr.mxu0 0.0
      %2436 = vmatpush1.msra.mxu0 0.0
      %2437 = vmatprep.subr.mxu0 0.0
      %2438 = vmatpush1.msra.mxu0 0.0
      %2439 = vmatprep.subr.mxu0 0.0
      %2440 = vmatpush1.msra.mxu0 0.0
      %2441 = vmatprep.subr.mxu0 0.0
      %2442 = vmatpush1.msra.mxu0 0.0
      %2443 = vmatprep.subr.mxu0 0.0
      %2444 = vmatpush1.msra.mxu0 0.0
      %2445 = vmatprep.subr.mxu0 0.0
      %2446 = vmatpush1.msra.mxu0 0.0
      %2447 = vmatprep.subr.mxu0 0.0
      %2448 = vmatpush1.msra.mxu0 0.0
      %2449 = vmatprep.subr.mxu0 0.0
      %2450 = vmatpush1.msra.mxu0 0.0
      %2451 = vmatprep.subr.mxu0 0.0
      %2452 = vmatpush1.msra.mxu0 0.0
      %2453 = vmatprep.subr.mxu0 0.0
      %2454 = vmatpush1.msra.mxu0 0.0
      %2455 = vmatprep.subr.mxu0 0.0
      %2456 = vmatpush1.msra.mxu0 0.0
      %2457 = vmatprep.subr.mxu0 0.0
      %2458 = vmatpush1.msra.mxu0 0.0
      %2459 = vmatprep.subr.mxu0 0.0
      %2460 = vmatpush1.msra.mxu0 0.0
      %2461 = vmatprep.subr.mxu0 0.0
      %2462 = vmatpush1.msra.mxu0 %v2423
      %2463 = vmatprep.subr.mxu0 0.0
      %2464 = vmatpush1.msra.mxu0 %v1894
      %2465 = vmatprep.subr.mxu0 0.0
      %2466 = vmatpush2.msra.mxu0 0.0
      %2467 = vmatprep.subr.mxu0 0.0
      %2468 = vmatpush2.msra.mxu0 0.0
      %2469 = vmatprep.subr.mxu0 0.0
      %2470 = vmatpush2.msra.mxu0 0.0
      %2471 = vmatprep.subr.mxu0 0.0
      %2472 = vmatpush2.msra.mxu0 0.0
      %2473 = vmatprep.subr.mxu0 0.0
      %2474 = vmatpush2.msra.mxu0 0.0
      %2475 = vmatprep.subr.mxu0 0.0
      %2476 = vmatpush2.msra.mxu0 0.0
      %2477 = vmatprep.subr.mxu0 0.0
      %2478 = vmatpush2.msra.mxu0 0.0
      %2479 = vmatprep.subr.mxu0 0.0
      %2480 = vmatpush2.msra.mxu0 0.0
      %2481 = vmatprep.subr.mxu0 0.0
      %2482 = vmatpush2.msra.mxu0 0.0
      %2483 = vmatprep.subr.mxu0 0.0
      %2484 = vmatpush2.msra.mxu0 0.0
      %2485 = vmatprep.subr.mxu0 0.0
      %2486 = vmatpush2.msra.mxu0 0.0
      %2487 = vmatprep.subr.mxu0 0.0
      %2488 = vmatpush2.msra.mxu0 0.0
      %2489 = vmatprep.subr.mxu0 0.0
      %2490 = vmatpush2.msra.mxu0 0.0
      %2491 = vmatprep.subr.mxu0 0.0
      %2492 = vmatpush2.msra.mxu0 0.0
      %2493 = vmatprep.subr.mxu0 0.0
      %2494 = vmatpush2.msra.mxu0 0.0
      %2495 = vmatprep.subr.mxu0 0.0
      %2496 = vmatpush2.msra.mxu0 0.0
      %2497 = vmatprep.mubr.f32.mxu0 0.0
      %2498 = vmatmul.mubr.f32.gmra.mxu0 %v2431
      %v2499 = vpop.f32.mrf.mxu0
      %v2500 = vadd.f32 %v2427, %v2499
      %v2501 = vpop.f32.mrf.mxu0
      %2502 = vdwg.mxu0
      %v2503 = vlaneseq
      %v2504 = vshrl.u32 %v2503, 7
      %v2505 = vsub.s32 1, %v2504
      %v2506 = vrot.slane %v1064, %v2505
      %v2507 = vlaneseq
      %v2508 = vshrl.u32 %v2507, 7
      %v2509 = vsub.s32 1, %v2508
      %v2510 = vrot.slane %v1065, %v2509
      %v2511 = vrot.slane %v1064, 1
      %v2512 = vsel %vm1093, %v1065, %v2511
      %v2514 = vmul.f32 %v2506, %v2512
      %v2515 = vmul.f32 %v2510, %v2512
      %v2516 = vlaneseq
      %v2517 = vshrl.u32 %v2516, 7
      %v2518 = vsub.s32 1, %v2517
      %v2519 = vrot.slane %v1066, %v2518
      %v2520 = vlaneseq
      %v2521 = vshrl.u32 %v2520, 7
      %v2522 = vsub.s32 1, %v2521
      %v2523 = vrot.slane %v1067, %v2522
      %v2524 = vrot.slane %v1066, 1
      %v2525 = vsel %vm1093, %v1067, %v2524
      %v2527 = vmul.f32 %v2519, %v2525
      %v2528 = vmul.f32 %v2523, %v2525
      %v2529 = vadd.f32 %v2514, %v2527
      %v2530 = vadd.f32 %v2515, %v2528
      %v2531 = vmul.f32 %v2519, %v2512
      %v2532 = vmul.f32 %v2523, %v2512
      %v2533 = vmul.f32 %v2506, %v2525
      %v2534 = vmul.f32 %v2510, %v2525
      %v2535 = vsub.f32 %v2531, %v2533
      %v2536 = vsub.f32 %v2532, %v2534
      %v2537 = vmul.f32 %v1170, %v2529
      %v2538 = vmul.f32 %v1174, %v2530
      %v2539 = vmul.f32 %v1178, %v2529
      %v2540 = vmul.f32 %v1182, %v2530
      %v2541 = vmul.f32 %v1240, %v2535
      %v2542 = vmul.f32 %v1244, %v2536
      %v2543 = vmul.f32 %v1248, %v2535
      %v2544 = vmul.f32 %v1252, %v2536
      %v2545 = vsub.f32 %v2537, %v2541
      %v2546 = vsub.f32 %v2538, %v2542
      %v2547 = vsub.f32 %v2539, %v2543
      %v2548 = vsub.f32 %v2540, %v2544
      %v2549 = vsel %vm1265, %v2545, 0.0
      %v2550 = vsel %vm1265, %v2546, 0.0
      %v2551 = vadd.f32 %v2549, %v2550
      %v2552 = vsel %vm1265, %v2547, 0.0
      %v2553 = vsel %vm1265, %v2548, 0.0
      %v2554 = vadd.f32 %v2552, %v2553
      %v2555 = vmul.f32 %v1170, %v2535
      %v2556 = vmul.f32 %v1174, %v2536
      %v2557 = vmul.f32 %v1178, %v2535
      %v2558 = vmul.f32 %v1182, %v2536
      %v2559 = vmul.f32 %v1240, %v2529
      %v2560 = vmul.f32 %v1244, %v2530
      %v2561 = vmul.f32 %v1248, %v2529
      %v2562 = vmul.f32 %v1252, %v2530
      %v2563 = vadd.f32 %v2555, %v2559
      %v2564 = vadd.f32 %v2556, %v2560
      %v2565 = vadd.f32 %v2557, %v2561
      %v2566 = vadd.f32 %v2558, %v2562
      %v2567 = vsel %vm1265, %v2563, 0.0
      %v2568 = vsel %vm1265, %v2564, 0.0
      %v2569 = vadd.f32 %v2567, %v2568
      %v2570 = vsel %vm1265, %v2565, 0.0
      %v2571 = vsel %vm1265, %v2566, 0.0
      %v2572 = vadd.f32 %v2570, %v2571
      %v2573 = vlaneseq
      %v2574 = vshrl.u32 %v2573, 7
      %v2575 = vsub.s32 1, %v2574
      %v2576 = vrot.slane %v1060, %v2575
      %v2577 = vlaneseq
      %v2578 = vshrl.u32 %v2577, 7
      %v2579 = vsub.s32 1, %v2578
      %v2580 = vrot.slane %v1061, %v2579
      %v2581 = vmul.f32 %v2551, %v2576
      %v2582 = vmul.f32 %v2554, %v2580
      %v2583 = vlaneseq
      %v2584 = vshrl.u32 %v2583, 7
      %v2585 = vsub.s32 1, %v2584
      %v2586 = vrot.slane %v1062, %v2585
      %v2587 = vlaneseq
      %v2588 = vshrl.u32 %v2587, 7
      %v2589 = vsub.s32 1, %v2588
      %v2590 = vrot.slane %v1063, %v2589
      %v2591 = vmul.f32 %v2569, %v2586
      %v2592 = vmul.f32 %v2572, %v2590
      %v2593 = vadd.f32 %v2581, %v2591
      %v2594 = vadd.f32 %v2582, %v2592
      %v2595 = vsel %vm1265, %v2593, 0.0
      %v2596 = vsel %vm1265, %v2594, 0.0
      %v2597 = vadd.f32 %v2595, %v2596
      %v2598 = vmul.f32 %v2551, %v2586
      %v2599 = vmul.f32 %v2554, %v2590
      %v2600 = vmul.f32 %v2569, %v2576
      %v2601 = vmul.f32 %v2572, %v2580
      %v2602 = vsub.f32 %v2598, %v2600
      %v2603 = vsub.f32 %v2599, %v2601
      %v2604 = vsel %vm1265, %v2602, 0.0
      %v2605 = vsel %vm1265, %v2603, 0.0
      %v2606 = vadd.f32 %v2604, %v2605
      %v2607 = vrot.slane %v1060, 1
      %v2608 = vsel %vm1093, %v1061, %v2607
      %v2610 = vrot.slane %v1062, 7
      %v2611 = vrot.slane %v1063, 6
      %v2612 = vsel %vm1346, %v2611, %v2610
      %v2614 = vsel %vm1265, %v2608, %v2612
      %v2616 = vrot.slane %v2606, 6
      %v2618 = vsel %vm1265, %v2597, %v2616
      %2619 = vrot.lane.b32.xlu0 %v2614, 1
      %v2620 = vpop.permute.xlu0 %2619
      %v2621 = vsel %vm1358, %v2620, 0.0
      %2622 = vrot.lane.b32.xlu0 %v2614, 127
      %v2623 = vpop.permute.xlu0 %2622
      %v2624 = vsel %vm1362, %v2623, 0.0
      %v2626 = vrot.slane %v2614, 4
      %v2628 = vsel %vm1367, %v2621, %v2626
      %v2630 = vsel %vm1367, %v2624, 0
      %2632 = vmatprep.subr.mxu0 0.0
      %2633 = vmatpush1.msra.mxu0 0.0
      %2634 = vmatprep.subr.mxu0 0.0
      %2635 = vmatpush1.msra.mxu0 0.0
      %2636 = vmatprep.subr.mxu0 0.0
      %2637 = vmatpush1.msra.mxu0 0.0
      %2638 = vmatprep.subr.mxu0 0.0
      %2639 = vmatpush1.msra.mxu0 0.0
      %2640 = vmatprep.subr.mxu0 0.0
      %2641 = vmatpush1.msra.mxu0 0.0
      %2642 = vmatprep.subr.mxu0 0.0
      %2643 = vmatpush1.msra.mxu0 0.0
      %2644 = vmatprep.subr.mxu0 0.0
      %2645 = vmatpush1.msra.mxu0 0.0
      %2646 = vmatprep.subr.mxu0 0.0
      %2647 = vmatpush1.msra.mxu0 0.0
      %2648 = vmatprep.subr.mxu0 0.0
      %2649 = vmatpush1.msra.mxu0 0.0
      %2650 = vmatprep.subr.mxu0 0.0
      %2651 = vmatpush1.msra.mxu0 0.0
      %2652 = vmatprep.subr.mxu0 0.0
      %2653 = vmatpush1.msra.mxu0 0.0
      %2654 = vmatprep.subr.mxu0 0.0
      %2655 = vmatpush1.msra.mxu0 0.0
      %2656 = vmatprep.subr.mxu0 0.0
      %2657 = vmatpush1.msra.mxu0 0.0
      %2658 = vmatprep.subr.mxu0 0.0
      %2659 = vmatpush1.msra.mxu0 0.0
      %2660 = vmatprep.subr.mxu0 0.0
      %2661 = vmatpush1.msra.mxu0 %v2630
      %2662 = vmatprep.subr.mxu0 0.0
      %2663 = vmatpush1.msra.mxu0 %v2628
      %2664 = vmatprep.subr.mxu0 0.0
      %2665 = vmatpush2.msra.mxu0 0.0
      %2666 = vmatprep.subr.mxu0 0.0
      %2667 = vmatpush2.msra.mxu0 0.0
      %2668 = vmatprep.subr.mxu0 0.0
      %2669 = vmatpush2.msra.mxu0 0.0
      %2670 = vmatprep.subr.mxu0 0.0
      %2671 = vmatpush2.msra.mxu0 0.0
      %2672 = vmatprep.subr.mxu0 0.0
      %2673 = vmatpush2.msra.mxu0 0.0
      %2674 = vmatprep.subr.mxu0 0.0
      %2675 = vmatpush2.msra.mxu0 0.0
      %2676 = vmatprep.subr.mxu0 0.0
      %2677 = vmatpush2.msra.mxu0 0.0
      %2678 = vmatprep.subr.mxu0 0.0
      %2679 = vmatpush2.msra.mxu0 0.0
      %2680 = vmatprep.subr.mxu0 0.0
      %2681 = vmatpush2.msra.mxu0 0.0
      %2682 = vmatprep.subr.mxu0 0.0
      %2683 = vmatpush2.msra.mxu0 0.0
      %2684 = vmatprep.subr.mxu0 0.0
      %2685 = vmatpush2.msra.mxu0 0.0
      %2686 = vmatprep.subr.mxu0 0.0
      %2687 = vmatpush2.msra.mxu0 0.0
      %2688 = vmatprep.subr.mxu0 0.0
      %2689 = vmatpush2.msra.mxu0 0.0
      %2690 = vmatprep.subr.mxu0 0.0
      %2691 = vmatpush2.msra.mxu0 0.0
      %2692 = vmatprep.subr.mxu0 0.0
      %2693 = vmatpush2.msra.mxu0 0.0
      %2694 = vmatprep.subr.mxu0 0.0
      %2695 = vmatpush2.msra.mxu0 0.0
      %2696 = vmatprep.mubr.f32.mxu0 0.0
      %2697 = vmatmul.mubr.f32.gmra.mxu0 %v1376
      %v2698 = vpop.f32.mrf.mxu0
      %v2699 = vadd.f32 %v1372, %v2698
      %v2700 = vpop.f32.mrf.mxu0
      %2701 = vdwg.mxu0
      %v2702 = vmax.f32 %v2699, 0.0
      %2703 = vrot.lane.b32.xlu0 %v2702, 2
      %v2704 = vpop.permute.xlu0 %2703
      %v2705 = vsel %vm1454, %v2704, 0.0
      %2706 = vrot.lane.b32.xlu0 %v2702, 126
      %v2707 = vpop.permute.xlu0 %2706
      %v2708 = vsel %vm1458, %v2707, 0.0
      %2709 = vmatprep.subr.mxu0 0.0
      %2710 = vmatpush1.msra.mxu0 0.0
      %2711 = vmatprep.subr.mxu0 0.0
      %2712 = vmatpush1.msra.mxu0 0.0
      %2713 = vmatprep.subr.mxu0 0.0
      %2714 = vmatpush1.msra.mxu0 0.0
      %2715 = vmatprep.subr.mxu0 0.0
      %2716 = vmatpush1.msra.mxu0 0.0
      %2717 = vmatprep.subr.mxu0 0.0
      %2718 = vmatpush1.msra.mxu0 0.0
      %2719 = vmatprep.subr.mxu0 0.0
      %2720 = vmatpush1.msra.mxu0 0.0
      %2721 = vmatprep.subr.mxu0 0.0
      %2722 = vmatpush1.msra.mxu0 0.0
      %2723 = vmatprep.subr.mxu0 0.0
      %2724 = vmatpush1.msra.mxu0 0.0
      %2725 = vmatprep.subr.mxu0 0.0
      %2726 = vmatpush1.msra.mxu0 0.0
      %2727 = vmatprep.subr.mxu0 0.0
      %2728 = vmatpush1.msra.mxu0 0.0
      %2729 = vmatprep.subr.mxu0 0.0
      %2730 = vmatpush1.msra.mxu0 0.0
      %2731 = vmatprep.subr.mxu0 0.0
      %2732 = vmatpush1.msra.mxu0 0.0
      %2733 = vmatprep.subr.mxu0 0.0
      %2734 = vmatpush1.msra.mxu0 0.0
      %2735 = vmatprep.subr.mxu0 0.0
      %2736 = vmatpush1.msra.mxu0 %v2708
      %2737 = vmatprep.subr.mxu0 0.0
      %2738 = vmatpush1.msra.mxu0 %v2702
      %2739 = vmatprep.subr.mxu0 0.0
      %2740 = vmatpush1.msra.mxu0 %v2705
      %2741 = vmatprep.subr.mxu0 0.0
      %2742 = vmatpush2.msra.mxu0 0.0
      %2743 = vmatprep.subr.mxu0 0.0
      %2744 = vmatpush2.msra.mxu0 0.0
      %2745 = vmatprep.subr.mxu0 0.0
      %2746 = vmatpush2.msra.mxu0 0.0
      %2747 = vmatprep.subr.mxu0 0.0
      %2748 = vmatpush2.msra.mxu0 0.0
      %2749 = vmatprep.subr.mxu0 0.0
      %2750 = vmatpush2.msra.mxu0 0.0
      %2751 = vmatprep.subr.mxu0 0.0
      %2752 = vmatpush2.msra.mxu0 0.0
      %2753 = vmatprep.subr.mxu0 0.0
      %2754 = vmatpush2.msra.mxu0 0.0
      %2755 = vmatprep.subr.mxu0 0.0
      %2756 = vmatpush2.msra.mxu0 0.0
      %2757 = vmatprep.subr.mxu0 0.0
      %2758 = vmatpush2.msra.mxu0 0.0
      %2759 = vmatprep.subr.mxu0 0.0
      %2760 = vmatpush2.msra.mxu0 0.0
      %2761 = vmatprep.subr.mxu0 0.0
      %2762 = vmatpush2.msra.mxu0 0.0
      %2763 = vmatprep.subr.mxu0 0.0
      %2764 = vmatpush2.msra.mxu0 0.0
      %2765 = vmatprep.subr.mxu0 0.0
      %2766 = vmatpush2.msra.mxu0 0.0
      %2767 = vmatprep.subr.mxu0 0.0
      %2768 = vmatpush2.msra.mxu0 0.0
      %2769 = vmatprep.subr.mxu0 0.0
      %2770 = vmatpush2.msra.mxu0 0.0
      %2771 = vmatprep.subr.mxu0 0.0
      %2772 = vmatpush2.msra.mxu0 0.0
      %2773 = vmatprep.mubr.f32.mxu0 0.0
      %2774 = vmatmul.mubr.f32.gmra.mxu0 %v1467
      %v2775 = vpop.f32.mrf.mxu0
      %v2776 = vadd.f32 %v1463, %v2775
      %v2777 = vpop.f32.mrf.mxu0
      %2778 = vdwg.mxu0
      %v2779 = vmax.f32 %v2776, 0.0
      %2780 = vrot.lane.b32.xlu0 %v2779, 4
      %v2781 = vpop.permute.xlu0 %2780
      %v2782 = vsel %vm1542, %v2781, 0.0
      %2783 = vrot.lane.b32.xlu0 %v2779, 124
      %v2784 = vpop.permute.xlu0 %2783
      %v2785 = vsel %vm1546, %v2784, 0.0
      %2786 = vmatprep.subr.mxu0 0.0
      %2787 = vmatpush1.msra.mxu0 0.0
      %2788 = vmatprep.subr.mxu0 0.0
      %2789 = vmatpush1.msra.mxu0 0.0
      %2790 = vmatprep.subr.mxu0 0.0
      %2791 = vmatpush1.msra.mxu0 0.0
      %2792 = vmatprep.subr.mxu0 0.0
      %2793 = vmatpush1.msra.mxu0 0.0
      %2794 = vmatprep.subr.mxu0 0.0
      %2795 = vmatpush1.msra.mxu0 0.0
      %2796 = vmatprep.subr.mxu0 0.0
      %2797 = vmatpush1.msra.mxu0 0.0
      %2798 = vmatprep.subr.mxu0 0.0
      %2799 = vmatpush1.msra.mxu0 0.0
      %2800 = vmatprep.subr.mxu0 0.0
      %2801 = vmatpush1.msra.mxu0 0.0
      %2802 = vmatprep.subr.mxu0 0.0
      %2803 = vmatpush1.msra.mxu0 0.0
      %2804 = vmatprep.subr.mxu0 0.0
      %2805 = vmatpush1.msra.mxu0 0.0
      %2806 = vmatprep.subr.mxu0 0.0
      %2807 = vmatpush1.msra.mxu0 0.0
      %2808 = vmatprep.subr.mxu0 0.0
      %2809 = vmatpush1.msra.mxu0 0.0
      %2810 = vmatprep.subr.mxu0 0.0
      %2811 = vmatpush1.msra.mxu0 0.0
      %2812 = vmatprep.subr.mxu0 0.0
      %2813 = vmatpush1.msra.mxu0 %v2785
      %2814 = vmatprep.subr.mxu0 0.0
      %2815 = vmatpush1.msra.mxu0 %v2779
      %2816 = vmatprep.subr.mxu0 0.0
      %2817 = vmatpush1.msra.mxu0 %v2782
      %2818 = vmatprep.subr.mxu0 0.0
      %2819 = vmatpush2.msra.mxu0 0.0
      %2820 = vmatprep.subr.mxu0 0.0
      %2821 = vmatpush2.msra.mxu0 0.0
      %2822 = vmatprep.subr.mxu0 0.0
      %2823 = vmatpush2.msra.mxu0 0.0
      %2824 = vmatprep.subr.mxu0 0.0
      %2825 = vmatpush2.msra.mxu0 0.0
      %2826 = vmatprep.subr.mxu0 0.0
      %2827 = vmatpush2.msra.mxu0 0.0
      %2828 = vmatprep.subr.mxu0 0.0
      %2829 = vmatpush2.msra.mxu0 0.0
      %2830 = vmatprep.subr.mxu0 0.0
      %2831 = vmatpush2.msra.mxu0 0.0
      %2832 = vmatprep.subr.mxu0 0.0
      %2833 = vmatpush2.msra.mxu0 0.0
      %2834 = vmatprep.subr.mxu0 0.0
      %2835 = vmatpush2.msra.mxu0 0.0
      %2836 = vmatprep.subr.mxu0 0.0
      %2837 = vmatpush2.msra.mxu0 0.0
      %2838 = vmatprep.subr.mxu0 0.0
      %2839 = vmatpush2.msra.mxu0 0.0
      %2840 = vmatprep.subr.mxu0 0.0
      %2841 = vmatpush2.msra.mxu0 0.0
      %2842 = vmatprep.subr.mxu0 0.0
      %2843 = vmatpush2.msra.mxu0 0.0
      %2844 = vmatprep.subr.mxu0 0.0
      %2845 = vmatpush2.msra.mxu0 0.0
      %2846 = vmatprep.subr.mxu0 0.0
      %2847 = vmatpush2.msra.mxu0 0.0
      %2848 = vmatprep.subr.mxu0 0.0
      %2849 = vmatpush2.msra.mxu0 0.0
      %2850 = vmatprep.mubr.f32.mxu0 0.0
      %2851 = vmatmul.mubr.f32.gmra.mxu0 %v1554
      %v2852 = vpop.f32.mrf.mxu0
      %v2853 = vadd.f32 %v1551, %v2852
      %v2854 = vpop.f32.mrf.mxu0
      %2855 = vdwg.mxu0
      %v2856 = vmax.f32 %v2853, 0.0
      %2857 = vrot.lane.b32.xlu0 %v2856, 4
      %v2858 = vpop.permute.xlu0 %2857
      %v2859 = vsel %vm1542, %v2858, 0.0
      %2860 = vrot.lane.b32.xlu0 %v2856, 124
      %v2861 = vpop.permute.xlu0 %2860
      %v2862 = vsel %vm1546, %v2861, 0.0
      %2863 = vmatprep.subr.mxu0 0.0
      %2864 = vmatpush1.msra.mxu0 0.0
      %2865 = vmatprep.subr.mxu0 0.0
      %2866 = vmatpush1.msra.mxu0 0.0
      %2867 = vmatprep.subr.mxu0 0.0
      %2868 = vmatpush1.msra.mxu0 0.0
      %2869 = vmatprep.subr.mxu0 0.0
      %2870 = vmatpush1.msra.mxu0 0.0
      %2871 = vmatprep.subr.mxu0 0.0
      %2872 = vmatpush1.msra.mxu0 0.0
      %2873 = vmatprep.subr.mxu0 0.0
      %2874 = vmatpush1.msra.mxu0 0.0
      %2875 = vmatprep.subr.mxu0 0.0
      %2876 = vmatpush1.msra.mxu0 0.0
      %2877 = vmatprep.subr.mxu0 0.0
      %2878 = vmatpush1.msra.mxu0 0.0
      %2879 = vmatprep.subr.mxu0 0.0
      %2880 = vmatpush1.msra.mxu0 0.0
      %2881 = vmatprep.subr.mxu0 0.0
      %2882 = vmatpush1.msra.mxu0 0.0
      %2883 = vmatprep.subr.mxu0 0.0
      %2884 = vmatpush1.msra.mxu0 0.0
      %2885 = vmatprep.subr.mxu0 0.0
      %2886 = vmatpush1.msra.mxu0 0.0
      %2887 = vmatprep.subr.mxu0 0.0
      %2888 = vmatpush1.msra.mxu0 0.0
      %2889 = vmatprep.subr.mxu0 0.0
      %2890 = vmatpush1.msra.mxu0 %v2862
      %2891 = vmatprep.subr.mxu0 0.0
      %2892 = vmatpush1.msra.mxu0 %v2856
      %2893 = vmatprep.subr.mxu0 0.0
      %2894 = vmatpush1.msra.mxu0 %v2859
      %2895 = vmatprep.subr.mxu0 0.0
      %2896 = vmatpush2.msra.mxu0 0.0
      %2897 = vmatprep.subr.mxu0 0.0
      %2898 = vmatpush2.msra.mxu0 0.0
      %2899 = vmatprep.subr.mxu0 0.0
      %2900 = vmatpush2.msra.mxu0 0.0
      %2901 = vmatprep.subr.mxu0 0.0
      %2902 = vmatpush2.msra.mxu0 0.0
      %2903 = vmatprep.subr.mxu0 0.0
      %2904 = vmatpush2.msra.mxu0 0.0
      %2905 = vmatprep.subr.mxu0 0.0
      %2906 = vmatpush2.msra.mxu0 0.0
      %2907 = vmatprep.subr.mxu0 0.0
      %2908 = vmatpush2.msra.mxu0 0.0
      %2909 = vmatprep.subr.mxu0 0.0
      %2910 = vmatpush2.msra.mxu0 0.0
      %2911 = vmatprep.subr.mxu0 0.0
      %2912 = vmatpush2.msra.mxu0 0.0
      %2913 = vmatprep.subr.mxu0 0.0
      %2914 = vmatpush2.msra.mxu0 0.0
      %2915 = vmatprep.subr.mxu0 0.0
      %2916 = vmatpush2.msra.mxu0 0.0
      %2917 = vmatprep.subr.mxu0 0.0
      %2918 = vmatpush2.msra.mxu0 0.0
      %2919 = vmatprep.subr.mxu0 0.0
      %2920 = vmatpush2.msra.mxu0 0.0
      %2921 = vmatprep.subr.mxu0 0.0
      %2922 = vmatpush2.msra.mxu0 0.0
      %2923 = vmatprep.subr.mxu0 0.0
      %2924 = vmatpush2.msra.mxu0 0.0
      %2925 = vmatprep.subr.mxu0 0.0
      %2926 = vmatpush2.msra.mxu0 0.0
      %2927 = vmatprep.mubr.f32.mxu0 0.0
      %2928 = vmatmul.mubr.f32.gmra.mxu0 %v1639
      %v2929 = vpop.f32.mrf.mxu0
      %v2930 = vadd.f32 %v1636, %v2929
      %v2931 = vpop.f32.mrf.mxu0
      %2932 = vdwg.mxu0
      %v2933 = vmax.f32 %v2930, 0.0
      %2934 = vrot.lane.b32.xlu0 %v2933, 2
      %v2935 = vpop.permute.xlu0 %2934
      %2936 = vrot.lane.b32.xlu0 %v2779, 2
      %v2937 = vpop.permute.xlu0 %2936
      %v2938 = vsel %vm1454, %v2935, 0.0
      %v2939 = vsel %vm1454, %v2937, 0.0
      %2940 = vrot.lane.b32.xlu0 %v2933, 126
      %v2941 = vpop.permute.xlu0 %2940
      %2942 = vrot.lane.b32.xlu0 %v2779, 126
      %v2943 = vpop.permute.xlu0 %2942
      %v2944 = vsel %vm1458, %v2941, 0.0
      %v2945 = vsel %vm1458, %v2943, 0.0
      %2946 = vmatprep.subr.mxu0 0.0
      %2947 = vmatpush1.msra.mxu0 0.0
      %2948 = vmatprep.subr.mxu0 0.0
      %2949 = vmatpush1.msra.mxu0 0.0
      %2950 = vmatprep.subr.mxu0 0.0
      %2951 = vmatpush1.msra.mxu0 0.0
      %2952 = vmatprep.subr.mxu0 0.0
      %2953 = vmatpush1.msra.mxu0 0.0
      %2954 = vmatprep.subr.mxu0 0.0
      %2955 = vmatpush1.msra.mxu0 0.0
      %2956 = vmatprep.subr.mxu0 0.0
      %2957 = vmatpush1.msra.mxu0 0.0
      %2958 = vmatprep.subr.mxu0 0.0
      %2959 = vmatpush1.msra.mxu0 0.0
      %2960 = vmatprep.subr.mxu0 0.0
      %2961 = vmatpush1.msra.mxu0 0.0
      %2962 = vmatprep.subr.mxu0 0.0
      %2963 = vmatpush1.msra.mxu0 0.0
      %2964 = vmatprep.subr.mxu0 0.0
      %2965 = vmatpush1.msra.mxu0 0.0
      %2966 = vmatprep.subr.mxu0 0.0
      %2967 = vmatpush1.msra.mxu0 %v2945
      %2968 = vmatprep.subr.mxu0 0.0
      %2969 = vmatpush1.msra.mxu0 %v2944
      %2970 = vmatprep.subr.mxu0 0.0
      %2971 = vmatpush1.msra.mxu0 %v2779
      %2972 = vmatprep.subr.mxu0 0.0
      %2973 = vmatpush1.msra.mxu0 %v2933
      %2974 = vmatprep.subr.mxu0 0.0
      %2975 = vmatpush1.msra.mxu0 %v2939
      %2976 = vmatprep.subr.mxu0 0.0
      %2977 = vmatpush1.msra.mxu0 %v2938
      %2978 = vmatprep.subr.mxu0 0.0
      %2979 = vmatpush2.msra.mxu0 0.0
      %2980 = vmatprep.subr.mxu0 0.0
      %2981 = vmatpush2.msra.mxu0 0.0
      %2982 = vmatprep.subr.mxu0 0.0
      %2983 = vmatpush2.msra.mxu0 0.0
      %2984 = vmatprep.subr.mxu0 0.0
      %2985 = vmatpush2.msra.mxu0 0.0
      %2986 = vmatprep.subr.mxu0 0.0
      %2987 = vmatpush2.msra.mxu0 0.0
      %2988 = vmatprep.subr.mxu0 0.0
      %2989 = vmatpush2.msra.mxu0 0.0
      %2990 = vmatprep.subr.mxu0 0.0
      %2991 = vmatpush2.msra.mxu0 0.0
      %2992 = vmatprep.subr.mxu0 0.0
      %2993 = vmatpush2.msra.mxu0 0.0
      %2994 = vmatprep.subr.mxu0 0.0
      %2995 = vmatpush2.msra.mxu0 0.0
      %2996 = vmatprep.subr.mxu0 0.0
      %2997 = vmatpush2.msra.mxu0 0.0
      %2998 = vmatprep.subr.mxu0 0.0
      %2999 = vmatpush2.msra.mxu0 0.0
      %3000 = vmatprep.subr.mxu0 0.0
      %3001 = vmatpush2.msra.mxu0 0.0
      %3002 = vmatprep.subr.mxu0 0.0
      %3003 = vmatpush2.msra.mxu0 0.0
      %3004 = vmatprep.subr.mxu0 0.0
      %3005 = vmatpush2.msra.mxu0 0.0
      %3006 = vmatprep.subr.mxu0 0.0
      %3007 = vmatpush2.msra.mxu0 0.0
      %3008 = vmatprep.subr.mxu0 0.0
      %3009 = vmatpush2.msra.mxu0 0.0
      %3010 = vmatprep.mubr.f32.mxu0 0.0
      %3011 = vmatmul.mubr.f32.gmra.mxu0 %v1731
      %v3012 = vpop.f32.mrf.mxu0
      %v3013 = vadd.f32 %v1727, %v3012
      %v3014 = vpop.f32.mrf.mxu0
      %3015 = vdwg.mxu0
      %v3016 = vmax.f32 %v3013, 0.0
      %3017 = vrot.lane.b32.xlu0 %v3016, 1
      %v3018 = vpop.permute.xlu0 %3017
      %3019 = vrot.lane.b32.xlu0 %v2702, 1
      %v3020 = vpop.permute.xlu0 %3019
      %v3021 = vsel %vm1358, %v3018, 0.0
      %v3022 = vsel %vm1358, %v3020, 0.0
      %3023 = vrot.lane.b32.xlu0 %v3016, 127
      %v3024 = vpop.permute.xlu0 %3023
      %3025 = vrot.lane.b32.xlu0 %v2702, 127
      %v3026 = vpop.permute.xlu0 %3025
      %v3027 = vsel %vm1362, %v3024, 0.0
      %v3028 = vsel %vm1362, %v3026, 0.0
      %3029 = vmatprep.subr.mxu0 0.0
      %3030 = vmatpush1.msra.mxu0 0.0
      %3031 = vmatprep.subr.mxu0 0.0
      %3032 = vmatpush1.msra.mxu0 0.0
      %3033 = vmatprep.subr.mxu0 0.0
      %3034 = vmatpush1.msra.mxu0 0.0
      %3035 = vmatprep.subr.mxu0 0.0
      %3036 = vmatpush1.msra.mxu0 0.0
      %3037 = vmatprep.subr.mxu0 0.0
      %3038 = vmatpush1.msra.mxu0 0.0
      %3039 = vmatprep.subr.mxu0 0.0
      %3040 = vmatpush1.msra.mxu0 0.0
      %3041 = vmatprep.subr.mxu0 0.0
      %3042 = vmatpush1.msra.mxu0 0.0
      %3043 = vmatprep.subr.mxu0 0.0
      %3044 = vmatpush1.msra.mxu0 0.0
      %3045 = vmatprep.subr.mxu0 0.0
      %3046 = vmatpush1.msra.mxu0 0.0
      %3047 = vmatprep.subr.mxu0 0.0
      %3048 = vmatpush1.msra.mxu0 0.0
      %3049 = vmatprep.subr.mxu0 0.0
      %3050 = vmatpush1.msra.mxu0 %v3028
      %3051 = vmatprep.subr.mxu0 0.0
      %3052 = vmatpush1.msra.mxu0 %v3027
      %3053 = vmatprep.subr.mxu0 0.0
      %3054 = vmatpush1.msra.mxu0 %v2702
      %3055 = vmatprep.subr.mxu0 0.0
      %3056 = vmatpush1.msra.mxu0 %v3016
      %3057 = vmatprep.subr.mxu0 0.0
      %3058 = vmatpush1.msra.mxu0 %v3022
      %3059 = vmatprep.subr.mxu0 0.0
      %3060 = vmatpush1.msra.mxu0 %v3021
      %3061 = vmatprep.subr.mxu0 0.0
      %3062 = vmatpush2.msra.mxu0 0.0
      %3063 = vmatprep.subr.mxu0 0.0
      %3064 = vmatpush2.msra.mxu0 0.0
      %3065 = vmatprep.subr.mxu0 0.0
      %3066 = vmatpush2.msra.mxu0 0.0
      %3067 = vmatprep.subr.mxu0 0.0
      %3068 = vmatpush2.msra.mxu0 0.0
      %3069 = vmatprep.subr.mxu0 0.0
      %3070 = vmatpush2.msra.mxu0 0.0
      %3071 = vmatprep.subr.mxu0 0.0
      %3072 = vmatpush2.msra.mxu0 0.0
      %3073 = vmatprep.subr.mxu0 0.0
      %3074 = vmatpush2.msra.mxu0 0.0
      %3075 = vmatprep.subr.mxu0 0.0
      %3076 = vmatpush2.msra.mxu0 0.0
      %3077 = vmatprep.subr.mxu0 0.0
      %3078 = vmatpush2.msra.mxu0 0.0
      %3079 = vmatprep.subr.mxu0 0.0
      %3080 = vmatpush2.msra.mxu0 0.0
      %3081 = vmatprep.subr.mxu0 0.0
      %3082 = vmatpush2.msra.mxu0 0.0
      %3083 = vmatprep.subr.mxu0 0.0
      %3084 = vmatpush2.msra.mxu0 0.0
      %3085 = vmatprep.subr.mxu0 0.0
      %3086 = vmatpush2.msra.mxu0 0.0
      %3087 = vmatprep.subr.mxu0 0.0
      %3088 = vmatpush2.msra.mxu0 0.0
      %3089 = vmatprep.subr.mxu0 0.0
      %3090 = vmatpush2.msra.mxu0 0.0
      %3091 = vmatprep.subr.mxu0 0.0
      %3092 = vmatpush2.msra.mxu0 0.0
      %3093 = vmatprep.mubr.f32.mxu0 0.0
      %3094 = vmatmul.mubr.f32.gmra.mxu0 %v1822
      %v3095 = vpop.f32.mrf.mxu0
      %v3096 = vadd.f32 %v1819, %v3095
      %v3097 = vpop.f32.mrf.mxu0
      %3098 = vdwg.mxu0
      %v3099 = vmax.f32 %v3096, 0.0
      %3100 = vrot.lane.b32.xlu0 %v2618, 1
      %v3101 = vpop.permute.xlu0 %3100
      %v3102 = vsel %vm1358, %v3101, 0.0
      %3103 = vrot.lane.b32.xlu0 %v2618, 127
      %v3104 = vpop.permute.xlu0 %3103
      %v3105 = vsel %vm1362, %v3104, 0.0
      %v3107 = vrot.slane %v2618, 4
      %v3109 = vsel %vm1367, %v3102, %v3107
      %v3111 = vsel %vm1367, %v3105, 0
      %3113 = vmatprep.subr.mxu0 0.0
      %3114 = vmatpush1.msra.mxu0 0.0
      %3115 = vmatprep.subr.mxu0 0.0
      %3116 = vmatpush1.msra.mxu0 0.0
      %3117 = vmatprep.subr.mxu0 0.0
      %3118 = vmatpush1.msra.mxu0 0.0
      %3119 = vmatprep.subr.mxu0 0.0
      %3120 = vmatpush1.msra.mxu0 0.0
      %3121 = vmatprep.subr.mxu0 0.0
      %3122 = vmatpush1.msra.mxu0 0.0
      %3123 = vmatprep.subr.mxu0 0.0
      %3124 = vmatpush1.msra.mxu0 0.0
      %3125 = vmatprep.subr.mxu0 0.0
      %3126 = vmatpush1.msra.mxu0 0.0
      %3127 = vmatprep.subr.mxu0 0.0
      %3128 = vmatpush1.msra.mxu0 0.0
      %3129 = vmatprep.subr.mxu0 0.0
      %3130 = vmatpush1.msra.mxu0 0.0
      %3131 = vmatprep.subr.mxu0 0.0
      %3132 = vmatpush1.msra.mxu0 0.0
      %3133 = vmatprep.subr.mxu0 0.0
      %3134 = vmatpush1.msra.mxu0 0.0
      %3135 = vmatprep.subr.mxu0 0.0
      %3136 = vmatpush1.msra.mxu0 0.0
      %3137 = vmatprep.subr.mxu0 0.0
      %3138 = vmatpush1.msra.mxu0 0.0
      %3139 = vmatprep.subr.mxu0 0.0
      %3140 = vmatpush1.msra.mxu0 0.0
      %3141 = vmatprep.subr.mxu0 0.0
      %3142 = vmatpush1.msra.mxu0 %v3111
      %3143 = vmatprep.subr.mxu0 0.0
      %3144 = vmatpush1.msra.mxu0 %v3109
      %3145 = vmatprep.subr.mxu0 0.0
      %3146 = vmatpush2.msra.mxu0 0.0
      %3147 = vmatprep.subr.mxu0 0.0
      %3148 = vmatpush2.msra.mxu0 0.0
      %3149 = vmatprep.subr.mxu0 0.0
      %3150 = vmatpush2.msra.mxu0 0.0
      %3151 = vmatprep.subr.mxu0 0.0
      %3152 = vmatpush2.msra.mxu0 0.0
      %3153 = vmatprep.subr.mxu0 0.0
      %3154 = vmatpush2.msra.mxu0 0.0
      %3155 = vmatprep.subr.mxu0 0.0
      %3156 = vmatpush2.msra.mxu0 0.0
      %3157 = vmatprep.subr.mxu0 0.0
      %3158 = vmatpush2.msra.mxu0 0.0
      %3159 = vmatprep.subr.mxu0 0.0
      %3160 = vmatpush2.msra.mxu0 0.0
      %3161 = vmatprep.subr.mxu0 0.0
      %3162 = vmatpush2.msra.mxu0 0.0
      %3163 = vmatprep.subr.mxu0 0.0
      %3164 = vmatpush2.msra.mxu0 0.0
      %3165 = vmatprep.subr.mxu0 0.0
      %3166 = vmatpush2.msra.mxu0 0.0
      %3167 = vmatprep.subr.mxu0 0.0
      %3168 = vmatpush2.msra.mxu0 0.0
      %3169 = vmatprep.subr.mxu0 0.0
      %3170 = vmatpush2.msra.mxu0 0.0
      %3171 = vmatprep.subr.mxu0 0.0
      %3172 = vmatpush2.msra.mxu0 0.0
      %3173 = vmatprep.subr.mxu0 0.0
      %3174 = vmatpush2.msra.mxu0 0.0
      %3175 = vmatprep.subr.mxu0 0.0
      %3176 = vmatpush2.msra.mxu0 0.0
      %3177 = vmatprep.mubr.f32.mxu0 0.0
      %3178 = vmatmul.mubr.f32.gmra.mxu0 %v1911
      %v3179 = vpop.f32.mrf.mxu0
      %v3180 = vadd.f32 %v1908, %v3179
      %v3181 = vpop.f32.mrf.mxu0
      %3182 = vdwg.mxu0
      %v3183 = vmax.f32 %v3180, 0.0
      %3184 = vrot.lane.b32.xlu0 %v3183, 2
      %v3185 = vpop.permute.xlu0 %3184
      %v3186 = vsel %vm1454, %v3185, 0.0
      %3187 = vrot.lane.b32.xlu0 %v3183, 126
      %v3188 = vpop.permute.xlu0 %3187
      %v3189 = vsel %vm1458, %v3188, 0.0
      %3190 = vmatprep.subr.mxu0 0.0
      %3191 = vmatpush1.msra.mxu0 0.0
      %3192 = vmatprep.subr.mxu0 0.0
      %3193 = vmatpush1.msra.mxu0 0.0
      %3194 = vmatprep.subr.mxu0 0.0
      %3195 = vmatpush1.msra.mxu0 0.0
      %3196 = vmatprep.subr.mxu0 0.0
      %3197 = vmatpush1.msra.mxu0 0.0
      %3198 = vmatprep.subr.mxu0 0.0
      %3199 = vmatpush1.msra.mxu0 0.0
      %3200 = vmatprep.subr.mxu0 0.0
      %3201 = vmatpush1.msra.mxu0 0.0
      %3202 = vmatprep.subr.mxu0 0.0
      %3203 = vmatpush1.msra.mxu0 0.0
      %3204 = vmatprep.subr.mxu0 0.0
      %3205 = vmatpush1.msra.mxu0 0.0
      %3206 = vmatprep.subr.mxu0 0.0
      %3207 = vmatpush1.msra.mxu0 0.0
      %3208 = vmatprep.subr.mxu0 0.0
      %3209 = vmatpush1.msra.mxu0 0.0
      %3210 = vmatprep.subr.mxu0 0.0
      %3211 = vmatpush1.msra.mxu0 0.0
      %3212 = vmatprep.subr.mxu0 0.0
      %3213 = vmatpush1.msra.mxu0 0.0
      %3214 = vmatprep.subr.mxu0 0.0
      %3215 = vmatpush1.msra.mxu0 0.0
      %3216 = vmatprep.subr.mxu0 0.0
      %3217 = vmatpush1.msra.mxu0 %v3189
      %3218 = vmatprep.subr.mxu0 0.0
      %3219 = vmatpush1.msra.mxu0 %v3183
      %3220 = vmatprep.subr.mxu0 0.0
      %3221 = vmatpush1.msra.mxu0 %v3186
      %3222 = vmatprep.subr.mxu0 0.0
      %3223 = vmatpush2.msra.mxu0 0.0
      %3224 = vmatprep.subr.mxu0 0.0
      %3225 = vmatpush2.msra.mxu0 0.0
      %3226 = vmatprep.subr.mxu0 0.0
      %3227 = vmatpush2.msra.mxu0 0.0
      %3228 = vmatprep.subr.mxu0 0.0
      %3229 = vmatpush2.msra.mxu0 0.0
      %3230 = vmatprep.subr.mxu0 0.0
      %3231 = vmatpush2.msra.mxu0 0.0
      %3232 = vmatprep.subr.mxu0 0.0
      %3233 = vmatpush2.msra.mxu0 0.0
      %3234 = vmatprep.subr.mxu0 0.0
      %3235 = vmatpush2.msra.mxu0 0.0
      %3236 = vmatprep.subr.mxu0 0.0
      %3237 = vmatpush2.msra.mxu0 0.0
      %3238 = vmatprep.subr.mxu0 0.0
      %3239 = vmatpush2.msra.mxu0 0.0
      %3240 = vmatprep.subr.mxu0 0.0
      %3241 = vmatpush2.msra.mxu0 0.0
      %3242 = vmatprep.subr.mxu0 0.0
      %3243 = vmatpush2.msra.mxu0 0.0
      %3244 = vmatprep.subr.mxu0 0.0
      %3245 = vmatpush2.msra.mxu0 0.0
      %3246 = vmatprep.subr.mxu0 0.0
      %3247 = vmatpush2.msra.mxu0 0.0
      %3248 = vmatprep.subr.mxu0 0.0
      %3249 = vmatpush2.msra.mxu0 0.0
      %3250 = vmatprep.subr.mxu0 0.0
      %3251 = vmatpush2.msra.mxu0 0.0
      %3252 = vmatprep.subr.mxu0 0.0
      %3253 = vmatpush2.msra.mxu0 0.0
      %3254 = vmatprep.mubr.f32.mxu0 0.0
      %3255 = vmatmul.mubr.f32.gmra.mxu0 %v1999
      %v3256 = vpop.f32.mrf.mxu0
      %v3257 = vadd.f32 %v1996, %v3256
      %v3258 = vpop.f32.mrf.mxu0
      %3259 = vdwg.mxu0
      %v3260 = vmax.f32 %v3257, 0.0
      %3261 = vrot.lane.b32.xlu0 %v3260, 4
      %v3262 = vpop.permute.xlu0 %3261
      %v3263 = vsel %vm1542, %v3262, 0.0
      %3264 = vrot.lane.b32.xlu0 %v3260, 124
      %v3265 = vpop.permute.xlu0 %3264
      %v3266 = vsel %vm1546, %v3265, 0.0
      %3267 = vmatprep.subr.mxu0 0.0
      %3268 = vmatpush1.msra.mxu0 0.0
      %3269 = vmatprep.subr.mxu0 0.0
      %3270 = vmatpush1.msra.mxu0 0.0
      %3271 = vmatprep.subr.mxu0 0.0
      %3272 = vmatpush1.msra.mxu0 0.0
      %3273 = vmatprep.subr.mxu0 0.0
      %3274 = vmatpush1.msra.mxu0 0.0
      %3275 = vmatprep.subr.mxu0 0.0
      %3276 = vmatpush1.msra.mxu0 0.0
      %3277 = vmatprep.subr.mxu0 0.0
      %3278 = vmatpush1.msra.mxu0 0.0
      %3279 = vmatprep.subr.mxu0 0.0
      %3280 = vmatpush1.msra.mxu0 0.0
      %3281 = vmatprep.subr.mxu0 0.0
      %3282 = vmatpush1.msra.mxu0 0.0
      %3283 = vmatprep.subr.mxu0 0.0
      %3284 = vmatpush1.msra.mxu0 0.0
      %3285 = vmatprep.subr.mxu0 0.0
      %3286 = vmatpush1.msra.mxu0 0.0
      %3287 = vmatprep.subr.mxu0 0.0
      %3288 = vmatpush1.msra.mxu0 0.0
      %3289 = vmatprep.subr.mxu0 0.0
      %3290 = vmatpush1.msra.mxu0 0.0
      %3291 = vmatprep.subr.mxu0 0.0
      %3292 = vmatpush1.msra.mxu0 0.0
      %3293 = vmatprep.subr.mxu0 0.0
      %3294 = vmatpush1.msra.mxu0 %v3266
      %3295 = vmatprep.subr.mxu0 0.0
      %3296 = vmatpush1.msra.mxu0 %v3260
      %3297 = vmatprep.subr.mxu0 0.0
      %3298 = vmatpush1.msra.mxu0 %v3263
      %3299 = vmatprep.subr.mxu0 0.0
      %3300 = vmatpush2.msra.mxu0 0.0
      %3301 = vmatprep.subr.mxu0 0.0
      %3302 = vmatpush2.msra.mxu0 0.0
      %3303 = vmatprep.subr.mxu0 0.0
      %3304 = vmatpush2.msra.mxu0 0.0
      %3305 = vmatprep.subr.mxu0 0.0
      %3306 = vmatpush2.msra.mxu0 0.0
      %3307 = vmatprep.subr.mxu0 0.0
      %3308 = vmatpush2.msra.mxu0 0.0
      %3309 = vmatprep.subr.mxu0 0.0
      %3310 = vmatpush2.msra.mxu0 0.0
      %3311 = vmatprep.subr.mxu0 0.0
      %3312 = vmatpush2.msra.mxu0 0.0
      %3313 = vmatprep.subr.mxu0 0.0
      %3314 = vmatpush2.msra.mxu0 0.0
      %3315 = vmatprep.subr.mxu0 0.0
      %3316 = vmatpush2.msra.mxu0 0.0
      %3317 = vmatprep.subr.mxu0 0.0
      %3318 = vmatpush2.msra.mxu0 0.0
      %3319 = vmatprep.subr.mxu0 0.0
      %3320 = vmatpush2.msra.mxu0 0.0
      %3321 = vmatprep.subr.mxu0 0.0
      %3322 = vmatpush2.msra.mxu0 0.0
      %3323 = vmatprep.subr.mxu0 0.0
      %3324 = vmatpush2.msra.mxu0 0.0
      %3325 = vmatprep.subr.mxu0 0.0
      %3326 = vmatpush2.msra.mxu0 0.0
      %3327 = vmatprep.subr.mxu0 0.0
      %3328 = vmatpush2.msra.mxu0 0.0
      %3329 = vmatprep.subr.mxu0 0.0
      %3330 = vmatpush2.msra.mxu0 0.0
      %3331 = vmatprep.mubr.f32.mxu0 0.0
      %3332 = vmatmul.mubr.f32.gmra.mxu0 %v2084
      %v3333 = vpop.f32.mrf.mxu0
      %v3334 = vadd.f32 %v2081, %v3333
      %v3335 = vpop.f32.mrf.mxu0
      %3336 = vdwg.mxu0
      %v3337 = vmax.f32 %v3334, 0.0
      %3338 = vrot.lane.b32.xlu0 %v3337, 4
      %v3339 = vpop.permute.xlu0 %3338
      %v3340 = vsel %vm1542, %v3339, 0.0
      %3341 = vrot.lane.b32.xlu0 %v3337, 124
      %v3342 = vpop.permute.xlu0 %3341
      %v3343 = vsel %vm1546, %v3342, 0.0
      %3344 = vmatprep.subr.mxu0 0.0
      %3345 = vmatpush1.msra.mxu0 0.0
      %3346 = vmatprep.subr.mxu0 0.0
      %3347 = vmatpush1.msra.mxu0 0.0
      %3348 = vmatprep.subr.mxu0 0.0
      %3349 = vmatpush1.msra.mxu0 0.0
      %3350 = vmatprep.subr.mxu0 0.0
      %3351 = vmatpush1.msra.mxu0 0.0
      %3352 = vmatprep.subr.mxu0 0.0
      %3353 = vmatpush1.msra.mxu0 0.0
      %3354 = vmatprep.subr.mxu0 0.0
      %3355 = vmatpush1.msra.mxu0 0.0
      %3356 = vmatprep.subr.mxu0 0.0
      %3357 = vmatpush1.msra.mxu0 0.0
      %3358 = vmatprep.subr.mxu0 0.0
      %3359 = vmatpush1.msra.mxu0 0.0
      %3360 = vmatprep.subr.mxu0 0.0
      %3361 = vmatpush1.msra.mxu0 0.0
      %3362 = vmatprep.subr.mxu0 0.0
      %3363 = vmatpush1.msra.mxu0 0.0
      %3364 = vmatprep.subr.mxu0 0.0
      %3365 = vmatpush1.msra.mxu0 0.0
      %3366 = vmatprep.subr.mxu0 0.0
      %3367 = vmatpush1.msra.mxu0 0.0
      %3368 = vmatprep.subr.mxu0 0.0
      %3369 = vmatpush1.msra.mxu0 0.0
      %3370 = vmatprep.subr.mxu0 0.0
      %3371 = vmatpush1.msra.mxu0 %v3343
      %3372 = vmatprep.subr.mxu0 0.0
      %3373 = vmatpush1.msra.mxu0 %v3337
      %3374 = vmatprep.subr.mxu0 0.0
      %3375 = vmatpush1.msra.mxu0 %v3340
      %3376 = vmatprep.subr.mxu0 0.0
      %3377 = vmatpush2.msra.mxu0 0.0
      %3378 = vmatprep.subr.mxu0 0.0
      %3379 = vmatpush2.msra.mxu0 0.0
      %3380 = vmatprep.subr.mxu0 0.0
      %3381 = vmatpush2.msra.mxu0 0.0
      %3382 = vmatprep.subr.mxu0 0.0
      %3383 = vmatpush2.msra.mxu0 0.0
      %3384 = vmatprep.subr.mxu0 0.0
      %3385 = vmatpush2.msra.mxu0 0.0
      %3386 = vmatprep.subr.mxu0 0.0
      %3387 = vmatpush2.msra.mxu0 0.0
      %3388 = vmatprep.subr.mxu0 0.0
      %3389 = vmatpush2.msra.mxu0 0.0
      %3390 = vmatprep.subr.mxu0 0.0
      %3391 = vmatpush2.msra.mxu0 0.0
      %3392 = vmatprep.subr.mxu0 0.0
      %3393 = vmatpush2.msra.mxu0 0.0
      %3394 = vmatprep.subr.mxu0 0.0
      %3395 = vmatpush2.msra.mxu0 0.0
      %3396 = vmatprep.subr.mxu0 0.0
      %3397 = vmatpush2.msra.mxu0 0.0
      %3398 = vmatprep.subr.mxu0 0.0
      %3399 = vmatpush2.msra.mxu0 0.0
      %3400 = vmatprep.subr.mxu0 0.0
      %3401 = vmatpush2.msra.mxu0 0.0
      %3402 = vmatprep.subr.mxu0 0.0
      %3403 = vmatpush2.msra.mxu0 0.0
      %3404 = vmatprep.subr.mxu0 0.0
      %3405 = vmatpush2.msra.mxu0 0.0
      %3406 = vmatprep.subr.mxu0 0.0
      %3407 = vmatpush2.msra.mxu0 0.0
      %3408 = vmatprep.mubr.f32.mxu0 0.0
      %3409 = vmatmul.mubr.f32.gmra.mxu0 %v2169
      %v3410 = vpop.f32.mrf.mxu0
      %v3411 = vadd.f32 %v2166, %v3410
      %v3412 = vpop.f32.mrf.mxu0
      %3413 = vdwg.mxu0
      %v3414 = vmax.f32 %v3411, 0.0
      %3415 = vrot.lane.b32.xlu0 %v3414, 2
      %v3416 = vpop.permute.xlu0 %3415
      %3417 = vrot.lane.b32.xlu0 %v3260, 2
      %v3418 = vpop.permute.xlu0 %3417
      %v3419 = vsel %vm1454, %v3416, 0.0
      %v3420 = vsel %vm1454, %v3418, 0.0
      %3421 = vrot.lane.b32.xlu0 %v3414, 126
      %v3422 = vpop.permute.xlu0 %3421
      %3423 = vrot.lane.b32.xlu0 %v3260, 126
      %v3424 = vpop.permute.xlu0 %3423
      %v3425 = vsel %vm1458, %v3422, 0.0
      %v3426 = vsel %vm1458, %v3424, 0.0
      %3427 = vmatprep.subr.mxu0 0.0
      %3428 = vmatpush1.msra.mxu0 0.0
      %3429 = vmatprep.subr.mxu0 0.0
      %3430 = vmatpush1.msra.mxu0 0.0
      %3431 = vmatprep.subr.mxu0 0.0
      %3432 = vmatpush1.msra.mxu0 0.0
      %3433 = vmatprep.subr.mxu0 0.0
      %3434 = vmatpush1.msra.mxu0 0.0
      %3435 = vmatprep.subr.mxu0 0.0
      %3436 = vmatpush1.msra.mxu0 0.0
      %3437 = vmatprep.subr.mxu0 0.0
      %3438 = vmatpush1.msra.mxu0 0.0
      %3439 = vmatprep.subr.mxu0 0.0
      %3440 = vmatpush1.msra.mxu0 0.0
      %3441 = vmatprep.subr.mxu0 0.0
      %3442 = vmatpush1.msra.mxu0 0.0
      %3443 = vmatprep.subr.mxu0 0.0
      %3444 = vmatpush1.msra.mxu0 0.0
      %3445 = vmatprep.subr.mxu0 0.0
      %3446 = vmatpush1.msra.mxu0 0.0
      %3447 = vmatprep.subr.mxu0 0.0
      %3448 = vmatpush1.msra.mxu0 %v3426
      %3449 = vmatprep.subr.mxu0 0.0
      %3450 = vmatpush1.msra.mxu0 %v3425
      %3451 = vmatprep.subr.mxu0 0.0
      %3452 = vmatpush1.msra.mxu0 %v3260
      %3453 = vmatprep.subr.mxu0 0.0
      %3454 = vmatpush1.msra.mxu0 %v3414
      %3455 = vmatprep.subr.mxu0 0.0
      %3456 = vmatpush1.msra.mxu0 %v3420
      %3457 = vmatprep.subr.mxu0 0.0
      %3458 = vmatpush1.msra.mxu0 %v3419
      %3459 = vmatprep.subr.mxu0 0.0
      %3460 = vmatpush2.msra.mxu0 0.0
      %3461 = vmatprep.subr.mxu0 0.0
      %3462 = vmatpush2.msra.mxu0 0.0
      %3463 = vmatprep.subr.mxu0 0.0
      %3464 = vmatpush2.msra.mxu0 0.0
      %3465 = vmatprep.subr.mxu0 0.0
      %3466 = vmatpush2.msra.mxu0 0.0
      %3467 = vmatprep.subr.mxu0 0.0
      %3468 = vmatpush2.msra.mxu0 0.0
      %3469 = vmatprep.subr.mxu0 0.0
      %3470 = vmatpush2.msra.mxu0 0.0
      %3471 = vmatprep.subr.mxu0 0.0
      %3472 = vmatpush2.msra.mxu0 0.0
      %3473 = vmatprep.subr.mxu0 0.0
      %3474 = vmatpush2.msra.mxu0 0.0
      %3475 = vmatprep.subr.mxu0 0.0
      %3476 = vmatpush2.msra.mxu0 0.0
      %3477 = vmatprep.subr.mxu0 0.0
      %3478 = vmatpush2.msra.mxu0 0.0
      %3479 = vmatprep.subr.mxu0 0.0
      %3480 = vmatpush2.msra.mxu0 0.0
      %3481 = vmatprep.subr.mxu0 0.0
      %3482 = vmatpush2.msra.mxu0 0.0
      %3483 = vmatprep.subr.mxu0 0.0
      %3484 = vmatpush2.msra.mxu0 0.0
      %3485 = vmatprep.subr.mxu0 0.0
      %3486 = vmatpush2.msra.mxu0 0.0
      %3487 = vmatprep.subr.mxu0 0.0
      %3488 = vmatpush2.msra.mxu0 0.0
      %3489 = vmatprep.subr.mxu0 0.0
      %3490 = vmatpush2.msra.mxu0 0.0
      %3491 = vmatprep.mubr.f32.mxu0 0.0
      %3492 = vmatmul.mubr.f32.gmra.mxu0 %v2260
      %v3493 = vpop.f32.mrf.mxu0
      %v3494 = vadd.f32 %v2257, %v3493
      %v3495 = vpop.f32.mrf.mxu0
      %3496 = vdwg.mxu0
      %v3497 = vmax.f32 %v3494, 0.0
      %3498 = vrot.lane.b32.xlu0 %v3497, 1
      %v3499 = vpop.permute.xlu0 %3498
      %3500 = vrot.lane.b32.xlu0 %v3183, 1
      %v3501 = vpop.permute.xlu0 %3500
      %v3502 = vsel %vm1358, %v3499, 0.0
      %v3503 = vsel %vm1358, %v3501, 0.0
      %3504 = vrot.lane.b32.xlu0 %v3497, 127
      %v3505 = vpop.permute.xlu0 %3504
      %3506 = vrot.lane.b32.xlu0 %v3183, 127
      %v3507 = vpop.permute.xlu0 %3506
      %v3508 = vsel %vm1362, %v3505, 0.0
      %v3509 = vsel %vm1362, %v3507, 0.0
      %3510 = vmatprep.subr.mxu0 0.0
      %3511 = vmatpush1.msra.mxu0 0.0
      %3512 = vmatprep.subr.mxu0 0.0
      %3513 = vmatpush1.msra.mxu0 0.0
      %3514 = vmatprep.subr.mxu0 0.0
      %3515 = vmatpush1.msra.mxu0 0.0
      %3516 = vmatprep.subr.mxu0 0.0
      %3517 = vmatpush1.msra.mxu0 0.0
      %3518 = vmatprep.subr.mxu0 0.0
      %3519 = vmatpush1.msra.mxu0 0.0
      %3520 = vmatprep.subr.mxu0 0.0
      %3521 = vmatpush1.msra.mxu0 0.0
      %3522 = vmatprep.subr.mxu0 0.0
      %3523 = vmatpush1.msra.mxu0 0.0
      %3524 = vmatprep.subr.mxu0 0.0
      %3525 = vmatpush1.msra.mxu0 0.0
      %3526 = vmatprep.subr.mxu0 0.0
      %3527 = vmatpush1.msra.mxu0 0.0
      %3528 = vmatprep.subr.mxu0 0.0
      %3529 = vmatpush1.msra.mxu0 0.0
      %3530 = vmatprep.subr.mxu0 0.0
      %3531 = vmatpush1.msra.mxu0 %v3509
      %3532 = vmatprep.subr.mxu0 0.0
      %3533 = vmatpush1.msra.mxu0 %v3508
      %3534 = vmatprep.subr.mxu0 0.0
      %3535 = vmatpush1.msra.mxu0 %v3183
      %3536 = vmatprep.subr.mxu0 0.0
      %3537 = vmatpush1.msra.mxu0 %v3497
      %3538 = vmatprep.subr.mxu0 0.0
      %3539 = vmatpush1.msra.mxu0 %v3503
      %3540 = vmatprep.subr.mxu0 0.0
      %3541 = vmatpush1.msra.mxu0 %v3502
      %3542 = vmatprep.subr.mxu0 0.0
      %3543 = vmatpush2.msra.mxu0 0.0
      %3544 = vmatprep.subr.mxu0 0.0
      %3545 = vmatpush2.msra.mxu0 0.0
      %3546 = vmatprep.subr.mxu0 0.0
      %3547 = vmatpush2.msra.mxu0 0.0
      %3548 = vmatprep.subr.mxu0 0.0
      %3549 = vmatpush2.msra.mxu0 0.0
      %3550 = vmatprep.subr.mxu0 0.0
      %3551 = vmatpush2.msra.mxu0 0.0
      %3552 = vmatprep.subr.mxu0 0.0
      %3553 = vmatpush2.msra.mxu0 0.0
      %3554 = vmatprep.subr.mxu0 0.0
      %3555 = vmatpush2.msra.mxu0 0.0
      %3556 = vmatprep.subr.mxu0 0.0
      %3557 = vmatpush2.msra.mxu0 0.0
      %3558 = vmatprep.subr.mxu0 0.0
      %3559 = vmatpush2.msra.mxu0 0.0
      %3560 = vmatprep.subr.mxu0 0.0
      %3561 = vmatpush2.msra.mxu0 0.0
      %3562 = vmatprep.subr.mxu0 0.0
      %3563 = vmatpush2.msra.mxu0 0.0
      %3564 = vmatprep.subr.mxu0 0.0
      %3565 = vmatpush2.msra.mxu0 0.0
      %3566 = vmatprep.subr.mxu0 0.0
      %3567 = vmatpush2.msra.mxu0 0.0
      %3568 = vmatprep.subr.mxu0 0.0
      %3569 = vmatpush2.msra.mxu0 0.0
      %3570 = vmatprep.subr.mxu0 0.0
      %3571 = vmatpush2.msra.mxu0 0.0
      %3572 = vmatprep.subr.mxu0 0.0
      %3573 = vmatpush2.msra.mxu0 0.0
      %3574 = vmatprep.mubr.f32.mxu0 0.0
      %3575 = vmatmul.mubr.f32.gmra.mxu0 %v2351
      %v3576 = vpop.f32.mrf.mxu0
      %v3577 = vadd.f32 %v2348, %v3576
      %v3578 = vpop.f32.mrf.mxu0
      %3579 = vdwg.mxu0
      %v3580 = vmax.f32 %v3577, 0.0
      %3581 = vmatprep.subr.mxu0 0.0
      %3582 = vmatpush1.msra.mxu0 0.0
      %3583 = vmatprep.subr.mxu0 0.0
      %3584 = vmatpush1.msra.mxu0 0.0
      %3585 = vmatprep.subr.mxu0 0.0
      %3586 = vmatpush1.msra.mxu0 0.0
      %3587 = vmatprep.subr.mxu0 0.0
      %3588 = vmatpush1.msra.mxu0 0.0
      %3589 = vmatprep.subr.mxu0 0.0
      %3590 = vmatpush1.msra.mxu0 0.0
      %3591 = vmatprep.subr.mxu0 0.0
      %3592 = vmatpush1.msra.mxu0 0.0
      %3593 = vmatprep.subr.mxu0 0.0
      %3594 = vmatpush1.msra.mxu0 0.0
      %3595 = vmatprep.subr.mxu0 0.0
      %3596 = vmatpush1.msra.mxu0 0.0
      %3597 = vmatprep.subr.mxu0 0.0
      %3598 = vmatpush1.msra.mxu0 0.0
      %3599 = vmatprep.subr.mxu0 0.0
      %3600 = vmatpush1.msra.mxu0 0.0
      %3601 = vmatprep.subr.mxu0 0.0
      %3602 = vmatpush1.msra.mxu0 0.0
      %3603 = vmatprep.subr.mxu0 0.0
      %3604 = vmatpush1.msra.mxu0 0.0
      %3605 = vmatprep.subr.mxu0 0.0
      %3606 = vmatpush1.msra.mxu0 0.0
      %3607 = vmatprep.subr.mxu0 0.0
      %3608 = vmatpush1.msra.mxu0 0.0
      %3609 = vmatprep.subr.mxu0 0.0
      %3610 = vmatpush1.msra.mxu0 %v3580
      %3611 = vmatprep.subr.mxu0 0.0
      %3612 = vmatpush1.msra.mxu0 %v3099
      %3613 = vmatprep.subr.mxu0 0.0
      %3614 = vmatpush2.msra.mxu0 0.0
      %3615 = vmatprep.subr.mxu0 0.0
      %3616 = vmatpush2.msra.mxu0 0.0
      %3617 = vmatprep.subr.mxu0 0.0
      %3618 = vmatpush2.msra.mxu0 0.0
      %3619 = vmatprep.subr.mxu0 0.0
      %3620 = vmatpush2.msra.mxu0 0.0
      %3621 = vmatprep.subr.mxu0 0.0
      %3622 = vmatpush2.msra.mxu0 0.0
      %3623 = vmatprep.subr.mxu0 0.0
      %3624 = vmatpush2.msra.mxu0 0.0
      %3625 = vmatprep.subr.mxu0 0.0
      %3626 = vmatpush2.msra.mxu0 0.0
      %3627 = vmatprep.subr.mxu0 0.0
      %3628 = vmatpush2.msra.mxu0 0.0
      %3629 = vmatprep.subr.mxu0 0.0
      %3630 = vmatpush2.msra.mxu0 0.0
      %3631 = vmatprep.subr.mxu0 0.0
      %3632 = vmatpush2.msra.mxu0 0.0
      %3633 = vmatprep.subr.mxu0 0.0
      %3634 = vmatpush2.msra.mxu0 0.0
      %3635 = vmatprep.subr.mxu0 0.0
      %3636 = vmatpush2.msra.mxu0 0.0
      %3637 = vmatprep.subr.mxu0 0.0
      %3638 = vmatpush2.msra.mxu0 0.0
      %3639 = vmatprep.subr.mxu0 0.0
      %3640 = vmatpush2.msra.mxu0 0.0
      %3641 = vmatprep.subr.mxu0 0.0
      %3642 = vmatpush2.msra.mxu0 0.0
      %3643 = vmatprep.subr.mxu0 0.0
      %3644 = vmatpush2.msra.mxu0 0.0
      %3645 = vmatprep.mubr.f32.mxu0 0.0
      %3646 = vmatmul.mubr.f32.gmra.mxu0 %v2431
      %v3647 = vpop.f32.mrf.mxu0
      %v3648 = vadd.f32 %v2427, %v3647
      %v3649 = vpop.f32.mrf.mxu0
      %3650 = vdwg.mxu0
      %v3651 = vlaneseq
      %v3652 = vshrl.u32 %v3651, 7
      %v3653 = vsub.s32 2, %v3652
      %v3654 = vrot.slane %v1064, %v3653
      %v3655 = vlaneseq
      %v3656 = vshrl.u32 %v3655, 7
      %v3657 = vsub.s32 2, %v3656
      %v3658 = vrot.slane %v1065, %v3657
      %v3659 = vrot.slane %v1064, 2
      %v3660 = vrot.slane %v1065, 1
      %v3661 = vsel %vm1093, %v3660, %v3659
      %v3663 = vmul.f32 %v3654, %v3661
      %v3664 = vmul.f32 %v3658, %v3661
      %v3665 = vlaneseq
      %v3666 = vshrl.u32 %v3665, 7
      %v3667 = vsub.s32 2, %v3666
      %v3668 = vrot.slane %v1066, %v3667
      %v3669 = vlaneseq
      %v3670 = vshrl.u32 %v3669, 7
      %v3671 = vsub.s32 2, %v3670
      %v3672 = vrot.slane %v1067, %v3671
      %v3673 = vrot.slane %v1066, 2
      %v3674 = vrot.slane %v1067, 1
      %v3675 = vsel %vm1093, %v3674, %v3673
      %v3677 = vmul.f32 %v3668, %v3675
      %v3678 = vmul.f32 %v3672, %v3675
      %v3679 = vadd.f32 %v3663, %v3677
      %v3680 = vadd.f32 %v3664, %v3678
      %v3681 = vmul.f32 %v3668, %v3661
      %v3682 = vmul.f32 %v3672, %v3661
      %v3683 = vmul.f32 %v3654, %v3675
      %v3684 = vmul.f32 %v3658, %v3675
      %v3685 = vsub.f32 %v3681, %v3683
      %v3686 = vsub.f32 %v3682, %v3684
      %v3687 = vmul.f32 %v1170, %v3679
      %v3688 = vmul.f32 %v1174, %v3680
      %v3689 = vmul.f32 %v1178, %v3679
      %v3690 = vmul.f32 %v1182, %v3680
      %v3691 = vmul.f32 %v1240, %v3685
      %v3692 = vmul.f32 %v1244, %v3686
      %v3693 = vmul.f32 %v1248, %v3685
      %v3694 = vmul.f32 %v1252, %v3686
      %v3695 = vsub.f32 %v3687, %v3691
      %v3696 = vsub.f32 %v3688, %v3692
      %v3697 = vsub.f32 %v3689, %v3693
      %v3698 = vsub.f32 %v3690, %v3694
      %v3699 = vsel %vm1265, %v3695, 0.0
      %v3700 = vsel %vm1265, %v3696, 0.0
      %v3701 = vadd.f32 %v3699, %v3700
      %v3702 = vsel %vm1265, %v3697, 0.0
      %v3703 = vsel %vm1265, %v3698, 0.0
      %v3704 = vadd.f32 %v3702, %v3703
      %v3705 = vmul.f32 %v1170, %v3685
      %v3706 = vmul.f32 %v1174, %v3686
      %v3707 = vmul.f32 %v1178, %v3685
      %v3708 = vmul.f32 %v1182, %v3686
      %v3709 = vmul.f32 %v1240, %v3679
      %v3710 = vmul.f32 %v1244, %v3680
      %v3711 = vmul.f32 %v1248, %v3679
      %v3712 = vmul.f32 %v1252, %v3680
      %v3713 = vadd.f32 %v3705, %v3709
      %v3714 = vadd.f32 %v3706, %v3710
      %v3715 = vadd.f32 %v3707, %v3711
      %v3716 = vadd.f32 %v3708, %v3712
      %v3717 = vsel %vm1265, %v3713, 0.0
      %v3718 = vsel %vm1265, %v3714, 0.0
      %v3719 = vadd.f32 %v3717, %v3718
      %v3720 = vsel %vm1265, %v3715, 0.0
      %v3721 = vsel %vm1265, %v3716, 0.0
      %v3722 = vadd.f32 %v3720, %v3721
      %v3723 = vlaneseq
      %v3724 = vshrl.u32 %v3723, 7
      %v3725 = vsub.s32 2, %v3724
      %v3726 = vrot.slane %v1060, %v3725
      %v3727 = vlaneseq
      %v3728 = vshrl.u32 %v3727, 7
      %v3729 = vsub.s32 2, %v3728
      %v3730 = vrot.slane %v1061, %v3729
      %v3731 = vmul.f32 %v3701, %v3726
      %v3732 = vmul.f32 %v3704, %v3730
      %v3733 = vlaneseq
      %v3734 = vshrl.u32 %v3733, 7
      %v3735 = vsub.s32 2, %v3734
      %v3736 = vrot.slane %v1062, %v3735
      %v3737 = vlaneseq
      %v3738 = vshrl.u32 %v3737, 7
      %v3739 = vsub.s32 2, %v3738
      %v3740 = vrot.slane %v1063, %v3739
      %v3741 = vmul.f32 %v3719, %v3736
      %v3742 = vmul.f32 %v3722, %v3740
      %v3743 = vadd.f32 %v3731, %v3741
      %v3744 = vadd.f32 %v3732, %v3742
      %v3745 = vsel %vm1265, %v3743, 0.0
      %v3746 = vsel %vm1265, %v3744, 0.0
      %v3747 = vadd.f32 %v3745, %v3746
      %v3748 = vmul.f32 %v3701, %v3736
      %v3749 = vmul.f32 %v3704, %v3740
      %v3750 = vmul.f32 %v3719, %v3726
      %v3751 = vmul.f32 %v3722, %v3730
      %v3752 = vsub.f32 %v3748, %v3750
      %v3753 = vsub.f32 %v3749, %v3751
      %v3754 = vsel %vm1265, %v3752, 0.0
      %v3755 = vsel %vm1265, %v3753, 0.0
      %v3756 = vadd.f32 %v3754, %v3755
      %v3757 = vrot.slane %v1060, 2
      %v3758 = vrot.slane %v1061, 1
      %v3759 = vsel %vm1093, %v3758, %v3757
      %v3761 = vrot.slane %v1063, 7
      %v3762 = vsel %vm1346, %v3761, %v1062
      %v3764 = vsel %vm1265, %v3759, %v3762
      %v3766 = vrot.slane %v3756, 6
      %v3768 = vsel %vm1265, %v3747, %v3766
      %3769 = vrot.lane.b32.xlu0 %v3764, 1
      %v3770 = vpop.permute.xlu0 %3769
      %v3771 = vsel %vm1358, %v3770, 0.0
      %3772 = vrot.lane.b32.xlu0 %v3764, 127
      %v3773 = vpop.permute.xlu0 %3772
      %v3774 = vsel %vm1362, %v3773, 0.0
      %v3776 = vrot.slane %v3764, 4
      %v3778 = vsel %vm1367, %v3771, %v3776
      %v3780 = vsel %vm1367, %v3774, 0
      %3782 = vmatprep.subr.mxu0 0.0
      %3783 = vmatpush1.msra.mxu0 0.0
      %3784 = vmatprep.subr.mxu0 0.0
      %3785 = vmatpush1.msra.mxu0 0.0
      %3786 = vmatprep.subr.mxu0 0.0
      %3787 = vmatpush1.msra.mxu0 0.0
      %3788 = vmatprep.subr.mxu0 0.0
      %3789 = vmatpush1.msra.mxu0 0.0
      %3790 = vmatprep.subr.mxu0 0.0
      %3791 = vmatpush1.msra.mxu0 0.0
      %3792 = vmatprep.subr.mxu0 0.0
      %3793 = vmatpush1.msra.mxu0 0.0
      %3794 = vmatprep.subr.mxu0 0.0
      %3795 = vmatpush1.msra.mxu0 0.0
      %3796 = vmatprep.subr.mxu0 0.0
      %3797 = vmatpush1.msra.mxu0 0.0
      %3798 = vmatprep.subr.mxu0 0.0
      %3799 = vmatpush1.msra.mxu0 0.0
      %3800 = vmatprep.subr.mxu0 0.0
      %3801 = vmatpush1.msra.mxu0 0.0
      %3802 = vmatprep.subr.mxu0 0.0
      %3803 = vmatpush1.msra.mxu0 0.0
      %3804 = vmatprep.subr.mxu0 0.0
      %3805 = vmatpush1.msra.mxu0 0.0
      %3806 = vmatprep.subr.mxu0 0.0
      %3807 = vmatpush1.msra.mxu0 0.0
      %3808 = vmatprep.subr.mxu0 0.0
      %3809 = vmatpush1.msra.mxu0 0.0
      %3810 = vmatprep.subr.mxu0 0.0
      %3811 = vmatpush1.msra.mxu0 %v3780
      %3812 = vmatprep.subr.mxu0 0.0
      %3813 = vmatpush1.msra.mxu0 %v3778
      %3814 = vmatprep.subr.mxu0 0.0
      %3815 = vmatpush2.msra.mxu0 0.0
      %3816 = vmatprep.subr.mxu0 0.0
      %3817 = vmatpush2.msra.mxu0 0.0
      %3818 = vmatprep.subr.mxu0 0.0
      %3819 = vmatpush2.msra.mxu0 0.0
      %3820 = vmatprep.subr.mxu0 0.0
      %3821 = vmatpush2.msra.mxu0 0.0
      %3822 = vmatprep.subr.mxu0 0.0
      %3823 = vmatpush2.msra.mxu0 0.0
      %3824 = vmatprep.subr.mxu0 0.0
      %3825 = vmatpush2.msra.mxu0 0.0
      %3826 = vmatprep.subr.mxu0 0.0
      %3827 = vmatpush2.msra.mxu0 0.0
      %3828 = vmatprep.subr.mxu0 0.0
      %3829 = vmatpush2.msra.mxu0 0.0
      %3830 = vmatprep.subr.mxu0 0.0
      %3831 = vmatpush2.msra.mxu0 0.0
      %3832 = vmatprep.subr.mxu0 0.0
      %3833 = vmatpush2.msra.mxu0 0.0
      %3834 = vmatprep.subr.mxu0 0.0
      %3835 = vmatpush2.msra.mxu0 0.0
      %3836 = vmatprep.subr.mxu0 0.0
      %3837 = vmatpush2.msra.mxu0 0.0
      %3838 = vmatprep.subr.mxu0 0.0
      %3839 = vmatpush2.msra.mxu0 0.0
      %3840 = vmatprep.subr.mxu0 0.0
      %3841 = vmatpush2.msra.mxu0 0.0
      %3842 = vmatprep.subr.mxu0 0.0
      %3843 = vmatpush2.msra.mxu0 0.0
      %3844 = vmatprep.subr.mxu0 0.0
      %3845 = vmatpush2.msra.mxu0 0.0
      %3846 = vmatprep.mubr.f32.mxu0 0.0
      %3847 = vmatmul.mubr.f32.gmra.mxu0 %v1376
      %v3848 = vpop.f32.mrf.mxu0
      %v3849 = vadd.f32 %v1372, %v3848
      %v3850 = vpop.f32.mrf.mxu0
      %3851 = vdwg.mxu0
      %v3852 = vmax.f32 %v3849, 0.0
      %3853 = vrot.lane.b32.xlu0 %v3852, 2
      %v3854 = vpop.permute.xlu0 %3853
      %v3855 = vsel %vm1454, %v3854, 0.0
      %3856 = vrot.lane.b32.xlu0 %v3852, 126
      %v3857 = vpop.permute.xlu0 %3856
      %v3858 = vsel %vm1458, %v3857, 0.0
      %3859 = vmatprep.subr.mxu0 0.0
      %3860 = vmatpush1.msra.mxu0 0.0
      %3861 = vmatprep.subr.mxu0 0.0
      %3862 = vmatpush1.msra.mxu0 0.0
      %3863 = vmatprep.subr.mxu0 0.0
      %3864 = vmatpush1.msra.mxu0 0.0
      %3865 = vmatprep.subr.mxu0 0.0
      %3866 = vmatpush1.msra.mxu0 0.0
      %3867 = vmatprep.subr.mxu0 0.0
      %3868 = vmatpush1.msra.mxu0 0.0
      %3869 = vmatprep.subr.mxu0 0.0
      %3870 = vmatpush1.msra.mxu0 0.0
      %3871 = vmatprep.subr.mxu0 0.0
      %3872 = vmatpush1.msra.mxu0 0.0
      %3873 = vmatprep.subr.mxu0 0.0
      %3874 = vmatpush1.msra.mxu0 0.0
      %3875 = vmatprep.subr.mxu0 0.0
      %3876 = vmatpush1.msra.mxu0 0.0
      %3877 = vmatprep.subr.mxu0 0.0
      %3878 = vmatpush1.msra.mxu0 0.0
      %3879 = vmatprep.subr.mxu0 0.0
      %3880 = vmatpush1.msra.mxu0 0.0
      %3881 = vmatprep.subr.mxu0 0.0
      %3882 = vmatpush1.msra.mxu0 0.0
      %3883 = vmatprep.subr.mxu0 0.0
      %3884 = vmatpush1.msra.mxu0 0.0
      %3885 = vmatprep.subr.mxu0 0.0
      %3886 = vmatpush1.msra.mxu0 %v3858
      %3887 = vmatprep.subr.mxu0 0.0
      %3888 = vmatpush1.msra.mxu0 %v3852
      %3889 = vmatprep.subr.mxu0 0.0
      %3890 = vmatpush1.msra.mxu0 %v3855
      %3891 = vmatprep.subr.mxu0 0.0
      %3892 = vmatpush2.msra.mxu0 0.0
      %3893 = vmatprep.subr.mxu0 0.0
      %3894 = vmatpush2.msra.mxu0 0.0
      %3895 = vmatprep.subr.mxu0 0.0
      %3896 = vmatpush2.msra.mxu0 0.0
      %3897 = vmatprep.subr.mxu0 0.0
      %3898 = vmatpush2.msra.mxu0 0.0
      %3899 = vmatprep.subr.mxu0 0.0
      %3900 = vmatpush2.msra.mxu0 0.0
      %3901 = vmatprep.subr.mxu0 0.0
      %3902 = vmatpush2.msra.mxu0 0.0
      %3903 = vmatprep.subr.mxu0 0.0
      %3904 = vmatpush2.msra.mxu0 0.0
      %3905 = vmatprep.subr.mxu0 0.0
      %3906 = vmatpush2.msra.mxu0 0.0
      %3907 = vmatprep.subr.mxu0 0.0
      %3908 = vmatpush2.msra.mxu0 0.0
      %3909 = vmatprep.subr.mxu0 0.0
      %3910 = vmatpush2.msra.mxu0 0.0
      %3911 = vmatprep.subr.mxu0 0.0
      %3912 = vmatpush2.msra.mxu0 0.0
      %3913 = vmatprep.subr.mxu0 0.0
      %3914 = vmatpush2.msra.mxu0 0.0
      %3915 = vmatprep.subr.mxu0 0.0
      %3916 = vmatpush2.msra.mxu0 0.0
      %3917 = vmatprep.subr.mxu0 0.0
      %3918 = vmatpush2.msra.mxu0 0.0
      %3919 = vmatprep.subr.mxu0 0.0
      %3920 = vmatpush2.msra.mxu0 0.0
      %3921 = vmatprep.subr.mxu0 0.0
      %3922 = vmatpush2.msra.mxu0 0.0
      %3923 = vmatprep.mubr.f32.mxu0 0.0
      %3924 = vmatmul.mubr.f32.gmra.mxu0 %v1467
      %v3925 = vpop.f32.mrf.mxu0
      %v3926 = vadd.f32 %v1463, %v3925
      %v3927 = vpop.f32.mrf.mxu0
      %3928 = vdwg.mxu0
      %v3929 = vmax.f32 %v3926, 0.0
      %3930 = vrot.lane.b32.xlu0 %v3929, 4
      %v3931 = vpop.permute.xlu0 %3930
      %v3932 = vsel %vm1542, %v3931, 0.0
      %3933 = vrot.lane.b32.xlu0 %v3929, 124
      %v3934 = vpop.permute.xlu0 %3933
      %v3935 = vsel %vm1546, %v3934, 0.0
      %3936 = vmatprep.subr.mxu0 0.0
      %3937 = vmatpush1.msra.mxu0 0.0
      %3938 = vmatprep.subr.mxu0 0.0
      %3939 = vmatpush1.msra.mxu0 0.0
      %3940 = vmatprep.subr.mxu0 0.0
      %3941 = vmatpush1.msra.mxu0 0.0
      %3942 = vmatprep.subr.mxu0 0.0
      %3943 = vmatpush1.msra.mxu0 0.0
      %3944 = vmatprep.subr.mxu0 0.0
      %3945 = vmatpush1.msra.mxu0 0.0
      %3946 = vmatprep.subr.mxu0 0.0
      %3947 = vmatpush1.msra.mxu0 0.0
      %3948 = vmatprep.subr.mxu0 0.0
      %3949 = vmatpush1.msra.mxu0 0.0
      %3950 = vmatprep.subr.mxu0 0.0
      %3951 = vmatpush1.msra.mxu0 0.0
      %3952 = vmatprep.subr.mxu0 0.0
      %3953 = vmatpush1.msra.mxu0 0.0
      %3954 = vmatprep.subr.mxu0 0.0
      %3955 = vmatpush1.msra.mxu0 0.0
      %3956 = vmatprep.subr.mxu0 0.0
      %3957 = vmatpush1.msra.mxu0 0.0
      %3958 = vmatprep.subr.mxu0 0.0
      %3959 = vmatpush1.msra.mxu0 0.0
      %3960 = vmatprep.subr.mxu0 0.0
      %3961 = vmatpush1.msra.mxu0 0.0
      %3962 = vmatprep.subr.mxu0 0.0
      %3963 = vmatpush1.msra.mxu0 %v3935
      %3964 = vmatprep.subr.mxu0 0.0
      %3965 = vmatpush1.msra.mxu0 %v3929
      %3966 = vmatprep.subr.mxu0 0.0
      %3967 = vmatpush1.msra.mxu0 %v3932
      %3968 = vmatprep.subr.mxu0 0.0
      %3969 = vmatpush2.msra.mxu0 0.0
      %3970 = vmatprep.subr.mxu0 0.0
      %3971 = vmatpush2.msra.mxu0 0.0
      %3972 = vmatprep.subr.mxu0 0.0
      %3973 = vmatpush2.msra.mxu0 0.0
      %3974 = vmatprep.subr.mxu0 0.0
      %3975 = vmatpush2.msra.mxu0 0.0
      %3976 = vmatprep.subr.mxu0 0.0
      %3977 = vmatpush2.msra.mxu0 0.0
      %3978 = vmatprep.subr.mxu0 0.0
      %3979 = vmatpush2.msra.mxu0 0.0
      %3980 = vmatprep.subr.mxu0 0.0
      %3981 = vmatpush2.msra.mxu0 0.0
      %3982 = vmatprep.subr.mxu0 0.0
      %3983 = vmatpush2.msra.mxu0 0.0
      %3984 = vmatprep.subr.mxu0 0.0
      %3985 = vmatpush2.msra.mxu0 0.0
      %3986 = vmatprep.subr.mxu0 0.0
      %3987 = vmatpush2.msra.mxu0 0.0
      %3988 = vmatprep.subr.mxu0 0.0
      %3989 = vmatpush2.msra.mxu0 0.0
      %3990 = vmatprep.subr.mxu0 0.0
      %3991 = vmatpush2.msra.mxu0 0.0
      %3992 = vmatprep.subr.mxu0 0.0
      %3993 = vmatpush2.msra.mxu0 0.0
      %3994 = vmatprep.subr.mxu0 0.0
      %3995 = vmatpush2.msra.mxu0 0.0
      %3996 = vmatprep.subr.mxu0 0.0
      %3997 = vmatpush2.msra.mxu0 0.0
      %3998 = vmatprep.subr.mxu0 0.0
      %3999 = vmatpush2.msra.mxu0 0.0
      %4000 = vmatprep.mubr.f32.mxu0 0.0
      %4001 = vmatmul.mubr.f32.gmra.mxu0 %v1554
      %v4002 = vpop.f32.mrf.mxu0
      %v4003 = vadd.f32 %v1551, %v4002
      %v4004 = vpop.f32.mrf.mxu0
      %4005 = vdwg.mxu0
      %v4006 = vmax.f32 %v4003, 0.0
      %4007 = vrot.lane.b32.xlu0 %v4006, 4
      %v4008 = vpop.permute.xlu0 %4007
      %v4009 = vsel %vm1542, %v4008, 0.0
      %4010 = vrot.lane.b32.xlu0 %v4006, 124
      %v4011 = vpop.permute.xlu0 %4010
      %v4012 = vsel %vm1546, %v4011, 0.0
      %4013 = vmatprep.subr.mxu0 0.0
      %4014 = vmatpush1.msra.mxu0 0.0
      %4015 = vmatprep.subr.mxu0 0.0
      %4016 = vmatpush1.msra.mxu0 0.0
      %4017 = vmatprep.subr.mxu0 0.0
      %4018 = vmatpush1.msra.mxu0 0.0
      %4019 = vmatprep.subr.mxu0 0.0
      %4020 = vmatpush1.msra.mxu0 0.0
      %4021 = vmatprep.subr.mxu0 0.0
      %4022 = vmatpush1.msra.mxu0 0.0
      %4023 = vmatprep.subr.mxu0 0.0
      %4024 = vmatpush1.msra.mxu0 0.0
      %4025 = vmatprep.subr.mxu0 0.0
      %4026 = vmatpush1.msra.mxu0 0.0
      %4027 = vmatprep.subr.mxu0 0.0
      %4028 = vmatpush1.msra.mxu0 0.0
      %4029 = vmatprep.subr.mxu0 0.0
      %4030 = vmatpush1.msra.mxu0 0.0
      %4031 = vmatprep.subr.mxu0 0.0
      %4032 = vmatpush1.msra.mxu0 0.0
      %4033 = vmatprep.subr.mxu0 0.0
      %4034 = vmatpush1.msra.mxu0 0.0
      %4035 = vmatprep.subr.mxu0 0.0
      %4036 = vmatpush1.msra.mxu0 0.0
      %4037 = vmatprep.subr.mxu0 0.0
      %4038 = vmatpush1.msra.mxu0 0.0
      %4039 = vmatprep.subr.mxu0 0.0
      %4040 = vmatpush1.msra.mxu0 %v4012
      %4041 = vmatprep.subr.mxu0 0.0
      %4042 = vmatpush1.msra.mxu0 %v4006
      %4043 = vmatprep.subr.mxu0 0.0
      %4044 = vmatpush1.msra.mxu0 %v4009
      %4045 = vmatprep.subr.mxu0 0.0
      %4046 = vmatpush2.msra.mxu0 0.0
      %4047 = vmatprep.subr.mxu0 0.0
      %4048 = vmatpush2.msra.mxu0 0.0
      %4049 = vmatprep.subr.mxu0 0.0
      %4050 = vmatpush2.msra.mxu0 0.0
      %4051 = vmatprep.subr.mxu0 0.0
      %4052 = vmatpush2.msra.mxu0 0.0
      %4053 = vmatprep.subr.mxu0 0.0
      %4054 = vmatpush2.msra.mxu0 0.0
      %4055 = vmatprep.subr.mxu0 0.0
      %4056 = vmatpush2.msra.mxu0 0.0
      %4057 = vmatprep.subr.mxu0 0.0
      %4058 = vmatpush2.msra.mxu0 0.0
      %4059 = vmatprep.subr.mxu0 0.0
      %4060 = vmatpush2.msra.mxu0 0.0
      %4061 = vmatprep.subr.mxu0 0.0
      %4062 = vmatpush2.msra.mxu0 0.0
      %4063 = vmatprep.subr.mxu0 0.0
      %4064 = vmatpush2.msra.mxu0 0.0
      %4065 = vmatprep.subr.mxu0 0.0
      %4066 = vmatpush2.msra.mxu0 0.0
      %4067 = vmatprep.subr.mxu0 0.0
      %4068 = vmatpush2.msra.mxu0 0.0
      %4069 = vmatprep.subr.mxu0 0.0
      %4070 = vmatpush2.msra.mxu0 0.0
      %4071 = vmatprep.subr.mxu0 0.0
      %4072 = vmatpush2.msra.mxu0 0.0
      %4073 = vmatprep.subr.mxu0 0.0
      %4074 = vmatpush2.msra.mxu0 0.0
      %4075 = vmatprep.subr.mxu0 0.0
      %4076 = vmatpush2.msra.mxu0 0.0
      %4077 = vmatprep.mubr.f32.mxu0 0.0
      %4078 = vmatmul.mubr.f32.gmra.mxu0 %v1639
      %v4079 = vpop.f32.mrf.mxu0
      %v4080 = vadd.f32 %v1636, %v4079
      %v4081 = vpop.f32.mrf.mxu0
      %4082 = vdwg.mxu0
      %v4083 = vmax.f32 %v4080, 0.0
      %4084 = vrot.lane.b32.xlu0 %v4083, 2
      %v4085 = vpop.permute.xlu0 %4084
      %4086 = vrot.lane.b32.xlu0 %v3929, 2
      %v4087 = vpop.permute.xlu0 %4086
      %v4088 = vsel %vm1454, %v4085, 0.0
      %v4089 = vsel %vm1454, %v4087, 0.0
      %4090 = vrot.lane.b32.xlu0 %v4083, 126
      %v4091 = vpop.permute.xlu0 %4090
      %4092 = vrot.lane.b32.xlu0 %v3929, 126
      %v4093 = vpop.permute.xlu0 %4092
      %v4094 = vsel %vm1458, %v4091, 0.0
      %v4095 = vsel %vm1458, %v4093, 0.0
      %4096 = vmatprep.subr.mxu0 0.0
      %4097 = vmatpush1.msra.mxu0 0.0
      %4098 = vmatprep.subr.mxu0 0.0
      %4099 = vmatpush1.msra.mxu0 0.0
      %4100 = vmatprep.subr.mxu0 0.0
      %4101 = vmatpush1.msra.mxu0 0.0
      %4102 = vmatprep.subr.mxu0 0.0
      %4103 = vmatpush1.msra.mxu0 0.0
      %4104 = vmatprep.subr.mxu0 0.0
      %4105 = vmatpush1.msra.mxu0 0.0
      %4106 = vmatprep.subr.mxu0 0.0
      %4107 = vmatpush1.msra.mxu0 0.0
      %4108 = vmatprep.subr.mxu0 0.0
      %4109 = vmatpush1.msra.mxu0 0.0
      %4110 = vmatprep.subr.mxu0 0.0
      %4111 = vmatpush1.msra.mxu0 0.0
      %4112 = vmatprep.subr.mxu0 0.0
      %4113 = vmatpush1.msra.mxu0 0.0
      %4114 = vmatprep.subr.mxu0 0.0
      %4115 = vmatpush1.msra.mxu0 0.0
      %4116 = vmatprep.subr.mxu0 0.0
      %4117 = vmatpush1.msra.mxu0 %v4095
      %4118 = vmatprep.subr.mxu0 0.0
      %4119 = vmatpush1.msra.mxu0 %v4094
      %4120 = vmatprep.subr.mxu0 0.0
      %4121 = vmatpush1.msra.mxu0 %v3929
      %4122 = vmatprep.subr.mxu0 0.0
      %4123 = vmatpush1.msra.mxu0 %v4083
      %4124 = vmatprep.subr.mxu0 0.0
      %4125 = vmatpush1.msra.mxu0 %v4089
      %4126 = vmatprep.subr.mxu0 0.0
      %4127 = vmatpush1.msra.mxu0 %v4088
      %4128 = vmatprep.subr.mxu0 0.0
      %4129 = vmatpush2.msra.mxu0 0.0
      %4130 = vmatprep.subr.mxu0 0.0
      %4131 = vmatpush2.msra.mxu0 0.0
      %4132 = vmatprep.subr.mxu0 0.0
      %4133 = vmatpush2.msra.mxu0 0.0
      %4134 = vmatprep.subr.mxu0 0.0
      %4135 = vmatpush2.msra.mxu0 0.0
      %4136 = vmatprep.subr.mxu0 0.0
      %4137 = vmatpush2.msra.mxu0 0.0
      %4138 = vmatprep.subr.mxu0 0.0
      %4139 = vmatpush2.msra.mxu0 0.0
      %4140 = vmatprep.subr.mxu0 0.0
      %4141 = vmatpush2.msra.mxu0 0.0
      %4142 = vmatprep.subr.mxu0 0.0
      %4143 = vmatpush2.msra.mxu0 0.0
      %4144 = vmatprep.subr.mxu0 0.0
      %4145 = vmatpush2.msra.mxu0 0.0
      %4146 = vmatprep.subr.mxu0 0.0
      %4147 = vmatpush2.msra.mxu0 0.0
      %4148 = vmatprep.subr.mxu0 0.0
      %4149 = vmatpush2.msra.mxu0 0.0
      %4150 = vmatprep.subr.mxu0 0.0
      %4151 = vmatpush2.msra.mxu0 0.0
      %4152 = vmatprep.subr.mxu0 0.0
      %4153 = vmatpush2.msra.mxu0 0.0
      %4154 = vmatprep.subr.mxu0 0.0
      %4155 = vmatpush2.msra.mxu0 0.0
      %4156 = vmatprep.subr.mxu0 0.0
      %4157 = vmatpush2.msra.mxu0 0.0
      %4158 = vmatprep.subr.mxu0 0.0
      %4159 = vmatpush2.msra.mxu0 0.0
      %4160 = vmatprep.mubr.f32.mxu0 0.0
      %4161 = vmatmul.mubr.f32.gmra.mxu0 %v1731
      %v4162 = vpop.f32.mrf.mxu0
      %v4163 = vadd.f32 %v1727, %v4162
      %v4164 = vpop.f32.mrf.mxu0
      %4165 = vdwg.mxu0
      %v4166 = vmax.f32 %v4163, 0.0
      %4167 = vrot.lane.b32.xlu0 %v4166, 1
      %v4168 = vpop.permute.xlu0 %4167
      %4169 = vrot.lane.b32.xlu0 %v3852, 1
      %v4170 = vpop.permute.xlu0 %4169
      %v4171 = vsel %vm1358, %v4168, 0.0
      %v4172 = vsel %vm1358, %v4170, 0.0
      %4173 = vrot.lane.b32.xlu0 %v4166, 127
      %v4174 = vpop.permute.xlu0 %4173
      %4175 = vrot.lane.b32.xlu0 %v3852, 127
      %v4176 = vpop.permute.xlu0 %4175
      %v4177 = vsel %vm1362, %v4174, 0.0
      %v4178 = vsel %vm1362, %v4176, 0.0
      %4179 = vmatprep.subr.mxu0 0.0
      %4180 = vmatpush1.msra.mxu0 0.0
      %4181 = vmatprep.subr.mxu0 0.0
      %4182 = vmatpush1.msra.mxu0 0.0
      %4183 = vmatprep.subr.mxu0 0.0
      %4184 = vmatpush1.msra.mxu0 0.0
      %4185 = vmatprep.subr.mxu0 0.0
      %4186 = vmatpush1.msra.mxu0 0.0
      %4187 = vmatprep.subr.mxu0 0.0
      %4188 = vmatpush1.msra.mxu0 0.0
      %4189 = vmatprep.subr.mxu0 0.0
      %4190 = vmatpush1.msra.mxu0 0.0
      %4191 = vmatprep.subr.mxu0 0.0
      %4192 = vmatpush1.msra.mxu0 0.0
      %4193 = vmatprep.subr.mxu0 0.0
      %4194 = vmatpush1.msra.mxu0 0.0
      %4195 = vmatprep.subr.mxu0 0.0
      %4196 = vmatpush1.msra.mxu0 0.0
      %4197 = vmatprep.subr.mxu0 0.0
      %4198 = vmatpush1.msra.mxu0 0.0
      %4199 = vmatprep.subr.mxu0 0.0
      %4200 = vmatpush1.msra.mxu0 %v4178
      %4201 = vmatprep.subr.mxu0 0.0
      %4202 = vmatpush1.msra.mxu0 %v4177
      %4203 = vmatprep.subr.mxu0 0.0
      %4204 = vmatpush1.msra.mxu0 %v3852
      %4205 = vmatprep.subr.mxu0 0.0
      %4206 = vmatpush1.msra.mxu0 %v4166
      %4207 = vmatprep.subr.mxu0 0.0
      %4208 = vmatpush1.msra.mxu0 %v4172
      %4209 = vmatprep.subr.mxu0 0.0
      %4210 = vmatpush1.msra.mxu0 %v4171
      %4211 = vmatprep.subr.mxu0 0.0
      %4212 = vmatpush2.msra.mxu0 0.0
      %4213 = vmatprep.subr.mxu0 0.0
      %4214 = vmatpush2.msra.mxu0 0.0
      %4215 = vmatprep.subr.mxu0 0.0
      %4216 = vmatpush2.msra.mxu0 0.0
      %4217 = vmatprep.subr.mxu0 0.0
      %4218 = vmatpush2.msra.mxu0 0.0
      %4219 = vmatprep.subr.mxu0 0.0
      %4220 = vmatpush2.msra.mxu0 0.0
      %4221 = vmatprep.subr.mxu0 0.0
      %4222 = vmatpush2.msra.mxu0 0.0
      %4223 = vmatprep.subr.mxu0 0.0
      %4224 = vmatpush2.msra.mxu0 0.0
      %4225 = vmatprep.subr.mxu0 0.0
      %4226 = vmatpush2.msra.mxu0 0.0
      %4227 = vmatprep.subr.mxu0 0.0
      %4228 = vmatpush2.msra.mxu0 0.0
      %4229 = vmatprep.subr.mxu0 0.0
      %4230 = vmatpush2.msra.mxu0 0.0
      %4231 = vmatprep.subr.mxu0 0.0
      %4232 = vmatpush2.msra.mxu0 0.0
      %4233 = vmatprep.subr.mxu0 0.0
      %4234 = vmatpush2.msra.mxu0 0.0
      %4235 = vmatprep.subr.mxu0 0.0
      %4236 = vmatpush2.msra.mxu0 0.0
      %4237 = vmatprep.subr.mxu0 0.0
      %4238 = vmatpush2.msra.mxu0 0.0
      %4239 = vmatprep.subr.mxu0 0.0
      %4240 = vmatpush2.msra.mxu0 0.0
      %4241 = vmatprep.subr.mxu0 0.0
      %4242 = vmatpush2.msra.mxu0 0.0
      %4243 = vmatprep.mubr.f32.mxu0 0.0
      %4244 = vmatmul.mubr.f32.gmra.mxu0 %v1822
      %v4245 = vpop.f32.mrf.mxu0
      %v4246 = vadd.f32 %v1819, %v4245
      %v4247 = vpop.f32.mrf.mxu0
      %4248 = vdwg.mxu0
      %v4249 = vmax.f32 %v4246, 0.0
      %4250 = vrot.lane.b32.xlu0 %v3768, 1
      %v4251 = vpop.permute.xlu0 %4250
      %v4252 = vsel %vm1358, %v4251, 0.0
      %4253 = vrot.lane.b32.xlu0 %v3768, 127
      %v4254 = vpop.permute.xlu0 %4253
      %v4255 = vsel %vm1362, %v4254, 0.0
      %v4257 = vrot.slane %v3768, 4
      %v4259 = vsel %vm1367, %v4252, %v4257
      %v4261 = vsel %vm1367, %v4255, 0
      %4263 = vmatprep.subr.mxu0 0.0
      %4264 = vmatpush1.msra.mxu0 0.0
      %4265 = vmatprep.subr.mxu0 0.0
      %4266 = vmatpush1.msra.mxu0 0.0
      %4267 = vmatprep.subr.mxu0 0.0
      %4268 = vmatpush1.msra.mxu0 0.0
      %4269 = vmatprep.subr.mxu0 0.0
      %4270 = vmatpush1.msra.mxu0 0.0
      %4271 = vmatprep.subr.mxu0 0.0
      %4272 = vmatpush1.msra.mxu0 0.0
      %4273 = vmatprep.subr.mxu0 0.0
      %4274 = vmatpush1.msra.mxu0 0.0
      %4275 = vmatprep.subr.mxu0 0.0
      %4276 = vmatpush1.msra.mxu0 0.0
      %4277 = vmatprep.subr.mxu0 0.0
      %4278 = vmatpush1.msra.mxu0 0.0
      %4279 = vmatprep.subr.mxu0 0.0
      %4280 = vmatpush1.msra.mxu0 0.0
      %4281 = vmatprep.subr.mxu0 0.0
      %4282 = vmatpush1.msra.mxu0 0.0
      %4283 = vmatprep.subr.mxu0 0.0
      %4284 = vmatpush1.msra.mxu0 0.0
      %4285 = vmatprep.subr.mxu0 0.0
      %4286 = vmatpush1.msra.mxu0 0.0
      %4287 = vmatprep.subr.mxu0 0.0
      %4288 = vmatpush1.msra.mxu0 0.0
      %4289 = vmatprep.subr.mxu0 0.0
      %4290 = vmatpush1.msra.mxu0 0.0
      %4291 = vmatprep.subr.mxu0 0.0
      %4292 = vmatpush1.msra.mxu0 %v4261
      %4293 = vmatprep.subr.mxu0 0.0
      %4294 = vmatpush1.msra.mxu0 %v4259
      %4295 = vmatprep.subr.mxu0 0.0
      %4296 = vmatpush2.msra.mxu0 0.0
      %4297 = vmatprep.subr.mxu0 0.0
      %4298 = vmatpush2.msra.mxu0 0.0
      %4299 = vmatprep.subr.mxu0 0.0
      %4300 = vmatpush2.msra.mxu0 0.0
      %4301 = vmatprep.subr.mxu0 0.0
      %4302 = vmatpush2.msra.mxu0 0.0
      %4303 = vmatprep.subr.mxu0 0.0
      %4304 = vmatpush2.msra.mxu0 0.0
      %4305 = vmatprep.subr.mxu0 0.0
      %4306 = vmatpush2.msra.mxu0 0.0
      %4307 = vmatprep.subr.mxu0 0.0
      %4308 = vmatpush2.msra.mxu0 0.0
      %4309 = vmatprep.subr.mxu0 0.0
      %4310 = vmatpush2.msra.mxu0 0.0
      %4311 = vmatprep.subr.mxu0 0.0
      %4312 = vmatpush2.msra.mxu0 0.0
      %4313 = vmatprep.subr.mxu0 0.0
      %4314 = vmatpush2.msra.mxu0 0.0
      %4315 = vmatprep.subr.mxu0 0.0
      %4316 = vmatpush2.msra.mxu0 0.0
      %4317 = vmatprep.subr.mxu0 0.0
      %4318 = vmatpush2.msra.mxu0 0.0
      %4319 = vmatprep.subr.mxu0 0.0
      %4320 = vmatpush2.msra.mxu0 0.0
      %4321 = vmatprep.subr.mxu0 0.0
      %4322 = vmatpush2.msra.mxu0 0.0
      %4323 = vmatprep.subr.mxu0 0.0
      %4324 = vmatpush2.msra.mxu0 0.0
      %4325 = vmatprep.subr.mxu0 0.0
      %4326 = vmatpush2.msra.mxu0 0.0
      %4327 = vmatprep.mubr.f32.mxu0 0.0
      %4328 = vmatmul.mubr.f32.gmra.mxu0 %v1911
      %v4329 = vpop.f32.mrf.mxu0
      %v4330 = vadd.f32 %v1908, %v4329
      %v4331 = vpop.f32.mrf.mxu0
      %4332 = vdwg.mxu0
      %v4333 = vmax.f32 %v4330, 0.0
      %4334 = vrot.lane.b32.xlu0 %v4333, 2
      %v4335 = vpop.permute.xlu0 %4334
      %v4336 = vsel %vm1454, %v4335, 0.0
      %4337 = vrot.lane.b32.xlu0 %v4333, 126
      %v4338 = vpop.permute.xlu0 %4337
      %v4339 = vsel %vm1458, %v4338, 0.0
      %4340 = vmatprep.subr.mxu0 0.0
      %4341 = vmatpush1.msra.mxu0 0.0
      %4342 = vmatprep.subr.mxu0 0.0
      %4343 = vmatpush1.msra.mxu0 0.0
      %4344 = vmatprep.subr.mxu0 0.0
      %4345 = vmatpush1.msra.mxu0 0.0
      %4346 = vmatprep.subr.mxu0 0.0
      %4347 = vmatpush1.msra.mxu0 0.0
      %4348 = vmatprep.subr.mxu0 0.0
      %4349 = vmatpush1.msra.mxu0 0.0
      %4350 = vmatprep.subr.mxu0 0.0
      %4351 = vmatpush1.msra.mxu0 0.0
      %4352 = vmatprep.subr.mxu0 0.0
      %4353 = vmatpush1.msra.mxu0 0.0
      %4354 = vmatprep.subr.mxu0 0.0
      %4355 = vmatpush1.msra.mxu0 0.0
      %4356 = vmatprep.subr.mxu0 0.0
      %4357 = vmatpush1.msra.mxu0 0.0
      %4358 = vmatprep.subr.mxu0 0.0
      %4359 = vmatpush1.msra.mxu0 0.0
      %4360 = vmatprep.subr.mxu0 0.0
      %4361 = vmatpush1.msra.mxu0 0.0
      %4362 = vmatprep.subr.mxu0 0.0
      %4363 = vmatpush1.msra.mxu0 0.0
      %4364 = vmatprep.subr.mxu0 0.0
      %4365 = vmatpush1.msra.mxu0 0.0
      %4366 = vmatprep.subr.mxu0 0.0
      %4367 = vmatpush1.msra.mxu0 %v4339
      %4368 = vmatprep.subr.mxu0 0.0
      %4369 = vmatpush1.msra.mxu0 %v4333
      %4370 = vmatprep.subr.mxu0 0.0
      %4371 = vmatpush1.msra.mxu0 %v4336
      %4372 = vmatprep.subr.mxu0 0.0
      %4373 = vmatpush2.msra.mxu0 0.0
      %4374 = vmatprep.subr.mxu0 0.0
      %4375 = vmatpush2.msra.mxu0 0.0
      %4376 = vmatprep.subr.mxu0 0.0
      %4377 = vmatpush2.msra.mxu0 0.0
      %4378 = vmatprep.subr.mxu0 0.0
      %4379 = vmatpush2.msra.mxu0 0.0
      %4380 = vmatprep.subr.mxu0 0.0
      %4381 = vmatpush2.msra.mxu0 0.0
      %4382 = vmatprep.subr.mxu0 0.0
      %4383 = vmatpush2.msra.mxu0 0.0
      %4384 = vmatprep.subr.mxu0 0.0
      %4385 = vmatpush2.msra.mxu0 0.0
      %4386 = vmatprep.subr.mxu0 0.0
      %4387 = vmatpush2.msra.mxu0 0.0
      %4388 = vmatprep.subr.mxu0 0.0
      %4389 = vmatpush2.msra.mxu0 0.0
      %4390 = vmatprep.subr.mxu0 0.0
      %4391 = vmatpush2.msra.mxu0 0.0
      %4392 = vmatprep.subr.mxu0 0.0
      %4393 = vmatpush2.msra.mxu0 0.0
      %4394 = vmatprep.subr.mxu0 0.0
      %4395 = vmatpush2.msra.mxu0 0.0
      %4396 = vmatprep.subr.mxu0 0.0
      %4397 = vmatpush2.msra.mxu0 0.0
      %4398 = vmatprep.subr.mxu0 0.0
      %4399 = vmatpush2.msra.mxu0 0.0
      %4400 = vmatprep.subr.mxu0 0.0
      %4401 = vmatpush2.msra.mxu0 0.0
      %4402 = vmatprep.subr.mxu0 0.0
      %4403 = vmatpush2.msra.mxu0 0.0
      %4404 = vmatprep.mubr.f32.mxu0 0.0
      %4405 = vmatmul.mubr.f32.gmra.mxu0 %v1999
      %v4406 = vpop.f32.mrf.mxu0
      %v4407 = vadd.f32 %v1996, %v4406
      %v4408 = vpop.f32.mrf.mxu0
      %4409 = vdwg.mxu0
      %v4410 = vmax.f32 %v4407, 0.0
      %4411 = vrot.lane.b32.xlu0 %v4410, 4
      %v4412 = vpop.permute.xlu0 %4411
      %v4413 = vsel %vm1542, %v4412, 0.0
      %4414 = vrot.lane.b32.xlu0 %v4410, 124
      %v4415 = vpop.permute.xlu0 %4414
      %v4416 = vsel %vm1546, %v4415, 0.0
      %4417 = vmatprep.subr.mxu0 0.0
      %4418 = vmatpush1.msra.mxu0 0.0
      %4419 = vmatprep.subr.mxu0 0.0
      %4420 = vmatpush1.msra.mxu0 0.0
      %4421 = vmatprep.subr.mxu0 0.0
      %4422 = vmatpush1.msra.mxu0 0.0
      %4423 = vmatprep.subr.mxu0 0.0
      %4424 = vmatpush1.msra.mxu0 0.0
      %4425 = vmatprep.subr.mxu0 0.0
      %4426 = vmatpush1.msra.mxu0 0.0
      %4427 = vmatprep.subr.mxu0 0.0
      %4428 = vmatpush1.msra.mxu0 0.0
      %4429 = vmatprep.subr.mxu0 0.0
      %4430 = vmatpush1.msra.mxu0 0.0
      %4431 = vmatprep.subr.mxu0 0.0
      %4432 = vmatpush1.msra.mxu0 0.0
      %4433 = vmatprep.subr.mxu0 0.0
      %4434 = vmatpush1.msra.mxu0 0.0
      %4435 = vmatprep.subr.mxu0 0.0
      %4436 = vmatpush1.msra.mxu0 0.0
      %4437 = vmatprep.subr.mxu0 0.0
      %4438 = vmatpush1.msra.mxu0 0.0
      %4439 = vmatprep.subr.mxu0 0.0
      %4440 = vmatpush1.msra.mxu0 0.0
      %4441 = vmatprep.subr.mxu0 0.0
      %4442 = vmatpush1.msra.mxu0 0.0
      %4443 = vmatprep.subr.mxu0 0.0
      %4444 = vmatpush1.msra.mxu0 %v4416
      %4445 = vmatprep.subr.mxu0 0.0
      %4446 = vmatpush1.msra.mxu0 %v4410
      %4447 = vmatprep.subr.mxu0 0.0
      %4448 = vmatpush1.msra.mxu0 %v4413
      %4449 = vmatprep.subr.mxu0 0.0
      %4450 = vmatpush2.msra.mxu0 0.0
      %4451 = vmatprep.subr.mxu0 0.0
      %4452 = vmatpush2.msra.mxu0 0.0
      %4453 = vmatprep.subr.mxu0 0.0
      %4454 = vmatpush2.msra.mxu0 0.0
      %4455 = vmatprep.subr.mxu0 0.0
      %4456 = vmatpush2.msra.mxu0 0.0
      %4457 = vmatprep.subr.mxu0 0.0
      %4458 = vmatpush2.msra.mxu0 0.0
      %4459 = vmatprep.subr.mxu0 0.0
      %4460 = vmatpush2.msra.mxu0 0.0
      %4461 = vmatprep.subr.mxu0 0.0
      %4462 = vmatpush2.msra.mxu0 0.0
      %4463 = vmatprep.subr.mxu0 0.0
      %4464 = vmatpush2.msra.mxu0 0.0
      %4465 = vmatprep.subr.mxu0 0.0
      %4466 = vmatpush2.msra.mxu0 0.0
      %4467 = vmatprep.subr.mxu0 0.0
      %4468 = vmatpush2.msra.mxu0 0.0
      %4469 = vmatprep.subr.mxu0 0.0
      %4470 = vmatpush2.msra.mxu0 0.0
      %4471 = vmatprep.subr.mxu0 0.0
      %4472 = vmatpush2.msra.mxu0 0.0
      %4473 = vmatprep.subr.mxu0 0.0
      %4474 = vmatpush2.msra.mxu0 0.0
      %4475 = vmatprep.subr.mxu0 0.0
      %4476 = vmatpush2.msra.mxu0 0.0
      %4477 = vmatprep.subr.mxu0 0.0
      %4478 = vmatpush2.msra.mxu0 0.0
      %4479 = vmatprep.subr.mxu0 0.0
      %4480 = vmatpush2.msra.mxu0 0.0
      %4481 = vmatprep.mubr.f32.mxu0 0.0
      %4482 = vmatmul.mubr.f32.gmra.mxu0 %v2084
      %v4483 = vpop.f32.mrf.mxu0
      %v4484 = vadd.f32 %v2081, %v4483
      %v4485 = vpop.f32.mrf.mxu0
      %4486 = vdwg.mxu0
      %v4487 = vmax.f32 %v4484, 0.0
      %4488 = vrot.lane.b32.xlu0 %v4487, 4
      %v4489 = vpop.permute.xlu0 %4488
      %v4490 = vsel %vm1542, %v4489, 0.0
      %4491 = vrot.lane.b32.xlu0 %v4487, 124
      %v4492 = vpop.permute.xlu0 %4491
      %v4493 = vsel %vm1546, %v4492, 0.0
      %4494 = vmatprep.subr.mxu0 0.0
      %4495 = vmatpush1.msra.mxu0 0.0
      %4496 = vmatprep.subr.mxu0 0.0
      %4497 = vmatpush1.msra.mxu0 0.0
      %4498 = vmatprep.subr.mxu0 0.0
      %4499 = vmatpush1.msra.mxu0 0.0
      %4500 = vmatprep.subr.mxu0 0.0
      %4501 = vmatpush1.msra.mxu0 0.0
      %4502 = vmatprep.subr.mxu0 0.0
      %4503 = vmatpush1.msra.mxu0 0.0
      %4504 = vmatprep.subr.mxu0 0.0
      %4505 = vmatpush1.msra.mxu0 0.0
      %4506 = vmatprep.subr.mxu0 0.0
      %4507 = vmatpush1.msra.mxu0 0.0
      %4508 = vmatprep.subr.mxu0 0.0
      %4509 = vmatpush1.msra.mxu0 0.0
      %4510 = vmatprep.subr.mxu0 0.0
      %4511 = vmatpush1.msra.mxu0 0.0
      %4512 = vmatprep.subr.mxu0 0.0
      %4513 = vmatpush1.msra.mxu0 0.0
      %4514 = vmatprep.subr.mxu0 0.0
      %4515 = vmatpush1.msra.mxu0 0.0
      %4516 = vmatprep.subr.mxu0 0.0
      %4517 = vmatpush1.msra.mxu0 0.0
      %4518 = vmatprep.subr.mxu0 0.0
      %4519 = vmatpush1.msra.mxu0 0.0
      %4520 = vmatprep.subr.mxu0 0.0
      %4521 = vmatpush1.msra.mxu0 %v4493
      %4522 = vmatprep.subr.mxu0 0.0
      %4523 = vmatpush1.msra.mxu0 %v4487
      %4524 = vmatprep.subr.mxu0 0.0
      %4525 = vmatpush1.msra.mxu0 %v4490
      %4526 = vmatprep.subr.mxu0 0.0
      %4527 = vmatpush2.msra.mxu0 0.0
      %4528 = vmatprep.subr.mxu0 0.0
      %4529 = vmatpush2.msra.mxu0 0.0
      %4530 = vmatprep.subr.mxu0 0.0
      %4531 = vmatpush2.msra.mxu0 0.0
      %4532 = vmatprep.subr.mxu0 0.0
      %4533 = vmatpush2.msra.mxu0 0.0
      %4534 = vmatprep.subr.mxu0 0.0
      %4535 = vmatpush2.msra.mxu0 0.0
      %4536 = vmatprep.subr.mxu0 0.0
      %4537 = vmatpush2.msra.mxu0 0.0
      %4538 = vmatprep.subr.mxu0 0.0
      %4539 = vmatpush2.msra.mxu0 0.0
      %4540 = vmatprep.subr.mxu0 0.0
      %4541 = vmatpush2.msra.mxu0 0.0
      %4542 = vmatprep.subr.mxu0 0.0
      %4543 = vmatpush2.msra.mxu0 0.0
      %4544 = vmatprep.subr.mxu0 0.0
      %4545 = vmatpush2.msra.mxu0 0.0
      %4546 = vmatprep.subr.mxu0 0.0
      %4547 = vmatpush2.msra.mxu0 0.0
      %4548 = vmatprep.subr.mxu0 0.0
      %4549 = vmatpush2.msra.mxu0 0.0
      %4550 = vmatprep.subr.mxu0 0.0
      %4551 = vmatpush2.msra.mxu0 0.0
      %4552 = vmatprep.subr.mxu0 0.0
      %4553 = vmatpush2.msra.mxu0 0.0
      %4554 = vmatprep.subr.mxu0 0.0
      %4555 = vmatpush2.msra.mxu0 0.0
      %4556 = vmatprep.subr.mxu0 0.0
      %4557 = vmatpush2.msra.mxu0 0.0
      %4558 = vmatprep.mubr.f32.mxu0 0.0
      %4559 = vmatmul.mubr.f32.gmra.mxu0 %v2169
      %v4560 = vpop.f32.mrf.mxu0
      %v4561 = vadd.f32 %v2166, %v4560
      %v4562 = vpop.f32.mrf.mxu0
      %4563 = vdwg.mxu0
      %v4564 = vmax.f32 %v4561, 0.0
      %4565 = vrot.lane.b32.xlu0 %v4564, 2
      %v4566 = vpop.permute.xlu0 %4565
      %4567 = vrot.lane.b32.xlu0 %v4410, 2
      %v4568 = vpop.permute.xlu0 %4567
      %v4569 = vsel %vm1454, %v4566, 0.0
      %v4570 = vsel %vm1454, %v4568, 0.0
      %4571 = vrot.lane.b32.xlu0 %v4564, 126
      %v4572 = vpop.permute.xlu0 %4571
      %4573 = vrot.lane.b32.xlu0 %v4410, 126
      %v4574 = vpop.permute.xlu0 %4573
      %v4575 = vsel %vm1458, %v4572, 0.0
      %v4576 = vsel %vm1458, %v4574, 0.0
      %4577 = vmatprep.subr.mxu0 0.0
      %4578 = vmatpush1.msra.mxu0 0.0
      %4579 = vmatprep.subr.mxu0 0.0
      %4580 = vmatpush1.msra.mxu0 0.0
      %4581 = vmatprep.subr.mxu0 0.0
      %4582 = vmatpush1.msra.mxu0 0.0
      %4583 = vmatprep.subr.mxu0 0.0
      %4584 = vmatpush1.msra.mxu0 0.0
      %4585 = vmatprep.subr.mxu0 0.0
      %4586 = vmatpush1.msra.mxu0 0.0
      %4587 = vmatprep.subr.mxu0 0.0
      %4588 = vmatpush1.msra.mxu0 0.0
      %4589 = vmatprep.subr.mxu0 0.0
      %4590 = vmatpush1.msra.mxu0 0.0
      %4591 = vmatprep.subr.mxu0 0.0
      %4592 = vmatpush1.msra.mxu0 0.0
      %4593 = vmatprep.subr.mxu0 0.0
      %4594 = vmatpush1.msra.mxu0 0.0
      %4595 = vmatprep.subr.mxu0 0.0
      %4596 = vmatpush1.msra.mxu0 0.0
      %4597 = vmatprep.subr.mxu0 0.0
      %4598 = vmatpush1.msra.mxu0 %v4576
      %4599 = vmatprep.subr.mxu0 0.0
      %4600 = vmatpush1.msra.mxu0 %v4575
      %4601 = vmatprep.subr.mxu0 0.0
      %4602 = vmatpush1.msra.mxu0 %v4410
      %4603 = vmatprep.subr.mxu0 0.0
      %4604 = vmatpush1.msra.mxu0 %v4564
      %4605 = vmatprep.subr.mxu0 0.0
      %4606 = vmatpush1.msra.mxu0 %v4570
      %4607 = vmatprep.subr.mxu0 0.0
      %4608 = vmatpush1.msra.mxu0 %v4569
      %4609 = vmatprep.subr.mxu0 0.0
      %4610 = vmatpush2.msra.mxu0 0.0
      %4611 = vmatprep.subr.mxu0 0.0
      %4612 = vmatpush2.msra.mxu0 0.0
      %4613 = vmatprep.subr.mxu0 0.0
      %4614 = vmatpush2.msra.mxu0 0.0
      %4615 = vmatprep.subr.mxu0 0.0
      %4616 = vmatpush2.msra.mxu0 0.0
      %4617 = vmatprep.subr.mxu0 0.0
      %4618 = vmatpush2.msra.mxu0 0.0
      %4619 = vmatprep.subr.mxu0 0.0
      %4620 = vmatpush2.msra.mxu0 0.0
      %4621 = vmatprep.subr.mxu0 0.0
      %4622 = vmatpush2.msra.mxu0 0.0
      %4623 = vmatprep.subr.mxu0 0.0
      %4624 = vmatpush2.msra.mxu0 0.0
      %4625 = vmatprep.subr.mxu0 0.0
      %4626 = vmatpush2.msra.mxu0 0.0
      %4627 = vmatprep.subr.mxu0 0.0
      %4628 = vmatpush2.msra.mxu0 0.0
      %4629 = vmatprep.subr.mxu0 0.0
      %4630 = vmatpush2.msra.mxu0 0.0
      %4631 = vmatprep.subr.mxu0 0.0
      %4632 = vmatpush2.msra.mxu0 0.0
      %4633 = vmatprep.subr.mxu0 0.0
      %4634 = vmatpush2.msra.mxu0 0.0
      %4635 = vmatprep.subr.mxu0 0.0
      %4636 = vmatpush2.msra.mxu0 0.0
      %4637 = vmatprep.subr.mxu0 0.0
      %4638 = vmatpush2.msra.mxu0 0.0
      %4639 = vmatprep.subr.mxu0 0.0
      %4640 = vmatpush2.msra.mxu0 0.0
      %4641 = vmatprep.mubr.f32.mxu0 0.0
      %4642 = vmatmul.mubr.f32.gmra.mxu0 %v2260
      %v4643 = vpop.f32.mrf.mxu0
      %v4644 = vadd.f32 %v2257, %v4643
      %v4645 = vpop.f32.mrf.mxu0
      %4646 = vdwg.mxu0
      %v4647 = vmax.f32 %v4644, 0.0
      %4648 = vrot.lane.b32.xlu0 %v4647, 1
      %v4649 = vpop.permute.xlu0 %4648
      %4650 = vrot.lane.b32.xlu0 %v4333, 1
      %v4651 = vpop.permute.xlu0 %4650
      %v4652 = vsel %vm1358, %v4649, 0.0
      %v4653 = vsel %vm1358, %v4651, 0.0
      %4654 = vrot.lane.b32.xlu0 %v4647, 127
      %v4655 = vpop.permute.xlu0 %4654
      %4656 = vrot.lane.b32.xlu0 %v4333, 127
      %v4657 = vpop.permute.xlu0 %4656
      %v4658 = vsel %vm1362, %v4655, 0.0
      %v4659 = vsel %vm1362, %v4657, 0.0
      %4660 = vmatprep.subr.mxu0 0.0
      %4661 = vmatpush1.msra.mxu0 0.0
      %4662 = vmatprep.subr.mxu0 0.0
      %4663 = vmatpush1.msra.mxu0 0.0
      %4664 = vmatprep.subr.mxu0 0.0
      %4665 = vmatpush1.msra.mxu0 0.0
      %4666 = vmatprep.subr.mxu0 0.0
      %4667 = vmatpush1.msra.mxu0 0.0
      %4668 = vmatprep.subr.mxu0 0.0
      %4669 = vmatpush1.msra.mxu0 0.0
      %4670 = vmatprep.subr.mxu0 0.0
      %4671 = vmatpush1.msra.mxu0 0.0
      %4672 = vmatprep.subr.mxu0 0.0
      %4673 = vmatpush1.msra.mxu0 0.0
      %4674 = vmatprep.subr.mxu0 0.0
      %4675 = vmatpush1.msra.mxu0 0.0
      %4676 = vmatprep.subr.mxu0 0.0
      %4677 = vmatpush1.msra.mxu0 0.0
      %4678 = vmatprep.subr.mxu0 0.0
      %4679 = vmatpush1.msra.mxu0 0.0
      %4680 = vmatprep.subr.mxu0 0.0
      %4681 = vmatpush1.msra.mxu0 %v4659
      %4682 = vmatprep.subr.mxu0 0.0
      %4683 = vmatpush1.msra.mxu0 %v4658
      %4684 = vmatprep.subr.mxu0 0.0
      %4685 = vmatpush1.msra.mxu0 %v4333
      %4686 = vmatprep.subr.mxu0 0.0
      %4687 = vmatpush1.msra.mxu0 %v4647
      %4688 = vmatprep.subr.mxu0 0.0
      %4689 = vmatpush1.msra.mxu0 %v4653
      %4690 = vmatprep.subr.mxu0 0.0
      %4691 = vmatpush1.msra.mxu0 %v4652
      %4692 = vmatprep.subr.mxu0 0.0
      %4693 = vmatpush2.msra.mxu0 0.0
      %4694 = vmatprep.subr.mxu0 0.0
      %4695 = vmatpush2.msra.mxu0 0.0
      %4696 = vmatprep.subr.mxu0 0.0
      %4697 = vmatpush2.msra.mxu0 0.0
      %4698 = vmatprep.subr.mxu0 0.0
      %4699 = vmatpush2.msra.mxu0 0.0
      %4700 = vmatprep.subr.mxu0 0.0
      %4701 = vmatpush2.msra.mxu0 0.0
      %4702 = vmatprep.subr.mxu0 0.0
      %4703 = vmatpush2.msra.mxu0 0.0
      %4704 = vmatprep.subr.mxu0 0.0
      %4705 = vmatpush2.msra.mxu0 0.0
      %4706 = vmatprep.subr.mxu0 0.0
      %4707 = vmatpush2.msra.mxu0 0.0
      %4708 = vmatprep.subr.mxu0 0.0
      %4709 = vmatpush2.msra.mxu0 0.0
      %4710 = vmatprep.subr.mxu0 0.0
      %4711 = vmatpush2.msra.mxu0 0.0
      %4712 = vmatprep.subr.mxu0 0.0
      %4713 = vmatpush2.msra.mxu0 0.0
      %4714 = vmatprep.subr.mxu0 0.0
      %4715 = vmatpush2.msra.mxu0 0.0
      %4716 = vmatprep.subr.mxu0 0.0
      %4717 = vmatpush2.msra.mxu0 0.0
      %4718 = vmatprep.subr.mxu0 0.0
      %4719 = vmatpush2.msra.mxu0 0.0
      %4720 = vmatprep.subr.mxu0 0.0
      %4721 = vmatpush2.msra.mxu0 0.0
      %4722 = vmatprep.subr.mxu0 0.0
      %4723 = vmatpush2.msra.mxu0 0.0
      %4724 = vmatprep.mubr.f32.mxu0 0.0
      %4725 = vmatmul.mubr.f32.gmra.mxu0 %v2351
      %v4726 = vpop.f32.mrf.mxu0
      %v4727 = vadd.f32 %v2348, %v4726
      %v4728 = vpop.f32.mrf.mxu0
      %4729 = vdwg.mxu0
      %v4730 = vmax.f32 %v4727, 0.0
      %4731 = vmatprep.subr.mxu0 0.0
      %4732 = vmatpush1.msra.mxu0 0.0
      %4733 = vmatprep.subr.mxu0 0.0
      %4734 = vmatpush1.msra.mxu0 0.0
      %4735 = vmatprep.subr.mxu0 0.0
      %4736 = vmatpush1.msra.mxu0 0.0
      %4737 = vmatprep.subr.mxu0 0.0
      %4738 = vmatpush1.msra.mxu0 0.0
      %4739 = vmatprep.subr.mxu0 0.0
      %4740 = vmatpush1.msra.mxu0 0.0
      %4741 = vmatprep.subr.mxu0 0.0
      %4742 = vmatpush1.msra.mxu0 0.0
      %4743 = vmatprep.subr.mxu0 0.0
      %4744 = vmatpush1.msra.mxu0 0.0
      %4745 = vmatprep.subr.mxu0 0.0
      %4746 = vmatpush1.msra.mxu0 0.0
      %4747 = vmatprep.subr.mxu0 0.0
      %4748 = vmatpush1.msra.mxu0 0.0
      %4749 = vmatprep.subr.mxu0 0.0
      %4750 = vmatpush1.msra.mxu0 0.0
      %4751 = vmatprep.subr.mxu0 0.0
      %4752 = vmatpush1.msra.mxu0 0.0
      %4753 = vmatprep.subr.mxu0 0.0
      %4754 = vmatpush1.msra.mxu0 0.0
      %4755 = vmatprep.subr.mxu0 0.0
      %4756 = vmatpush1.msra.mxu0 0.0
      %4757 = vmatprep.subr.mxu0 0.0
      %4758 = vmatpush1.msra.mxu0 0.0
      %4759 = vmatprep.subr.mxu0 0.0
      %4760 = vmatpush1.msra.mxu0 %v4730
      %4761 = vmatprep.subr.mxu0 0.0
      %4762 = vmatpush1.msra.mxu0 %v4249
      %4763 = vmatprep.subr.mxu0 0.0
      %4764 = vmatpush2.msra.mxu0 0.0
      %4765 = vmatprep.subr.mxu0 0.0
      %4766 = vmatpush2.msra.mxu0 0.0
      %4767 = vmatprep.subr.mxu0 0.0
      %4768 = vmatpush2.msra.mxu0 0.0
      %4769 = vmatprep.subr.mxu0 0.0
      %4770 = vmatpush2.msra.mxu0 0.0
      %4771 = vmatprep.subr.mxu0 0.0
      %4772 = vmatpush2.msra.mxu0 0.0
      %4773 = vmatprep.subr.mxu0 0.0
      %4774 = vmatpush2.msra.mxu0 0.0
      %4775 = vmatprep.subr.mxu0 0.0
      %4776 = vmatpush2.msra.mxu0 0.0
      %4777 = vmatprep.subr.mxu0 0.0
      %4778 = vmatpush2.msra.mxu0 0.0
      %4779 = vmatprep.subr.mxu0 0.0
      %4780 = vmatpush2.msra.mxu0 0.0
      %4781 = vmatprep.subr.mxu0 0.0
      %4782 = vmatpush2.msra.mxu0 0.0
      %4783 = vmatprep.subr.mxu0 0.0
      %4784 = vmatpush2.msra.mxu0 0.0
      %4785 = vmatprep.subr.mxu0 0.0
      %4786 = vmatpush2.msra.mxu0 0.0
      %4787 = vmatprep.subr.mxu0 0.0
      %4788 = vmatpush2.msra.mxu0 0.0
      %4789 = vmatprep.subr.mxu0 0.0
      %4790 = vmatpush2.msra.mxu0 0.0
      %4791 = vmatprep.subr.mxu0 0.0
      %4792 = vmatpush2.msra.mxu0 0.0
      %4793 = vmatprep.subr.mxu0 0.0
      %4794 = vmatpush2.msra.mxu0 0.0
      %4795 = vmatprep.mubr.f32.mxu0 0.0
      %4796 = vmatmul.mubr.f32.gmra.mxu0 %v2431
      %v4797 = vpop.f32.mrf.mxu0
      %v4798 = vadd.f32 %v2427, %v4797
      %v4799 = vpop.f32.mrf.mxu0
      %4800 = vdwg.mxu0
      %v4803 = vunpack.c.l.s4 1966171168
      %v4804 = vunpack.c.0.s8 %v4803
      %v4805 = vlaneseq
      %v4806 = vshrl.u32 %v4805, 7
      %v4807 = vsub.s32 %v4804, %v4806
      %v4808 = vrot.slane %v1327, %v4807
      %v4809 = vcombine.high %v4808, %v4808
      %v4811 = vunpack.c.l.s4 1966171168
      %v4812 = vunpack.c.0.s8 %v4811
      %v4813 = vlaneseq
      %v4814 = vshrl.u32 %v4813, 7
      %v4815 = vsub.s32 %v4812, %v4814
      %v4816 = vrot.slane %v4808, %v4815
      %v4818 = vunpack.c.l.s4 1966171168
      %v4819 = vunpack.c.0.s8 %v4818
      %v4820 = vlaneseq
      %v4821 = vshrl.u32 %v4820, 7
      %v4822 = vsub.s32 %v4819, %v4821
      %v4823 = vrot.slane %v4809, %v4822
      %v4828 = vunpack.c.l.s4 1966171168
      %v4829 = vunpack.c.0.s8 %v4828
      %v4830 = vlaneseq
      %v4831 = vshrl.u32 %v4830, 7
      %v4832 = vsub.s32 %v4829, %v4831
      %v4833 = vrot.slane %v2597, %v4832
      %v4834 = vcombine.high %v4833, %v4833
      %v4836 = vunpack.c.l.s4 1966171168
      %v4837 = vunpack.c.0.s8 %v4836
      %v4838 = vlaneseq
      %v4839 = vshrl.u32 %v4838, 7
      %v4840 = vsub.s32 %v4837, %v4839
      %v4841 = vrot.slane %v4833, %v4840
      %v4843 = vunpack.c.l.s4 1966171168
      %v4844 = vunpack.c.0.s8 %v4843
      %v4845 = vlaneseq
      %v4846 = vshrl.u32 %v4845, 7
      %v4847 = vsub.s32 %v4844, %v4846
      %v4848 = vrot.slane %v4834, %v4847
      %v4851 = vunpack.c.l.s4 1966171168
      %v4852 = vunpack.c.0.s8 %v4851
      %v4853 = vlaneseq
      %v4854 = vshrl.u32 %v4853, 7
      %v4855 = vsub.s32 %v4852, %v4854
      %v4856 = vrot.slane %v3747, %v4855
      %v4857 = vcombine.high %v4856, %v4856
      %v4859 = vunpack.c.l.s4 1966171168
      %v4860 = vunpack.c.0.s8 %v4859
      %v4861 = vlaneseq
      %v4862 = vshrl.u32 %v4861, 7
      %v4863 = vsub.s32 %v4860, %v4862
      %v4864 = vrot.slane %v4856, %v4863
      %v4866 = vunpack.c.l.s4 1966171168
      %v4867 = vunpack.c.0.s8 %v4866
      %v4868 = vlaneseq
      %v4869 = vshrl.u32 %v4868, 7
      %v4870 = vsub.s32 %v4867, %v4869
      %v4871 = vrot.slane %v4857, %v4870
      %v4872 = vlaneseq
      %v4873 = vshrl.u32 %v4872, 7
      %v4874 = vsub.s32 0, %v4873
      %v4875 = vrot.slane %v4841, %v4874
      %v4876 = vlaneseq
      %v4877 = vshrl.u32 %v4876, 7
      %v4878 = vsub.s32 0, %v4877
      %v4879 = vrot.slane %v4848, %v4878
      %v4882 = vlaneseq
      %v4883 = vshrl.u32 %v4882, 7
      %v4884 = vsub.s32 0, %v4883
      %v4885 = vrot.slane %v4864, %v4884
      %v4886 = vlaneseq
      %v4887 = vshrl.u32 %v4886, 7
      %v4888 = vsub.s32 0, %v4887
      %v4889 = vrot.slane %v4871, %v4888
      %vm4892 = vcmask 1040384
      %v4893 = vsel %vm4892, %v4816, %v4875
      %v4894 = vsel %vm4892, %v4823, %v4879
      %v4895 = vsel %vm1265, %v4893, %v4885
      %v4896 = vsel %vm1265, %v4894, %v4889
      %v4898 = vunpack.c.l.s4 1966171168
      %v4899 = vunpack.c.0.s8 %v4898
      %v4900 = vlaneseq
      %v4901 = vshrl.u32 %v4900, 7
      %v4902 = vsub.s32 %v4899, %v4901
      %v4903 = vrot.slane %v1336, %v4902
      %v4904 = vcombine.high %v4903, %v4903
      %v4906 = vunpack.c.l.s4 1966171168
      %v4907 = vunpack.c.0.s8 %v4906
      %v4908 = vlaneseq
      %v4909 = vshrl.u32 %v4908, 7
      %v4910 = vsub.s32 %v4907, %v4909
      %v4911 = vrot.slane %v4903, %v4910
      %v4913 = vunpack.c.l.s4 1966171168
      %v4914 = vunpack.c.0.s8 %v4913
      %v4915 = vlaneseq
      %v4916 = vshrl.u32 %v4915, 7
      %v4917 = vsub.s32 %v4914, %v4916
      %v4918 = vrot.slane %v4904, %v4917
      %v4922 = vunpack.c.l.s4 1966171168
      %v4923 = vunpack.c.0.s8 %v4922
      %v4924 = vlaneseq
      %v4925 = vshrl.u32 %v4924, 7
      %v4926 = vsub.s32 %v4923, %v4925
      %v4927 = vrot.slane %v2606, %v4926
      %v4928 = vcombine.high %v4927, %v4927
      %v4930 = vunpack.c.l.s4 1966171168
      %v4931 = vunpack.c.0.s8 %v4930
      %v4932 = vlaneseq
      %v4933 = vshrl.u32 %v4932, 7
      %v4934 = vsub.s32 %v4931, %v4933
      %v4935 = vrot.slane %v4927, %v4934
      %v4937 = vunpack.c.l.s4 1966171168
      %v4938 = vunpack.c.0.s8 %v4937
      %v4939 = vlaneseq
      %v4940 = vshrl.u32 %v4939, 7
      %v4941 = vsub.s32 %v4938, %v4940
      %v4942 = vrot.slane %v4928, %v4941
      %v4944 = vunpack.c.l.s4 1966171168
      %v4945 = vunpack.c.0.s8 %v4944
      %v4946 = vlaneseq
      %v4947 = vshrl.u32 %v4946, 7
      %v4948 = vsub.s32 %v4945, %v4947
      %v4949 = vrot.slane %v3756, %v4948
      %v4950 = vcombine.high %v4949, %v4949
      %v4952 = vunpack.c.l.s4 1966171168
      %v4953 = vunpack.c.0.s8 %v4952
      %v4954 = vlaneseq
      %v4955 = vshrl.u32 %v4954, 7
      %v4956 = vsub.s32 %v4953, %v4955
      %v4957 = vrot.slane %v4949, %v4956
      %v4959 = vunpack.c.l.s4 1966171168
      %v4960 = vunpack.c.0.s8 %v4959
      %v4961 = vlaneseq
      %v4962 = vshrl.u32 %v4961, 7
      %v4963 = vsub.s32 %v4960, %v4962
      %v4964 = vrot.slane %v4950, %v4963
      %v4965 = vlaneseq
      %v4966 = vshrl.u32 %v4965, 7
      %v4967 = vsub.s32 0, %v4966
      %v4968 = vrot.slane %v4935, %v4967
      %v4969 = vlaneseq
      %v4970 = vshrl.u32 %v4969, 7
      %v4971 = vsub.s32 0, %v4970
      %v4972 = vrot.slane %v4942, %v4971
      %v4975 = vlaneseq
      %v4976 = vshrl.u32 %v4975, 7
      %v4977 = vsub.s32 0, %v4976
      %v4978 = vrot.slane %v4957, %v4977
      %v4979 = vlaneseq
      %v4980 = vshrl.u32 %v4979, 7
      %v4981 = vsub.s32 0, %v4980
      %v4982 = vrot.slane %v4964, %v4981
      %v4985 = vsel %vm4892, %v4911, %v4968
      %v4986 = vsel %vm4892, %v4918, %v4972
      %v4987 = vsel %vm1265, %v4985, %v4978
      %v4988 = vsel %vm1265, %v4986, %v4982
      %4989 = vst [vmem:[%s1025] sm:$0x7] %v4895
      %4990 = vst [vmem:[%s1025 + $0x4] sm:$0x7] %v4987
      %4991 = vst [vmem:[%s1025 + $0x8] sm:$0x7] %v4896
      %4992 = vst [vmem:[%s1025 + $0xc] sm:$0x7] %v4988
      %v4995 = vunpack.c.l.s4 1966171168
      %v4996 = vunpack.c.0.s8 %v4995
      %v4997 = vlaneseq
      %v4998 = vshrl.u32 %v4997, 7
      %v4999 = vsub.s32 %v4996, %v4998
      %v5000 = vrot.slane %v2500, %v4999
      %v5001 = vcombine.high %v5000, %v5000
      %v5003 = vunpack.c.l.s4 1966171168
      %v5004 = vunpack.c.0.s8 %v5003
      %v5005 = vlaneseq
      %v5006 = vshrl.u32 %v5005, 7
      %v5007 = vsub.s32 %v5004, %v5006
      %v5008 = vrot.slane %v5000, %v5007
      %v5010 = vunpack.c.l.s4 1966171168
      %v5011 = vunpack.c.0.s8 %v5010
      %v5012 = vlaneseq
      %v5013 = vshrl.u32 %v5012, 7
      %v5014 = vsub.s32 %v5011, %v5013
      %v5015 = vrot.slane %v5001, %v5014
      %v5020 = vunpack.c.l.s4 1966171168
      %v5021 = vunpack.c.0.s8 %v5020
      %v5022 = vlaneseq
      %v5023 = vshrl.u32 %v5022, 7
      %v5024 = vsub.s32 %v5021, %v5023
      %v5025 = vrot.slane %v3648, %v5024
      %v5026 = vcombine.high %v5025, %v5025
      %v5028 = vunpack.c.l.s4 1966171168
      %v5029 = vunpack.c.0.s8 %v5028
      %v5030 = vlaneseq
      %v5031 = vshrl.u32 %v5030, 7
      %v5032 = vsub.s32 %v5029, %v5031
      %v5033 = vrot.slane %v5025, %v5032
      %v5035 = vunpack.c.l.s4 1966171168
      %v5036 = vunpack.c.0.s8 %v5035
      %v5037 = vlaneseq
      %v5038 = vshrl.u32 %v5037, 7
      %v5039 = vsub.s32 %v5036, %v5038
      %v5040 = vrot.slane %v5026, %v5039
      %v5043 = vunpack.c.l.s4 1966171168
      %v5044 = vunpack.c.0.s8 %v5043
      %v5045 = vlaneseq
      %v5046 = vshrl.u32 %v5045, 7
      %v5047 = vsub.s32 %v5044, %v5046
      %v5048 = vrot.slane %v4798, %v5047
      %v5049 = vcombine.high %v5048, %v5048
      %v5051 = vunpack.c.l.s4 1966171168
      %v5052 = vunpack.c.0.s8 %v5051
      %v5053 = vlaneseq
      %v5054 = vshrl.u32 %v5053, 7
      %v5055 = vsub.s32 %v5052, %v5054
      %v5056 = vrot.slane %v5048, %v5055
      %v5058 = vunpack.c.l.s4 1966171168
      %v5059 = vunpack.c.0.s8 %v5058
      %v5060 = vlaneseq
      %v5061 = vshrl.u32 %v5060, 7
      %v5062 = vsub.s32 %v5059, %v5061
      %v5063 = vrot.slane %v5049, %v5062
      %v5064 = vlaneseq
      %v5065 = vshrl.u32 %v5064, 7
      %v5066 = vsub.s32 0, %v5065
      %v5067 = vrot.slane %v5033, %v5066
      %v5068 = vlaneseq
      %v5069 = vshrl.u32 %v5068, 7
      %v5070 = vsub.s32 0, %v5069
      %v5071 = vrot.slane %v5040, %v5070
      %v5074 = vlaneseq
      %v5075 = vshrl.u32 %v5074, 7
      %v5076 = vsub.s32 0, %v5075
      %v5077 = vrot.slane %v5056, %v5076
      %v5078 = vlaneseq
      %v5079 = vshrl.u32 %v5078, 7
      %v5080 = vsub.s32 0, %v5079
      %v5081 = vrot.slane %v5063, %v5080
      %v5084 = vsel %vm4892, %v5008, %v5067
      %v5085 = vsel %vm4892, %v5015, %v5071
      %v5086 = vsel %vm1265, %v5084, %v5077
      %v5087 = vsel %vm1265, %v5085, %v5081
      %v5088 = vcombine.high %v5008, %v5008
      %v5089 = vcombine.high %v5015, %v5015
      %v5092 = vcombine.high %v5033, %v5033
      %v5093 = vcombine.high %v5040, %v5040
      %v5094 = vcombine.high %v5056, %v5056
      %v5095 = vcombine.high %v5063, %v5063
      %v5096 = vlaneseq
      %v5097 = vshrl.u32 %v5096, 7
      %v5098 = vsub.s32 0, %v5097
      %v5099 = vrot.slane %v5092, %v5098
      %v5100 = vlaneseq
      %v5101 = vshrl.u32 %v5100, 7
      %v5102 = vsub.s32 0, %v5101
      %v5103 = vrot.slane %v5093, %v5102
      %v5106 = vlaneseq
      %v5107 = vshrl.u32 %v5106, 7
      %v5108 = vsub.s32 0, %v5107
      %v5109 = vrot.slane %v5094, %v5108
      %v5110 = vlaneseq
      %v5111 = vshrl.u32 %v5110, 7
      %v5112 = vsub.s32 0, %v5111
      %v5113 = vrot.slane %v5095, %v5112
      %v5116 = vsel %vm4892, %v5088, %v5099
      %v5117 = vsel %vm4892, %v5089, %v5103
      %v5118 = vsel %vm1265, %v5116, %v5109
      %v5119 = vsel %vm1265, %v5117, %v5113
      %5120 = vst [vmem:[%s1033] sm:$0x7] %v5086
      %5121 = vst [vmem:[%s1033 + $0x4] sm:$0x7] %v5118
      %5122 = vst [vmem:[%s1033 + $0x8] sm:$0x7] %v5087
      %5123 = vst [vmem:[%s1033 + $0xc] sm:$0x7] %v5119
      %p5124 = scmp.lt.s32.totalorder %s77, 1
      %s5125 = scalar_select %p5124, %s77, 1
      %p5126 = scmp.lt.s32.totalorder %s78, 0
      %s5127 = scalar_select %p5126, %s78, 0
      %s5128 = smul.addr %s5125, 4
      %s5129 = sadd.s32 %s5127, %s5128
      %s5130 = smul.addr %s5129, 4
      %s5131 = scalar_lea.vmem %s59, %s5130
      %p5132 = scmp.lt.s32.totalorder %s77, 1
      %s5133 = scalar_select %p5132, %s77, 1
      %p5134 = scmp.lt.s32.totalorder %s78, 0
      %s5135 = scalar_select %p5134, %s78, 0
      %s5136 = smul.addr %s5133, 4
      %s5137 = sadd.s32 %s5135, %s5136
      %s5138 = smul.addr %s5137, 4
      %s5139 = scalar_lea.vmem %s61, %s5138
      // Predicated region
      $region137: #{forward_train.3} parent=135 // pred_check
        %p5140 = pneg %p733
      $region138: #{forward_train.3} parent=135 // pred_check_branch
        %5142 = sbr.rel (%p5140) target = $region140
      $region139: #{forward_train.3} parent=135 // pred_region
        _
      $region140: #{forward_train.3} parent=135 // pred_fallthru
        _
      // Predicated region
      $region141: #{forward_train.3} parent=135 // pred_check
        %p5143 = pneg %p761
      $region142: #{forward_train.3} parent=135 // pred_check_branch
        %5145 = sbr.rel (%p5143) target = $region144
      $region143: #{forward_train.3} parent=135 // pred_region
        _
      $region144: #{forward_train.3} parent=135 // pred_fallthru
        _
    $region136: #{forward_train.3} parent=5 // pred_fallthru
      _
    %p5146 = scmp.le.s32.totalorder 2, %s68
    // Predicated region
    $region145: #{forward_train.3} parent=5 // pred_check
      %p5147 = pneg %p5146
    $region146: #{forward_train.3} parent=5 // pred_check_branch
      %5149 = sbr.rel (%p5147) target = $region148
    $region147: #{forward_train.3} parent=5 // pred_region
      %s5150 = ssub.s32 %s68, 2
      // Predicated region
      $region149: #{forward_train.3} parent=147 // pred_check
        %p5151 = pneg %p739
      $region150: #{forward_train.3} parent=147 // pred_check_branch
        %5153 = sbr.rel (%p5151) target = $region152
      $region151: #{forward_train.3} parent=147 // pred_region
        %p5154 = scmp.lt.s32.totalorder %s79, 1
        %s5155 = scalar_select %p5154, %s79, 1
        %p5156 = scmp.lt.s32.totalorder %s80, 0
        %s5157 = scalar_select %p5156, %s80, 0
        %s5158 = smul.addr %s5155, 4
        %s5159 = sadd.s32 %s5157, %s5158
        %s5160 = smul.addr %s5159, 4
        %s5161 = scalar_lea.vmem %s59, %s5160
      $region152: #{forward_train.3} parent=147 // pred_fallthru
        _
      // Predicated region
      $region153: #{forward_train.3} parent=147 // pred_check
        %p5162 = pneg %p767
      $region154: #{forward_train.3} parent=147 // pred_check_branch
        %5164 = sbr.rel (%p5162) target = $region156
      $region155: #{forward_train.3} parent=147 // pred_region
        %p5165 = scmp.lt.s32.totalorder %s79, 1
        %s5166 = scalar_select %p5165, %s79, 1
        %p5167 = scmp.lt.s32.totalorder %s80, 0
        %s5168 = scalar_select %p5167, %s80, 0
        %s5169 = smul.addr %s5166, 4
        %s5170 = sadd.s32 %s5168, %s5169
        %s5171 = smul.addr %s5170, 4
        %s5172 = scalar_lea.vmem %s61, %s5171
      $region156: #{forward_train.3} parent=147 // pred_fallthru
        _
    $region148: #{forward_train.3} parent=5 // pred_fallthru
      _
  $region6: #{forward_train.3} parent=0 // loop_footer
    %s72 = sadd.s32 1, %s68
  $region7: #{forward_train.3} parent=0 // loop_footer_branch
    %67 = sbr.rel target = $region3
  $region8: #{forward_train.3} parent=0 // loop_exit
    _

</llo_original>
